<compile_context>
chip_gen: v7x
topology: tpu7x:2x2x1
jax: 0.10.0
libtpu: 0.0.40
codegen_flags: <defaults>
</compile_context>

<pallas_src>
import functools
import math

import jax
import jax.numpy as jnp
from jax import lax
from jax.experimental import pallas as pl
from jax.experimental.pallas import tpu as pltpu


# --------------------------------------------------------------------------------------
# helpers
# --------------------------------------------------------------------------------------
def _round_up(x, m):
    return ((x + m - 1) // m) * m


def extract_patches(x, patch_size):
    """(B, C, H, W) NCHW -> (B, num_patches, C*P*P); features in (c, ph, pw) order
    to match Conv2d weight.reshape(H, C*P*P)."""
    B, C, H, W = x.shape
    P = patch_size
    nh, nw = H // P, W // P
    x = x.reshape(B, C, nh, P, nw, P)
    x = x.transpose(0, 2, 4, 1, 3, 5)                 # (B, nh, nw, C, P, P)
    return x.reshape(B, nh * nw, C * P * P)


def _mm(a, b):
    """bf16-input / f32-accumulate matmul (mirrors the in-kernel MXU precision)."""
    return jnp.dot(a.astype(jnp.bfloat16), b.astype(jnp.bfloat16),
                   preferred_element_type=jnp.float32)


def _layer_norm(x, g, b, eps=1e-5):
    mu = jnp.mean(x, axis=-1, keepdims=True)
    xc = x - mu
    var = jnp.mean(xc * xc, axis=-1, keepdims=True)
    return xc * lax.rsqrt(var + eps) * g + b


# --------------------------------------------------------------------------------------
# Pallas kernels
# --------------------------------------------------------------------------------------
def _embed_kernel(p_ref, w_ref, t_ref, o_ref):
    # p_ref: (TB, Sp, Dp) bf16  -- row 0 of each batch = zeros (cls placeholder),
    #                              rows 1..N = patch features, pad rows/cols = 0
    # w_ref: (Dp, H)   bf16     -- projection weight, K zero-padded to 128 (resident)
    # t_ref: (Sp, H)   f32      -- row 0 = cls+pos[0]; rows 1..N = pos[1:]+conv_bias (resident)
    # o_ref: (TB, Sp, H) f32
    TB, Sp, Dp = p_ref.shape
    H = w_ref.shape[1]
    proj = jnp.dot(p_ref[...].reshape(TB * Sp, Dp), w_ref[...],
                   preferred_element_type=jnp.float32)
    o_ref[...] = (proj.reshape(TB, Sp, H) + t_ref[...][None]).astype(o_ref.dtype)


def _layer_kernel(x_ref, g1_ref, b1_ref, wqkv_ref, bqkv_ref, wo_ref, bo_ref,
                  g2_ref, b2_ref, w1_ref, b1m_ref, w2_ref, b2m_ref, o_ref,
                  *, num_heads, head_dim, valid_len):
    # Fused transformer Block: LN1 + MHA + residual + LN2 + MLP + residual.
    # x_ref/o_ref: (TB, Sp, H) f32; weights bf16 (constant index maps -> VMEM resident).
    TB, Sp, H = x_ref.shape
    M = TB * Sp
    x = x_ref[...].reshape(M, H)                                               # f32

    # ---- LayerNorm 1 (f32) ----
    mu = jnp.mean(x, axis=-1, keepdims=True)
    xc = x - mu
    var = jnp.mean(xc * xc, axis=-1, keepdims=True)
    ln1 = xc * lax.rsqrt(var + 1e-5) * g1_ref[...] + b1_ref[...]

    # ---- fused QKV projection: (M, 3H), batch folded into the MXU M dimension ----
    qkv = jnp.dot(ln1.astype(jnp.bfloat16), wqkv_ref[...],
                  preferred_element_type=jnp.float32) + bqkv_ref[...]

    scale = 1.0 / math.sqrt(head_dim)
    # additive key mask for sequence-padding columns (constant per compile)
    col = lax.broadcasted_iota(jnp.int32, (1, 1, Sp), 2)
    kmask = jnp.where(col < valid_len, 0.0, -1e9)                              # (1,1,Sp) f32

    attn = jnp.zeros((M, H), jnp.float32)
    for h in range(num_heads):                                                 # static unroll
        q = qkv[:, h * head_dim:(h + 1) * head_dim].reshape(TB, Sp, head_dim)
        k = qkv[:, H + h * head_dim:H + (h + 1) * head_dim].reshape(TB, Sp, head_dim)
        v = qkv[:, 2 * H + h * head_dim:2 * H + (h + 1) * head_dim].reshape(TB, Sp, head_dim)
        s = jnp.einsum('bqd,bkd->bqk', q.astype(jnp.bfloat16), k.astype(jnp.bfloat16),
                       preferred_element_type=jnp.float32) * scale + kmask     # (TB,Sp,Sp)
        m = jnp.max(s, axis=-1, keepdims=True)
        e = jnp.exp(s - m)
        denom = jnp.sum(e, axis=-1, keepdims=True)                             # (TB,Sp,1)
        # deferred softmax denominator: normalize AFTER the PV matmul (S*dh mults
        # instead of S*S divides; reciprocal goes to the EUP slot)
        ctx = jnp.einsum('bqk,bkd->bqd', e.astype(jnp.bfloat16), v.astype(jnp.bfloat16),
                         preferred_element_type=jnp.float32)
        ctx = ctx * pl.reciprocal(denom, approx=True)                          # (TB,Sp,dh)
        # accumulate directly into the output projection (no concat / relayout)
        attn = attn + jnp.dot(ctx.reshape(M, head_dim).astype(jnp.bfloat16),
                              wo_ref[h * head_dim:(h + 1) * head_dim, :],
                              preferred_element_type=jnp.float32)
    x = x + attn + bo_ref[...]                                                 # residual 1

    # ---- LayerNorm 2 + MLP (f32 elementwise, bf16 MXU inputs) ----
    mu2 = jnp.mean(x, axis=-1, keepdims=True)
    xc2 = x - mu2
    var2 = jnp.mean(xc2 * xc2, axis=-1, keepdims=True)
    ln2 = xc2 * lax.rsqrt(var2 + 1e-5) * g2_ref[...] + b2_ref[...]

    hid = jnp.dot(ln2.astype(jnp.bfloat16), w1_ref[...],
                  preferred_element_type=jnp.float32) + b1m_ref[...]           # (M, I)
    act = hid * jax.nn.sigmoid(1.702 * hid)        # module's NewGELUActivation: x*sigmoid(1.702x)
    mlp = jnp.dot(act.astype(jnp.bfloat16), w2_ref[...],
                  preferred_element_type=jnp.float32) + b2m_ref[...]           # (M, H)
    o_ref[...] = (x + mlp).reshape(TB, Sp, H).astype(o_ref.dtype)              # residual 2


def _classifier_kernel(x_ref, w_ref, b_ref, o_ref):
    o_ref[...] = (jnp.dot(x_ref[...], w_ref[...], preferred_element_type=jnp.float32)
                  + b_ref[...]).astype(o_ref.dtype)


# --------------------------------------------------------------------------------------
# pallas_call wrappers
# --------------------------------------------------------------------------------------
def embeddings_pallas(x, conv_w, conv_b, cls_token, pos_emb, patch_size, tb):
    """Returns padded embeddings (Bp, Sp, H) f32; pad rows/batches are exactly zero."""
    B, C, Hi, Wi = x.shape
    P = patch_size
    N = (Hi // P) * (Wi // P)
    H = conv_w.shape[0]
    D = C * P * P
    Dp = _round_up(D, 128)                       # lane/K padding for the MXU
    Sp = _round_up(N + 1, 8)                     # sublane-aligned sequence (carried through)
    Bp = _round_up(B, tb)

    patches = extract_patches(x, P).astype(jnp.bfloat16)                       # (B, N, D)
    # tokens bf16: prepend a zero cls row, pad seq to Sp, features to Dp, batch to Bp
    tokens = jnp.pad(patches, ((0, Bp - B), (1, Sp - N - 1), (0, Dp - D)))     # (Bp,Sp,Dp)

    # projection weight (Dp, H) bf16, zero-padded in K
    w = jnp.zeros((Dp, H), jnp.bfloat16).at[:D, :].set(
        conv_w.reshape(H, D).T.astype(jnp.bfloat16))

    # additive table: row 0 = cls + pos[0]; rows 1..N = pos[1:] + conv bias; pad rows = 0
    pos = pos_emb.reshape(N + 1, H)
    table = jnp.zeros((Sp, H), jnp.float32)
    table = table.at[0].set(cls_token.reshape(H) + pos[0])
    table = table.at[1:N + 1].set(pos[1:] + conv_b.reshape(1, H))

    return pl.pallas_call(
        _embed_kernel,
        out_shape=jax.ShapeDtypeStruct((Bp, Sp, H), jnp.float32),
        grid_spec=pltpu.PrefetchScalarGridSpec(
            num_scalar_prefetch=0,
            grid=(Bp // tb,),
            in_specs=[
                pl.BlockSpec((tb, Sp, Dp), lambda i: (i, 0, 0)),
                pl.BlockSpec((Dp, H), lambda i: (0, 0)),      # resident weight
                pl.BlockSpec((Sp, H), lambda i: (0, 0)),      # resident table (no tiling)
            ],
            out_specs=pl.BlockSpec((tb, Sp, H), lambda i: (i, 0, 0)),
        ),
        compiler_params=pltpu.CompilerParams(dimension_semantics=("parallel",)),
    )(tokens, w, table)


def encoder_layer_pallas(h, lp, num_heads, valid_len, tb):
    Bp, Sp, H = h.shape
    dh = H // num_heads
    I = lp['w1'].shape[1]
    kernel = functools.partial(_layer_kernel, num_heads=num_heads, head_dim=dh,
                               valid_len=valid_len)
    const = lambda b: (0, 0)
    return pl.pallas_call(
        kernel,
        out_shape=jax.ShapeDtypeStruct((Bp, Sp, H), jnp.float32),
        grid_spec=pltpu.PrefetchScalarGridSpec(
            num_scalar_prefetch=0,
            grid=(Bp // tb,),
            in_specs=[
                pl.BlockSpec((tb, Sp, H), lambda b: (b, 0, 0)),
                pl.BlockSpec((1, H), const),          # ln1 gamma
                pl.BlockSpec((1, H), const),          # ln1 beta
                pl.BlockSpec((H, 3 * H), const),      # wqkv (resident)
                pl.BlockSpec((1, 3 * H), const),      # bqkv
                pl.BlockSpec((H, H), const),          # wo   (resident)
                pl.BlockSpec((1, H), const),          # bo
                pl.BlockSpec((1, H), const),          # ln2 gamma
                pl.BlockSpec((1, H), const),          # ln2 beta
                pl.BlockSpec((H, I), const),          # w1   (resident)
                pl.BlockSpec((1, I), const),          # b1
                pl.BlockSpec((I, H), const),          # w2   (resident)
                pl.BlockSpec((1, H), const),          # b2
            ],
            out_specs=pl.BlockSpec((tb, Sp, H), lambda b: (b, 0, 0)),
        ),
        compiler_params=pltpu.CompilerParams(dimension_semantics=("parallel",)),
    )(h,
      lp['ln1_g'].reshape(1, H), lp['ln1_b'].reshape(1, H),
      lp['wqkv'].astype(jnp.bfloat16), lp['bqkv'].reshape(1, 3 * H),
      lp['wo'].astype(jnp.bfloat16), lp['bo'].reshape(1, H),
      lp['ln2_g'].reshape(1, H), lp['ln2_b'].reshape(1, H),
      lp['w1'].astype(jnp.bfloat16), lp['b1'].reshape(1, I),
      lp['w2'].astype(jnp.bfloat16), lp['b2'].reshape(1, H))


def classifier_pallas(feats, wc, bc):
    B, H = feats.shape
    nc = wc.shape[1]
    Bp = _round_up(B, 8)                          # sublane-aligned rows
    ncp = _round_up(nc, 128)                      # lane-dense output store
    feats_p = jnp.pad(feats.astype(jnp.bfloat16), ((0, Bp - B), (0, 0)))
    wc_p = jnp.zeros((H, ncp), jnp.bfloat16).at[:, :nc].set(wc.astype(jnp.bfloat16))
    bc_p = jnp.zeros((1, ncp), jnp.float32).at[0, :nc].set(bc)
    out = pl.pallas_call(
        _classifier_kernel,
        out_shape=jax.ShapeDtypeStruct((Bp, ncp), jnp.float32),
        grid_spec=pltpu.PrefetchScalarGridSpec(
            num_scalar_prefetch=0,
            grid=(1,),
            in_specs=[
                pl.BlockSpec((Bp, H), lambda i: (0, 0)),
                pl.BlockSpec((H, ncp), lambda i: (0, 0)),
                pl.BlockSpec((1, ncp), lambda i: (0, 0)),
            ],
            out_specs=pl.BlockSpec((Bp, ncp), lambda i: (0, 0)),
        ),
    )(feats_p, wc_p, bc_p)
    return out[:B, :nc]


@functools.partial(jax.jit, static_argnames=("patch_size", "num_heads"))
def vit_forward(params, x, *, patch_size, num_heads):
    """ViTForClassification.forward (eval mode); returns logits (module returns (logits, None))."""
    B = x.shape[0]
    N = (x.shape[2] // patch_size) * (x.shape[3] // patch_size)
    valid_len = N + 1
    Sp = _round_up(valid_len, 8)
    # batch-fold so each grid step feeds >=256 MXU rows (fills v6e/v7x 256-wide MXU,
    # 2x-fills v5e's 128-wide), capped by the actual batch.
    tb = max(1, min(B, -(-256 // Sp)))

    h = embeddings_pallas(x, params['conv_w'], params['conv_b'],
                          params['cls_token'], params['pos_emb'], patch_size, tb)
    for lp in params['layers']:
        h = encoder_layer_pallas(h, lp, num_heads, valid_len, tb)   # one fused kernel / layer
    feats = h[:B, 0, :]                                             # CLS token (real batches)
    return classifier_pallas(feats, params['wc'], params['bc'])


# --------------------------------------------------------------------------------------
# pure-JAX reference (same bf16-matmul / f32-accumulate precision as the kernels)
# --------------------------------------------------------------------------------------
def reference_forward(params, x, cfg):
    P = cfg['patch_size']
    H = cfg['hidden_size']
    nh = cfg['num_attention_heads']
    dh = H // nh

    patches = extract_patches(x, P)                        # (B, N, D)
    B, N, D = patches.shape
    w = params['conv_w'].reshape(H, D).T
    proj = _mm(patches.reshape(B * N, D), w).reshape(B, N, H) + params['conv_b']
    cls = jnp.broadcast_to(params['cls_token'].reshape(1, 1, H), (B, 1, H))
    h = jnp.concatenate([cls, proj], axis=1) + params['pos_emb'].reshape(1, N + 1, H)

    S = N + 1
    for lp in params['layers']:
        ln = _layer_norm(h, lp['ln1_g'], lp['ln1_b'])
        qkv = _mm(ln.reshape(B * S, H), lp['wqkv']).reshape(B, S, 3 * H) + lp['bqkv']
        parts = []
        for hd in range(nh):
            q = qkv[..., hd * dh:(hd + 1) * dh]
            k = qkv[..., H + hd * dh:H + (hd + 1) * dh]
            v = qkv[..., 2 * H + hd * dh:2 * H + (hd + 1) * dh]
            s = jnp.einsum('bqd,bkd->bqk', q.astype(jnp.bfloat16), k.astype(jnp.bfloat16),
                           preferred_element_type=jnp.float32) * (1.0 / math.sqrt(dh))
            m = jnp.max(s, axis=-1, keepdims=True)
            e = jnp.exp(s - m)
            ctx = jnp.einsum('bqk,bkd->bqd', e.astype(jnp.bfloat16), v.astype(jnp.bfloat16),
                             preferred_element_type=jnp.float32)
            parts.append(ctx / jnp.sum(e, axis=-1, keepdims=True))
        ctx = jnp.concatenate(parts, axis=-1)
        attn = _mm(ctx.reshape(B * S, H), lp['wo']).reshape(B, S, H) + lp['bo']
        h = h + attn

        ln2 = _layer_norm(h, lp['ln2_g'], lp['ln2_b'])
        hid = _mm(ln2.reshape(B * S, H), lp['w1']).reshape(B, S, -1) + lp['b1']
        act = hid * jax.nn.sigmoid(1.702 * hid)
        mlp = _mm(act.reshape(B * S, -1), lp['w2']).reshape(B, S, H) + lp['b2']
        h = h + mlp

    return _mm(h[:, 0, :], params['wc']) + params['bc'].reshape(1, -1)


# --------------------------------------------------------------------------------------
# parameter init (mirrors the module's parameter shapes; nonzero biases to exercise paths)
# --------------------------------------------------------------------------------------
def init_params(key, cfg):
    H = cfg['hidden_size']
    I = cfg['intermediate_size']
    C = cfg['num_channels']
    P = cfg['patch_size']
    N = (cfg['image_size'] // P) ** 2
    nc = cfg['num_classes']
    std = cfg['initializer_range']
    L = cfg['num_hidden_layers']

    ks = jax.random.split(key, 6 + L)

    def nrm(k, shape, s=std):
        return s * jax.random.normal(k, shape, jnp.float32)

    params = {
        'conv_w': nrm(ks[0], (H, C, P, P)),
        'conv_b': nrm(ks[1], (H,), 0.05),
        'cls_token': jax.random.normal(ks[2], (1, 1, H), jnp.float32),
        'pos_emb': jax.random.normal(ks[3], (1, N + 1, H), jnp.float32),
        'wc': nrm(ks[4], (H, nc)),
        'bc': nrm(ks[5], (nc,), 0.05),
        'layers': [],
    }
    for l in range(L):
        lk = jax.random.split(ks[6 + l], 12)
        params['layers'].append({
            'ln1_g': 1.0 + 0.1 * jax.random.normal(lk[0], (H,), jnp.float32),
            'ln1_b': 0.1 * jax.random.normal(lk[1], (H,), jnp.float32),
            'wqkv': nrm(lk[2], (H, 3 * H)),
            'bqkv': nrm(lk[3], (3 * H,), 0.05),
            'wo': nrm(lk[4], (H, H)),
            'bo': nrm(lk[5], (H,), 0.05),
            'ln2_g': 1.0 + 0.1 * jax.random.normal(lk[6], (H,), jnp.float32),
            'ln2_b': 0.1 * jax.random.normal(lk[7], (H,), jnp.float32),
            'w1': nrm(lk[8], (H, I)),
            'b1': nrm(lk[9], (I,), 0.05),
            'w2': nrm(lk[10], (I, H)),
            'b2': nrm(lk[11], (H,), 0.05),
        })
    return params


# --------------------------------------------------------------------------------------
if __name__ == "__main__":
    # Reduced-depth config (same widths as the spec config, fewer layers / small batch).
    cfg = {
        'patch_size': 4, 'hidden_size': 256, 'num_hidden_layers': 2,
        'num_attention_heads': 4, 'intermediate_size': 1024,
        'image_size': 32, 'num_classes': 10, 'num_channels': 3,
        'initializer_range': 0.02,
    }
    B = 2

    key = jax.random.PRNGKey(0)
    kp, kx = jax.random.split(key)
    params = init_params(kp, cfg)
    x = jax.random.normal(
        kx, (B, cfg['num_channels'], cfg['image_size'], cfg['image_size']), jnp.float32)

    logits = vit_forward(params, x, patch_size=cfg['patch_size'],
                         num_heads=cfg['num_attention_heads'])
    logits = jax.block_until_ready(logits)

    ref = reference_forward(params, x, cfg)
    assert logits.shape == (B, cfg['num_classes']), logits.shape
    max_err = float(jnp.max(jnp.abs(logits - ref)))
    # bf16 MXU inputs + approx reciprocal in the softmax epilogue => small, documented drift
    assert jnp.allclose(logits, ref, rtol=3e-3, atol=3e-3), f"mismatch vs reference: {max_err}"

    print("KERNEL_OK")
</pallas_src>

<mosaic_0001>
module attributes {stable_mosaic.version = 11 : i64} {
  func.func @_embed_kernel(%arg0: i32, %arg1: memref<2x72x128xbf16, #tpu.memory_space<vmem>>, %arg2: memref<128x256xbf16, #tpu.memory_space<vmem>>, %arg3: memref<72x256xf32, #tpu.memory_space<vmem>>, %arg4: memref<2x72x256xf32, #tpu.memory_space<vmem>>) attributes {dimension_semantics = [#tpu.dimension_semantics<parallel>], iteration_bounds = array<i64: 1>, scalar_prefetch = 0 : i64, scratch_operands = 0 : i64, tpu.core_type = #tpu.core_type<tc>, window_params = [{transform_indices = @transform_0, window_bounds = array<i64: 2, 72, 128>}, {pipeline_mode = #tpu.pipeline_mode<synchronous>, transform_indices = @transform_1, window_bounds = array<i64: 128, 256>}, {pipeline_mode = #tpu.pipeline_mode<synchronous>, transform_indices = @transform_2, window_bounds = array<i64: 72, 256>}, {transform_indices = @transform_3, window_bounds = array<i64: 2, 72, 256>}]} {
    %c0 = arith.constant 0 : index
    %c0_0 = arith.constant 0 : index
    %c0_1 = arith.constant 0 : index
    %0 = vector.load %arg1[%c0, %c0_0, %c0_1] : memref<2x72x128xbf16, #tpu.memory_space<vmem>>, vector<2x72x128xbf16>
    %1 = vector.shape_cast %0 : vector<2x72x128xbf16> to vector<144x128xbf16>
    %c0_2 = arith.constant 0 : index
    %c0_3 = arith.constant 0 : index
    %2 = vector.load %arg2[%c0_2, %c0_3] : memref<128x256xbf16, #tpu.memory_space<vmem>>, vector<128x256xbf16>
    %cst = arith.constant dense<0.000000e+00> : vector<144x256xf32>
    %3 = tpu.matmul %1, %2, %cst {dimension_numbers = #tpu.dot_dimension_numbers<[1], [0], [0], [1], [0, 0, 1, 1], [], []>} : vector<144x128xbf16>, vector<128x256xbf16>, vector<144x256xf32> -> vector<144x256xf32>
    %4 = vector.shape_cast %3 : vector<144x256xf32> to vector<2x72x256xf32>
    %c0_4 = arith.constant 0 : index
    %c0_5 = arith.constant 0 : index
    %5 = vector.load %arg3[%c0_4, %c0_5] : memref<72x256xf32, #tpu.memory_space<vmem>>, vector<72x256xf32>
    %6 = vector.shape_cast %5 : vector<72x256xf32> to vector<1x72x256xf32>
    %7 = vector.broadcast %6 : vector<1x72x256xf32> to vector<2x72x256xf32>
    %8 = arith.addf %4, %7 : vector<2x72x256xf32>
    %c0_6 = arith.constant 0 : index
    %c0_7 = arith.constant 0 : index
    %c0_8 = arith.constant 0 : index
    %9 = vector.load %arg4[%c0_6, %c0_7, %c0_8] : memref<2x72x256xf32, #tpu.memory_space<vmem>>, vector<2x72x256xf32>
    tpu.vector_store %arg4[%c0_6, %c0_7, %c0_8], %8 {strides = array<i32>} : memref<2x72x256xf32, #tpu.memory_space<vmem>>, vector<2x72x256xf32>,
    return
  }
  func.func @transform_0(%arg0: i32) -> (i32, i32, i32) {
    %c0_i32 = arith.constant 0 : i32
    %c0_i32_0 = arith.constant 0 : i32
    %c0_i32_1 = arith.constant 0 : i32
    return %arg0, %c0_i32, %c0_i32_0 : i32, i32, i32
  }
  func.func @transform_1(%arg0: i32) -> (i32, i32) {
    %c0_i32 = arith.constant 0 : i32
    %c0_i32_0 = arith.constant 0 : i32
    %c0_i32_1 = arith.constant 0 : i32
    return %c0_i32, %c0_i32_0 : i32, i32
  }
  func.func @transform_2(%arg0: i32) -> (i32, i32) {
    %c0_i32 = arith.constant 0 : i32
    %c0_i32_0 = arith.constant 0 : i32
    %c0_i32_1 = arith.constant 0 : i32
    return %c0_i32, %c0_i32_0 : i32, i32
  }
  func.func @transform_3(%arg0: i32) -> (i32, i32, i32) {
    %c0_i32 = arith.constant 0 : i32
    %c0_i32_0 = arith.constant 0 : i32
    %c0_i32_1 = arith.constant 0 : i32
    return %arg0, %c0_i32, %c0_i32_0 : i32, i32, i32
  }
}

module attributes {stable_mosaic.version = 11 : i64} {
  func.func @_layer_kernel(%arg0: i32, %arg1: memref<2x72x256xf32, #tpu.memory_space<vmem>>, %arg2: memref<1x256xf32, #tpu.memory_space<vmem>>, %arg3: memref<1x256xf32, #tpu.memory_space<vmem>>, %arg4: memref<256x768xbf16, #tpu.memory_space<vmem>>, %arg5: memref<1x768xf32, #tpu.memory_space<vmem>>, %arg6: memref<256x256xbf16, #tpu.memory_space<vmem>>, %arg7: memref<1x256xf32, #tpu.memory_space<vmem>>, %arg8: memref<1x256xf32, #tpu.memory_space<vmem>>, %arg9: memref<1x256xf32, #tpu.memory_space<vmem>>, %arg10: memref<256x1024xbf16, #tpu.memory_space<vmem>>, %arg11: memref<1x1024xf32, #tpu.memory_space<vmem>>, %arg12: memref<1024x256xbf16, #tpu.memory_space<vmem>>, %arg13: memref<1x256xf32, #tpu.memory_space<vmem>>, %arg14: memref<2x72x256xf32, #tpu.memory_space<vmem>>) attributes {dimension_semantics = [#tpu.dimension_semantics<parallel>], iteration_bounds = array<i64: 1>, scalar_prefetch = 0 : i64, scratch_operands = 0 : i64, tpu.core_type = #tpu.core_type<tc>, window_params = [{transform_indices = @transform_0, window_bounds = array<i64: 2, 72, 256>}, {pipeline_mode = #tpu.pipeline_mode<synchronous>, transform_indices = @transform_1, window_bounds = array<i64: 1, 256>}, {pipeline_mode = #tpu.pipeline_mode<synchronous>, transform_indices = @transform_2, window_bounds = array<i64: 1, 256>}, {pipeline_mode = #tpu.pipeline_mode<synchronous>, transform_indices = @transform_3, window_bounds = array<i64: 256, 768>}, {pipeline_mode = #tpu.pipeline_mode<synchronous>, transform_indices = @transform_4, window_bounds = array<i64: 1, 768>}, {pipeline_mode = #tpu.pipeline_mode<synchronous>, transform_indices = @transform_5, window_bounds = array<i64: 256, 256>}, {pipeline_mode = #tpu.pipeline_mode<synchronous>, transform_indices = @transform_6, window_bounds = array<i64: 1, 256>}, {pipeline_mode = #tpu.pipeline_mode<synchronous>, transform_indices = @transform_7, window_bounds = array<i64: 1, 256>}, {pipeline_mode = #tpu.pipeline_mode<synchronous>, transform_indices = @transform_8, window_bounds = array<i64: 1, 256>}, {pipeline_mode = #tpu.pipeline_mode<synchronous>, transform_indices = @transform_9, window_bounds = array<i64: 256, 1024>}, {pipeline_mode = #tpu.pipeline_mode<synchronous>, transform_indices = @transform_10, window_bounds = array<i64: 1, 1024>}, {pipeline_mode = #tpu.pipeline_mode<synchronous>, transform_indices = @transform_11, window_bounds = array<i64: 1024, 256>}, {pipeline_mode = #tpu.pipeline_mode<synchronous>, transform_indices = @transform_12, window_bounds = array<i64: 1, 256>}, {transform_indices = @transform_13, window_bounds = array<i64: 2, 72, 256>}]} {
    %c0 = arith.constant 0 : index
    %c0_0 = arith.constant 0 : index
    %c0_1 = arith.constant 0 : index
    %0 = vector.load %arg1[%c0, %c0_0, %c0_1] : memref<2x72x256xf32, #tpu.memory_space<vmem>>, vector<2x72x256xf32>
    %1 = vector.shape_cast %0 : vector<2x72x256xf32> to vector<144x256xf32>
    %cst = arith.constant dense<0.000000e+00> : vector<144xf32>
    %2 = vector.multi_reduction <add>, %1, %cst [1] : vector<144x256xf32> to vector<144xf32>
    %3 = vector.shape_cast %2 : vector<144xf32> to vector<144x1xf32>
    %cst_2 = arith.constant 2.560000e+02 : f32
    %4 = vector.broadcast %cst_2 : f32 to vector<144x1xf32>
    %5 = arith.divf %3, %4 : vector<144x1xf32>
    %6 = vector.broadcast %5 : vector<144x1xf32> to vector<144x256xf32>
    %7 = arith.subf %1, %6 : vector<144x256xf32>
    %8 = arith.mulf %7, %7 : vector<144x256xf32>
    %cst_3 = arith.constant dense<0.000000e+00> : vector<144xf32>
    %9 = vector.multi_reduction <add>, %8, %cst_3 [1] : vector<144x256xf32> to vector<144xf32>
    %10 = vector.shape_cast %9 : vector<144xf32> to vector<144x1xf32>
    %cst_4 = arith.constant 2.560000e+02 : f32
    %11 = vector.broadcast %cst_4 : f32 to vector<144x1xf32>
    %12 = arith.divf %10, %11 : vector<144x1xf32>
    %cst_5 = arith.constant 9.99999974E-6 : f32
    %13 = vector.broadcast %cst_5 : f32 to vector<144x1xf32>
    %14 = arith.addf %12, %13 : vector<144x1xf32>
    %15 = math.rsqrt %14 : vector<144x1xf32>
    %16 = vector.broadcast %15 : vector<144x1xf32> to vector<144x256xf32>
    %17 = arith.mulf %7, %16 : vector<144x256xf32>
    %c0_6 = arith.constant 0 : index
    %c0_7 = arith.constant 0 : index
    %18 = vector.load %arg2[%c0_6, %c0_7] : memref<1x256xf32, #tpu.memory_space<vmem>>, vector<1x256xf32>
    %19 = vector.broadcast %18 : vector<1x256xf32> to vector<144x256xf32>
    %20 = arith.mulf %17, %19 : vector<144x256xf32>
    %c0_8 = arith.constant 0 : index
    %c0_9 = arith.constant 0 : index
    %21 = vector.load %arg3[%c0_8, %c0_9] : memref<1x256xf32, #tpu.memory_space<vmem>>, vector<1x256xf32>
    %22 = vector.broadcast %21 : vector<1x256xf32> to vector<144x256xf32>
    %23 = arith.addf %20, %22 : vector<144x256xf32>
    %24 = arith.truncf %23 : vector<144x256xf32> to vector<144x256xbf16>
    %c0_10 = arith.constant 0 : index
    %c0_11 = arith.constant 0 : index
    %25 = vector.load %arg4[%c0_10, %c0_11] : memref<256x768xbf16, #tpu.memory_space<vmem>>, vector<256x768xbf16>
    %cst_12 = arith.constant dense<0.000000e+00> : vector<144x768xf32>
    %26 = tpu.matmul %24, %25, %cst_12 {dimension_numbers = #tpu.dot_dimension_numbers<[1], [0], [0], [1], [0, 0, 1, 1], [], []>} : vector<144x256xbf16>, vector<256x768xbf16>, vector<144x768xf32> -> vector<144x768xf32>
    %c0_13 = arith.constant 0 : index
    %c0_14 = arith.constant 0 : index
    %27 = vector.load %arg5[%c0_13, %c0_14] : memref<1x768xf32, #tpu.memory_space<vmem>>, vector<1x768xf32>
    %28 = vector.broadcast %27 : vector<1x768xf32> to vector<144x768xf32>
    %29 = arith.addf %26, %28 : vector<144x768xf32>
    %30 = tpu.iota {dimensions = array<i32: 2>} : vector<1x1x72xi32>
    %c65_i32 = arith.constant 65 : i32
    %31 = vector.broadcast %c65_i32 : i32 to vector<1x1x72xi32>
    %32 = arith.cmpi slt, %30, %31 : vector<1x1x72xi32>
    %cst_15 = arith.constant 0.000000e+00 : f32
    %cst_16 = arith.constant -1.000000e+09 : f32
    %33 = vector.broadcast %cst_15 : f32 to vector<1x1x72xf32>
    %34 = vector.broadcast %cst_16 : f32 to vector<1x1x72xf32>
    %35 = arith.select %32, %33, %34 : vector<1x1x72xi1>, vector<1x1x72xf32>
    %cst_17 = arith.constant 0.000000e+00 : f32
    %36 = vector.broadcast %cst_17 : f32 to vector<144x256xf32>
    %37 = vector.extract_strided_slice %29 {offsets = [0, 0], sizes = [144, 64], strides = [1, 1]} : vector<144x768xf32> to vector<144x64xf32>
    %38 = vector.shape_cast %37 : vector<144x64xf32> to vector<2x72x64xf32>
    %39 = vector.extract_strided_slice %29 {offsets = [0, 256], sizes = [144, 64], strides = [1, 1]} : vector<144x768xf32> to vector<144x64xf32>
    %40 = vector.shape_cast %39 : vector<144x64xf32> to vector<2x72x64xf32>
    %41 = vector.extract_strided_slice %29 {offsets = [0, 512], sizes = [144, 64], strides = [1, 1]} : vector<144x768xf32> to vector<144x64xf32>
    %42 = vector.shape_cast %41 : vector<144x64xf32> to vector<2x72x64xf32>
    %43 = arith.truncf %38 : vector<2x72x64xf32> to vector<2x72x64xbf16>
    %44 = arith.truncf %40 : vector<2x72x64xf32> to vector<2x72x64xbf16>
    "tpu.trace_start"() <{level = 10 : i32, message = "bqd,bkd->bqk"}> : () -> ()
    %cst_18 = arith.constant dense<0.000000e+00> : vector<2x72x72xf32>
    %45 = tpu.matmul %43, %44, %cst_18 {dimension_numbers = #tpu.dot_dimension_numbers<[2], [2], [1], [1], [0, 0, 0, 1, 1, 1], [0], [0]>} : vector<2x72x64xbf16>, vector<2x72x64xbf16>, vector<2x72x72xf32> -> vector<2x72x72xf32>
    "tpu.trace_stop"() : () -> ()
    %cst_19 = arith.constant 1.250000e-01 : f32
    %46 = vector.broadcast %cst_19 : f32 to vector<2x72x72xf32>
    %47 = arith.mulf %45, %46 : vector<2x72x72xf32>
    %48 = vector.broadcast %35 : vector<1x1x72xf32> to vector<2x72x72xf32>
    %49 = arith.addf %47, %48 : vector<2x72x72xf32>
    %cst_20 = arith.constant dense<0xFF800000> : vector<2x72xf32>
    %50 = vector.multi_reduction <maximumf>, %49, %cst_20 [2] : vector<2x72x72xf32> to vector<2x72xf32>
    %51 = vector.shape_cast %50 : vector<2x72xf32> to vector<2x72x1xf32>
    %52 = vector.broadcast %51 : vector<2x72x1xf32> to vector<2x72x72xf32>
    %53 = arith.subf %49, %52 : vector<2x72x72xf32>
    %54 = math.exp %53 : vector<2x72x72xf32>
    %cst_21 = arith.constant dense<0.000000e+00> : vector<2x72xf32>
    %55 = vector.multi_reduction <add>, %54, %cst_21 [2] : vector<2x72x72xf32> to vector<2x72xf32>
    %56 = vector.shape_cast %55 : vector<2x72xf32> to vector<2x72x1xf32>
    %57 = arith.truncf %54 : vector<2x72x72xf32> to vector<2x72x72xbf16>
    %58 = arith.truncf %42 : vector<2x72x64xf32> to vector<2x72x64xbf16>
    "tpu.trace_start"() <{level = 10 : i32, message = "bqk,bkd->bqd"}> : () -> ()
    %cst_22 = arith.constant dense<0.000000e+00> : vector<2x72x64xf32>
    %59 = tpu.matmul %57, %58, %cst_22 {dimension_numbers = #tpu.dot_dimension_numbers<[2], [1], [1], [2], [0, 0, 0, 1, 1, 2], [0], [0]>} : vector<2x72x72xbf16>, vector<2x72x64xbf16>, vector<2x72x64xf32> -> vector<2x72x64xf32>
    "tpu.trace_stop"() : () -> ()
    %60 = tpu.reciprocal %56 {approx = true} : vector<2x72x1xf32> -> vector<2x72x1xf32>
    %61 = vector.broadcast %60 : vector<2x72x1xf32> to vector<2x72x64xf32>
    %62 = arith.mulf %59, %61 : vector<2x72x64xf32>
    %63 = vector.shape_cast %62 : vector<2x72x64xf32> to vector<144x64xf32>
    %64 = arith.truncf %63 : vector<144x64xf32> to vector<144x64xbf16>
    %c0_23 = arith.constant 0 : index
    %c0_24 = arith.constant 0 : index
    %65 = vector.load %arg6[%c0_23, %c0_24] : memref<256x256xbf16, #tpu.memory_space<vmem>>, vector<64x256xbf16>
    %cst_25 = arith.constant dense<0.000000e+00> : vector<144x256xf32>
    %66 = tpu.matmul %64, %65, %cst_25 {dimension_numbers = #tpu.dot_dimension_numbers<[1], [0], [0], [1], [0, 0, 1, 1], [], []>} : vector<144x64xbf16>, vector<64x256xbf16>, vector<144x256xf32> -> vector<144x256xf32>
    %67 = arith.addf %36, %66 : vector<144x256xf32>
    %68 = vector.extract_strided_slice %29 {offsets = [0, 64], sizes = [144, 64], strides = [1, 1]} : vector<144x768xf32> to vector<144x64xf32>
    %69 = vector.shape_cast %68 : vector<144x64xf32> to vector<2x72x64xf32>
    %70 = vector.extract_strided_slice %29 {offsets = [0, 320], sizes = [144, 64], strides = [1, 1]} : vector<144x768xf32> to vector<144x64xf32>
    %71 = vector.shape_cast %70 : vector<144x64xf32> to vector<2x72x64xf32>
    %72 = vector.extract_strided_slice %29 {offsets = [0, 576], sizes = [144, 64], strides = [1, 1]} : vector<144x768xf32> to vector<144x64xf32>
    %73 = vector.shape_cast %72 : vector<144x64xf32> to vector<2x72x64xf32>
    %74 = arith.truncf %69 : vector<2x72x64xf32> to vector<2x72x64xbf16>
    %75 = arith.truncf %71 : vector<2x72x64xf32> to vector<2x72x64xbf16>
    "tpu.trace_start"() <{level = 10 : i32, message = "bqd,bkd->bqk"}> : () -> ()
    %cst_26 = arith.constant dense<0.000000e+00> : vector<2x72x72xf32>
    %76 = tpu.matmul %74, %75, %cst_26 {dimension_numbers = #tpu.dot_dimension_numbers<[2], [2], [1], [1], [0, 0, 0, 1, 1, 1], [0], [0]>} : vector<2x72x64xbf16>, vector<2x72x64xbf16>, vector<2x72x72xf32> -> vector<2x72x72xf32>
    "tpu.trace_stop"() : () -> ()
    %cst_27 = arith.constant 1.250000e-01 : f32
    %77 = vector.broadcast %cst_27 : f32 to vector<2x72x72xf32>
    %78 = arith.mulf %76, %77 : vector<2x72x72xf32>
    %79 = vector.broadcast %35 : vector<1x1x72xf32> to vector<2x72x72xf32>
    %80 = arith.addf %78, %79 : vector<2x72x72xf32>
    %cst_28 = arith.constant dense<0xFF800000> : vector<2x72xf32>
    %81 = vector.multi_reduction <maximumf>, %80, %cst_28 [2] : vector<2x72x72xf32> to vector<2x72xf32>
    %82 = vector.shape_cast %81 : vector<2x72xf32> to vector<2x72x1xf32>
    %83 = vector.broadcast %82 : vector<2x72x1xf32> to vector<2x72x72xf32>
    %84 = arith.subf %80, %83 : vector<2x72x72xf32>
    %85 = math.exp %84 : vector<2x72x72xf32>
    %cst_29 = arith.constant dense<0.000000e+00> : vector<2x72xf32>
    %86 = vector.multi_reduction <add>, %85, %cst_29 [2] : vector<2x72x72xf32> to vector<2x72xf32>
    %87 = vector.shape_cast %86 : vector<2x72xf32> to vector<2x72x1xf32>
    %88 = arith.truncf %85 : vector<2x72x72xf32> to vector<2x72x72xbf16>
    %89 = arith.truncf %73 : vector<2x72x64xf32> to vector<2x72x64xbf16>
    "tpu.trace_start"() <{level = 10 : i32, message = "bqk,bkd->bqd"}> : () -> ()
    %cst_30 = arith.constant dense<0.000000e+00> : vector<2x72x64xf32>
    %90 = tpu.matmul %88, %89, %cst_30 {dimension_numbers = #tpu.dot_dimension_numbers<[2], [1], [1], [2], [0, 0, 0, 1, 1, 2], [0], [0]>} : vector<2x72x72xbf16>, vector<2x72x64xbf16>, vector<2x72x64xf32> -> vector<2x72x64xf32>
    "tpu.trace_stop"() : () -> ()
    %91 = tpu.reciprocal %87 {approx = true} : vector<2x72x1xf32> -> vector<2x72x1xf32>
    %92 = vector.broadcast %91 : vector<2x72x1xf32> to vector<2x72x64xf32>
    %93 = arith.mulf %90, %92 : vector<2x72x64xf32>
    %94 = vector.shape_cast %93 : vector<2x72x64xf32> to vector<144x64xf32>
    %95 = arith.truncf %94 : vector<144x64xf32> to vector<144x64xbf16>
    %c64 = arith.constant 64 : index
    %c0_31 = arith.constant 0 : index
    %96 = vector.load %arg6[%c64, %c0_31] : memref<256x256xbf16, #tpu.memory_space<vmem>>, vector<64x256xbf16>
    %cst_32 = arith.constant dense<0.000000e+00> : vector<144x256xf32>
    %97 = tpu.matmul %95, %96, %cst_32 {dimension_numbers = #tpu.dot_dimension_numbers<[1], [0], [0], [1], [0, 0, 1, 1], [], []>} : vector<144x64xbf16>, vector<64x256xbf16>, vector<144x256xf32> -> vector<144x256xf32>
    %98 = arith.addf %67, %97 : vector<144x256xf32>
    %99 = vector.extract_strided_slice %29 {offsets = [0, 128], sizes = [144, 64], strides = [1, 1]} : vector<144x768xf32> to vector<144x64xf32>
    %100 = vector.shape_cast %99 : vector<144x64xf32> to vector<2x72x64xf32>
    %101 = vector.extract_strided_slice %29 {offsets = [0, 384], sizes = [144, 64], strides = [1, 1]} : vector<144x768xf32> to vector<144x64xf32>
    %102 = vector.shape_cast %101 : vector<144x64xf32> to vector<2x72x64xf32>
    %103 = vector.extract_strided_slice %29 {offsets = [0, 640], sizes = [144, 64], strides = [1, 1]} : vector<144x768xf32> to vector<144x64xf32>
    %104 = vector.shape_cast %103 : vector<144x64xf32> to vector<2x72x64xf32>
    %105 = arith.truncf %100 : vector<2x72x64xf32> to vector<2x72x64xbf16>
    %106 = arith.truncf %102 : vector<2x72x64xf32> to vector<2x72x64xbf16>
    "tpu.trace_start"() <{level = 10 : i32, message = "bqd,bkd->bqk"}> : () -> ()
    %cst_33 = arith.constant dense<0.000000e+00> : vector<2x72x72xf32>
    %107 = tpu.matmul %105, %106, %cst_33 {dimension_numbers = #tpu.dot_dimension_numbers<[2], [2], [1], [1], [0, 0, 0, 1, 1, 1], [0], [0]>} : vector<2x72x64xbf16>, vector<2x72x64xbf16>, vector<2x72x72xf32> -> vector<2x72x72xf32>
    "tpu.trace_stop"() : () -> ()
    %cst_34 = arith.constant 1.250000e-01 : f32
    %108 = vector.broadcast %cst_34 : f32 to vector<2x72x72xf32>
    %109 = arith.mulf %107, %108 : vector<2x72x72xf32>
    %110 = vector.broadcast %35 : vector<1x1x72xf32> to vector<2x72x72xf32>
    %111 = arith.addf %109, %110 : vector<2x72x72xf32>
    %cst_35 = arith.constant dense<0xFF800000> : vector<2x72xf32>
    %112 = vector.multi_reduction <maximumf>, %111, %cst_35 [2] : vector<2x72x72xf32> to vector<2x72xf32>
    %113 = vector.shape_cast %112 : vector<2x72xf32> to vector<2x72x1xf32>
    %114 = vector.broadcast %113 : vector<2x72x1xf32> to vector<2x72x72xf32>
    %115 = arith.subf %111, %114 : vector<2x72x72xf32>
    %116 = math.exp %115 : vector<2x72x72xf32>
    %cst_36 = arith.constant dense<0.000000e+00> : vector<2x72xf32>
    %117 = vector.multi_reduction <add>, %116, %cst_36 [2] : vector<2x72x72xf32> to vector<2x72xf32>
    %118 = vector.shape_cast %117 : vector<2x72xf32> to vector<2x72x1xf32>
    %119 = arith.truncf %116 : vector<2x72x72xf32> to vector<2x72x72xbf16>
    %120 = arith.truncf %104 : vector<2x72x64xf32> to vector<2x72x64xbf16>
    "tpu.trace_start"() <{level = 10 : i32, message = "bqk,bkd->bqd"}> : () -> ()
    %cst_37 = arith.constant dense<0.000000e+00> : vector<2x72x64xf32>
    %121 = tpu.matmul %119, %120, %cst_37 {dimension_numbers = #tpu.dot_dimension_numbers<[2], [1], [1], [2], [0, 0, 0, 1, 1, 2], [0], [0]>} : vector<2x72x72xbf16>, vector<2x72x64xbf16>, vector<2x72x64xf32> -> vector<2x72x64xf32>
    "tpu.trace_stop"() : () -> ()
    %122 = tpu.reciprocal %118 {approx = true} : vector<2x72x1xf32> -> vector<2x72x1xf32>
    %123 = vector.broadcast %122 : vector<2x72x1xf32> to vector<2x72x64xf32>
    %124 = arith.mulf %121, %123 : vector<2x72x64xf32>
    %125 = vector.shape_cast %124 : vector<2x72x64xf32> to vector<144x64xf32>
    %126 = arith.truncf %125 : vector<144x64xf32> to vector<144x64xbf16>
    %c128 = arith.constant 128 : index
    %c0_38 = arith.constant 0 : index
    %127 = vector.load %arg6[%c128, %c0_38] : memref<256x256xbf16, #tpu.memory_space<vmem>>, vector<64x256xbf16>
    %cst_39 = arith.constant dense<0.000000e+00> : vector<144x256xf32>
    %128 = tpu.matmul %126, %127, %cst_39 {dimension_numbers = #tpu.dot_dimension_numbers<[1], [0], [0], [1], [0, 0, 1, 1], [], []>} : vector<144x64xbf16>, vector<64x256xbf16>, vector<144x256xf32> -> vector<144x256xf32>
    %129 = arith.addf %98, %128 : vector<144x256xf32>
    %130 = vector.extract_strided_slice %29 {offsets = [0, 192], sizes = [144, 64], strides = [1, 1]} : vector<144x768xf32> to vector<144x64xf32>
    %131 = vector.shape_cast %130 : vector<144x64xf32> to vector<2x72x64xf32>
    %132 = vector.extract_strided_slice %29 {offsets = [0, 448], sizes = [144, 64], strides = [1, 1]} : vector<144x768xf32> to vector<144x64xf32>
    %133 = vector.shape_cast %132 : vector<144x64xf32> to vector<2x72x64xf32>
    %134 = vector.extract_strided_slice %29 {offsets = [0, 704], sizes = [144, 64], strides = [1, 1]} : vector<144x768xf32> to vector<144x64xf32>
    %135 = vector.shape_cast %134 : vector<144x64xf32> to vector<2x72x64xf32>
    %136 = arith.truncf %131 : vector<2x72x64xf32> to vector<2x72x64xbf16>
    %137 = arith.truncf %133 : vector<2x72x64xf32> to vector<2x72x64xbf16>
    "tpu.trace_start"() <{level = 10 : i32, message = "bqd,bkd->bqk"}> : () -> ()
    %cst_40 = arith.constant dense<0.000000e+00> : vector<2x72x72xf32>
    %138 = tpu.matmul %136, %137, %cst_40 {dimension_numbers = #tpu.dot_dimension_numbers<[2], [2], [1], [1], [0, 0, 0, 1, 1, 1], [0], [0]>} : vector<2x72x64xbf16>, vector<2x72x64xbf16>, vector<2x72x72xf32> -> vector<2x72x72xf32>
    "tpu.trace_stop"() : () -> ()
    %cst_41 = arith.constant 1.250000e-01 : f32
    %139 = vector.broadcast %cst_41 : f32 to vector<2x72x72xf32>
    %140 = arith.mulf %138, %139 : vector<2x72x72xf32>
    %141 = vector.broadcast %35 : vector<1x1x72xf32> to vector<2x72x72xf32>
    %142 = arith.addf %140, %141 : vector<2x72x72xf32>
    %cst_42 = arith.constant dense<0xFF800000> : vector<2x72xf32>
    %143 = vector.multi_reduction <maximumf>, %142, %cst_42 [2] : vector<2x72x72xf32> to vector<2x72xf32>
    %144 = vector.shape_cast %143 : vector<2x72xf32> to vector<2x72x1xf32>
    %145 = vector.broadcast %144 : vector<2x72x1xf32> to vector<2x72x72xf32>
    %146 = arith.subf %142, %145 : vector<2x72x72xf32>
    %147 = math.exp %146 : vector<2x72x72xf32>
    %cst_43 = arith.constant dense<0.000000e+00> : vector<2x72xf32>
    %148 = vector.multi_reduction <add>, %147, %cst_43 [2] : vector<2x72x72xf32> to vector<2x72xf32>
    %149 = vector.shape_cast %148 : vector<2x72xf32> to vector<2x72x1xf32>
    %150 = arith.truncf %147 : vector<2x72x72xf32> to vector<2x72x72xbf16>
    %151 = arith.truncf %135 : vector<2x72x64xf32> to vector<2x72x64xbf16>
    "tpu.trace_start"() <{level = 10 : i32, message = "bqk,bkd->bqd"}> : () -> ()
    %cst_44 = arith.constant dense<0.000000e+00> : vector<2x72x64xf32>
    %152 = tpu.matmul %150, %151, %cst_44 {dimension_numbers = #tpu.dot_dimension_numbers<[2], [1], [1], [2], [0, 0, 0, 1, 1, 2], [0], [0]>} : vector<2x72x72xbf16>, vector<2x72x64xbf16>, vector<2x72x64xf32> -> vector<2x72x64xf32>
    "tpu.trace_stop"() : () -> ()
    %153 = tpu.reciprocal %149 {approx = true} : vector<2x72x1xf32> -> vector<2x72x1xf32>
    %154 = vector.broadcast %153 : vector<2x72x1xf32> to vector<2x72x64xf32>
    %155 = arith.mulf %152, %154 : vector<2x72x64xf32>
    %156 = vector.shape_cast %155 : vector<2x72x64xf32> to vector<144x64xf32>
    %157 = arith.truncf %156 : vector<144x64xf32> to vector<144x64xbf16>
    %c192 = arith.constant 192 : index
    %c0_45 = arith.constant 0 : index
    %158 = vector.load %arg6[%c192, %c0_45] : memref<256x256xbf16, #tpu.memory_space<vmem>>, vector<64x256xbf16>
    %cst_46 = arith.constant dense<0.000000e+00> : vector<144x256xf32>
    %159 = tpu.matmul %157, %158, %cst_46 {dimension_numbers = #tpu.dot_dimension_numbers<[1], [0], [0], [1], [0, 0, 1, 1], [], []>} : vector<144x64xbf16>, vector<64x256xbf16>, vector<144x256xf32> -> vector<144x256xf32>
    %160 = arith.addf %129, %159 : vector<144x256xf32>
    %161 = arith.addf %1, %160 : vector<144x256xf32>
    %c0_47 = arith.constant 0 : index
    %c0_48 = arith.constant 0 : index
    %162 = vector.load %arg7[%c0_47, %c0_48] : memref<1x256xf32, #tpu.memory_space<vmem>>, vector<1x256xf32>
    %163 = vector.broadcast %162 : vector<1x256xf32> to vector<144x256xf32>
    %164 = arith.addf %161, %163 : vector<144x256xf32>
    %cst_49 = arith.constant dense<0.000000e+00> : vector<144xf32>
    %165 = vector.multi_reduction <add>, %164, %cst_49 [1] : vector<144x256xf32> to vector<144xf32>
    %166 = vector.shape_cast %165 : vector<144xf32> to vector<144x1xf32>
    %cst_50 = arith.constant 2.560000e+02 : f32
    %167 = vector.broadcast %cst_50 : f32 to vector<144x1xf32>
    %168 = arith.divf %166, %167 : vector<144x1xf32>
    %169 = vector.broadcast %168 : vector<144x1xf32> to vector<144x256xf32>
    %170 = arith.subf %164, %169 : vector<144x256xf32>
    %171 = arith.mulf %170, %170 : vector<144x256xf32>
    %cst_51 = arith.constant dense<0.000000e+00> : vector<144xf32>
    %172 = vector.multi_reduction <add>, %171, %cst_51 [1] : vector<144x256xf32> to vector<144xf32>
    %173 = vector.shape_cast %172 : vector<144xf32> to vector<144x1xf32>
    %cst_52 = arith.constant 2.560000e+02 : f32
    %174 = vector.broadcast %cst_52 : f32 to vector<144x1xf32>
    %175 = arith.divf %173, %174 : vector<144x1xf32>
    %cst_53 = arith.constant 9.99999974E-6 : f32
    %176 = vector.broadcast %cst_53 : f32 to vector<144x1xf32>
    %177 = arith.addf %175, %176 : vector<144x1xf32>
    %178 = math.rsqrt %177 : vector<144x1xf32>
    %179 = vector.broadcast %178 : vector<144x1xf32> to vector<144x256xf32>
    %180 = arith.mulf %170, %179 : vector<144x256xf32>
    %c0_54 = arith.constant 0 : index
    %c0_55 = arith.constant 0 : index
    %181 = vector.load %arg8[%c0_54, %c0_55] : memref<1x256xf32, #tpu.memory_space<vmem>>, vector<1x256xf32>
    %182 = vector.broadcast %181 : vector<1x256xf32> to vector<144x256xf32>
    %183 = arith.mulf %180, %182 : vector<144x256xf32>
    %c0_56 = arith.constant 0 : index
    %c0_57 = arith.constant 0 : index
    %184 = vector.load %arg9[%c0_56, %c0_57] : memref<1x256xf32, #tpu.memory_space<vmem>>, vector<1x256xf32>
    %185 = vector.broadcast %184 : vector<1x256xf32> to vector<144x256xf32>
    %186 = arith.addf %183, %185 : vector<144x256xf32>
    %187 = arith.truncf %186 : vector<144x256xf32> to vector<144x256xbf16>
    %c0_58 = arith.constant 0 : index
    %c0_59 = arith.constant 0 : index
    %188 = vector.load %arg10[%c0_58, %c0_59] : memref<256x1024xbf16, #tpu.memory_space<vmem>>, vector<256x1024xbf16>
    %cst_60 = arith.constant dense<0.000000e+00> : vector<144x1024xf32>
    %189 = tpu.matmul %187, %188, %cst_60 {dimension_numbers = #tpu.dot_dimension_numbers<[1], [0], [0], [1], [0, 0, 1, 1], [], []>} : vector<144x256xbf16>, vector<256x1024xbf16>, vector<144x1024xf32> -> vector<144x1024xf32>
    %c0_61 = arith.constant 0 : index
    %c0_62 = arith.constant 0 : index
    %190 = vector.load %arg11[%c0_61, %c0_62] : memref<1x1024xf32, #tpu.memory_space<vmem>>, vector<1x1024xf32>
    %191 = vector.broadcast %190 : vector<1x1024xf32> to vector<144x1024xf32>
    %192 = arith.addf %189, %191 : vector<144x1024xf32>
    %cst_63 = arith.constant 1.702000e+00 : f32
    %193 = vector.broadcast %cst_63 : f32 to vector<144x1024xf32>
    %194 = arith.mulf %193, %192 : vector<144x1024xf32>
    %195 = arith.negf %194 : vector<144x1024xf32>
    %196 = math.exp %195 : vector<144x1024xf32>
    %cst_64 = arith.constant 1.000000e+00 : f32
    %197 = vector.broadcast %cst_64 : f32 to vector<144x1024xf32>
    %198 = arith.addf %197, %196 : vector<144x1024xf32>
    %199 = arith.divf %197, %198 : vector<144x1024xf32>
    %200 = arith.mulf %192, %199 : vector<144x1024xf32>
    %201 = arith.truncf %200 : vector<144x1024xf32> to vector<144x1024xbf16>
    %c0_65 = arith.constant 0 : index
    %c0_66 = arith.constant 0 : index
    %202 = vector.load %arg12[%c0_65, %c0_66] : memref<1024x256xbf16, #tpu.memory_space<vmem>>, vector<1024x256xbf16>
    %cst_67 = arith.constant dense<0.000000e+00> : vector<144x256xf32>
    %203 = tpu.matmul %201, %202, %cst_67 {dimension_numbers = #tpu.dot_dimension_numbers<[1], [0], [0], [1], [0, 0, 1, 1], [], []>} : vector<144x1024xbf16>, vector<1024x256xbf16>, vector<144x256xf32> -> vector<144x256xf32>
    %c0_68 = arith.constant 0 : index
    %c0_69 = arith.constant 0 : index
    %204 = vector.load %arg13[%c0_68, %c0_69] : memref<1x256xf32, #tpu.memory_space<vmem>>, vector<1x256xf32>
    %205 = vector.broadcast %204 : vector<1x256xf32> to vector<144x256xf32>
    %206 = arith.addf %203, %205 : vector<144x256xf32>
    %207 = arith.addf %164, %206 : vector<144x256xf32>
    %208 = vector.shape_cast %207 : vector<144x256xf32> to vector<2x72x256xf32>
    %c0_70 = arith.constant 0 : index
    %c0_71 = arith.constant 0 : index
    %c0_72 = arith.constant 0 : index
    %209 = vector.load %arg14[%c0_70, %c0_71, %c0_72] : memref<2x72x256xf32, #tpu.memory_space<vmem>>, vector<2x72x256xf32>
    tpu.vector_store %arg14[%c0_70, %c0_71, %c0_72], %208 {strides = array<i32>} : memref<2x72x256xf32, #tpu.memory_space<vmem>>, vector<2x72x256xf32>,
    return
  }
  func.func @transform_0(%arg0: i32) -> (i32, i32, i32) {
    %c0_i32 = arith.constant 0 : i32
    %c0_i32_0 = arith.constant 0 : i32
    %c0_i32_1 = arith.constant 0 : i32
    return %arg0, %c0_i32, %c0_i32_0 : i32, i32, i32
  }
  func.func @transform_1(%arg0: i32) -> (i32, i32) {
    %c0_i32 = arith.constant 0 : i32
    %c0_i32_0 = arith.constant 0 : i32
    %c0_i32_1 = arith.constant 0 : i32
    return %c0_i32, %c0_i32_0 : i32, i32
  }
  func.func @transform_2(%arg0: i32) -> (i32, i32) {
    %c0_i32 = arith.constant 0 : i32
    %c0_i32_0 = arith.constant 0 : i32
    %c0_i32_1 = arith.constant 0 : i32
    return %c0_i32, %c0_i32_0 : i32, i32
  }
  func.func @transform_3(%arg0: i32) -> (i32, i32) {
    %c0_i32 = arith.constant 0 : i32
    %c0_i32_0 = arith.constant 0 : i32
    %c0_i32_1 = arith.constant 0 : i32
    return %c0_i32, %c0_i32_0 : i32, i32
  }
  func.func @transform_4(%arg0: i32) -> (i32, i32) {
    %c0_i32 = arith.constant 0 : i32
    %c0_i32_0 = arith.constant 0 : i32
    %c0_i32_1 = arith.constant 0 : i32
    return %c0_i32, %c0_i32_0 : i32, i32
  }
  func.func @transform_5(%arg0: i32) -> (i32, i32) {
    %c0_i32 = arith.constant 0 : i32
    %c0_i32_0 = arith.constant 0 : i32
    %c0_i32_1 = arith.constant 0 : i32
    return %c0_i32, %c0_i32_0 : i32, i32
  }
  func.func @transform_6(%arg0: i32) -> (i32, i32) {
    %c0_i32 = arith.constant 0 : i32
    %c0_i32_0 = arith.constant 0 : i32
    %c0_i32_1 = arith.constant 0 : i32
    return %c0_i32, %c0_i32_0 : i32, i32
  }
  func.func @transform_7(%arg0: i32) -> (i32, i32) {
    %c0_i32 = arith.constant 0 : i32
    %c0_i32_0 = arith.constant 0 : i32
    %c0_i32_1 = arith.constant 0 : i32
    return %c0_i32, %c0_i32_0 : i32, i32
  }
  func.func @transform_8(%arg0: i32) -> (i32, i32) {
    %c0_i32 = arith.constant 0 : i32
    %c0_i32_0 = arith.constant 0 : i32
    %c0_i32_1 = arith.constant 0 : i32
    return %c0_i32, %c0_i32_0 : i32, i32
  }
  func.func @transform_9(%arg0: i32) -> (i32, i32) {
    %c0_i32 = arith.constant 0 : i32
    %c0_i32_0 = arith.constant 0 : i32
    %c0_i32_1 = arith.constant 0 : i32
    return %c0_i32, %c0_i32_0 : i32, i32
  }
  func.func @transform_10(%arg0: i32) -> (i32, i32) {
    %c0_i32 = arith.constant 0 : i32
    %c0_i32_0 = arith.constant 0 : i32
    %c0_i32_1 = arith.constant 0 : i32
    return %c0_i32, %c0_i32_0 : i32, i32
  }
  func.func @transform_11(%arg0: i32) -> (i32, i32) {
    %c0_i32 = arith.constant 0 : i32
    %c0_i32_0 = arith.constant 0 : i32
    %c0_i32_1 = arith.constant 0 : i32
    return %c0_i32, %c0_i32_0 : i32, i32
  }
  func.func @transform_12(%arg0: i32) -> (i32, i32) {
    %c0_i32 = arith.constant 0 : i32
    %c0_i32_0 = arith.constant 0 : i32
    %c0_i32_1 = arith.constant 0 : i32
    return %c0_i32, %c0_i32_0 : i32, i32
  }
  func.func @transform_13(%arg0: i32) -> (i32, i32, i32) {
    %c0_i32 = arith.constant 0 : i32
    %c0_i32_0 = arith.constant 0 : i32
    %c0_i32_1 = arith.constant 0 : i32
    return %arg0, %c0_i32, %c0_i32_0 : i32, i32, i32
  }
}

module attributes {stable_mosaic.version = 11 : i64} {
  func.func @_classifier_kernel(%arg0: i32, %arg1: memref<8x256xbf16, #tpu.memory_space<vmem>>, %arg2: memref<256x128xbf16, #tpu.memory_space<vmem>>, %arg3: memref<1x128xf32, #tpu.memory_space<vmem>>, %arg4: memref<8x128xf32, #tpu.memory_space<vmem>>) attributes {dimension_semantics = [#tpu.dimension_semantics<arbitrary>], iteration_bounds = array<i64: 1>, scalar_prefetch = 0 : i64, scratch_operands = 0 : i64, tpu.core_type = #tpu.core_type<tc>, window_params = [{pipeline_mode = #tpu.pipeline_mode<synchronous>, transform_indices = @transform_0, window_bounds = array<i64: 8, 256>}, {pipeline_mode = #tpu.pipeline_mode<synchronous>, transform_indices = @transform_1, window_bounds = array<i64: 256, 128>}, {pipeline_mode = #tpu.pipeline_mode<synchronous>, transform_indices = @transform_2, window_bounds = array<i64: 1, 128>}, {pipeline_mode = #tpu.pipeline_mode<synchronous>, transform_indices = @transform_3, window_bounds = array<i64: 8, 128>}]} {
    %c0 = arith.constant 0 : index
    %c0_0 = arith.constant 0 : index
    %0 = vector.load %arg1[%c0, %c0_0] : memref<8x256xbf16, #tpu.memory_space<vmem>>, vector<8x256xbf16>
    %c0_1 = arith.constant 0 : index
    %c0_2 = arith.constant 0 : index
    %1 = vector.load %arg2[%c0_1, %c0_2] : memref<256x128xbf16, #tpu.memory_space<vmem>>, vector<256x128xbf16>
    %cst = arith.constant dense<0.000000e+00> : vector<8x128xf32>
    %2 = tpu.matmul %0, %1, %cst {dimension_numbers = #tpu.dot_dimension_numbers<[1], [0], [0], [1], [0, 0, 1, 1], [], []>} : vector<8x256xbf16>, vector<256x128xbf16>, vector<8x128xf32> -> vector<8x128xf32>
    %c0_3 = arith.constant 0 : index
    %c0_4 = arith.constant 0 : index
    %3 = vector.load %arg3[%c0_3, %c0_4] : memref<1x128xf32, #tpu.memory_space<vmem>>, vector<1x128xf32>
    %4 = vector.broadcast %3 : vector<1x128xf32> to vector<8x128xf32>
    %5 = arith.addf %2, %4 : vector<8x128xf32>
    %c0_5 = arith.constant 0 : index
    %c0_6 = arith.constant 0 : index
    %6 = vector.load %arg4[%c0_5, %c0_6] : memref<8x128xf32, #tpu.memory_space<vmem>>, vector<8x128xf32>
    tpu.vector_store %arg4[%c0_5, %c0_6], %5 {strides = array<i32>} : memref<8x128xf32, #tpu.memory_space<vmem>>, vector<8x128xf32>,
    return
  }
  func.func @transform_0(%arg0: i32) -> (i32, i32) {
    %c0_i32 = arith.constant 0 : i32
    %c0_i32_0 = arith.constant 0 : i32
    %c0_i32_1 = arith.constant 0 : i32
    return %c0_i32, %c0_i32_0 : i32, i32
  }
  func.func @transform_1(%arg0: i32) -> (i32, i32) {
    %c0_i32 = arith.constant 0 : i32
    %c0_i32_0 = arith.constant 0 : i32
    %c0_i32_1 = arith.constant 0 : i32
    return %c0_i32, %c0_i32_0 : i32, i32
  }
  func.func @transform_2(%arg0: i32) -> (i32, i32) {
    %c0_i32 = arith.constant 0 : i32
    %c0_i32_0 = arith.constant 0 : i32
    %c0_i32_1 = arith.constant 0 : i32
    return %c0_i32, %c0_i32_0 : i32, i32
  }
  func.func @transform_3(%arg0: i32) -> (i32, i32) {
    %c0_i32 = arith.constant 0 : i32
    %c0_i32_0 = arith.constant 0 : i32
    %c0_i32_1 = arith.constant 0 : i32
    return %c0_i32, %c0_i32_0 : i32, i32
  }
}

</mosaic_0001>

<llo_original>
// kernel: vit_forward.4
$region0: #{vit_forward.4}
  #allocation0 [shape = 'u32[]', space=smem, size = 0x4, offset = 0x4, fixed_abs, tag = 'smem constant byte address 0x4 - core index']
  #allocation1 [shape = 'u32[144,128]{1,0:T(1,128)}', space=vmem, size = 0x12000, scoped, tag = 'internal scratch']
  %s0 = inlined_call_operand.vmem [shape: bf16[2,72,128], index: 0, kind: input, shape index: {}]
  %s1 = inlined_call_operand.vmem [shape: bf16[128,256], index: 1, kind: input, shape index: {}]
  %s2 = inlined_call_operand.vmem [shape: f32[72,256], index: 2, kind: input, shape index: {}]
  %s3 = inlined_call_operand.vmem [shape: f32[2,72,256], index: 3, kind: output, shape index: {}]
  %s4 = sld [smem:[#allocation0]]
  $region22: #{vit_forward.4} parent=0
    _
  %s6 = ssub.s32 1, %s4
  %s7 = scalar_select 0, %s6, %s4
  // Predicated region
  $region2: #{vit_forward.4} parent=0 // pred_check
    _
  $region3: #{vit_forward.4} parent=0 // pred_check_branch
    %9 = sbr.rel (0) target = $region5
  $region4: #{vit_forward.4} parent=0 // pred_region
    _
  $region5: #{vit_forward.4} parent=0 // pred_fallthru
    _
  // Predicated region
  $region6: #{vit_forward.4} parent=0 // pred_check
    _
  $region7: #{vit_forward.4} parent=0 // pred_check_branch
    %11 = sbr.rel (0) target = $region9
  $region8: #{vit_forward.4} parent=0 // pred_region
    _
  $region9: #{vit_forward.4} parent=0 // pred_fallthru
    _
  // Predicated region
  $region10: #{vit_forward.4} parent=0 // pred_check
    _
  $region11: #{vit_forward.4} parent=0 // pred_check_branch
    %13 = sbr.rel (0) target = $region13
  $region12: #{vit_forward.4} parent=0 // pred_region
    _
  $region13: #{vit_forward.4} parent=0 // pred_fallthru
    _
  %v15 = vld [vmem:[%s0] sm:$0xf]
  %v16 = vld [vmem:[%s0 + $0x4] sm:$0xf]
  %v17 = vld [vmem:[%s0 + $0x8] sm:$0xf]
  %v18 = vld [vmem:[%s0 + $0xc] sm:$0xf]
  %v19 = vld [vmem:[%s0 + $0x10] sm:$0xf]
  %v20 = vld [vmem:[%s0 + $0x14] sm:$0xf]
  %v21 = vld [vmem:[%s0 + $0x18] sm:$0xf]
  %v22 = vld [vmem:[%s0 + $0x1c] sm:$0xf]
  %v23 = vld [vmem:[%s0 + $0x20] sm:$0xf]
  %v24 = vld [vmem:[%s0 + $0x24] sm:$0xf]
  %v25 = vld [vmem:[%s0 + $0x28] sm:$0xf]
  %v26 = vld [vmem:[%s0 + $0x2c] sm:$0xf]
  %v27 = vld [vmem:[%s0 + $0x30] sm:$0xf]
  %v28 = vld [vmem:[%s0 + $0x34] sm:$0xf]
  %v29 = vld [vmem:[%s0 + $0x38] sm:$0xf]
  %v30 = vld [vmem:[%s0 + $0x3c] sm:$0xf]
  %v31 = vld [vmem:[%s0 + $0x40] sm:$0xf]
  %v32 = vld [vmem:[%s0 + $0x44] sm:$0xf]
  %v33 = vld [vmem:[%s1] sm:$0xff]
  %v34 = vld [vmem:[%s1 + $0x8] sm:$0xff]
  %v35 = vld [vmem:[%s1 + $0x10] sm:$0xff]
  %v36 = vld [vmem:[%s1 + $0x18] sm:$0xff]
  %v37 = vld [vmem:[%s1 + $0x20] sm:$0xff]
  %v38 = vld [vmem:[%s1 + $0x28] sm:$0xff]
  %v39 = vld [vmem:[%s1 + $0x30] sm:$0xff]
  %v40 = vld [vmem:[%s1 + $0x38] sm:$0xff]
  %v41 = vld [vmem:[%s1 + $0x40] sm:$0xff]
  %v42 = vld [vmem:[%s1 + $0x48] sm:$0xff]
  %v43 = vld [vmem:[%s1 + $0x50] sm:$0xff]
  %v44 = vld [vmem:[%s1 + $0x58] sm:$0xff]
  %v45 = vld [vmem:[%s1 + $0x60] sm:$0xff]
  %v46 = vld [vmem:[%s1 + $0x68] sm:$0xff]
  %v47 = vld [vmem:[%s1 + $0x70] sm:$0xff]
  %v48 = vld [vmem:[%s1 + $0x78] sm:$0xff]
  %v67 = vunpack.c.l.b16 %v15
  %v68 = vunpack.c.l.b16 %v16
  %v69 = vunpack.c.l.b16 %v17
  %v70 = vunpack.c.l.b16 %v18
  %v71 = vunpack.c.l.b16 %v19
  %v72 = vunpack.c.l.b16 %v20
  %v73 = vunpack.c.l.b16 %v21
  %v74 = vunpack.c.l.b16 %v22
  %v75 = vunpack.c.l.b16 %v23
  %v76 = vunpack.c.l.b16 %v24
  %v77 = vunpack.c.l.b16 %v25
  %v78 = vunpack.c.l.b16 %v26
  %v79 = vunpack.c.l.b16 %v27
  %v80 = vunpack.c.l.b16 %v28
  %v81 = vunpack.c.l.b16 %v29
  %v82 = vunpack.c.l.b16 %v30
  %v83 = vunpack.c.l.b16 %v31
  %v84 = vunpack.c.l.b16 %v32
  %v85 = vpack.c.b16 %v68, %v67
  %v86 = vpack.c.b16 %v70, %v69
  %v87 = vpack.c.b16 %v72, %v71
  %v88 = vpack.c.b16 %v74, %v73
  %v89 = vpack.c.b16 %v76, %v75
  %v90 = vpack.c.b16 %v78, %v77
  %v91 = vpack.c.b16 %v80, %v79
  %v92 = vpack.c.b16 %v82, %v81
  %v93 = vpack.c.b16 %v84, %v83
  %v119 = vunpack.c.l.b16 %v33
  %v120 = vunpack.c.h.b16 %v33
  %v121 = vunpack.c.l.b16 %v34
  %v122 = vunpack.c.h.b16 %v34
  %v123 = vunpack.c.l.b16 %v35
  %v124 = vunpack.c.h.b16 %v35
  %v125 = vunpack.c.l.b16 %v36
  %v126 = vunpack.c.h.b16 %v36
  %v127 = vunpack.c.l.b16 %v37
  %v128 = vunpack.c.h.b16 %v37
  %v129 = vunpack.c.l.b16 %v38
  %v130 = vunpack.c.h.b16 %v38
  %v131 = vunpack.c.l.b16 %v39
  %v132 = vunpack.c.h.b16 %v39
  %v133 = vunpack.c.l.b16 %v40
  %v134 = vunpack.c.h.b16 %v40
  %v135 = vunpack.c.l.b16 %v41
  %v136 = vunpack.c.h.b16 %v41
  %v137 = vunpack.c.l.b16 %v42
  %v138 = vunpack.c.h.b16 %v42
  %v139 = vunpack.c.l.b16 %v43
  %v140 = vunpack.c.h.b16 %v43
  %v141 = vunpack.c.l.b16 %v44
  %v142 = vunpack.c.h.b16 %v44
  %v143 = vunpack.c.l.b16 %v45
  %v144 = vunpack.c.h.b16 %v45
  %v145 = vunpack.c.l.b16 %v46
  %v146 = vunpack.c.h.b16 %v46
  %v147 = vunpack.c.l.b16 %v47
  %v148 = vunpack.c.h.b16 %v47
  %v149 = vunpack.c.l.b16 %v48
  %v150 = vunpack.c.h.b16 %v48
  %v151 = vpack.c.b16 %v121, %v119
  %v152 = vpack.c.b16 %v122, %v120
  %v153 = vpack.c.b16 %v125, %v123
  %v154 = vpack.c.b16 %v126, %v124
  %v155 = vpack.c.b16 %v129, %v127
  %v156 = vpack.c.b16 %v130, %v128
  %v157 = vpack.c.b16 %v133, %v131
  %v158 = vpack.c.b16 %v134, %v132
  %v159 = vpack.c.b16 %v137, %v135
  %v160 = vpack.c.b16 %v138, %v136
  %v161 = vpack.c.b16 %v141, %v139
  %v162 = vpack.c.b16 %v142, %v140
  %v163 = vpack.c.b16 %v145, %v143
  %v164 = vpack.c.b16 %v146, %v144
  %v165 = vpack.c.b16 %v149, %v147
  %v166 = vpack.c.b16 %v150, %v148
  %183 = vmatprep.subr.bf16.mxu0 %v152
  %184 = vmatpush1.bf16.msra.mxu0 %v151
  %185 = vmatprep.subr.bf16.mxu0 %v154
  %186 = vmatpush1.bf16.msra.mxu0 %v153
  %187 = vmatprep.subr.bf16.mxu0 %v156
  %188 = vmatpush1.bf16.msra.mxu0 %v155
  %189 = vmatprep.subr.bf16.mxu0 %v158
  %190 = vmatpush1.bf16.msra.mxu0 %v157
  %191 = vmatprep.subr.bf16.mxu0 %v160
  %192 = vmatpush1.bf16.msra.mxu0 %v159
  %193 = vmatprep.subr.bf16.mxu0 %v162
  %194 = vmatpush1.bf16.msra.mxu0 %v161
  %195 = vmatprep.subr.bf16.mxu0 %v164
  %196 = vmatpush1.bf16.msra.mxu0 %v163
  %197 = vmatprep.subr.bf16.mxu0 %v166
  %198 = vmatpush1.bf16.msra.mxu0 %v165
  %199 = vmatprep.subr.bf16.mxu0 0
  %200 = vmatpush1.bf16.msra.mxu0 0
  %201 = vmatprep.subr.bf16.mxu0 0
  %202 = vmatpush1.bf16.msra.mxu0 0
  %203 = vmatprep.subr.bf16.mxu0 0
  %204 = vmatpush1.bf16.msra.mxu0 0
  %205 = vmatprep.subr.bf16.mxu0 0
  %206 = vmatpush1.bf16.msra.mxu0 0
  %207 = vmatprep.subr.bf16.mxu0 0
  %208 = vmatpush1.bf16.msra.mxu0 0
  %209 = vmatprep.subr.bf16.mxu0 0
  %210 = vmatpush1.bf16.msra.mxu0 0
  %211 = vmatprep.subr.bf16.mxu0 0
  %212 = vmatpush1.bf16.msra.mxu0 0
  %213 = vmatprep.subr.bf16.mxu0 0
  %214 = vmatpush1.bf16.msra.mxu0 0
  %215 = vmatprep.mubr.bf16.mxu0 0
  %216 = vmatmul.mubr.bf16.gmra.mrb[0].mxu0 %v85
  %v217 = vpop.f32.mrb[0].mxu0
  %v218 = vadd.f32 0.0, %v217
  %v219 = vpop.f32.mrb[0].mxu0
  %v220 = vadd.f32 0.0, %v219
  %v221 = vpop.f32.mrb[0].mxu0
  %v222 = vadd.f32 0.0, %v221
  %v223 = vpop.f32.mrb[0].mxu0
  %v224 = vadd.f32 0.0, %v223
  %225 = vmatprep.mubr.bf16.mxu0 0
  %226 = vmatmul.mubr.bf16.gmra.mrb[0].mxu0 %v86
  %v227 = vpop.f32.mrb[0].mxu0
  %v228 = vadd.f32 0.0, %v227
  %v229 = vpop.f32.mrb[0].mxu0
  %v230 = vadd.f32 0.0, %v229
  %v231 = vpop.f32.mrb[0].mxu0
  %v232 = vadd.f32 0.0, %v231
  %v233 = vpop.f32.mrb[0].mxu0
  %v234 = vadd.f32 0.0, %v233
  %235 = vmatprep.mubr.bf16.mxu0 0
  %236 = vmatmul.mubr.bf16.gmra.mrb[0].mxu0 %v87
  %v237 = vpop.f32.mrb[0].mxu0
  %v238 = vadd.f32 0.0, %v237
  %v239 = vpop.f32.mrb[0].mxu0
  %v240 = vadd.f32 0.0, %v239
  %v241 = vpop.f32.mrb[0].mxu0
  %v242 = vadd.f32 0.0, %v241
  %v243 = vpop.f32.mrb[0].mxu0
  %v244 = vadd.f32 0.0, %v243
  %245 = vmatprep.mubr.bf16.mxu0 0
  %246 = vmatmul.mubr.bf16.gmra.mrb[0].mxu0 %v88
  %v247 = vpop.f32.mrb[0].mxu0
  %v248 = vadd.f32 0.0, %v247
  %v249 = vpop.f32.mrb[0].mxu0
  %v250 = vadd.f32 0.0, %v249
  %v251 = vpop.f32.mrb[0].mxu0
  %v252 = vadd.f32 0.0, %v251
  %v253 = vpop.f32.mrb[0].mxu0
  %v254 = vadd.f32 0.0, %v253
  %255 = vmatprep.mubr.bf16.mxu0 0
  %256 = vmatmul.mubr.bf16.gmra.mrb[0].mxu0 %v89
  %v257 = vpop.f32.mrb[0].mxu0
  %v258 = vadd.f32 0.0, %v257
  %v259 = vpop.f32.mrb[0].mxu0
  %v260 = vadd.f32 0.0, %v259
  %v261 = vpop.f32.mrb[0].mxu0
  %v262 = vadd.f32 0.0, %v261
  %v263 = vpop.f32.mrb[0].mxu0
  %v264 = vadd.f32 0.0, %v263
  %265 = vmatprep.mubr.bf16.mxu0 0
  %266 = vmatmul.mubr.bf16.gmra.mrb[0].mxu0 %v90
  %v267 = vpop.f32.mrb[0].mxu0
  %v268 = vadd.f32 0.0, %v267
  %v269 = vpop.f32.mrb[0].mxu0
  %v270 = vadd.f32 0.0, %v269
  %v271 = vpop.f32.mrb[0].mxu0
  %v272 = vadd.f32 0.0, %v271
  %v273 = vpop.f32.mrb[0].mxu0
  %v274 = vadd.f32 0.0, %v273
  %275 = vmatprep.mubr.bf16.mxu0 0
  %276 = vmatmul.mubr.bf16.gmra.mrb[0].mxu0 %v91
  %v277 = vpop.f32.mrb[0].mxu0
  %v278 = vadd.f32 0.0, %v277
  %v279 = vpop.f32.mrb[0].mxu0
  %v280 = vadd.f32 0.0, %v279
  %v281 = vpop.f32.mrb[0].mxu0
  %v282 = vadd.f32 0.0, %v281
  %v283 = vpop.f32.mrb[0].mxu0
  %v284 = vadd.f32 0.0, %v283
  %285 = vmatprep.mubr.bf16.mxu0 0
  %286 = vmatmul.mubr.bf16.gmra.mrb[0].mxu0 %v92
  %v287 = vpop.f32.mrb[0].mxu0
  %v288 = vadd.f32 0.0, %v287
  %v289 = vpop.f32.mrb[0].mxu0
  %v290 = vadd.f32 0.0, %v289
  %v291 = vpop.f32.mrb[0].mxu0
  %v292 = vadd.f32 0.0, %v291
  %v293 = vpop.f32.mrb[0].mxu0
  %v294 = vadd.f32 0.0, %v293
  %295 = vmatprep.mubr.bf16.mxu0 0
  %296 = vmatmul.mubr.bf16.gmra.mrb[0].mxu0 %v93
  %v297 = vpop.f32.mrb[0].mxu0
  %v298 = vadd.f32 0.0, %v297
  %v299 = vpop.f32.mrb[0].mxu0
  %v300 = vadd.f32 0.0, %v299
  %v301 = vpop.f32.mrb[0].mxu0
  %v302 = vadd.f32 0.0, %v301
  %v303 = vpop.f32.mrb[0].mxu0
  %v304 = vadd.f32 0.0, %v303
  %305 = vdwg.mxu0
  %v306 = vld [vmem:[%s2] sm:$0xff]
  %v307 = vld [vmem:[%s2 + $0x8] sm:$0xff]
  %v308 = vld [vmem:[%s2 + $0x10] sm:$0xff]
  %v309 = vld [vmem:[%s2 + $0x18] sm:$0xff]
  %v310 = vld [vmem:[%s2 + $0x20] sm:$0xff]
  %v311 = vld [vmem:[%s2 + $0x28] sm:$0xff]
  %v312 = vld [vmem:[%s2 + $0x30] sm:$0xff]
  %v313 = vld [vmem:[%s2 + $0x38] sm:$0xff]
  %v314 = vld [vmem:[%s2 + $0x40] sm:$0xff]
  %v315 = vld [vmem:[%s2 + $0x48] sm:$0xff]
  %v316 = vld [vmem:[%s2 + $0x50] sm:$0xff]
  %v317 = vld [vmem:[%s2 + $0x58] sm:$0xff]
  %v318 = vld [vmem:[%s2 + $0x60] sm:$0xff]
  %v319 = vld [vmem:[%s2 + $0x68] sm:$0xff]
  %v320 = vld [vmem:[%s2 + $0x70] sm:$0xff]
  %v321 = vld [vmem:[%s2 + $0x78] sm:$0xff]
  %v322 = vld [vmem:[%s2 + $0x80] sm:$0xff]
  %v323 = vld [vmem:[%s2 + $0x88] sm:$0xff]
  %v324 = vadd.f32 %v218, %v306
  %v325 = vadd.f32 %v220, %v307
  %v326 = vadd.f32 %v222, %v308
  %v327 = vadd.f32 %v224, %v309
  %v328 = vadd.f32 %v228, %v310
  %v329 = vadd.f32 %v230, %v311
  %v330 = vadd.f32 %v232, %v312
  %v331 = vadd.f32 %v234, %v313
  %v332 = vadd.f32 %v238, %v314
  %v333 = vadd.f32 %v240, %v315
  %v334 = vadd.f32 %v242, %v316
  %v335 = vadd.f32 %v244, %v317
  %v336 = vadd.f32 %v248, %v318
  %v337 = vadd.f32 %v250, %v319
  %v338 = vadd.f32 %v252, %v320
  %v339 = vadd.f32 %v254, %v321
  %v340 = vadd.f32 %v258, %v322
  %v341 = vadd.f32 %v260, %v323
  %v342 = vadd.f32 %v262, %v306
  %v343 = vadd.f32 %v264, %v307
  %v344 = vadd.f32 %v268, %v308
  %v345 = vadd.f32 %v270, %v309
  %v346 = vadd.f32 %v272, %v310
  %v347 = vadd.f32 %v274, %v311
  %v348 = vadd.f32 %v278, %v312
  %v349 = vadd.f32 %v280, %v313
  %v350 = vadd.f32 %v282, %v314
  %v351 = vadd.f32 %v284, %v315
  %v352 = vadd.f32 %v288, %v316
  %v353 = vadd.f32 %v290, %v317
  %v354 = vadd.f32 %v292, %v318
  %v355 = vadd.f32 %v294, %v319
  %v356 = vadd.f32 %v298, %v320
  %v357 = vadd.f32 %v300, %v321
  %v358 = vadd.f32 %v302, %v322
  %v359 = vadd.f32 %v304, %v323
  %360 = vst [vmem:[%s3] sm:$0xff] %v324
  %361 = vst [vmem:[%s3 + $0x8] sm:$0xff] %v325
  %362 = vst [vmem:[%s3 + $0x10] sm:$0xff] %v326
  %363 = vst [vmem:[%s3 + $0x18] sm:$0xff] %v327
  %364 = vst [vmem:[%s3 + $0x20] sm:$0xff] %v328
  %365 = vst [vmem:[%s3 + $0x28] sm:$0xff] %v329
  %366 = vst [vmem:[%s3 + $0x30] sm:$0xff] %v330
  %367 = vst [vmem:[%s3 + $0x38] sm:$0xff] %v331
  %368 = vst [vmem:[%s3 + $0x40] sm:$0xff] %v332
  %369 = vst [vmem:[%s3 + $0x48] sm:$0xff] %v333
  %370 = vst [vmem:[%s3 + $0x50] sm:$0xff] %v334
  %371 = vst [vmem:[%s3 + $0x58] sm:$0xff] %v335
  %372 = vst [vmem:[%s3 + $0x60] sm:$0xff] %v336
  %373 = vst [vmem:[%s3 + $0x68] sm:$0xff] %v337
  %374 = vst [vmem:[%s3 + $0x70] sm:$0xff] %v338
  %375 = vst [vmem:[%s3 + $0x78] sm:$0xff] %v339
  %376 = vst [vmem:[%s3 + $0x80] sm:$0xff] %v340
  %377 = vst [vmem:[%s3 + $0x88] sm:$0xff] %v341
  %378 = vst [vmem:[%s3 + $0x90] sm:$0xff] %v342
  %379 = vst [vmem:[%s3 + $0x98] sm:$0xff] %v343
  %380 = vst [vmem:[%s3 + $0xa0] sm:$0xff] %v344
  %381 = vst [vmem:[%s3 + $0xa8] sm:$0xff] %v345
  %382 = vst [vmem:[%s3 + $0xb0] sm:$0xff] %v346
  %383 = vst [vmem:[%s3 + $0xb8] sm:$0xff] %v347
  %384 = vst [vmem:[%s3 + $0xc0] sm:$0xff] %v348
  %385 = vst [vmem:[%s3 + $0xc8] sm:$0xff] %v349
  %386 = vst [vmem:[%s3 + $0xd0] sm:$0xff] %v350
  %387 = vst [vmem:[%s3 + $0xd8] sm:$0xff] %v351
  %388 = vst [vmem:[%s3 + $0xe0] sm:$0xff] %v352
  %389 = vst [vmem:[%s3 + $0xe8] sm:$0xff] %v353
  %390 = vst [vmem:[%s3 + $0xf0] sm:$0xff] %v354
  %391 = vst [vmem:[%s3 + $0xf8] sm:$0xff] %v355
  %392 = vst [vmem:[%s3 + $0x100] sm:$0xff] %v356
  %393 = vst [vmem:[%s3 + $0x108] sm:$0xff] %v357
  %394 = vst [vmem:[%s3 + $0x110] sm:$0xff] %v358
  %395 = vst [vmem:[%s3 + $0x118] sm:$0xff] %v359
  // Predicated region
  $region14: #{vit_forward.4} parent=0 // pred_check
    _
  $region15: #{vit_forward.4} parent=0 // pred_check_branch
    %397 = sbr.rel (0) target = $region17
  $region16: #{vit_forward.4} parent=0 // pred_region
    _
  $region17: #{vit_forward.4} parent=0 // pred_fallthru
    _
  // Predicated region
  $region18: #{vit_forward.4} parent=0 // pred_check
    _
  $region19: #{vit_forward.4} parent=0 // pred_check_branch
    %399 = sbr.rel (0) target = $region21
  $region20: #{vit_forward.4} parent=0 // pred_region
    _
  $region21: #{vit_forward.4} parent=0 // pred_fallthru
    _

// kernel: vit_forward.7
$region0: #{vit_forward.7}
  #allocation0 [shape = 'u32[]', space=smem, size = 0x4, offset = 0x4, fixed_abs, tag = 'smem constant byte address 0x4 - core index']
  #allocation1 [shape = 'u32[144,128]{1,0:T(1,128)}', space=vmem, size = 0x12000, scoped, tag = 'internal scratch']
  %s0 = inlined_call_operand.vmem [shape: bf16[8,256], index: 0, kind: input, shape index: {}]
  %s1 = inlined_call_operand.vmem [shape: bf16[256,128], index: 1, kind: input, shape index: {}]
  %s2 = inlined_call_operand.vmem [shape: f32[1,128], index: 2, kind: input, shape index: {}]
  %s3 = inlined_call_operand.vmem [shape: f32[8,128], index: 3, kind: output, shape index: {}]
  %s4 = sld [smem:[#allocation0]]
  $region22: #{vit_forward.7} parent=0
    _
  %s6 = ssub.s32 1, %s4
  %s7 = scalar_select 0, %s6, %s4
  // Predicated region
  $region2: #{vit_forward.7} parent=0 // pred_check
    _
  $region3: #{vit_forward.7} parent=0 // pred_check_branch
    %9 = sbr.rel (0) target = $region5
  $region4: #{vit_forward.7} parent=0 // pred_region
    _
  $region5: #{vit_forward.7} parent=0 // pred_fallthru
    _
  // Predicated region
  $region6: #{vit_forward.7} parent=0 // pred_check
    _
  $region7: #{vit_forward.7} parent=0 // pred_check_branch
    %11 = sbr.rel (0) target = $region9
  $region8: #{vit_forward.7} parent=0 // pred_region
    _
  $region9: #{vit_forward.7} parent=0 // pred_fallthru
    _
  // Predicated region
  $region10: #{vit_forward.7} parent=0 // pred_check
    _
  $region11: #{vit_forward.7} parent=0 // pred_check_branch
    %13 = sbr.rel (0) target = $region13
  $region12: #{vit_forward.7} parent=0 // pred_region
    _
  $region13: #{vit_forward.7} parent=0 // pred_fallthru
    _
  %v15 = vld [vmem:[%s0] sm:$0xff]
  %v16 = vld [vmem:[%s1] sm:$0xf]
  %v17 = vld [vmem:[%s1 + $0x4] sm:$0xf]
  %v18 = vld [vmem:[%s1 + $0x8] sm:$0xf]
  %v19 = vld [vmem:[%s1 + $0xc] sm:$0xf]
  %v20 = vld [vmem:[%s1 + $0x10] sm:$0xf]
  %v21 = vld [vmem:[%s1 + $0x14] sm:$0xf]
  %v22 = vld [vmem:[%s1 + $0x18] sm:$0xf]
  %v23 = vld [vmem:[%s1 + $0x1c] sm:$0xf]
  %v24 = vld [vmem:[%s1 + $0x20] sm:$0xf]
  %v25 = vld [vmem:[%s1 + $0x24] sm:$0xf]
  %v26 = vld [vmem:[%s1 + $0x28] sm:$0xf]
  %v27 = vld [vmem:[%s1 + $0x2c] sm:$0xf]
  %v28 = vld [vmem:[%s1 + $0x30] sm:$0xf]
  %v29 = vld [vmem:[%s1 + $0x34] sm:$0xf]
  %v30 = vld [vmem:[%s1 + $0x38] sm:$0xf]
  %v31 = vld [vmem:[%s1 + $0x3c] sm:$0xf]
  %v32 = vld [vmem:[%s1 + $0x40] sm:$0xf]
  %v33 = vld [vmem:[%s1 + $0x44] sm:$0xf]
  %v34 = vld [vmem:[%s1 + $0x48] sm:$0xf]
  %v35 = vld [vmem:[%s1 + $0x4c] sm:$0xf]
  %v36 = vld [vmem:[%s1 + $0x50] sm:$0xf]
  %v37 = vld [vmem:[%s1 + $0x54] sm:$0xf]
  %v38 = vld [vmem:[%s1 + $0x58] sm:$0xf]
  %v39 = vld [vmem:[%s1 + $0x5c] sm:$0xf]
  %v40 = vld [vmem:[%s1 + $0x60] sm:$0xf]
  %v41 = vld [vmem:[%s1 + $0x64] sm:$0xf]
  %v42 = vld [vmem:[%s1 + $0x68] sm:$0xf]
  %v43 = vld [vmem:[%s1 + $0x6c] sm:$0xf]
  %v44 = vld [vmem:[%s1 + $0x70] sm:$0xf]
  %v45 = vld [vmem:[%s1 + $0x74] sm:$0xf]
  %v46 = vld [vmem:[%s1 + $0x78] sm:$0xf]
  %v47 = vld [vmem:[%s1 + $0x7c] sm:$0xf]
  %v48 = vld [vmem:[%s2] sm:$0x1]
  %v50 = vlaneseq
  %v51 = vshrl.u32 %v50, 7
  %v52 = vsub.s32 0, %v51
  %v53 = vrot.slane %v48, %v52
  %v56 = vunpack.c.l.b16 %v15
  %v57 = vunpack.c.h.b16 %v15
  %v58 = vpack.c.b16 %v56, %v56
  %v59 = vpack.c.b16 %v57, %v57
  %v94 = vunpack.c.l.b16 %v16
  %v95 = vunpack.c.l.b16 %v17
  %v96 = vunpack.c.l.b16 %v18
  %v97 = vunpack.c.l.b16 %v19
  %v98 = vunpack.c.l.b16 %v20
  %v99 = vunpack.c.l.b16 %v21
  %v100 = vunpack.c.l.b16 %v22
  %v101 = vunpack.c.l.b16 %v23
  %v102 = vunpack.c.l.b16 %v24
  %v103 = vunpack.c.l.b16 %v25
  %v104 = vunpack.c.l.b16 %v26
  %v105 = vunpack.c.l.b16 %v27
  %v106 = vunpack.c.l.b16 %v28
  %v107 = vunpack.c.l.b16 %v29
  %v108 = vunpack.c.l.b16 %v30
  %v109 = vunpack.c.l.b16 %v31
  %v110 = vunpack.c.l.b16 %v32
  %v111 = vunpack.c.l.b16 %v33
  %v112 = vunpack.c.l.b16 %v34
  %v113 = vunpack.c.l.b16 %v35
  %v114 = vunpack.c.l.b16 %v36
  %v115 = vunpack.c.l.b16 %v37
  %v116 = vunpack.c.l.b16 %v38
  %v117 = vunpack.c.l.b16 %v39
  %v118 = vunpack.c.l.b16 %v40
  %v119 = vunpack.c.l.b16 %v41
  %v120 = vunpack.c.l.b16 %v42
  %v121 = vunpack.c.l.b16 %v43
  %v122 = vunpack.c.l.b16 %v44
  %v123 = vunpack.c.l.b16 %v45
  %v124 = vunpack.c.l.b16 %v46
  %v125 = vunpack.c.l.b16 %v47
  %v126 = vpack.c.b16 %v95, %v94
  %v127 = vpack.c.b16 %v97, %v96
  %v128 = vpack.c.b16 %v99, %v98
  %v129 = vpack.c.b16 %v101, %v100
  %v130 = vpack.c.b16 %v103, %v102
  %v131 = vpack.c.b16 %v105, %v104
  %v132 = vpack.c.b16 %v107, %v106
  %v133 = vpack.c.b16 %v109, %v108
  %v134 = vpack.c.b16 %v111, %v110
  %v135 = vpack.c.b16 %v113, %v112
  %v136 = vpack.c.b16 %v115, %v114
  %v137 = vpack.c.b16 %v117, %v116
  %v138 = vpack.c.b16 %v119, %v118
  %v139 = vpack.c.b16 %v121, %v120
  %v140 = vpack.c.b16 %v123, %v122
  %v141 = vpack.c.b16 %v125, %v124
  %158 = vmatprep.subr.bf16.mxu0 0
  %159 = vmatpush1.bf16.msra.mxu0 %v126
  %160 = vmatprep.subr.bf16.mxu0 0
  %161 = vmatpush1.bf16.msra.mxu0 %v127
  %162 = vmatprep.subr.bf16.mxu0 0
  %163 = vmatpush1.bf16.msra.mxu0 %v128
  %164 = vmatprep.subr.bf16.mxu0 0
  %165 = vmatpush1.bf16.msra.mxu0 %v129
  %166 = vmatprep.subr.bf16.mxu0 0
  %167 = vmatpush1.bf16.msra.mxu0 %v130
  %168 = vmatprep.subr.bf16.mxu0 0
  %169 = vmatpush1.bf16.msra.mxu0 %v131
  %170 = vmatprep.subr.bf16.mxu0 0
  %171 = vmatpush1.bf16.msra.mxu0 %v132
  %172 = vmatprep.subr.bf16.mxu0 0
  %173 = vmatpush1.bf16.msra.mxu0 %v133
  %174 = vmatprep.subr.bf16.mxu0 0
  %175 = vmatpush1.bf16.msra.mxu0 %v134
  %176 = vmatprep.subr.bf16.mxu0 0
  %177 = vmatpush1.bf16.msra.mxu0 %v135
  %178 = vmatprep.subr.bf16.mxu0 0
  %179 = vmatpush1.bf16.msra.mxu0 %v136
  %180 = vmatprep.subr.bf16.mxu0 0
  %181 = vmatpush1.bf16.msra.mxu0 %v137
  %182 = vmatprep.subr.bf16.mxu0 0
  %183 = vmatpush1.bf16.msra.mxu0 %v138
  %184 = vmatprep.subr.bf16.mxu0 0
  %185 = vmatpush1.bf16.msra.mxu0 %v139
  %186 = vmatprep.subr.bf16.mxu0 0
  %187 = vmatpush1.bf16.msra.mxu0 %v140
  %188 = vmatprep.subr.bf16.mxu0 0
  %189 = vmatpush1.bf16.msra.mxu0 %v141
  %190 = vmatprep.mubr.bf16.mxu0 %v59
  %191 = vmatmul.mubr.bf16.gmra.mrb[0].mxu0 %v58
  %v192 = vpop.f32.mrb[0].mxu0
  %v193 = vadd.f32 %v53, %v192
  %v194 = vpop.f32.mrb[0].mxu0
  %v195 = vpop.f32.mrb[0].mxu0
  %v196 = vpop.f32.mrb[0].mxu0
  %197 = vdwg.mxu0
  %198 = vst [vmem:[%s3] sm:$0xff] %v193
  // Predicated region
  $region14: #{vit_forward.7} parent=0 // pred_check
    _
  $region15: #{vit_forward.7} parent=0 // pred_check_branch
    %200 = sbr.rel (0) target = $region17
  $region16: #{vit_forward.7} parent=0 // pred_region
    _
  $region17: #{vit_forward.7} parent=0 // pred_fallthru
    _
  // Predicated region
  $region18: #{vit_forward.7} parent=0 // pred_check
    _
  $region19: #{vit_forward.7} parent=0 // pred_check_branch
    %202 = sbr.rel (0) target = $region21
  $region20: #{vit_forward.7} parent=0 // pred_region
    _
  $region21: #{vit_forward.7} parent=0 // pred_fallthru
    _

// kernel: vit_forward.5
$region0: #{vit_forward.5}
  #allocation0 [shape = 'u32[]', space=smem, size = 0x4, offset = 0x4, fixed_abs, tag = 'smem constant byte address 0x4 - core index']
  #allocation1 [shape = 'u32[144,128]{1,0:T(1,128)}', space=vmem, size = 0x12000, scoped, tag = 'internal scratch']
  %s0 = inlined_call_operand.vmem [shape: f32[2,72,256], index: 0, kind: input, shape index: {}]
  %s1 = inlined_call_operand.vmem [shape: f32[1,256], index: 1, kind: input, shape index: {}]
  %s2 = inlined_call_operand.vmem [shape: f32[1,256], index: 2, kind: input, shape index: {}]
  %s3 = inlined_call_operand.vmem [shape: bf16[256,768], index: 3, kind: input, shape index: {}]
  %s4 = inlined_call_operand.vmem [shape: f32[1,768], index: 4, kind: input, shape index: {}]
  %s5 = inlined_call_operand.vmem [shape: bf16[256,256], index: 5, kind: input, shape index: {}]
  %s6 = inlined_call_operand.vmem [shape: f32[1,256], index: 6, kind: input, shape index: {}]
  %s7 = inlined_call_operand.vmem [shape: f32[1,256], index: 7, kind: input, shape index: {}]
  %s8 = inlined_call_operand.vmem [shape: f32[1,256], index: 8, kind: input, shape index: {}]
  %s9 = inlined_call_operand.vmem [shape: bf16[256,1024], index: 9, kind: input, shape index: {}]
  %s10 = inlined_call_operand.vmem [shape: f32[1,1024], index: 10, kind: input, shape index: {}]
  %s11 = inlined_call_operand.vmem [shape: bf16[1024,256], index: 11, kind: input, shape index: {}]
  %s12 = inlined_call_operand.vmem [shape: f32[1,256], index: 12, kind: input, shape index: {}]
  %s13 = inlined_call_operand.vmem [shape: f32[2,72,256], index: 13, kind: output, shape index: {}]
  %s14 = sld [smem:[#allocation0]]
  $region62: #{vit_forward.5} parent=0
    _
  %s16 = ssub.s32 1, %s14
  %s17 = scalar_select 0, %s16, %s14
  // Predicated region
  $region2: #{vit_forward.5} parent=0 // pred_check
    _
  $region3: #{vit_forward.5} parent=0 // pred_check_branch
    %19 = sbr.rel (0) target = $region5
  $region4: #{vit_forward.5} parent=0 // pred_region
    _
  $region5: #{vit_forward.5} parent=0 // pred_fallthru
    _
  // Predicated region
  $region6: #{vit_forward.5} parent=0 // pred_check
    _
  $region7: #{vit_forward.5} parent=0 // pred_check_branch
    %21 = sbr.rel (0) target = $region9
  $region8: #{vit_forward.5} parent=0 // pred_region
    _
  $region9: #{vit_forward.5} parent=0 // pred_fallthru
    _
  // Predicated region
  $region10: #{vit_forward.5} parent=0 // pred_check
    _
  $region11: #{vit_forward.5} parent=0 // pred_check_branch
    %23 = sbr.rel (0) target = $region13
  $region12: #{vit_forward.5} parent=0 // pred_region
    _
  $region13: #{vit_forward.5} parent=0 // pred_fallthru
    _
  // Predicated region
  $region14: #{vit_forward.5} parent=0 // pred_check
    _
  $region15: #{vit_forward.5} parent=0 // pred_check_branch
    %25 = sbr.rel (0) target = $region17
  $region16: #{vit_forward.5} parent=0 // pred_region
    _
  $region17: #{vit_forward.5} parent=0 // pred_fallthru
    _
  // Predicated region
  $region18: #{vit_forward.5} parent=0 // pred_check
    _
  $region19: #{vit_forward.5} parent=0 // pred_check_branch
    %27 = sbr.rel (0) target = $region21
  $region20: #{vit_forward.5} parent=0 // pred_region
    _
  $region21: #{vit_forward.5} parent=0 // pred_fallthru
    _
  // Predicated region
  $region22: #{vit_forward.5} parent=0 // pred_check
    _
  $region23: #{vit_forward.5} parent=0 // pred_check_branch
    %29 = sbr.rel (0) target = $region25
  $region24: #{vit_forward.5} parent=0 // pred_region
    _
  $region25: #{vit_forward.5} parent=0 // pred_fallthru
    _
  // Predicated region
  $region26: #{vit_forward.5} parent=0 // pred_check
    _
  $region27: #{vit_forward.5} parent=0 // pred_check_branch
    %31 = sbr.rel (0) target = $region29
  $region28: #{vit_forward.5} parent=0 // pred_region
    _
  $region29: #{vit_forward.5} parent=0 // pred_fallthru
    _
  // Predicated region
  $region30: #{vit_forward.5} parent=0 // pred_check
    _
  $region31: #{vit_forward.5} parent=0 // pred_check_branch
    %33 = sbr.rel (0) target = $region33
  $region32: #{vit_forward.5} parent=0 // pred_region
    _
  $region33: #{vit_forward.5} parent=0 // pred_fallthru
    _
  // Predicated region
  $region34: #{vit_forward.5} parent=0 // pred_check
    _
  $region35: #{vit_forward.5} parent=0 // pred_check_branch
    %35 = sbr.rel (0) target = $region37
  $region36: #{vit_forward.5} parent=0 // pred_region
    _
  $region37: #{vit_forward.5} parent=0 // pred_fallthru
    _
  // Predicated region
  $region38: #{vit_forward.5} parent=0 // pred_check
    _
  $region39: #{vit_forward.5} parent=0 // pred_check_branch
    %37 = sbr.rel (0) target = $region41
  $region40: #{vit_forward.5} parent=0 // pred_region
    _
  $region41: #{vit_forward.5} parent=0 // pred_fallthru
    _
  // Predicated region
  $region42: #{vit_forward.5} parent=0 // pred_check
    _
  $region43: #{vit_forward.5} parent=0 // pred_check_branch
    %39 = sbr.rel (0) target = $region45
  $region44: #{vit_forward.5} parent=0 // pred_region
    _
  $region45: #{vit_forward.5} parent=0 // pred_fallthru
    _
  // Predicated region
  $region46: #{vit_forward.5} parent=0 // pred_check
    _
  $region47: #{vit_forward.5} parent=0 // pred_check_branch
    %41 = sbr.rel (0) target = $region49
  $region48: #{vit_forward.5} parent=0 // pred_region
    _
  $region49: #{vit_forward.5} parent=0 // pred_fallthru
    _
  // Predicated region
  $region50: #{vit_forward.5} parent=0 // pred_check
    _
  $region51: #{vit_forward.5} parent=0 // pred_check_branch
    %43 = sbr.rel (0) target = $region53
  $region52: #{vit_forward.5} parent=0 // pred_region
    _
  $region53: #{vit_forward.5} parent=0 // pred_fallthru
    _
  %v45 = vld [vmem:[%s0] sm:$0xff]
  %v46 = vld [vmem:[%s0 + $0x8] sm:$0xff]
  %v47 = vld [vmem:[%s0 + $0x10] sm:$0xff]
  %v48 = vld [vmem:[%s0 + $0x18] sm:$0xff]
  %v49 = vld [vmem:[%s0 + $0x20] sm:$0xff]
  %v50 = vld [vmem:[%s0 + $0x28] sm:$0xff]
  %v51 = vld [vmem:[%s0 + $0x30] sm:$0xff]
  %v52 = vld [vmem:[%s0 + $0x38] sm:$0xff]
  %v53 = vld [vmem:[%s0 + $0x40] sm:$0xff]
  %v54 = vld [vmem:[%s0 + $0x48] sm:$0xff]
  %v55 = vld [vmem:[%s0 + $0x50] sm:$0xff]
  %v56 = vld [vmem:[%s0 + $0x58] sm:$0xff]
  %v57 = vld [vmem:[%s0 + $0x60] sm:$0xff]
  %v58 = vld [vmem:[%s0 + $0x68] sm:$0xff]
  %v59 = vld [vmem:[%s0 + $0x70] sm:$0xff]
  %v60 = vld [vmem:[%s0 + $0x78] sm:$0xff]
  %v61 = vld [vmem:[%s0 + $0x80] sm:$0xff]
  %v62 = vld [vmem:[%s0 + $0x88] sm:$0xff]
  %v63 = vld [vmem:[%s0 + $0x90] sm:$0xff]
  %v64 = vld [vmem:[%s0 + $0x98] sm:$0xff]
  %v65 = vld [vmem:[%s0 + $0xa0] sm:$0xff]
  %v66 = vld [vmem:[%s0 + $0xa8] sm:$0xff]
  %v67 = vld [vmem:[%s0 + $0xb0] sm:$0xff]
  %v68 = vld [vmem:[%s0 + $0xb8] sm:$0xff]
  %v69 = vld [vmem:[%s0 + $0xc0] sm:$0xff]
  %v70 = vld [vmem:[%s0 + $0xc8] sm:$0xff]
  %v71 = vld [vmem:[%s0 + $0xd0] sm:$0xff]
  %v72 = vld [vmem:[%s0 + $0xd8] sm:$0xff]
  %v73 = vld [vmem:[%s0 + $0xe0] sm:$0xff]
  %v74 = vld [vmem:[%s0 + $0xe8] sm:$0xff]
  %v75 = vld [vmem:[%s0 + $0xf0] sm:$0xff]
  %v76 = vld [vmem:[%s0 + $0xf8] sm:$0xff]
  %v77 = vld [vmem:[%s0 + $0x100] sm:$0xff]
  %v78 = vld [vmem:[%s0 + $0x108] sm:$0xff]
  %v79 = vld [vmem:[%s0 + $0x110] sm:$0xff]
  %v80 = vld [vmem:[%s0 + $0x118] sm:$0xff]
  %v81 = vadd.f32 %v45, %v46
  %82 = vadd.xlane.f32.xlu0 %v81
  %v83 = vpop.xlane.xlu0 %82
  %v84 = vadd.f32 %v47, %v48
  %85 = vadd.xlane.f32.xlu0 %v84
  %v86 = vpop.xlane.xlu0 %85
  %v87 = vadd.f32 %v49, %v50
  %88 = vadd.xlane.f32.xlu0 %v87
  %v89 = vpop.xlane.xlu0 %88
  %v90 = vadd.f32 %v51, %v52
  %91 = vadd.xlane.f32.xlu0 %v90
  %v92 = vpop.xlane.xlu0 %91
  %v93 = vadd.f32 %v53, %v54
  %94 = vadd.xlane.f32.xlu0 %v93
  %v95 = vpop.xlane.xlu0 %94
  %v96 = vadd.f32 %v55, %v56
  %97 = vadd.xlane.f32.xlu0 %v96
  %v98 = vpop.xlane.xlu0 %97
  %v99 = vadd.f32 %v57, %v58
  %100 = vadd.xlane.f32.xlu0 %v99
  %v101 = vpop.xlane.xlu0 %100
  %v102 = vadd.f32 %v59, %v60
  %103 = vadd.xlane.f32.xlu0 %v102
  %v104 = vpop.xlane.xlu0 %103
  %v105 = vadd.f32 %v61, %v62
  %106 = vadd.xlane.f32.xlu0 %v105
  %v107 = vpop.xlane.xlu0 %106
  %v108 = vadd.f32 %v63, %v64
  %109 = vadd.xlane.f32.xlu0 %v108
  %v110 = vpop.xlane.xlu0 %109
  %v111 = vadd.f32 %v65, %v66
  %112 = vadd.xlane.f32.xlu0 %v111
  %v113 = vpop.xlane.xlu0 %112
  %v114 = vadd.f32 %v67, %v68
  %115 = vadd.xlane.f32.xlu0 %v114
  %v116 = vpop.xlane.xlu0 %115
  %v117 = vadd.f32 %v69, %v70
  %118 = vadd.xlane.f32.xlu0 %v117
  %v119 = vpop.xlane.xlu0 %118
  %v120 = vadd.f32 %v71, %v72
  %121 = vadd.xlane.f32.xlu0 %v120
  %v122 = vpop.xlane.xlu0 %121
  %v123 = vadd.f32 %v73, %v74
  %124 = vadd.xlane.f32.xlu0 %v123
  %v125 = vpop.xlane.xlu0 %124
  %v126 = vadd.f32 %v75, %v76
  %127 = vadd.xlane.f32.xlu0 %v126
  %v128 = vpop.xlane.xlu0 %127
  %v129 = vadd.f32 %v77, %v78
  %130 = vadd.xlane.f32.xlu0 %v129
  %v131 = vpop.xlane.xlu0 %130
  %v132 = vadd.f32 %v79, %v80
  %133 = vadd.xlane.f32.xlu0 %v132
  %v134 = vpop.xlane.xlu0 %133
  %v135 = vrcp.pop 256.0
  %v136 = vmul.f32 %v83, %v135
  %v137 = vmul.f32 %v86, %v135
  %v138 = vmul.f32 %v89, %v135
  %v139 = vmul.f32 %v92, %v135
  %v140 = vmul.f32 %v95, %v135
  %v141 = vmul.f32 %v98, %v135
  %v142 = vmul.f32 %v101, %v135
  %v143 = vmul.f32 %v104, %v135
  %v144 = vmul.f32 %v107, %v135
  %v145 = vmul.f32 %v110, %v135
  %v146 = vmul.f32 %v113, %v135
  %v147 = vmul.f32 %v116, %v135
  %v148 = vmul.f32 %v119, %v135
  %v149 = vmul.f32 %v122, %v135
  %v150 = vmul.f32 %v125, %v135
  %v151 = vmul.f32 %v128, %v135
  %v152 = vmul.f32 %v131, %v135
  %v153 = vmul.f32 %v134, %v135
  %v154 = vsub.f32 %v45, %v136
  %v155 = vsub.f32 %v46, %v136
  %v156 = vsub.f32 %v47, %v137
  %v157 = vsub.f32 %v48, %v137
  %v158 = vsub.f32 %v49, %v138
  %v159 = vsub.f32 %v50, %v138
  %v160 = vsub.f32 %v51, %v139
  %v161 = vsub.f32 %v52, %v139
  %v162 = vsub.f32 %v53, %v140
  %v163 = vsub.f32 %v54, %v140
  %v164 = vsub.f32 %v55, %v141
  %v165 = vsub.f32 %v56, %v141
  %v166 = vsub.f32 %v57, %v142
  %v167 = vsub.f32 %v58, %v142
  %v168 = vsub.f32 %v59, %v143
  %v169 = vsub.f32 %v60, %v143
  %v170 = vsub.f32 %v61, %v144
  %v171 = vsub.f32 %v62, %v144
  %v172 = vsub.f32 %v63, %v145
  %v173 = vsub.f32 %v64, %v145
  %v174 = vsub.f32 %v65, %v146
  %v175 = vsub.f32 %v66, %v146
  %v176 = vsub.f32 %v67, %v147
  %v177 = vsub.f32 %v68, %v147
  %v178 = vsub.f32 %v69, %v148
  %v179 = vsub.f32 %v70, %v148
  %v180 = vsub.f32 %v71, %v149
  %v181 = vsub.f32 %v72, %v149
  %v182 = vsub.f32 %v73, %v150
  %v183 = vsub.f32 %v74, %v150
  %v184 = vsub.f32 %v75, %v151
  %v185 = vsub.f32 %v76, %v151
  %v186 = vsub.f32 %v77, %v152
  %v187 = vsub.f32 %v78, %v152
  %v188 = vsub.f32 %v79, %v153
  %v189 = vsub.f32 %v80, %v153
  %v190 = vmul.f32 %v154, %v154
  %v191 = vmul.f32 %v155, %v155
  %v192 = vmul.f32 %v156, %v156
  %v193 = vmul.f32 %v157, %v157
  %v194 = vmul.f32 %v158, %v158
  %v195 = vmul.f32 %v159, %v159
  %v196 = vmul.f32 %v160, %v160
  %v197 = vmul.f32 %v161, %v161
  %v198 = vmul.f32 %v162, %v162
  %v199 = vmul.f32 %v163, %v163
  %v200 = vmul.f32 %v164, %v164
  %v201 = vmul.f32 %v165, %v165
  %v202 = vmul.f32 %v166, %v166
  %v203 = vmul.f32 %v167, %v167
  %v204 = vmul.f32 %v168, %v168
  %v205 = vmul.f32 %v169, %v169
  %v206 = vmul.f32 %v170, %v170
  %v207 = vmul.f32 %v171, %v171
  %v208 = vmul.f32 %v172, %v172
  %v209 = vmul.f32 %v173, %v173
  %v210 = vmul.f32 %v174, %v174
  %v211 = vmul.f32 %v175, %v175
  %v212 = vmul.f32 %v176, %v176
  %v213 = vmul.f32 %v177, %v177
  %v214 = vmul.f32 %v178, %v178
  %v215 = vmul.f32 %v179, %v179
  %v216 = vmul.f32 %v180, %v180
  %v217 = vmul.f32 %v181, %v181
  %v218 = vmul.f32 %v182, %v182
  %v219 = vmul.f32 %v183, %v183
  %v220 = vmul.f32 %v184, %v184
  %v221 = vmul.f32 %v185, %v185
  %v222 = vmul.f32 %v186, %v186
  %v223 = vmul.f32 %v187, %v187
  %v224 = vmul.f32 %v188, %v188
  %v225 = vmul.f32 %v189, %v189
  %v226 = vadd.f32 %v190, %v191
  %227 = vadd.xlane.f32.xlu0 %v226
  %v228 = vpop.xlane.xlu0 %227
  %v229 = vadd.f32 %v192, %v193
  %230 = vadd.xlane.f32.xlu0 %v229
  %v231 = vpop.xlane.xlu0 %230
  %v232 = vadd.f32 %v194, %v195
  %233 = vadd.xlane.f32.xlu0 %v232
  %v234 = vpop.xlane.xlu0 %233
  %v235 = vadd.f32 %v196, %v197
  %236 = vadd.xlane.f32.xlu0 %v235
  %v237 = vpop.xlane.xlu0 %236
  %v238 = vadd.f32 %v198, %v199
  %239 = vadd.xlane.f32.xlu0 %v238
  %v240 = vpop.xlane.xlu0 %239
  %v241 = vadd.f32 %v200, %v201
  %242 = vadd.xlane.f32.xlu0 %v241
  %v243 = vpop.xlane.xlu0 %242
  %v244 = vadd.f32 %v202, %v203
  %245 = vadd.xlane.f32.xlu0 %v244
  %v246 = vpop.xlane.xlu0 %245
  %v247 = vadd.f32 %v204, %v205
  %248 = vadd.xlane.f32.xlu0 %v247
  %v249 = vpop.xlane.xlu0 %248
  %v250 = vadd.f32 %v206, %v207
  %251 = vadd.xlane.f32.xlu0 %v250
  %v252 = vpop.xlane.xlu0 %251
  %v253 = vadd.f32 %v208, %v209
  %254 = vadd.xlane.f32.xlu0 %v253
  %v255 = vpop.xlane.xlu0 %254
  %v256 = vadd.f32 %v210, %v211
  %257 = vadd.xlane.f32.xlu0 %v256
  %v258 = vpop.xlane.xlu0 %257
  %v259 = vadd.f32 %v212, %v213
  %260 = vadd.xlane.f32.xlu0 %v259
  %v261 = vpop.xlane.xlu0 %260
  %v262 = vadd.f32 %v214, %v215
  %263 = vadd.xlane.f32.xlu0 %v262
  %v264 = vpop.xlane.xlu0 %263
  %v265 = vadd.f32 %v216, %v217
  %266 = vadd.xlane.f32.xlu0 %v265
  %v267 = vpop.xlane.xlu0 %266
  %v268 = vadd.f32 %v218, %v219
  %269 = vadd.xlane.f32.xlu0 %v268
  %v270 = vpop.xlane.xlu0 %269
  %v271 = vadd.f32 %v220, %v221
  %272 = vadd.xlane.f32.xlu0 %v271
  %v273 = vpop.xlane.xlu0 %272
  %v274 = vadd.f32 %v222, %v223
  %275 = vadd.xlane.f32.xlu0 %v274
  %v276 = vpop.xlane.xlu0 %275
  %v277 = vadd.f32 %v224, %v225
  %278 = vadd.xlane.f32.xlu0 %v277
  %v279 = vpop.xlane.xlu0 %278
  %v280 = vmul.f32 %v228, %v135
  %v281 = vmul.f32 %v231, %v135
  %v282 = vmul.f32 %v234, %v135
  %v283 = vmul.f32 %v237, %v135
  %v284 = vmul.f32 %v240, %v135
  %v285 = vmul.f32 %v243, %v135
  %v286 = vmul.f32 %v246, %v135
  %v287 = vmul.f32 %v249, %v135
  %v288 = vmul.f32 %v252, %v135
  %v289 = vmul.f32 %v255, %v135
  %v290 = vmul.f32 %v258, %v135
  %v291 = vmul.f32 %v261, %v135
  %v292 = vmul.f32 %v264, %v135
  %v293 = vmul.f32 %v267, %v135
  %v294 = vmul.f32 %v270, %v135
  %v295 = vmul.f32 %v273, %v135
  %v296 = vmul.f32 %v276, %v135
  %v297 = vmul.f32 %v279, %v135
  %v298 = vadd.f32 %v280, 1e-05
  %v299 = vadd.f32 %v281, 1e-05
  %v300 = vadd.f32 %v282, 1e-05
  %v301 = vadd.f32 %v283, 1e-05
  %v302 = vadd.f32 %v284, 1e-05
  %v303 = vadd.f32 %v285, 1e-05
  %v304 = vadd.f32 %v286, 1e-05
  %v305 = vadd.f32 %v287, 1e-05
  %v306 = vadd.f32 %v288, 1e-05
  %v307 = vadd.f32 %v289, 1e-05
  %v308 = vadd.f32 %v290, 1e-05
  %v309 = vadd.f32 %v291, 1e-05
  %v310 = vadd.f32 %v292, 1e-05
  %v311 = vadd.f32 %v293, 1e-05
  %v312 = vadd.f32 %v294, 1e-05
  %v313 = vadd.f32 %v295, 1e-05
  %v314 = vadd.f32 %v296, 1e-05
  %v315 = vadd.f32 %v297, 1e-05
  %v316 = vrsqrt.pop %v298
  %v317 = vrsqrt.pop %v299
  %v318 = vrsqrt.pop %v300
  %v319 = vrsqrt.pop %v301
  %v320 = vrsqrt.pop %v302
  %v321 = vrsqrt.pop %v303
  %v322 = vrsqrt.pop %v304
  %v323 = vrsqrt.pop %v305
  %v324 = vrsqrt.pop %v306
  %v325 = vrsqrt.pop %v307
  %v326 = vrsqrt.pop %v308
  %v327 = vrsqrt.pop %v309
  %v328 = vrsqrt.pop %v310
  %v329 = vrsqrt.pop %v311
  %v330 = vrsqrt.pop %v312
  %v331 = vrsqrt.pop %v313
  %v332 = vrsqrt.pop %v314
  %v333 = vrsqrt.pop %v315
  %v334 = vmul.f32 %v154, %v316
  %v335 = vmul.f32 %v155, %v316
  %v336 = vmul.f32 %v156, %v317
  %v337 = vmul.f32 %v157, %v317
  %v338 = vmul.f32 %v158, %v318
  %v339 = vmul.f32 %v159, %v318
  %v340 = vmul.f32 %v160, %v319
  %v341 = vmul.f32 %v161, %v319
  %v342 = vmul.f32 %v162, %v320
  %v343 = vmul.f32 %v163, %v320
  %v344 = vmul.f32 %v164, %v321
  %v345 = vmul.f32 %v165, %v321
  %v346 = vmul.f32 %v166, %v322
  %v347 = vmul.f32 %v167, %v322
  %v348 = vmul.f32 %v168, %v323
  %v349 = vmul.f32 %v169, %v323
  %v350 = vmul.f32 %v170, %v324
  %v351 = vmul.f32 %v171, %v324
  %v352 = vmul.f32 %v172, %v325
  %v353 = vmul.f32 %v173, %v325
  %v354 = vmul.f32 %v174, %v326
  %v355 = vmul.f32 %v175, %v326
  %v356 = vmul.f32 %v176, %v327
  %v357 = vmul.f32 %v177, %v327
  %v358 = vmul.f32 %v178, %v328
  %v359 = vmul.f32 %v179, %v328
  %v360 = vmul.f32 %v180, %v329
  %v361 = vmul.f32 %v181, %v329
  %v362 = vmul.f32 %v182, %v330
  %v363 = vmul.f32 %v183, %v330
  %v364 = vmul.f32 %v184, %v331
  %v365 = vmul.f32 %v185, %v331
  %v366 = vmul.f32 %v186, %v332
  %v367 = vmul.f32 %v187, %v332
  %v368 = vmul.f32 %v188, %v333
  %v369 = vmul.f32 %v189, %v333
  %v370 = vld [vmem:[%s1] sm:$0x3]
  %v372 = vlaneseq
  %v373 = vshrl.u32 %v372, 7
  %v374 = vsub.s32 0, %v373
  %v375 = vrot.slane %v370, %v374
  %v376 = vlaneseq
  %v377 = vshrl.u32 %v376, 7
  %v378 = vsub.s32 1, %v377
  %v379 = vrot.slane %v370, %v378
  %v382 = vmul.f32 %v334, %v375
  %v383 = vmul.f32 %v335, %v379
  %v384 = vmul.f32 %v336, %v375
  %v385 = vmul.f32 %v337, %v379
  %v386 = vmul.f32 %v338, %v375
  %v387 = vmul.f32 %v339, %v379
  %v388 = vmul.f32 %v340, %v375
  %v389 = vmul.f32 %v341, %v379
  %v390 = vmul.f32 %v342, %v375
  %v391 = vmul.f32 %v343, %v379
  %v392 = vmul.f32 %v344, %v375
  %v393 = vmul.f32 %v345, %v379
  %v394 = vmul.f32 %v346, %v375
  %v395 = vmul.f32 %v347, %v379
  %v396 = vmul.f32 %v348, %v375
  %v397 = vmul.f32 %v349, %v379
  %v398 = vmul.f32 %v350, %v375
  %v399 = vmul.f32 %v351, %v379
  %v400 = vmul.f32 %v352, %v375
  %v401 = vmul.f32 %v353, %v379
  %v402 = vmul.f32 %v354, %v375
  %v403 = vmul.f32 %v355, %v379
  %v404 = vmul.f32 %v356, %v375
  %v405 = vmul.f32 %v357, %v379
  %v406 = vmul.f32 %v358, %v375
  %v407 = vmul.f32 %v359, %v379
  %v408 = vmul.f32 %v360, %v375
  %v409 = vmul.f32 %v361, %v379
  %v410 = vmul.f32 %v362, %v375
  %v411 = vmul.f32 %v363, %v379
  %v412 = vmul.f32 %v364, %v375
  %v413 = vmul.f32 %v365, %v379
  %v414 = vmul.f32 %v366, %v375
  %v415 = vmul.f32 %v367, %v379
  %v416 = vmul.f32 %v368, %v375
  %v417 = vmul.f32 %v369, %v379
  %v418 = vld [vmem:[%s2] sm:$0x3]
  %v420 = vlaneseq
  %v421 = vshrl.u32 %v420, 7
  %v422 = vsub.s32 0, %v421
  %v423 = vrot.slane %v418, %v422
  %v424 = vlaneseq
  %v425 = vshrl.u32 %v424, 7
  %v426 = vsub.s32 1, %v425
  %v427 = vrot.slane %v418, %v426
  %v430 = vadd.f32 %v382, %v423
  %v431 = vadd.f32 %v383, %v427
  %v432 = vadd.f32 %v384, %v423
  %v433 = vadd.f32 %v385, %v427
  %v434 = vadd.f32 %v386, %v423
  %v435 = vadd.f32 %v387, %v427
  %v436 = vadd.f32 %v388, %v423
  %v437 = vadd.f32 %v389, %v427
  %v438 = vadd.f32 %v390, %v423
  %v439 = vadd.f32 %v391, %v427
  %v440 = vadd.f32 %v392, %v423
  %v441 = vadd.f32 %v393, %v427
  %v442 = vadd.f32 %v394, %v423
  %v443 = vadd.f32 %v395, %v427
  %v444 = vadd.f32 %v396, %v423
  %v445 = vadd.f32 %v397, %v427
  %v446 = vadd.f32 %v398, %v423
  %v447 = vadd.f32 %v399, %v427
  %v448 = vadd.f32 %v400, %v423
  %v449 = vadd.f32 %v401, %v427
  %v450 = vadd.f32 %v402, %v423
  %v451 = vadd.f32 %v403, %v427
  %v452 = vadd.f32 %v404, %v423
  %v453 = vadd.f32 %v405, %v427
  %v454 = vadd.f32 %v406, %v423
  %v455 = vadd.f32 %v407, %v427
  %v456 = vadd.f32 %v408, %v423
  %v457 = vadd.f32 %v409, %v427
  %v458 = vadd.f32 %v410, %v423
  %v459 = vadd.f32 %v411, %v427
  %v460 = vadd.f32 %v412, %v423
  %v461 = vadd.f32 %v413, %v427
  %v462 = vadd.f32 %v414, %v423
  %v463 = vadd.f32 %v415, %v427
  %v464 = vadd.f32 %v416, %v423
  %v465 = vadd.f32 %v417, %v427
  %v466 = vpack.c.bf16 %v432, %v430
  %v467 = vpack.c.bf16 %v433, %v431
  %v468 = vpack.c.bf16 %v436, %v434
  %v469 = vpack.c.bf16 %v437, %v435
  %v470 = vpack.c.bf16 %v440, %v438
  %v471 = vpack.c.bf16 %v441, %v439
  %v472 = vpack.c.bf16 %v444, %v442
  %v473 = vpack.c.bf16 %v445, %v443
  %v474 = vpack.c.bf16 %v448, %v446
  %v475 = vpack.c.bf16 %v449, %v447
  %v476 = vpack.c.bf16 %v452, %v450
  %v477 = vpack.c.bf16 %v453, %v451
  %v478 = vpack.c.bf16 %v456, %v454
  %v479 = vpack.c.bf16 %v457, %v455
  %v480 = vpack.c.bf16 %v460, %v458
  %v481 = vpack.c.bf16 %v461, %v459
  %v482 = vpack.c.bf16 %v464, %v462
  %v483 = vpack.c.bf16 %v465, %v463
  %v484 = vld [vmem:[%s3] sm:$0xff]
  %v485 = vld [vmem:[%s3 + $0x8] sm:$0xff]
  %v486 = vld [vmem:[%s3 + $0x10] sm:$0xff]
  %v487 = vld [vmem:[%s3 + $0x18] sm:$0xff]
  %v488 = vld [vmem:[%s3 + $0x20] sm:$0xff]
  %v489 = vld [vmem:[%s3 + $0x28] sm:$0xff]
  %v490 = vld [vmem:[%s3 + $0x30] sm:$0xff]
  %v491 = vld [vmem:[%s3 + $0x38] sm:$0xff]
  %v492 = vld [vmem:[%s3 + $0x40] sm:$0xff]
  %v493 = vld [vmem:[%s3 + $0x48] sm:$0xff]
  %v494 = vld [vmem:[%s3 + $0x50] sm:$0xff]
  %v495 = vld [vmem:[%s3 + $0x58] sm:$0xff]
  %v496 = vld [vmem:[%s3 + $0x60] sm:$0xff]
  %v497 = vld [vmem:[%s3 + $0x68] sm:$0xff]
  %v498 = vld [vmem:[%s3 + $0x70] sm:$0xff]
  %v499 = vld [vmem:[%s3 + $0x78] sm:$0xff]
  %v500 = vld [vmem:[%s3 + $0x80] sm:$0xff]
  %v501 = vld [vmem:[%s3 + $0x88] sm:$0xff]
  %v502 = vld [vmem:[%s3 + $0x90] sm:$0xff]
  %v503 = vld [vmem:[%s3 + $0x98] sm:$0xff]
  %v504 = vld [vmem:[%s3 + $0xa0] sm:$0xff]
  %v505 = vld [vmem:[%s3 + $0xa8] sm:$0xff]
  %v506 = vld [vmem:[%s3 + $0xb0] sm:$0xff]
  %v507 = vld [vmem:[%s3 + $0xb8] sm:$0xff]
  %v508 = vld [vmem:[%s3 + $0xc0] sm:$0xff]
  %v509 = vld [vmem:[%s3 + $0xc8] sm:$0xff]
  %v510 = vld [vmem:[%s3 + $0xd0] sm:$0xff]
  %v511 = vld [vmem:[%s3 + $0xd8] sm:$0xff]
  %v512 = vld [vmem:[%s3 + $0xe0] sm:$0xff]
  %v513 = vld [vmem:[%s3 + $0xe8] sm:$0xff]
  %v514 = vld [vmem:[%s3 + $0xf0] sm:$0xff]
  %v515 = vld [vmem:[%s3 + $0xf8] sm:$0xff]
  %v516 = vld [vmem:[%s3 + $0x100] sm:$0xff]
  %v517 = vld [vmem:[%s3 + $0x108] sm:$0xff]
  %v518 = vld [vmem:[%s3 + $0x110] sm:$0xff]
  %v519 = vld [vmem:[%s3 + $0x118] sm:$0xff]
  %v520 = vld [vmem:[%s3 + $0x120] sm:$0xff]
  %v521 = vld [vmem:[%s3 + $0x128] sm:$0xff]
  %v522 = vld [vmem:[%s3 + $0x130] sm:$0xff]
  %v523 = vld [vmem:[%s3 + $0x138] sm:$0xff]
  %v524 = vld [vmem:[%s3 + $0x140] sm:$0xff]
  %v525 = vld [vmem:[%s3 + $0x148] sm:$0xff]
  %v526 = vld [vmem:[%s3 + $0x150] sm:$0xff]
  %v527 = vld [vmem:[%s3 + $0x158] sm:$0xff]
  %v528 = vld [vmem:[%s3 + $0x160] sm:$0xff]
  %v529 = vld [vmem:[%s3 + $0x168] sm:$0xff]
  %v530 = vld [vmem:[%s3 + $0x170] sm:$0xff]
  %v531 = vld [vmem:[%s3 + $0x178] sm:$0xff]
  %v532 = vld [vmem:[%s3 + $0x180] sm:$0xff]
  %v533 = vld [vmem:[%s3 + $0x188] sm:$0xff]
  %v534 = vld [vmem:[%s3 + $0x190] sm:$0xff]
  %v535 = vld [vmem:[%s3 + $0x198] sm:$0xff]
  %v536 = vld [vmem:[%s3 + $0x1a0] sm:$0xff]
  %v537 = vld [vmem:[%s3 + $0x1a8] sm:$0xff]
  %v538 = vld [vmem:[%s3 + $0x1b0] sm:$0xff]
  %v539 = vld [vmem:[%s3 + $0x1b8] sm:$0xff]
  %v540 = vld [vmem:[%s3 + $0x1c0] sm:$0xff]
  %v541 = vld [vmem:[%s3 + $0x1c8] sm:$0xff]
  %v542 = vld [vmem:[%s3 + $0x1d0] sm:$0xff]
  %v543 = vld [vmem:[%s3 + $0x1d8] sm:$0xff]
  %v544 = vld [vmem:[%s3 + $0x1e0] sm:$0xff]
  %v545 = vld [vmem:[%s3 + $0x1e8] sm:$0xff]
  %v546 = vld [vmem:[%s3 + $0x1f0] sm:$0xff]
  %v547 = vld [vmem:[%s3 + $0x1f8] sm:$0xff]
  %v548 = vld [vmem:[%s3 + $0x200] sm:$0xff]
  %v549 = vld [vmem:[%s3 + $0x208] sm:$0xff]
  %v550 = vld [vmem:[%s3 + $0x210] sm:$0xff]
  %v551 = vld [vmem:[%s3 + $0x218] sm:$0xff]
  %v552 = vld [vmem:[%s3 + $0x220] sm:$0xff]
  %v553 = vld [vmem:[%s3 + $0x228] sm:$0xff]
  %v554 = vld [vmem:[%s3 + $0x230] sm:$0xff]
  %v555 = vld [vmem:[%s3 + $0x238] sm:$0xff]
  %v556 = vld [vmem:[%s3 + $0x240] sm:$0xff]
  %v557 = vld [vmem:[%s3 + $0x248] sm:$0xff]
  %v558 = vld [vmem:[%s3 + $0x250] sm:$0xff]
  %v559 = vld [vmem:[%s3 + $0x258] sm:$0xff]
  %v560 = vld [vmem:[%s3 + $0x260] sm:$0xff]
  %v561 = vld [vmem:[%s3 + $0x268] sm:$0xff]
  %v562 = vld [vmem:[%s3 + $0x270] sm:$0xff]
  %v563 = vld [vmem:[%s3 + $0x278] sm:$0xff]
  %v564 = vld [vmem:[%s3 + $0x280] sm:$0xff]
  %v565 = vld [vmem:[%s3 + $0x288] sm:$0xff]
  %v566 = vld [vmem:[%s3 + $0x290] sm:$0xff]
  %v567 = vld [vmem:[%s3 + $0x298] sm:$0xff]
  %v568 = vld [vmem:[%s3 + $0x2a0] sm:$0xff]
  %v569 = vld [vmem:[%s3 + $0x2a8] sm:$0xff]
  %v570 = vld [vmem:[%s3 + $0x2b0] sm:$0xff]
  %v571 = vld [vmem:[%s3 + $0x2b8] sm:$0xff]
  %v572 = vld [vmem:[%s3 + $0x2c0] sm:$0xff]
  %v573 = vld [vmem:[%s3 + $0x2c8] sm:$0xff]
  %v574 = vld [vmem:[%s3 + $0x2d0] sm:$0xff]
  %v575 = vld [vmem:[%s3 + $0x2d8] sm:$0xff]
  %v576 = vld [vmem:[%s3 + $0x2e0] sm:$0xff]
  %v577 = vld [vmem:[%s3 + $0x2e8] sm:$0xff]
  %v578 = vld [vmem:[%s3 + $0x2f0] sm:$0xff]
  %v579 = vld [vmem:[%s3 + $0x2f8] sm:$0xff]
  %v580 = vld [vmem:[%s4] sm:$0x3f]
  %v582 = vlaneseq
  %v583 = vshrl.u32 %v582, 7
  %v584 = vsub.s32 0, %v583
  %v585 = vrot.slane %v580, %v584
  %v586 = vlaneseq
  %v587 = vshrl.u32 %v586, 7
  %v588 = vsub.s32 1, %v587
  %v589 = vrot.slane %v580, %v588
  %v590 = vlaneseq
  %v591 = vshrl.u32 %v590, 7
  %v592 = vsub.s32 2, %v591
  %v593 = vrot.slane %v580, %v592
  %v594 = vlaneseq
  %v595 = vshrl.u32 %v594, 7
  %v596 = vsub.s32 3, %v595
  %v597 = vrot.slane %v580, %v596
  %v598 = vlaneseq
  %v599 = vshrl.u32 %v598, 7
  %v600 = vsub.s32 4, %v599
  %v601 = vrot.slane %v580, %v600
  %v602 = vlaneseq
  %v603 = vshrl.u32 %v602, 7
  %v604 = vsub.s32 5, %v603
  %v605 = vrot.slane %v580, %v604
  %v708 = vunpack.c.l.b16 %v484
  %v709 = vunpack.c.h.b16 %v484
  %v710 = vunpack.c.l.b16 %v485
  %v711 = vunpack.c.h.b16 %v485
  %v712 = vunpack.c.l.b16 %v486
  %v713 = vunpack.c.h.b16 %v486
  %v714 = vunpack.c.l.b16 %v487
  %v715 = vunpack.c.h.b16 %v487
  %v716 = vunpack.c.l.b16 %v488
  %v717 = vunpack.c.h.b16 %v488
  %v718 = vunpack.c.l.b16 %v489
  %v719 = vunpack.c.h.b16 %v489
  %v720 = vunpack.c.l.b16 %v490
  %v721 = vunpack.c.h.b16 %v490
  %v722 = vunpack.c.l.b16 %v491
  %v723 = vunpack.c.h.b16 %v491
  %v724 = vunpack.c.l.b16 %v492
  %v725 = vunpack.c.h.b16 %v492
  %v726 = vunpack.c.l.b16 %v493
  %v727 = vunpack.c.h.b16 %v493
  %v728 = vunpack.c.l.b16 %v494
  %v729 = vunpack.c.h.b16 %v494
  %v730 = vunpack.c.l.b16 %v495
  %v731 = vunpack.c.h.b16 %v495
  %v732 = vunpack.c.l.b16 %v496
  %v733 = vunpack.c.h.b16 %v496
  %v734 = vunpack.c.l.b16 %v497
  %v735 = vunpack.c.h.b16 %v497
  %v736 = vunpack.c.l.b16 %v498
  %v737 = vunpack.c.h.b16 %v498
  %v738 = vunpack.c.l.b16 %v499
  %v739 = vunpack.c.h.b16 %v499
  %v740 = vunpack.c.l.b16 %v500
  %v741 = vunpack.c.h.b16 %v500
  %v742 = vunpack.c.l.b16 %v501
  %v743 = vunpack.c.h.b16 %v501
  %v744 = vunpack.c.l.b16 %v502
  %v745 = vunpack.c.h.b16 %v502
  %v746 = vunpack.c.l.b16 %v503
  %v747 = vunpack.c.h.b16 %v503
  %v748 = vunpack.c.l.b16 %v504
  %v749 = vunpack.c.h.b16 %v504
  %v750 = vunpack.c.l.b16 %v505
  %v751 = vunpack.c.h.b16 %v505
  %v752 = vunpack.c.l.b16 %v506
  %v753 = vunpack.c.h.b16 %v506
  %v754 = vunpack.c.l.b16 %v507
  %v755 = vunpack.c.h.b16 %v507
  %v756 = vunpack.c.l.b16 %v508
  %v757 = vunpack.c.h.b16 %v508
  %v758 = vunpack.c.l.b16 %v509
  %v759 = vunpack.c.h.b16 %v509
  %v760 = vunpack.c.l.b16 %v510
  %v761 = vunpack.c.h.b16 %v510
  %v762 = vunpack.c.l.b16 %v511
  %v763 = vunpack.c.h.b16 %v511
  %v764 = vunpack.c.l.b16 %v512
  %v765 = vunpack.c.h.b16 %v512
  %v766 = vunpack.c.l.b16 %v513
  %v767 = vunpack.c.h.b16 %v513
  %v768 = vunpack.c.l.b16 %v514
  %v769 = vunpack.c.h.b16 %v514
  %v770 = vunpack.c.l.b16 %v515
  %v771 = vunpack.c.h.b16 %v515
  %v772 = vunpack.c.l.b16 %v516
  %v773 = vunpack.c.h.b16 %v516
  %v774 = vunpack.c.l.b16 %v517
  %v775 = vunpack.c.h.b16 %v517
  %v776 = vunpack.c.l.b16 %v518
  %v777 = vunpack.c.h.b16 %v518
  %v778 = vunpack.c.l.b16 %v519
  %v779 = vunpack.c.h.b16 %v519
  %v780 = vunpack.c.l.b16 %v520
  %v781 = vunpack.c.h.b16 %v520
  %v782 = vunpack.c.l.b16 %v521
  %v783 = vunpack.c.h.b16 %v521
  %v784 = vunpack.c.l.b16 %v522
  %v785 = vunpack.c.h.b16 %v522
  %v786 = vunpack.c.l.b16 %v523
  %v787 = vunpack.c.h.b16 %v523
  %v788 = vunpack.c.l.b16 %v524
  %v789 = vunpack.c.h.b16 %v524
  %v790 = vunpack.c.l.b16 %v525
  %v791 = vunpack.c.h.b16 %v525
  %v792 = vunpack.c.l.b16 %v526
  %v793 = vunpack.c.h.b16 %v526
  %v794 = vunpack.c.l.b16 %v527
  %v795 = vunpack.c.h.b16 %v527
  %v796 = vunpack.c.l.b16 %v528
  %v797 = vunpack.c.h.b16 %v528
  %v798 = vunpack.c.l.b16 %v529
  %v799 = vunpack.c.h.b16 %v529
  %v800 = vunpack.c.l.b16 %v530
  %v801 = vunpack.c.h.b16 %v530
  %v802 = vunpack.c.l.b16 %v531
  %v803 = vunpack.c.h.b16 %v531
  %v804 = vunpack.c.l.b16 %v532
  %v805 = vunpack.c.h.b16 %v532
  %v806 = vunpack.c.l.b16 %v533
  %v807 = vunpack.c.h.b16 %v533
  %v808 = vunpack.c.l.b16 %v534
  %v809 = vunpack.c.h.b16 %v534
  %v810 = vunpack.c.l.b16 %v535
  %v811 = vunpack.c.h.b16 %v535
  %v812 = vunpack.c.l.b16 %v536
  %v813 = vunpack.c.h.b16 %v536
  %v814 = vunpack.c.l.b16 %v537
  %v815 = vunpack.c.h.b16 %v537
  %v816 = vunpack.c.l.b16 %v538
  %v817 = vunpack.c.h.b16 %v538
  %v818 = vunpack.c.l.b16 %v539
  %v819 = vunpack.c.h.b16 %v539
  %v820 = vunpack.c.l.b16 %v540
  %v821 = vunpack.c.h.b16 %v540
  %v822 = vunpack.c.l.b16 %v541
  %v823 = vunpack.c.h.b16 %v541
  %v824 = vunpack.c.l.b16 %v542
  %v825 = vunpack.c.h.b16 %v542
  %v826 = vunpack.c.l.b16 %v543
  %v827 = vunpack.c.h.b16 %v543
  %v828 = vunpack.c.l.b16 %v544
  %v829 = vunpack.c.h.b16 %v544
  %v830 = vunpack.c.l.b16 %v545
  %v831 = vunpack.c.h.b16 %v545
  %v832 = vunpack.c.l.b16 %v546
  %v833 = vunpack.c.h.b16 %v546
  %v834 = vunpack.c.l.b16 %v547
  %v835 = vunpack.c.h.b16 %v547
  %v836 = vunpack.c.l.b16 %v548
  %v837 = vunpack.c.h.b16 %v548
  %v838 = vunpack.c.l.b16 %v549
  %v839 = vunpack.c.h.b16 %v549
  %v840 = vunpack.c.l.b16 %v550
  %v841 = vunpack.c.h.b16 %v550
  %v842 = vunpack.c.l.b16 %v551
  %v843 = vunpack.c.h.b16 %v551
  %v844 = vunpack.c.l.b16 %v552
  %v845 = vunpack.c.h.b16 %v552
  %v846 = vunpack.c.l.b16 %v553
  %v847 = vunpack.c.h.b16 %v553
  %v848 = vunpack.c.l.b16 %v554
  %v849 = vunpack.c.h.b16 %v554
  %v850 = vunpack.c.l.b16 %v555
  %v851 = vunpack.c.h.b16 %v555
  %v852 = vunpack.c.l.b16 %v556
  %v853 = vunpack.c.h.b16 %v556
  %v854 = vunpack.c.l.b16 %v557
  %v855 = vunpack.c.h.b16 %v557
  %v856 = vunpack.c.l.b16 %v558
  %v857 = vunpack.c.h.b16 %v558
  %v858 = vunpack.c.l.b16 %v559
  %v859 = vunpack.c.h.b16 %v559
  %v860 = vunpack.c.l.b16 %v560
  %v861 = vunpack.c.h.b16 %v560
  %v862 = vunpack.c.l.b16 %v561
  %v863 = vunpack.c.h.b16 %v561
  %v864 = vunpack.c.l.b16 %v562
  %v865 = vunpack.c.h.b16 %v562
  %v866 = vunpack.c.l.b16 %v563
  %v867 = vunpack.c.h.b16 %v563
  %v868 = vunpack.c.l.b16 %v564
  %v869 = vunpack.c.h.b16 %v564
  %v870 = vunpack.c.l.b16 %v565
  %v871 = vunpack.c.h.b16 %v565
  %v872 = vunpack.c.l.b16 %v566
  %v873 = vunpack.c.h.b16 %v566
  %v874 = vunpack.c.l.b16 %v567
  %v875 = vunpack.c.h.b16 %v567
  %v876 = vunpack.c.l.b16 %v568
  %v877 = vunpack.c.h.b16 %v568
  %v878 = vunpack.c.l.b16 %v569
  %v879 = vunpack.c.h.b16 %v569
  %v880 = vunpack.c.l.b16 %v570
  %v881 = vunpack.c.h.b16 %v570
  %v882 = vunpack.c.l.b16 %v571
  %v883 = vunpack.c.h.b16 %v571
  %v884 = vunpack.c.l.b16 %v572
  %v885 = vunpack.c.h.b16 %v572
  %v886 = vunpack.c.l.b16 %v573
  %v887 = vunpack.c.h.b16 %v573
  %v888 = vunpack.c.l.b16 %v574
  %v889 = vunpack.c.h.b16 %v574
  %v890 = vunpack.c.l.b16 %v575
  %v891 = vunpack.c.h.b16 %v575
  %v892 = vunpack.c.l.b16 %v576
  %v893 = vunpack.c.h.b16 %v576
  %v894 = vunpack.c.l.b16 %v577
  %v895 = vunpack.c.h.b16 %v577
  %v896 = vunpack.c.l.b16 %v578
  %v897 = vunpack.c.h.b16 %v578
  %v898 = vunpack.c.l.b16 %v579
  %v899 = vunpack.c.h.b16 %v579
  %v900 = vpack.c.b16 %v714, %v708
  %v901 = vpack.c.b16 %v715, %v709
  %v902 = vpack.c.b16 %v716, %v710
  %v903 = vpack.c.b16 %v717, %v711
  %v904 = vpack.c.b16 %v718, %v712
  %v905 = vpack.c.b16 %v719, %v713
  %v906 = vpack.c.b16 %v726, %v720
  %v907 = vpack.c.b16 %v727, %v721
  %v908 = vpack.c.b16 %v728, %v722
  %v909 = vpack.c.b16 %v729, %v723
  %v910 = vpack.c.b16 %v730, %v724
  %v911 = vpack.c.b16 %v731, %v725
  %v912 = vpack.c.b16 %v738, %v732
  %v913 = vpack.c.b16 %v739, %v733
  %v914 = vpack.c.b16 %v740, %v734
  %v915 = vpack.c.b16 %v741, %v735
  %v916 = vpack.c.b16 %v742, %v736
  %v917 = vpack.c.b16 %v743, %v737
  %v918 = vpack.c.b16 %v750, %v744
  %v919 = vpack.c.b16 %v751, %v745
  %v920 = vpack.c.b16 %v752, %v746
  %v921 = vpack.c.b16 %v753, %v747
  %v922 = vpack.c.b16 %v754, %v748
  %v923 = vpack.c.b16 %v755, %v749
  %v924 = vpack.c.b16 %v762, %v756
  %v925 = vpack.c.b16 %v763, %v757
  %v926 = vpack.c.b16 %v764, %v758
  %v927 = vpack.c.b16 %v765, %v759
  %v928 = vpack.c.b16 %v766, %v760
  %v929 = vpack.c.b16 %v767, %v761
  %v930 = vpack.c.b16 %v774, %v768
  %v931 = vpack.c.b16 %v775, %v769
  %v932 = vpack.c.b16 %v776, %v770
  %v933 = vpack.c.b16 %v777, %v771
  %v934 = vpack.c.b16 %v778, %v772
  %v935 = vpack.c.b16 %v779, %v773
  %v936 = vpack.c.b16 %v786, %v780
  %v937 = vpack.c.b16 %v787, %v781
  %v938 = vpack.c.b16 %v788, %v782
  %v939 = vpack.c.b16 %v789, %v783
  %v940 = vpack.c.b16 %v790, %v784
  %v941 = vpack.c.b16 %v791, %v785
  %v942 = vpack.c.b16 %v798, %v792
  %v943 = vpack.c.b16 %v799, %v793
  %v944 = vpack.c.b16 %v800, %v794
  %v945 = vpack.c.b16 %v801, %v795
  %v946 = vpack.c.b16 %v802, %v796
  %v947 = vpack.c.b16 %v803, %v797
  %v948 = vpack.c.b16 %v810, %v804
  %v949 = vpack.c.b16 %v811, %v805
  %v950 = vpack.c.b16 %v812, %v806
  %v951 = vpack.c.b16 %v813, %v807
  %v952 = vpack.c.b16 %v814, %v808
  %v953 = vpack.c.b16 %v815, %v809
  %v954 = vpack.c.b16 %v822, %v816
  %v955 = vpack.c.b16 %v823, %v817
  %v956 = vpack.c.b16 %v824, %v818
  %v957 = vpack.c.b16 %v825, %v819
  %v958 = vpack.c.b16 %v826, %v820
  %v959 = vpack.c.b16 %v827, %v821
  %v960 = vpack.c.b16 %v834, %v828
  %v961 = vpack.c.b16 %v835, %v829
  %v962 = vpack.c.b16 %v836, %v830
  %v963 = vpack.c.b16 %v837, %v831
  %v964 = vpack.c.b16 %v838, %v832
  %v965 = vpack.c.b16 %v839, %v833
  %v966 = vpack.c.b16 %v846, %v840
  %v967 = vpack.c.b16 %v847, %v841
  %v968 = vpack.c.b16 %v848, %v842
  %v969 = vpack.c.b16 %v849, %v843
  %v970 = vpack.c.b16 %v850, %v844
  %v971 = vpack.c.b16 %v851, %v845
  %v972 = vpack.c.b16 %v858, %v852
  %v973 = vpack.c.b16 %v859, %v853
  %v974 = vpack.c.b16 %v860, %v854
  %v975 = vpack.c.b16 %v861, %v855
  %v976 = vpack.c.b16 %v862, %v856
  %v977 = vpack.c.b16 %v863, %v857
  %v978 = vpack.c.b16 %v870, %v864
  %v979 = vpack.c.b16 %v871, %v865
  %v980 = vpack.c.b16 %v872, %v866
  %v981 = vpack.c.b16 %v873, %v867
  %v982 = vpack.c.b16 %v874, %v868
  %v983 = vpack.c.b16 %v875, %v869
  %v984 = vpack.c.b16 %v882, %v876
  %v985 = vpack.c.b16 %v883, %v877
  %v986 = vpack.c.b16 %v884, %v878
  %v987 = vpack.c.b16 %v885, %v879
  %v988 = vpack.c.b16 %v886, %v880
  %v989 = vpack.c.b16 %v887, %v881
  %v990 = vpack.c.b16 %v894, %v888
  %v991 = vpack.c.b16 %v895, %v889
  %v992 = vpack.c.b16 %v896, %v890
  %v993 = vpack.c.b16 %v897, %v891
  %v994 = vpack.c.b16 %v898, %v892
  %v995 = vpack.c.b16 %v899, %v893
  %1092 = vmatprep.subr.bf16.mxu0 %v901
  %1093 = vmatpush1.bf16.msra.mxu0 %v900
  %1094 = vmatprep.subr.bf16.mxu0 %v907
  %1095 = vmatpush1.bf16.msra.mxu0 %v906
  %1096 = vmatprep.subr.bf16.mxu0 %v913
  %1097 = vmatpush1.bf16.msra.mxu0 %v912
  %1098 = vmatprep.subr.bf16.mxu0 %v919
  %1099 = vmatpush1.bf16.msra.mxu0 %v918
  %1100 = vmatprep.subr.bf16.mxu0 %v925
  %1101 = vmatpush1.bf16.msra.mxu0 %v924
  %1102 = vmatprep.subr.bf16.mxu0 %v931
  %1103 = vmatpush1.bf16.msra.mxu0 %v930
  %1104 = vmatprep.subr.bf16.mxu0 %v937
  %1105 = vmatpush1.bf16.msra.mxu0 %v936
  %1106 = vmatprep.subr.bf16.mxu0 %v943
  %1107 = vmatpush1.bf16.msra.mxu0 %v942
  %1108 = vmatprep.subr.bf16.mxu0 %v949
  %1109 = vmatpush1.bf16.msra.mxu0 %v948
  %1110 = vmatprep.subr.bf16.mxu0 %v955
  %1111 = vmatpush1.bf16.msra.mxu0 %v954
  %1112 = vmatprep.subr.bf16.mxu0 %v961
  %1113 = vmatpush1.bf16.msra.mxu0 %v960
  %1114 = vmatprep.subr.bf16.mxu0 %v967
  %1115 = vmatpush1.bf16.msra.mxu0 %v966
  %1116 = vmatprep.subr.bf16.mxu0 %v973
  %1117 = vmatpush1.bf16.msra.mxu0 %v972
  %1118 = vmatprep.subr.bf16.mxu0 %v979
  %1119 = vmatpush1.bf16.msra.mxu0 %v978
  %1120 = vmatprep.subr.bf16.mxu0 %v985
  %1121 = vmatpush1.bf16.msra.mxu0 %v984
  %1122 = vmatprep.subr.bf16.mxu0 %v991
  %1123 = vmatpush1.bf16.msra.mxu0 %v990
  %1124 = vmatprep.mubr.bf16.mxu0 %v467
  %1125 = vmatmul.mubr.bf16.gmra.mrb[0].mxu0 %v466
  %v1126 = vpop.f32.mrb[0].mxu0
  %v1127 = vadd.f32 %v585, %v1126
  %v1128 = vpop.f32.mrb[0].mxu0
  %v1129 = vadd.f32 %v589, %v1128
  %v1130 = vpop.f32.mrb[0].mxu0
  %v1131 = vadd.f32 %v585, %v1130
  %v1132 = vpop.f32.mrb[0].mxu0
  %v1133 = vadd.f32 %v589, %v1132
  %1134 = vmatprep.mubr.bf16.mxu0 %v469
  %1135 = vmatmul.mubr.bf16.gmra.mrb[0].mxu0 %v468
  %v1136 = vpop.f32.mrb[0].mxu0
  %v1137 = vadd.f32 %v585, %v1136
  %v1138 = vpop.f32.mrb[0].mxu0
  %v1139 = vadd.f32 %v589, %v1138
  %v1140 = vpop.f32.mrb[0].mxu0
  %v1141 = vadd.f32 %v585, %v1140
  %v1142 = vpop.f32.mrb[0].mxu0
  %v1143 = vadd.f32 %v589, %v1142
  %1144 = vmatprep.mubr.bf16.mxu0 %v471
  %1145 = vmatmul.mubr.bf16.gmra.mrb[0].mxu0 %v470
  %v1146 = vpop.f32.mrb[0].mxu0
  %v1147 = vadd.f32 %v585, %v1146
  %v1148 = vpop.f32.mrb[0].mxu0
  %v1149 = vadd.f32 %v589, %v1148
  %v1150 = vpop.f32.mrb[0].mxu0
  %v1151 = vadd.f32 %v585, %v1150
  %v1152 = vpop.f32.mrb[0].mxu0
  %v1153 = vadd.f32 %v589, %v1152
  %1154 = vmatprep.mubr.bf16.mxu0 %v473
  %1155 = vmatmul.mubr.bf16.gmra.mrb[0].mxu0 %v472
  %v1156 = vpop.f32.mrb[0].mxu0
  %v1157 = vadd.f32 %v585, %v1156
  %v1158 = vpop.f32.mrb[0].mxu0
  %v1159 = vadd.f32 %v589, %v1158
  %v1160 = vpop.f32.mrb[0].mxu0
  %v1161 = vadd.f32 %v585, %v1160
  %v1162 = vpop.f32.mrb[0].mxu0
  %v1163 = vadd.f32 %v589, %v1162
  %1164 = vmatprep.mubr.bf16.mxu0 %v475
  %1165 = vmatmul.mubr.bf16.gmra.mrb[0].mxu0 %v474
  %v1166 = vpop.f32.mrb[0].mxu0
  %v1167 = vadd.f32 %v585, %v1166
  %v1168 = vpop.f32.mrb[0].mxu0
  %v1169 = vadd.f32 %v589, %v1168
  %v1170 = vpop.f32.mrb[0].mxu0
  %v1171 = vadd.f32 %v585, %v1170
  %v1172 = vpop.f32.mrb[0].mxu0
  %v1173 = vadd.f32 %v589, %v1172
  %1174 = vmatprep.mubr.bf16.mxu0 %v477
  %1175 = vmatmul.mubr.bf16.gmra.mrb[0].mxu0 %v476
  %v1176 = vpop.f32.mrb[0].mxu0
  %v1177 = vadd.f32 %v585, %v1176
  %v1178 = vpop.f32.mrb[0].mxu0
  %v1179 = vadd.f32 %v589, %v1178
  %v1180 = vpop.f32.mrb[0].mxu0
  %v1181 = vadd.f32 %v585, %v1180
  %v1182 = vpop.f32.mrb[0].mxu0
  %v1183 = vadd.f32 %v589, %v1182
  %1184 = vmatprep.mubr.bf16.mxu0 %v479
  %1185 = vmatmul.mubr.bf16.gmra.mrb[0].mxu0 %v478
  %v1186 = vpop.f32.mrb[0].mxu0
  %v1187 = vadd.f32 %v585, %v1186
  %v1188 = vpop.f32.mrb[0].mxu0
  %v1189 = vadd.f32 %v589, %v1188
  %v1190 = vpop.f32.mrb[0].mxu0
  %v1191 = vadd.f32 %v585, %v1190
  %v1192 = vpop.f32.mrb[0].mxu0
  %v1193 = vadd.f32 %v589, %v1192
  %1194 = vmatprep.mubr.bf16.mxu0 %v481
  %1195 = vmatmul.mubr.bf16.gmra.mrb[0].mxu0 %v480
  %v1196 = vpop.f32.mrb[0].mxu0
  %v1197 = vadd.f32 %v585, %v1196
  %v1198 = vpop.f32.mrb[0].mxu0
  %v1199 = vadd.f32 %v589, %v1198
  %v1200 = vpop.f32.mrb[0].mxu0
  %v1201 = vadd.f32 %v585, %v1200
  %v1202 = vpop.f32.mrb[0].mxu0
  %v1203 = vadd.f32 %v589, %v1202
  %1204 = vmatprep.mubr.bf16.mxu0 %v483
  %1205 = vmatmul.mubr.bf16.gmra.mrb[0].mxu0 %v482
  %v1206 = vpop.f32.mrb[0].mxu0
  %v1207 = vadd.f32 %v585, %v1206
  %v1208 = vpop.f32.mrb[0].mxu0
  %v1209 = vadd.f32 %v589, %v1208
  %v1210 = vpop.f32.mrb[0].mxu0
  %v1211 = vadd.f32 %v585, %v1210
  %v1212 = vpop.f32.mrb[0].mxu0
  %v1213 = vadd.f32 %v589, %v1212
  %1214 = vdwg.mxu0
  %1215 = vmatprep.subr.bf16.mxu0 %v903
  %1216 = vmatpush1.bf16.msra.mxu0 %v902
  %1217 = vmatprep.subr.bf16.mxu0 %v909
  %1218 = vmatpush1.bf16.msra.mxu0 %v908
  %1219 = vmatprep.subr.bf16.mxu0 %v915
  %1220 = vmatpush1.bf16.msra.mxu0 %v914
  %1221 = vmatprep.subr.bf16.mxu0 %v921
  %1222 = vmatpush1.bf16.msra.mxu0 %v920
  %1223 = vmatprep.subr.bf16.mxu0 %v927
  %1224 = vmatpush1.bf16.msra.mxu0 %v926
  %1225 = vmatprep.subr.bf16.mxu0 %v933
  %1226 = vmatpush1.bf16.msra.mxu0 %v932
  %1227 = vmatprep.subr.bf16.mxu0 %v939
  %1228 = vmatpush1.bf16.msra.mxu0 %v938
  %1229 = vmatprep.subr.bf16.mxu0 %v945
  %1230 = vmatpush1.bf16.msra.mxu0 %v944
  %1231 = vmatprep.subr.bf16.mxu0 %v951
  %1232 = vmatpush1.bf16.msra.mxu0 %v950
  %1233 = vmatprep.subr.bf16.mxu0 %v957
  %1234 = vmatpush1.bf16.msra.mxu0 %v956
  %1235 = vmatprep.subr.bf16.mxu0 %v963
  %1236 = vmatpush1.bf16.msra.mxu0 %v962
  %1237 = vmatprep.subr.bf16.mxu0 %v969
  %1238 = vmatpush1.bf16.msra.mxu0 %v968
  %1239 = vmatprep.subr.bf16.mxu0 %v975
  %1240 = vmatpush1.bf16.msra.mxu0 %v974
  %1241 = vmatprep.subr.bf16.mxu0 %v981
  %1242 = vmatpush1.bf16.msra.mxu0 %v980
  %1243 = vmatprep.subr.bf16.mxu0 %v987
  %1244 = vmatpush1.bf16.msra.mxu0 %v986
  %1245 = vmatprep.subr.bf16.mxu0 %v993
  %1246 = vmatpush1.bf16.msra.mxu0 %v992
  %1247 = vmatprep.mubr.bf16.mxu0 %v467
  %1248 = vmatmul.mubr.bf16.gmra.mrb[0].mxu0 %v466
  %v1249 = vpop.f32.mrb[0].mxu0
  %v1250 = vadd.f32 %v593, %v1249
  %v1251 = vpop.f32.mrb[0].mxu0
  %v1252 = vadd.f32 %v597, %v1251
  %v1253 = vpop.f32.mrb[0].mxu0
  %v1254 = vadd.f32 %v593, %v1253
  %v1255 = vpop.f32.mrb[0].mxu0
  %v1256 = vadd.f32 %v597, %v1255
  %1257 = vmatprep.mubr.bf16.mxu0 %v469
  %1258 = vmatmul.mubr.bf16.gmra.mrb[0].mxu0 %v468
  %v1259 = vpop.f32.mrb[0].mxu0
  %v1260 = vadd.f32 %v593, %v1259
  %v1261 = vpop.f32.mrb[0].mxu0
  %v1262 = vadd.f32 %v597, %v1261
  %v1263 = vpop.f32.mrb[0].mxu0
  %v1264 = vadd.f32 %v593, %v1263
  %v1265 = vpop.f32.mrb[0].mxu0
  %v1266 = vadd.f32 %v597, %v1265
  %1267 = vmatprep.mubr.bf16.mxu0 %v471
  %1268 = vmatmul.mubr.bf16.gmra.mrb[0].mxu0 %v470
  %v1269 = vpop.f32.mrb[0].mxu0
  %v1270 = vadd.f32 %v593, %v1269
  %v1271 = vpop.f32.mrb[0].mxu0
  %v1272 = vadd.f32 %v597, %v1271
  %v1273 = vpop.f32.mrb[0].mxu0
  %v1274 = vadd.f32 %v593, %v1273
  %v1275 = vpop.f32.mrb[0].mxu0
  %v1276 = vadd.f32 %v597, %v1275
  %1277 = vmatprep.mubr.bf16.mxu0 %v473
  %1278 = vmatmul.mubr.bf16.gmra.mrb[0].mxu0 %v472
  %v1279 = vpop.f32.mrb[0].mxu0
  %v1280 = vadd.f32 %v593, %v1279
  %v1281 = vpop.f32.mrb[0].mxu0
  %v1282 = vadd.f32 %v597, %v1281
  %v1283 = vpop.f32.mrb[0].mxu0
  %v1284 = vadd.f32 %v593, %v1283
  %v1285 = vpop.f32.mrb[0].mxu0
  %v1286 = vadd.f32 %v597, %v1285
  %1287 = vmatprep.mubr.bf16.mxu0 %v475
  %1288 = vmatmul.mubr.bf16.gmra.mrb[0].mxu0 %v474
  %v1289 = vpop.f32.mrb[0].mxu0
  %v1290 = vadd.f32 %v593, %v1289
  %v1291 = vpop.f32.mrb[0].mxu0
  %v1292 = vadd.f32 %v597, %v1291
  %v1293 = vpop.f32.mrb[0].mxu0
  %v1294 = vadd.f32 %v593, %v1293
  %v1295 = vpop.f32.mrb[0].mxu0
  %v1296 = vadd.f32 %v597, %v1295
  %1297 = vmatprep.mubr.bf16.mxu0 %v477
  %1298 = vmatmul.mubr.bf16.gmra.mrb[0].mxu0 %v476
  %v1299 = vpop.f32.mrb[0].mxu0
  %v1300 = vadd.f32 %v593, %v1299
  %v1301 = vpop.f32.mrb[0].mxu0
  %v1302 = vadd.f32 %v597, %v1301
  %v1303 = vpop.f32.mrb[0].mxu0
  %v1304 = vadd.f32 %v593, %v1303
  %v1305 = vpop.f32.mrb[0].mxu0
  %v1306 = vadd.f32 %v597, %v1305
  %1307 = vmatprep.mubr.bf16.mxu0 %v479
  %1308 = vmatmul.mubr.bf16.gmra.mrb[0].mxu0 %v478
  %v1309 = vpop.f32.mrb[0].mxu0
  %v1310 = vadd.f32 %v593, %v1309
  %v1311 = vpop.f32.mrb[0].mxu0
  %v1312 = vadd.f32 %v597, %v1311
  %v1313 = vpop.f32.mrb[0].mxu0
  %v1314 = vadd.f32 %v593, %v1313
  %v1315 = vpop.f32.mrb[0].mxu0
  %v1316 = vadd.f32 %v597, %v1315
  %1317 = vmatprep.mubr.bf16.mxu0 %v481
  %1318 = vmatmul.mubr.bf16.gmra.mrb[0].mxu0 %v480
  %v1319 = vpop.f32.mrb[0].mxu0
  %v1320 = vadd.f32 %v593, %v1319
  %v1321 = vpop.f32.mrb[0].mxu0
  %v1322 = vadd.f32 %v597, %v1321
  %v1323 = vpop.f32.mrb[0].mxu0
  %v1324 = vadd.f32 %v593, %v1323
  %v1325 = vpop.f32.mrb[0].mxu0
  %v1326 = vadd.f32 %v597, %v1325
  %1327 = vmatprep.mubr.bf16.mxu0 %v483
  %1328 = vmatmul.mubr.bf16.gmra.mrb[0].mxu0 %v482
  %v1329 = vpop.f32.mrb[0].mxu0
  %v1330 = vadd.f32 %v593, %v1329
  %v1331 = vpop.f32.mrb[0].mxu0
  %v1332 = vadd.f32 %v597, %v1331
  %v1333 = vpop.f32.mrb[0].mxu0
  %v1334 = vadd.f32 %v593, %v1333
  %v1335 = vpop.f32.mrb[0].mxu0
  %v1336 = vadd.f32 %v597, %v1335
  %1337 = vdwg.mxu0
  %1338 = vmatprep.subr.bf16.mxu0 %v905
  %1339 = vmatpush1.bf16.msra.mxu0 %v904
  %1340 = vmatprep.subr.bf16.mxu0 %v911
  %1341 = vmatpush1.bf16.msra.mxu0 %v910
  %1342 = vmatprep.subr.bf16.mxu0 %v917
  %1343 = vmatpush1.bf16.msra.mxu0 %v916
  %1344 = vmatprep.subr.bf16.mxu0 %v923
  %1345 = vmatpush1.bf16.msra.mxu0 %v922
  %1346 = vmatprep.subr.bf16.mxu0 %v929
  %1347 = vmatpush1.bf16.msra.mxu0 %v928
  %1348 = vmatprep.subr.bf16.mxu0 %v935
  %1349 = vmatpush1.bf16.msra.mxu0 %v934
  %1350 = vmatprep.subr.bf16.mxu0 %v941
  %1351 = vmatpush1.bf16.msra.mxu0 %v940
  %1352 = vmatprep.subr.bf16.mxu0 %v947
  %1353 = vmatpush1.bf16.msra.mxu0 %v946
  %1354 = vmatprep.subr.bf16.mxu0 %v953
  %1355 = vmatpush1.bf16.msra.mxu0 %v952
  %1356 = vmatprep.subr.bf16.mxu0 %v959
  %1357 = vmatpush1.bf16.msra.mxu0 %v958
  %1358 = vmatprep.subr.bf16.mxu0 %v965
  %1359 = vmatpush1.bf16.msra.mxu0 %v964
  %1360 = vmatprep.subr.bf16.mxu0 %v971
  %1361 = vmatpush1.bf16.msra.mxu0 %v970
  %1362 = vmatprep.subr.bf16.mxu0 %v977
  %1363 = vmatpush1.bf16.msra.mxu0 %v976
  %1364 = vmatprep.subr.bf16.mxu0 %v983
  %1365 = vmatpush1.bf16.msra.mxu0 %v982
  %1366 = vmatprep.subr.bf16.mxu0 %v989
  %1367 = vmatpush1.bf16.msra.mxu0 %v988
  %1368 = vmatprep.subr.bf16.mxu0 %v995
  %1369 = vmatpush1.bf16.msra.mxu0 %v994
  %1370 = vmatprep.mubr.bf16.mxu0 %v467
  %1371 = vmatmul.mubr.bf16.gmra.mrb[0].mxu0 %v466
  %v1372 = vpop.f32.mrb[0].mxu0
  %v1373 = vadd.f32 %v601, %v1372
  %v1374 = vpop.f32.mrb[0].mxu0
  %v1375 = vadd.f32 %v605, %v1374
  %v1376 = vpop.f32.mrb[0].mxu0
  %v1377 = vadd.f32 %v601, %v1376
  %v1378 = vpop.f32.mrb[0].mxu0
  %v1379 = vadd.f32 %v605, %v1378
  %1380 = vmatprep.mubr.bf16.mxu0 %v469
  %1381 = vmatmul.mubr.bf16.gmra.mrb[0].mxu0 %v468
  %v1382 = vpop.f32.mrb[0].mxu0
  %v1383 = vadd.f32 %v601, %v1382
  %v1384 = vpop.f32.mrb[0].mxu0
  %v1385 = vadd.f32 %v605, %v1384
  %v1386 = vpop.f32.mrb[0].mxu0
  %v1387 = vadd.f32 %v601, %v1386
  %v1388 = vpop.f32.mrb[0].mxu0
  %v1389 = vadd.f32 %v605, %v1388
  %1390 = vmatprep.mubr.bf16.mxu0 %v471
  %1391 = vmatmul.mubr.bf16.gmra.mrb[0].mxu0 %v470
  %v1392 = vpop.f32.mrb[0].mxu0
  %v1393 = vadd.f32 %v601, %v1392
  %v1394 = vpop.f32.mrb[0].mxu0
  %v1395 = vadd.f32 %v605, %v1394
  %v1396 = vpop.f32.mrb[0].mxu0
  %v1397 = vadd.f32 %v601, %v1396
  %v1398 = vpop.f32.mrb[0].mxu0
  %v1399 = vadd.f32 %v605, %v1398
  %1400 = vmatprep.mubr.bf16.mxu0 %v473
  %1401 = vmatmul.mubr.bf16.gmra.mrb[0].mxu0 %v472
  %v1402 = vpop.f32.mrb[0].mxu0
  %v1403 = vadd.f32 %v601, %v1402
  %v1404 = vpop.f32.mrb[0].mxu0
  %v1405 = vadd.f32 %v605, %v1404
  %v1406 = vpop.f32.mrb[0].mxu0
  %v1407 = vadd.f32 %v601, %v1406
  %v1408 = vpop.f32.mrb[0].mxu0
  %v1409 = vadd.f32 %v605, %v1408
  %1410 = vmatprep.mubr.bf16.mxu0 %v475
  %1411 = vmatmul.mubr.bf16.gmra.mrb[0].mxu0 %v474
  %v1412 = vpop.f32.mrb[0].mxu0
  %v1413 = vadd.f32 %v601, %v1412
  %v1414 = vpop.f32.mrb[0].mxu0
  %v1415 = vadd.f32 %v605, %v1414
  %v1416 = vpop.f32.mrb[0].mxu0
  %v1417 = vadd.f32 %v601, %v1416
  %v1418 = vpop.f32.mrb[0].mxu0
  %v1419 = vadd.f32 %v605, %v1418
  %1420 = vmatprep.mubr.bf16.mxu0 %v477
  %1421 = vmatmul.mubr.bf16.gmra.mrb[0].mxu0 %v476
  %v1422 = vpop.f32.mrb[0].mxu0
  %v1423 = vadd.f32 %v601, %v1422
  %v1424 = vpop.f32.mrb[0].mxu0
  %v1425 = vadd.f32 %v605, %v1424
  %v1426 = vpop.f32.mrb[0].mxu0
  %v1427 = vadd.f32 %v601, %v1426
  %v1428 = vpop.f32.mrb[0].mxu0
  %v1429 = vadd.f32 %v605, %v1428
  %1430 = vmatprep.mubr.bf16.mxu0 %v479
  %1431 = vmatmul.mubr.bf16.gmra.mrb[0].mxu0 %v478
  %v1432 = vpop.f32.mrb[0].mxu0
  %v1433 = vadd.f32 %v601, %v1432
  %v1434 = vpop.f32.mrb[0].mxu0
  %v1435 = vadd.f32 %v605, %v1434
  %v1436 = vpop.f32.mrb[0].mxu0
  %v1437 = vadd.f32 %v601, %v1436
  %v1438 = vpop.f32.mrb[0].mxu0
  %v1439 = vadd.f32 %v605, %v1438
  %1440 = vmatprep.mubr.bf16.mxu0 %v481
  %1441 = vmatmul.mubr.bf16.gmra.mrb[0].mxu0 %v480
  %v1442 = vpop.f32.mrb[0].mxu0
  %v1443 = vadd.f32 %v601, %v1442
  %v1444 = vpop.f32.mrb[0].mxu0
  %v1445 = vadd.f32 %v605, %v1444
  %v1446 = vpop.f32.mrb[0].mxu0
  %v1447 = vadd.f32 %v601, %v1446
  %v1448 = vpop.f32.mrb[0].mxu0
  %v1449 = vadd.f32 %v605, %v1448
  %1450 = vmatprep.mubr.bf16.mxu0 %v483
  %1451 = vmatmul.mubr.bf16.gmra.mrb[0].mxu0 %v482
  %v1452 = vpop.f32.mrb[0].mxu0
  %v1453 = vadd.f32 %v601, %v1452
  %v1454 = vpop.f32.mrb[0].mxu0
  %v1455 = vadd.f32 %v605, %v1454
  %v1456 = vpop.f32.mrb[0].mxu0
  %v1457 = vadd.f32 %v601, %v1456
  %v1458 = vpop.f32.mrb[0].mxu0
  %v1459 = vadd.f32 %v605, %v1458
  %1460 = vdwg.mxu0
  %v1461 = vlaneseq
  %v1462 = vand.u32 %v1461, 127
  %vm1463 = vcmp.lt.s32.totalorder %v1462, 65
  %v1464 = vsel %vm1463, 0.0, -1e+09
  %v1465 = vpack.c.bf16 %v1131, %v1127
  %v1466 = vpack.c.bf16 %v1141, %v1137
  %v1467 = vpack.c.bf16 %v1151, %v1147
  %v1468 = vpack.c.bf16 %v1161, %v1157
  %v1469 = vpack.c.bf16 %v1167, %v1167
  %v1470 = vpack.c.bf16 %v1177, %v1171
  %v1471 = vpack.c.bf16 %v1187, %v1181
  %v1472 = vpack.c.bf16 %v1197, %v1191
  %v1473 = vpack.c.bf16 %v1207, %v1201
  %v1474 = vpack.c.bf16 %v1211, %v1211
  %v1475 = vpack.c.bf16 %v1254, %v1250
  %v1476 = vpack.c.bf16 %v1264, %v1260
  %v1477 = vpack.c.bf16 %v1274, %v1270
  %v1478 = vpack.c.bf16 %v1284, %v1280
  %v1479 = vpack.c.bf16 %v1290, %v1290
  %v1480 = vpack.c.bf16 %v1300, %v1294
  %v1481 = vpack.c.bf16 %v1310, %v1304
  %v1482 = vpack.c.bf16 %v1320, %v1314
  %v1483 = vpack.c.bf16 %v1330, %v1324
  %v1484 = vpack.c.bf16 %v1334, %v1334
  %vm1485 = vcmask 523264
  %v1487 = vsel %vm1485, %v1465, 0
  %v1490 = vsel %vm1485, %v1466, 0
  %v1493 = vsel %vm1485, %v1467, 0
  %v1496 = vsel %vm1485, %v1468, 0
  %v1499 = vsel %vm1485, %v1469, 0
  %v1502 = vsel %vm1485, %v1475, 0
  %v1505 = vsel %vm1485, %v1476, 0
  %v1508 = vsel %vm1485, %v1477, 0
  %v1511 = vsel %vm1485, %v1478, 0
  %v1514 = vsel %vm1485, %v1479, 0
  %1516 = vmatprep.subr.bf16.mxu0 0
  %1517 = vmatpush1.bf16.xpose.msra.mxu0 %v1502
  %1518 = vmatprep.subr.bf16.mxu0 0
  %1519 = vmatpush1.bf16.xpose.msra.mxu0 %v1505
  %1520 = vmatprep.subr.bf16.mxu0 0
  %1521 = vmatpush1.bf16.xpose.msra.mxu0 %v1508
  %1522 = vmatprep.subr.bf16.mxu0 0
  %1523 = vmatpush1.bf16.xpose.msra.mxu0 %v1511
  %1524 = vmatprep.subr.bf16.mxu0 0
  %1525 = vmatpush1.bf16.xpose.msra.mxu0 %v1514
  %1526 = vmatprep.subr.bf16.mxu0 0
  %1527 = vmatpush1.bf16.xpose.msra.mxu0 0
  %1528 = vmatprep.subr.bf16.mxu0 0
  %1529 = vmatpush1.bf16.xpose.msra.mxu0 0
  %1530 = vmatprep.subr.bf16.mxu0 0
  %1531 = vmatpush1.bf16.xpose.msra.mxu0 0
  %1532 = vmatprep.subr.bf16.mxu0 0
  %1533 = vmatpush1.bf16.xpose.msra.mxu0 0
  %1534 = vmatprep.subr.bf16.mxu0 0
  %1535 = vmatpush1.bf16.xpose.msra.mxu0 0
  %1536 = vmatprep.subr.bf16.mxu0 0
  %1537 = vmatpush1.bf16.xpose.msra.mxu0 0
  %1538 = vmatprep.subr.bf16.mxu0 0
  %1539 = vmatpush1.bf16.xpose.msra.mxu0 0
  %1540 = vmatprep.subr.bf16.mxu0 0
  %1541 = vmatpush1.bf16.xpose.msra.mxu0 0
  %1542 = vmatprep.subr.bf16.mxu0 0
  %1543 = vmatpush1.bf16.xpose.msra.mxu0 0
  %1544 = vmatprep.subr.bf16.mxu0 0
  %1545 = vmatpush1.bf16.xpose.msra.mxu0 0
  %1546 = vmatprep.subr.bf16.mxu0 0
  %1547 = vmatpush1.bf16.xpose.msra.mxu0 0
  %1548 = vmatprep.mubr.bf16.mxu0 0
  %1549 = vmatmul.mubr.bf16.gmra.mrb[0].mxu0 %v1487
  %v1550 = vpop.f32.mrb[0].mxu0
  %v1551 = vadd.f32 0.0, %v1550
  %v1552 = vpop.f32.mrb[0].mxu0
  %v1553 = vpop.f32.mrb[0].mxu0
  %v1554 = vadd.f32 0.0, %v1553
  %v1555 = vpop.f32.mrb[0].mxu0
  %1556 = vmatprep.mubr.bf16.mxu0 0
  %1557 = vmatmul.mubr.bf16.gmra.mrb[0].mxu0 %v1490
  %v1558 = vpop.f32.mrb[0].mxu0
  %v1559 = vadd.f32 0.0, %v1558
  %v1560 = vpop.f32.mrb[0].mxu0
  %v1561 = vpop.f32.mrb[0].mxu0
  %v1562 = vadd.f32 0.0, %v1561
  %v1563 = vpop.f32.mrb[0].mxu0
  %1564 = vmatprep.mubr.bf16.mxu0 0
  %1565 = vmatmul.mubr.bf16.gmra.mrb[0].mxu0 %v1493
  %v1566 = vpop.f32.mrb[0].mxu0
  %v1567 = vadd.f32 0.0, %v1566
  %v1568 = vpop.f32.mrb[0].mxu0
  %v1569 = vpop.f32.mrb[0].mxu0
  %v1570 = vadd.f32 0.0, %v1569
  %v1571 = vpop.f32.mrb[0].mxu0
  %1572 = vmatprep.mubr.bf16.mxu0 0
  %1573 = vmatmul.mubr.bf16.gmra.mrb[0].mxu0 %v1496
  %v1574 = vpop.f32.mrb[0].mxu0
  %v1575 = vadd.f32 0.0, %v1574
  %v1576 = vpop.f32.mrb[0].mxu0
  %v1577 = vpop.f32.mrb[0].mxu0
  %v1578 = vadd.f32 0.0, %v1577
  %v1579 = vpop.f32.mrb[0].mxu0
  %1580 = vmatprep.mubr.bf16.mxu0 0
  %1581 = vmatmul.mubr.bf16.gmra.mrb[0].mxu0 %v1499
  %v1582 = vpop.f32.mrb[0].mxu0
  %v1583 = vadd.f32 0.0, %v1582
  %v1584 = vpop.f32.mrb[0].mxu0
  %v1585 = vpop.f32.mrb[0].mxu0
  %v1586 = vpop.f32.mrb[0].mxu0
  %1587 = vdwg.mxu0
  %v1589 = vsel %vm1485, %v1470, 0
  %v1592 = vsel %vm1485, %v1471, 0
  %v1595 = vsel %vm1485, %v1472, 0
  %v1598 = vsel %vm1485, %v1473, 0
  %v1601 = vsel %vm1485, %v1474, 0
  %v1604 = vsel %vm1485, %v1480, 0
  %v1607 = vsel %vm1485, %v1481, 0
  %v1610 = vsel %vm1485, %v1482, 0
  %v1613 = vsel %vm1485, %v1483, 0
  %v1616 = vsel %vm1485, %v1484, 0
  %1618 = vmatprep.subr.bf16.mxu0 0
  %1619 = vmatpush1.bf16.xpose.msra.mxu0 %v1604
  %1620 = vmatprep.subr.bf16.mxu0 0
  %1621 = vmatpush1.bf16.xpose.msra.mxu0 %v1607
  %1622 = vmatprep.subr.bf16.mxu0 0
  %1623 = vmatpush1.bf16.xpose.msra.mxu0 %v1610
  %1624 = vmatprep.subr.bf16.mxu0 0
  %1625 = vmatpush1.bf16.xpose.msra.mxu0 %v1613
  %1626 = vmatprep.subr.bf16.mxu0 0
  %1627 = vmatpush1.bf16.xpose.msra.mxu0 %v1616
  %1628 = vmatprep.subr.bf16.mxu0 0
  %1629 = vmatpush1.bf16.xpose.msra.mxu0 0
  %1630 = vmatprep.subr.bf16.mxu0 0
  %1631 = vmatpush1.bf16.xpose.msra.mxu0 0
  %1632 = vmatprep.subr.bf16.mxu0 0
  %1633 = vmatpush1.bf16.xpose.msra.mxu0 0
  %1634 = vmatprep.subr.bf16.mxu0 0
  %1635 = vmatpush1.bf16.xpose.msra.mxu0 0
  %1636 = vmatprep.subr.bf16.mxu0 0
  %1637 = vmatpush1.bf16.xpose.msra.mxu0 0
  %1638 = vmatprep.subr.bf16.mxu0 0
  %1639 = vmatpush1.bf16.xpose.msra.mxu0 0
  %1640 = vmatprep.subr.bf16.mxu0 0
  %1641 = vmatpush1.bf16.xpose.msra.mxu0 0
  %1642 = vmatprep.subr.bf16.mxu0 0
  %1643 = vmatpush1.bf16.xpose.msra.mxu0 0
  %1644 = vmatprep.subr.bf16.mxu0 0
  %1645 = vmatpush1.bf16.xpose.msra.mxu0 0
  %1646 = vmatprep.subr.bf16.mxu0 0
  %1647 = vmatpush1.bf16.xpose.msra.mxu0 0
  %1648 = vmatprep.subr.bf16.mxu0 0
  %1649 = vmatpush1.bf16.xpose.msra.mxu0 0
  %1650 = vmatprep.mubr.bf16.mxu0 0
  %1651 = vmatmul.mubr.bf16.gmra.mrb[0].mxu0 %v1589
  %v1652 = vpop.f32.mrb[0].mxu0
  %v1653 = vadd.f32 0.0, %v1652
  %v1654 = vpop.f32.mrb[0].mxu0
  %v1655 = vpop.f32.mrb[0].mxu0
  %v1656 = vadd.f32 0.0, %v1655
  %v1657 = vpop.f32.mrb[0].mxu0
  %1658 = vmatprep.mubr.bf16.mxu0 0
  %1659 = vmatmul.mubr.bf16.gmra.mrb[0].mxu0 %v1592
  %v1660 = vpop.f32.mrb[0].mxu0
  %v1661 = vadd.f32 0.0, %v1660
  %v1662 = vpop.f32.mrb[0].mxu0
  %v1663 = vpop.f32.mrb[0].mxu0
  %v1664 = vadd.f32 0.0, %v1663
  %v1665 = vpop.f32.mrb[0].mxu0
  %1666 = vmatprep.mubr.bf16.mxu0 0
  %1667 = vmatmul.mubr.bf16.gmra.mrb[0].mxu0 %v1595
  %v1668 = vpop.f32.mrb[0].mxu0
  %v1669 = vadd.f32 0.0, %v1668
  %v1670 = vpop.f32.mrb[0].mxu0
  %v1671 = vpop.f32.mrb[0].mxu0
  %v1672 = vadd.f32 0.0, %v1671
  %v1673 = vpop.f32.mrb[0].mxu0
  %1674 = vmatprep.mubr.bf16.mxu0 0
  %1675 = vmatmul.mubr.bf16.gmra.mrb[0].mxu0 %v1598
  %v1676 = vpop.f32.mrb[0].mxu0
  %v1677 = vadd.f32 0.0, %v1676
  %v1678 = vpop.f32.mrb[0].mxu0
  %v1679 = vpop.f32.mrb[0].mxu0
  %v1680 = vadd.f32 0.0, %v1679
  %v1681 = vpop.f32.mrb[0].mxu0
  %1682 = vmatprep.mubr.bf16.mxu0 0
  %1683 = vmatmul.mubr.bf16.gmra.mrb[0].mxu0 %v1601
  %v1684 = vpop.f32.mrb[0].mxu0
  %v1685 = vadd.f32 0.0, %v1684
  %v1686 = vpop.f32.mrb[0].mxu0
  %v1687 = vpop.f32.mrb[0].mxu0
  %v1688 = vpop.f32.mrb[0].mxu0
  %1689 = vdwg.mxu0
  %v1690 = vmul.f32 %v1551, 0.125
  %v1691 = vmul.f32 %v1554, 0.125
  %v1692 = vmul.f32 %v1559, 0.125
  %v1693 = vmul.f32 %v1562, 0.125
  %v1694 = vmul.f32 %v1567, 0.125
  %v1695 = vmul.f32 %v1570, 0.125
  %v1696 = vmul.f32 %v1575, 0.125
  %v1697 = vmul.f32 %v1578, 0.125
  %v1698 = vmul.f32 %v1583, 0.125
  %v1699 = vmul.f32 %v1653, 0.125
  %v1700 = vmul.f32 %v1656, 0.125
  %v1701 = vmul.f32 %v1661, 0.125
  %v1702 = vmul.f32 %v1664, 0.125
  %v1703 = vmul.f32 %v1669, 0.125
  %v1704 = vmul.f32 %v1672, 0.125
  %v1705 = vmul.f32 %v1677, 0.125
  %v1706 = vmul.f32 %v1680, 0.125
  %v1707 = vmul.f32 %v1685, 0.125
  %v1708 = vadd.f32 %v1690, %v1464
  %v1709 = vadd.f32 %v1691, %v1464
  %v1710 = vadd.f32 %v1692, %v1464
  %v1711 = vadd.f32 %v1693, %v1464
  %v1712 = vadd.f32 %v1694, %v1464
  %v1713 = vadd.f32 %v1695, %v1464
  %v1714 = vadd.f32 %v1696, %v1464
  %v1715 = vadd.f32 %v1697, %v1464
  %v1716 = vadd.f32 %v1698, %v1464
  %v1717 = vadd.f32 %v1699, %v1464
  %v1718 = vadd.f32 %v1700, %v1464
  %v1719 = vadd.f32 %v1701, %v1464
  %v1720 = vadd.f32 %v1702, %v1464
  %v1721 = vadd.f32 %v1703, %v1464
  %v1722 = vadd.f32 %v1704, %v1464
  %v1723 = vadd.f32 %v1705, %v1464
  %v1724 = vadd.f32 %v1706, %v1464
  %v1725 = vadd.f32 %v1707, %v1464
  %vm1726 = vcmask 588800
  %v1727 = vsel %vm1726, %v1708, -inf
  %1728 = vmax.xlane.f32.xlu0 %v1727
  %v1729 = vpop.xlane.xlu0 %1728
  %v1730 = vsel %vm1726, %v1709, -inf
  %1731 = vmax.xlane.f32.xlu0 %v1730
  %v1732 = vpop.xlane.xlu0 %1731
  %v1733 = vsel %vm1726, %v1710, -inf
  %1734 = vmax.xlane.f32.xlu0 %v1733
  %v1735 = vpop.xlane.xlu0 %1734
  %v1736 = vsel %vm1726, %v1711, -inf
  %1737 = vmax.xlane.f32.xlu0 %v1736
  %v1738 = vpop.xlane.xlu0 %1737
  %v1739 = vsel %vm1726, %v1712, -inf
  %1740 = vmax.xlane.f32.xlu0 %v1739
  %v1741 = vpop.xlane.xlu0 %1740
  %v1742 = vsel %vm1726, %v1713, -inf
  %1743 = vmax.xlane.f32.xlu0 %v1742
  %v1744 = vpop.xlane.xlu0 %1743
  %v1745 = vsel %vm1726, %v1714, -inf
  %1746 = vmax.xlane.f32.xlu0 %v1745
  %v1747 = vpop.xlane.xlu0 %1746
  %v1748 = vsel %vm1726, %v1715, -inf
  %1749 = vmax.xlane.f32.xlu0 %v1748
  %v1750 = vpop.xlane.xlu0 %1749
  %v1751 = vsel %vm1726, %v1716, -inf
  %1752 = vmax.xlane.f32.xlu0 %v1751
  %v1753 = vpop.xlane.xlu0 %1752
  %v1754 = vsel %vm1726, %v1717, -inf
  %1755 = vmax.xlane.f32.xlu0 %v1754
  %v1756 = vpop.xlane.xlu0 %1755
  %v1757 = vsel %vm1726, %v1718, -inf
  %1758 = vmax.xlane.f32.xlu0 %v1757
  %v1759 = vpop.xlane.xlu0 %1758
  %v1760 = vsel %vm1726, %v1719, -inf
  %1761 = vmax.xlane.f32.xlu0 %v1760
  %v1762 = vpop.xlane.xlu0 %1761
  %v1763 = vsel %vm1726, %v1720, -inf
  %1764 = vmax.xlane.f32.xlu0 %v1763
  %v1765 = vpop.xlane.xlu0 %1764
  %v1766 = vsel %vm1726, %v1721, -inf
  %1767 = vmax.xlane.f32.xlu0 %v1766
  %v1768 = vpop.xlane.xlu0 %1767
  %v1769 = vsel %vm1726, %v1722, -inf
  %1770 = vmax.xlane.f32.xlu0 %v1769
  %v1771 = vpop.xlane.xlu0 %1770
  %v1772 = vsel %vm1726, %v1723, -inf
  %1773 = vmax.xlane.f32.xlu0 %v1772
  %v1774 = vpop.xlane.xlu0 %1773
  %v1775 = vsel %vm1726, %v1724, -inf
  %1776 = vmax.xlane.f32.xlu0 %v1775
  %v1777 = vpop.xlane.xlu0 %1776
  %v1778 = vsel %vm1726, %v1725, -inf
  %1779 = vmax.xlane.f32.xlu0 %v1778
  %v1780 = vpop.xlane.xlu0 %1779
  %v1781 = vsub.f32 %v1708, %v1729
  %v1782 = vsub.f32 %v1709, %v1732
  %v1783 = vsub.f32 %v1710, %v1735
  %v1784 = vsub.f32 %v1711, %v1738
  %v1785 = vsub.f32 %v1712, %v1741
  %v1786 = vsub.f32 %v1713, %v1744
  %v1787 = vsub.f32 %v1714, %v1747
  %v1788 = vsub.f32 %v1715, %v1750
  %v1789 = vsub.f32 %v1716, %v1753
  %v1790 = vsub.f32 %v1717, %v1756
  %v1791 = vsub.f32 %v1718, %v1759
  %v1792 = vsub.f32 %v1719, %v1762
  %v1793 = vsub.f32 %v1720, %v1765
  %v1794 = vsub.f32 %v1721, %v1768
  %v1795 = vsub.f32 %v1722, %v1771
  %v1796 = vsub.f32 %v1723, %v1774
  %v1797 = vsub.f32 %v1724, %v1777
  %v1798 = vsub.f32 %v1725, %v1780
  %v1799 = vmul.f32 %v1781, 1.442695
  %v1800 = vpow.pop %v1799
  %v1801 = vmul.f32 %v1782, 1.442695
  %v1802 = vpow.pop %v1801
  %v1803 = vmul.f32 %v1783, 1.442695
  %v1804 = vpow.pop %v1803
  %v1805 = vmul.f32 %v1784, 1.442695
  %v1806 = vpow.pop %v1805
  %v1807 = vmul.f32 %v1785, 1.442695
  %v1808 = vpow.pop %v1807
  %v1809 = vmul.f32 %v1786, 1.442695
  %v1810 = vpow.pop %v1809
  %v1811 = vmul.f32 %v1787, 1.442695
  %v1812 = vpow.pop %v1811
  %v1813 = vmul.f32 %v1788, 1.442695
  %v1814 = vpow.pop %v1813
  %v1815 = vmul.f32 %v1789, 1.442695
  %v1816 = vpow.pop %v1815
  %v1817 = vmul.f32 %v1790, 1.442695
  %v1818 = vpow.pop %v1817
  %v1819 = vmul.f32 %v1791, 1.442695
  %v1820 = vpow.pop %v1819
  %v1821 = vmul.f32 %v1792, 1.442695
  %v1822 = vpow.pop %v1821
  %v1823 = vmul.f32 %v1793, 1.442695
  %v1824 = vpow.pop %v1823
  %v1825 = vmul.f32 %v1794, 1.442695
  %v1826 = vpow.pop %v1825
  %v1827 = vmul.f32 %v1795, 1.442695
  %v1828 = vpow.pop %v1827
  %v1829 = vmul.f32 %v1796, 1.442695
  %v1830 = vpow.pop %v1829
  %v1831 = vmul.f32 %v1797, 1.442695
  %v1832 = vpow.pop %v1831
  %v1833 = vmul.f32 %v1798, 1.442695
  %v1834 = vpow.pop %v1833
  %v1835 = vsel %vm1726, %v1800, 0.0
  %1836 = vadd.xlane.f32.xlu0 %v1835
  %v1837 = vpop.xlane.xlu0 %1836
  %v1838 = vsel %vm1726, %v1802, 0.0
  %1839 = vadd.xlane.f32.xlu0 %v1838
  %v1840 = vpop.xlane.xlu0 %1839
  %v1841 = vsel %vm1726, %v1804, 0.0
  %1842 = vadd.xlane.f32.xlu0 %v1841
  %v1843 = vpop.xlane.xlu0 %1842
  %v1844 = vsel %vm1726, %v1806, 0.0
  %1845 = vadd.xlane.f32.xlu0 %v1844
  %v1846 = vpop.xlane.xlu0 %1845
  %v1847 = vsel %vm1726, %v1808, 0.0
  %1848 = vadd.xlane.f32.xlu0 %v1847
  %v1849 = vpop.xlane.xlu0 %1848
  %v1850 = vsel %vm1726, %v1810, 0.0
  %1851 = vadd.xlane.f32.xlu0 %v1850
  %v1852 = vpop.xlane.xlu0 %1851
  %v1853 = vsel %vm1726, %v1812, 0.0
  %1854 = vadd.xlane.f32.xlu0 %v1853
  %v1855 = vpop.xlane.xlu0 %1854
  %v1856 = vsel %vm1726, %v1814, 0.0
  %1857 = vadd.xlane.f32.xlu0 %v1856
  %v1858 = vpop.xlane.xlu0 %1857
  %v1859 = vsel %vm1726, %v1816, 0.0
  %1860 = vadd.xlane.f32.xlu0 %v1859
  %v1861 = vpop.xlane.xlu0 %1860
  %v1862 = vsel %vm1726, %v1818, 0.0
  %1863 = vadd.xlane.f32.xlu0 %v1862
  %v1864 = vpop.xlane.xlu0 %1863
  %v1865 = vsel %vm1726, %v1820, 0.0
  %1866 = vadd.xlane.f32.xlu0 %v1865
  %v1867 = vpop.xlane.xlu0 %1866
  %v1868 = vsel %vm1726, %v1822, 0.0
  %1869 = vadd.xlane.f32.xlu0 %v1868
  %v1870 = vpop.xlane.xlu0 %1869
  %v1871 = vsel %vm1726, %v1824, 0.0
  %1872 = vadd.xlane.f32.xlu0 %v1871
  %v1873 = vpop.xlane.xlu0 %1872
  %v1874 = vsel %vm1726, %v1826, 0.0
  %1875 = vadd.xlane.f32.xlu0 %v1874
  %v1876 = vpop.xlane.xlu0 %1875
  %v1877 = vsel %vm1726, %v1828, 0.0
  %1878 = vadd.xlane.f32.xlu0 %v1877
  %v1879 = vpop.xlane.xlu0 %1878
  %v1880 = vsel %vm1726, %v1830, 0.0
  %1881 = vadd.xlane.f32.xlu0 %v1880
  %v1882 = vpop.xlane.xlu0 %1881
  %v1883 = vsel %vm1726, %v1832, 0.0
  %1884 = vadd.xlane.f32.xlu0 %v1883
  %v1885 = vpop.xlane.xlu0 %1884
  %v1886 = vsel %vm1726, %v1834, 0.0
  %1887 = vadd.xlane.f32.xlu0 %v1886
  %v1888 = vpop.xlane.xlu0 %1887
  %v1889 = vpack.c.bf16 %v1802, %v1800
  %v1890 = vpack.c.bf16 %v1806, %v1804
  %v1891 = vpack.c.bf16 %v1810, %v1808
  %v1892 = vpack.c.bf16 %v1814, %v1812
  %v1893 = vpack.c.bf16 %v1816, %v1816
  %v1894 = vpack.c.bf16 %v1820, %v1818
  %v1895 = vpack.c.bf16 %v1824, %v1822
  %v1896 = vpack.c.bf16 %v1828, %v1826
  %v1897 = vpack.c.bf16 %v1832, %v1830
  %v1898 = vpack.c.bf16 %v1834, %v1834
  %v1899 = vpack.c.bf16 %v1377, %v1373
  %v1900 = vpack.c.bf16 %v1387, %v1383
  %v1901 = vpack.c.bf16 %v1397, %v1393
  %v1902 = vpack.c.bf16 %v1407, %v1403
  %v1903 = vpack.c.bf16 %v1413, %v1413
  %v1904 = vpack.c.bf16 %v1423, %v1417
  %v1905 = vpack.c.bf16 %v1433, %v1427
  %v1906 = vpack.c.bf16 %v1443, %v1437
  %v1907 = vpack.c.bf16 %v1453, %v1447
  %v1908 = vpack.c.bf16 %v1457, %v1457
  %v1910 = vsel %vm1726, %v1889, 0
  %v1913 = vsel %vm1726, %v1890, 0
  %v1916 = vsel %vm1726, %v1891, 0
  %v1919 = vsel %vm1726, %v1892, 0
  %v1922 = vsel %vm1726, %v1893, 0
  %vm1924 = vcmask 1043456
  %v1926 = vsel %vm1924, %v1903, 0
  %1928 = vmatprep.subr.bf16.mxu0 0
  %1929 = vmatpush1.bf16.msra.mxu0 %v1899
  %1930 = vmatprep.subr.bf16.mxu0 0
  %1931 = vmatpush1.bf16.msra.mxu0 %v1900
  %1932 = vmatprep.subr.bf16.mxu0 0
  %1933 = vmatpush1.bf16.msra.mxu0 %v1901
  %1934 = vmatprep.subr.bf16.mxu0 0
  %1935 = vmatpush1.bf16.msra.mxu0 %v1902
  %1936 = vmatprep.subr.bf16.mxu0 0
  %1937 = vmatpush1.bf16.msra.mxu0 %v1926
  %1938 = vmatprep.subr.bf16.mxu0 0
  %1939 = vmatpush1.bf16.msra.mxu0 0
  %1940 = vmatprep.subr.bf16.mxu0 0
  %1941 = vmatpush1.bf16.msra.mxu0 0
  %1942 = vmatprep.subr.bf16.mxu0 0
  %1943 = vmatpush1.bf16.msra.mxu0 0
  %1944 = vmatprep.subr.bf16.mxu0 0
  %1945 = vmatpush1.bf16.msra.mxu0 0
  %1946 = vmatprep.subr.bf16.mxu0 0
  %1947 = vmatpush1.bf16.msra.mxu0 0
  %1948 = vmatprep.subr.bf16.mxu0 0
  %1949 = vmatpush1.bf16.msra.mxu0 0
  %1950 = vmatprep.subr.bf16.mxu0 0
  %1951 = vmatpush1.bf16.msra.mxu0 0
  %1952 = vmatprep.subr.bf16.mxu0 0
  %1953 = vmatpush1.bf16.msra.mxu0 0
  %1954 = vmatprep.subr.bf16.mxu0 0
  %1955 = vmatpush1.bf16.msra.mxu0 0
  %1956 = vmatprep.subr.bf16.mxu0 0
  %1957 = vmatpush1.bf16.msra.mxu0 0
  %1958 = vmatprep.subr.bf16.mxu0 0
  %1959 = vmatpush1.bf16.msra.mxu0 0
  %1960 = vmatprep.mubr.bf16.mxu0 0
  %1961 = vmatmul.mubr.bf16.gmra.mrb[0].mxu0 %v1910
  %v1962 = vpop.f32.mrb[0].mxu0
  %v1963 = vadd.f32 0.0, %v1962
  %v1964 = vpop.f32.mrb[0].mxu0
  %v1965 = vpop.f32.mrb[0].mxu0
  %v1966 = vadd.f32 0.0, %v1965
  %v1967 = vpop.f32.mrb[0].mxu0
  %1968 = vmatprep.mubr.bf16.mxu0 0
  %1969 = vmatmul.mubr.bf16.gmra.mrb[0].mxu0 %v1913
  %v1970 = vpop.f32.mrb[0].mxu0
  %v1971 = vadd.f32 0.0, %v1970
  %v1972 = vpop.f32.mrb[0].mxu0
  %v1973 = vpop.f32.mrb[0].mxu0
  %v1974 = vadd.f32 0.0, %v1973
  %v1975 = vpop.f32.mrb[0].mxu0
  %1976 = vmatprep.mubr.bf16.mxu0 0
  %1977 = vmatmul.mubr.bf16.gmra.mrb[0].mxu0 %v1916
  %v1978 = vpop.f32.mrb[0].mxu0
  %v1979 = vadd.f32 0.0, %v1978
  %v1980 = vpop.f32.mrb[0].mxu0
  %v1981 = vpop.f32.mrb[0].mxu0
  %v1982 = vadd.f32 0.0, %v1981
  %v1983 = vpop.f32.mrb[0].mxu0
  %1984 = vmatprep.mubr.bf16.mxu0 0
  %1985 = vmatmul.mubr.bf16.gmra.mrb[0].mxu0 %v1919
  %v1986 = vpop.f32.mrb[0].mxu0
  %v1987 = vadd.f32 0.0, %v1986
  %v1988 = vpop.f32.mrb[0].mxu0
  %v1989 = vpop.f32.mrb[0].mxu0
  %v1990 = vadd.f32 0.0, %v1989
  %v1991 = vpop.f32.mrb[0].mxu0
  %1992 = vmatprep.mubr.bf16.mxu0 0
  %1993 = vmatmul.mubr.bf16.gmra.mrb[0].mxu0 %v1922
  %v1994 = vpop.f32.mrb[0].mxu0
  %v1995 = vadd.f32 0.0, %v1994
  %v1996 = vpop.f32.mrb[0].mxu0
  %v1997 = vpop.f32.mrb[0].mxu0
  %v1998 = vpop.f32.mrb[0].mxu0
  %1999 = vdwg.mxu0
  %v2001 = vsel %vm1726, %v1894, 0
  %v2004 = vsel %vm1726, %v1895, 0
  %v2007 = vsel %vm1726, %v1896, 0
  %v2010 = vsel %vm1726, %v1897, 0
  %v2013 = vsel %vm1726, %v1898, 0
  %v2016 = vsel %vm1924, %v1908, 0
  %2018 = vmatprep.subr.bf16.mxu0 0
  %2019 = vmatpush1.bf16.msra.mxu0 %v1904
  %2020 = vmatprep.subr.bf16.mxu0 0
  %2021 = vmatpush1.bf16.msra.mxu0 %v1905
  %2022 = vmatprep.subr.bf16.mxu0 0
  %2023 = vmatpush1.bf16.msra.mxu0 %v1906
  %2024 = vmatprep.subr.bf16.mxu0 0
  %2025 = vmatpush1.bf16.msra.mxu0 %v1907
  %2026 = vmatprep.subr.bf16.mxu0 0
  %2027 = vmatpush1.bf16.msra.mxu0 %v2016
  %2028 = vmatprep.subr.bf16.mxu0 0
  %2029 = vmatpush1.bf16.msra.mxu0 0
  %2030 = vmatprep.subr.bf16.mxu0 0
  %2031 = vmatpush1.bf16.msra.mxu0 0
  %2032 = vmatprep.subr.bf16.mxu0 0
  %2033 = vmatpush1.bf16.msra.mxu0 0
  %2034 = vmatprep.subr.bf16.mxu0 0
  %2035 = vmatpush1.bf16.msra.mxu0 0
  %2036 = vmatprep.subr.bf16.mxu0 0
  %2037 = vmatpush1.bf16.msra.mxu0 0
  %2038 = vmatprep.subr.bf16.mxu0 0
  %2039 = vmatpush1.bf16.msra.mxu0 0
  %2040 = vmatprep.subr.bf16.mxu0 0
  %2041 = vmatpush1.bf16.msra.mxu0 0
  %2042 = vmatprep.subr.bf16.mxu0 0
  %2043 = vmatpush1.bf16.msra.mxu0 0
  %2044 = vmatprep.subr.bf16.mxu0 0
  %2045 = vmatpush1.bf16.msra.mxu0 0
  %2046 = vmatprep.subr.bf16.mxu0 0
  %2047 = vmatpush1.bf16.msra.mxu0 0
  %2048 = vmatprep.subr.bf16.mxu0 0
  %2049 = vmatpush1.bf16.msra.mxu0 0
  %2050 = vmatprep.mubr.bf16.mxu0 0
  %2051 = vmatmul.mubr.bf16.gmra.mrb[0].mxu0 %v2001
  %v2052 = vpop.f32.mrb[0].mxu0
  %v2053 = vadd.f32 0.0, %v2052
  %v2054 = vpop.f32.mrb[0].mxu0
  %v2055 = vpop.f32.mrb[0].mxu0
  %v2056 = vadd.f32 0.0, %v2055
  %v2057 = vpop.f32.mrb[0].mxu0
  %2058 = vmatprep.mubr.bf16.mxu0 0
  %2059 = vmatmul.mubr.bf16.gmra.mrb[0].mxu0 %v2004
  %v2060 = vpop.f32.mrb[0].mxu0
  %v2061 = vadd.f32 0.0, %v2060
  %v2062 = vpop.f32.mrb[0].mxu0
  %v2063 = vpop.f32.mrb[0].mxu0
  %v2064 = vadd.f32 0.0, %v2063
  %v2065 = vpop.f32.mrb[0].mxu0
  %2066 = vmatprep.mubr.bf16.mxu0 0
  %2067 = vmatmul.mubr.bf16.gmra.mrb[0].mxu0 %v2007
  %v2068 = vpop.f32.mrb[0].mxu0
  %v2069 = vadd.f32 0.0, %v2068
  %v2070 = vpop.f32.mrb[0].mxu0
  %v2071 = vpop.f32.mrb[0].mxu0
  %v2072 = vadd.f32 0.0, %v2071
  %v2073 = vpop.f32.mrb[0].mxu0
  %2074 = vmatprep.mubr.bf16.mxu0 0
  %2075 = vmatmul.mubr.bf16.gmra.mrb[0].mxu0 %v2010
  %v2076 = vpop.f32.mrb[0].mxu0
  %v2077 = vadd.f32 0.0, %v2076
  %v2078 = vpop.f32.mrb[0].mxu0
  %v2079 = vpop.f32.mrb[0].mxu0
  %v2080 = vadd.f32 0.0, %v2079
  %v2081 = vpop.f32.mrb[0].mxu0
  %2082 = vmatprep.mubr.bf16.mxu0 0
  %2083 = vmatmul.mubr.bf16.gmra.mrb[0].mxu0 %v2013
  %v2084 = vpop.f32.mrb[0].mxu0
  %v2085 = vadd.f32 0.0, %v2084
  %v2086 = vpop.f32.mrb[0].mxu0
  %v2087 = vpop.f32.mrb[0].mxu0
  %v2088 = vpop.f32.mrb[0].mxu0
  %2089 = vdwg.mxu0
  %v2090 = vrcp.pop %v1837
  %v2091 = vrcp.pop %v1840
  %v2092 = vrcp.pop %v1843
  %v2093 = vrcp.pop %v1846
  %v2094 = vrcp.pop %v1849
  %v2095 = vrcp.pop %v1852
  %v2096 = vrcp.pop %v1855
  %v2097 = vrcp.pop %v1858
  %v2098 = vrcp.pop %v1861
  %v2099 = vrcp.pop %v1864
  %v2100 = vrcp.pop %v1867
  %v2101 = vrcp.pop %v1870
  %v2102 = vrcp.pop %v1873
  %v2103 = vrcp.pop %v1876
  %v2104 = vrcp.pop %v1879
  %v2105 = vrcp.pop %v1882
  %v2106 = vrcp.pop %v1885
  %v2107 = vrcp.pop %v1888
  %v2108 = vmul.f32 %v1963, %v2090
  %v2109 = vmul.f32 %v1966, %v2091
  %v2110 = vmul.f32 %v1971, %v2092
  %v2111 = vmul.f32 %v1974, %v2093
  %v2112 = vmul.f32 %v1979, %v2094
  %v2113 = vmul.f32 %v1982, %v2095
  %v2114 = vmul.f32 %v1987, %v2096
  %v2115 = vmul.f32 %v1990, %v2097
  %v2116 = vmul.f32 %v1995, %v2098
  %v2117 = vmul.f32 %v2053, %v2099
  %v2118 = vmul.f32 %v2056, %v2100
  %v2119 = vmul.f32 %v2061, %v2101
  %v2120 = vmul.f32 %v2064, %v2102
  %v2121 = vmul.f32 %v2069, %v2103
  %v2122 = vmul.f32 %v2072, %v2104
  %v2123 = vmul.f32 %v2077, %v2105
  %v2124 = vmul.f32 %v2080, %v2106
  %v2125 = vmul.f32 %v2085, %v2107
  %v2126 = vpack.c.bf16 %v2109, %v2108
  %v2127 = vpack.c.bf16 %v2111, %v2110
  %v2128 = vpack.c.bf16 %v2113, %v2112
  %v2129 = vpack.c.bf16 %v2115, %v2114
  %v2130 = vpack.c.bf16 %v2117, %v2116
  %v2131 = vpack.c.bf16 %v2119, %v2118
  %v2132 = vpack.c.bf16 %v2121, %v2120
  %v2133 = vpack.c.bf16 %v2123, %v2122
  %v2134 = vpack.c.bf16 %v2125, %v2124
  %v2135 = vld [vmem:[%s5] sm:$0xff]
  %v2136 = vld [vmem:[%s5 + $0x8] sm:$0xff]
  %v2137 = vld [vmem:[%s5 + $0x10] sm:$0xff]
  %v2138 = vld [vmem:[%s5 + $0x18] sm:$0xff]
  %v2139 = vld [vmem:[%s5 + $0x20] sm:$0xff]
  %v2140 = vld [vmem:[%s5 + $0x28] sm:$0xff]
  %v2141 = vld [vmem:[%s5 + $0x30] sm:$0xff]
  %v2142 = vld [vmem:[%s5 + $0x38] sm:$0xff]
  %2148 = vrot.lane.b32.xlu0 %v1465, 64
  %v2149 = vpop.permute.xlu0 %2148
  %2150 = vrot.lane.b32.xlu0 %v1466, 64
  %v2151 = vpop.permute.xlu0 %2150
  %2152 = vrot.lane.b32.xlu0 %v1467, 64
  %v2153 = vpop.permute.xlu0 %2152
  %2154 = vrot.lane.b32.xlu0 %v1468, 64
  %v2155 = vpop.permute.xlu0 %2154
  %2156 = vrot.lane.b32.xlu0 %v1469, 64
  %v2157 = vpop.permute.xlu0 %2156
  %2163 = vrot.lane.b32.xlu0 %v1475, 64
  %v2164 = vpop.permute.xlu0 %2163
  %2165 = vrot.lane.b32.xlu0 %v1476, 64
  %v2166 = vpop.permute.xlu0 %2165
  %2167 = vrot.lane.b32.xlu0 %v1477, 64
  %v2168 = vpop.permute.xlu0 %2167
  %2169 = vrot.lane.b32.xlu0 %v1478, 64
  %v2170 = vpop.permute.xlu0 %2169
  %2171 = vrot.lane.b32.xlu0 %v1479, 64
  %v2172 = vpop.permute.xlu0 %2171
  %v2174 = vsel %vm1485, %v2149, 0
  %v2177 = vsel %vm1485, %v2151, 0
  %v2180 = vsel %vm1485, %v2153, 0
  %v2183 = vsel %vm1485, %v2155, 0
  %v2186 = vsel %vm1485, %v2157, 0
  %v2189 = vsel %vm1485, %v2164, 0
  %v2192 = vsel %vm1485, %v2166, 0
  %v2195 = vsel %vm1485, %v2168, 0
  %v2198 = vsel %vm1485, %v2170, 0
  %v2201 = vsel %vm1485, %v2172, 0
  %2203 = vmatprep.subr.bf16.mxu0 0
  %2204 = vmatpush1.bf16.xpose.msra.mxu0 %v2189
  %2205 = vmatprep.subr.bf16.mxu0 0
  %2206 = vmatpush1.bf16.xpose.msra.mxu0 %v2192
  %2207 = vmatprep.subr.bf16.mxu0 0
  %2208 = vmatpush1.bf16.xpose.msra.mxu0 %v2195
  %2209 = vmatprep.subr.bf16.mxu0 0
  %2210 = vmatpush1.bf16.xpose.msra.mxu0 %v2198
  %2211 = vmatprep.subr.bf16.mxu0 0
  %2212 = vmatpush1.bf16.xpose.msra.mxu0 %v2201
  %2213 = vmatprep.subr.bf16.mxu0 0
  %2214 = vmatpush1.bf16.xpose.msra.mxu0 0
  %2215 = vmatprep.subr.bf16.mxu0 0
  %2216 = vmatpush1.bf16.xpose.msra.mxu0 0
  %2217 = vmatprep.subr.bf16.mxu0 0
  %2218 = vmatpush1.bf16.xpose.msra.mxu0 0
  %2219 = vmatprep.subr.bf16.mxu0 0
  %2220 = vmatpush1.bf16.xpose.msra.mxu0 0
  %2221 = vmatprep.subr.bf16.mxu0 0
  %2222 = vmatpush1.bf16.xpose.msra.mxu0 0
  %2223 = vmatprep.subr.bf16.mxu0 0
  %2224 = vmatpush1.bf16.xpose.msra.mxu0 0
  %2225 = vmatprep.subr.bf16.mxu0 0
  %2226 = vmatpush1.bf16.xpose.msra.mxu0 0
  %2227 = vmatprep.subr.bf16.mxu0 0
  %2228 = vmatpush1.bf16.xpose.msra.mxu0 0
  %2229 = vmatprep.subr.bf16.mxu0 0
  %2230 = vmatpush1.bf16.xpose.msra.mxu0 0
  %2231 = vmatprep.subr.bf16.mxu0 0
  %2232 = vmatpush1.bf16.xpose.msra.mxu0 0
  %2233 = vmatprep.subr.bf16.mxu0 0
  %2234 = vmatpush1.bf16.xpose.msra.mxu0 0
  %2235 = vmatprep.mubr.bf16.mxu0 0
  %2236 = vmatmul.mubr.bf16.gmra.mrb[0].mxu0 %v2174
  %v2237 = vpop.f32.mrb[0].mxu0
  %v2238 = vadd.f32 0.0, %v2237
  %v2239 = vpop.f32.mrb[0].mxu0
  %v2240 = vpop.f32.mrb[0].mxu0
  %v2241 = vadd.f32 0.0, %v2240
  %v2242 = vpop.f32.mrb[0].mxu0
  %2243 = vmatprep.mubr.bf16.mxu0 0
  %2244 = vmatmul.mubr.bf16.gmra.mrb[0].mxu0 %v2177
  %v2245 = vpop.f32.mrb[0].mxu0
  %v2246 = vadd.f32 0.0, %v2245
  %v2247 = vpop.f32.mrb[0].mxu0
  %v2248 = vpop.f32.mrb[0].mxu0
  %v2249 = vadd.f32 0.0, %v2248
  %v2250 = vpop.f32.mrb[0].mxu0
  %2251 = vmatprep.mubr.bf16.mxu0 0
  %2252 = vmatmul.mubr.bf16.gmra.mrb[0].mxu0 %v2180
  %v2253 = vpop.f32.mrb[0].mxu0
  %v2254 = vadd.f32 0.0, %v2253
  %v2255 = vpop.f32.mrb[0].mxu0
  %v2256 = vpop.f32.mrb[0].mxu0
  %v2257 = vadd.f32 0.0, %v2256
  %v2258 = vpop.f32.mrb[0].mxu0
  %2259 = vmatprep.mubr.bf16.mxu0 0
  %2260 = vmatmul.mubr.bf16.gmra.mrb[0].mxu0 %v2183
  %v2261 = vpop.f32.mrb[0].mxu0
  %v2262 = vadd.f32 0.0, %v2261
  %v2263 = vpop.f32.mrb[0].mxu0
  %v2264 = vpop.f32.mrb[0].mxu0
  %v2265 = vadd.f32 0.0, %v2264
  %v2266 = vpop.f32.mrb[0].mxu0
  %2267 = vmatprep.mubr.bf16.mxu0 0
  %2268 = vmatmul.mubr.bf16.gmra.mrb[0].mxu0 %v2186
  %v2269 = vpop.f32.mrb[0].mxu0
  %v2270 = vadd.f32 0.0, %v2269
  %v2271 = vpop.f32.mrb[0].mxu0
  %v2272 = vpop.f32.mrb[0].mxu0
  %v2273 = vpop.f32.mrb[0].mxu0
  %2274 = vdwg.mxu0
  %2280 = vrot.lane.b32.xlu0 %v1470, 64
  %v2281 = vpop.permute.xlu0 %2280
  %2282 = vrot.lane.b32.xlu0 %v1471, 64
  %v2283 = vpop.permute.xlu0 %2282
  %2284 = vrot.lane.b32.xlu0 %v1472, 64
  %v2285 = vpop.permute.xlu0 %2284
  %2286 = vrot.lane.b32.xlu0 %v1473, 64
  %v2287 = vpop.permute.xlu0 %2286
  %2288 = vrot.lane.b32.xlu0 %v1474, 64
  %v2289 = vpop.permute.xlu0 %2288
  %2295 = vrot.lane.b32.xlu0 %v1480, 64
  %v2296 = vpop.permute.xlu0 %2295
  %2297 = vrot.lane.b32.xlu0 %v1481, 64
  %v2298 = vpop.permute.xlu0 %2297
  %2299 = vrot.lane.b32.xlu0 %v1482, 64
  %v2300 = vpop.permute.xlu0 %2299
  %2301 = vrot.lane.b32.xlu0 %v1483, 64
  %v2302 = vpop.permute.xlu0 %2301
  %2303 = vrot.lane.b32.xlu0 %v1484, 64
  %v2304 = vpop.permute.xlu0 %2303
  %v2306 = vsel %vm1485, %v2281, 0
  %v2309 = vsel %vm1485, %v2283, 0
  %v2312 = vsel %vm1485, %v2285, 0
  %v2315 = vsel %vm1485, %v2287, 0
  %v2318 = vsel %vm1485, %v2289, 0
  %v2321 = vsel %vm1485, %v2296, 0
  %v2324 = vsel %vm1485, %v2298, 0
  %v2327 = vsel %vm1485, %v2300, 0
  %v2330 = vsel %vm1485, %v2302, 0
  %v2333 = vsel %vm1485, %v2304, 0
  %2335 = vmatprep.subr.bf16.mxu0 0
  %2336 = vmatpush1.bf16.xpose.msra.mxu0 %v2321
  %2337 = vmatprep.subr.bf16.mxu0 0
  %2338 = vmatpush1.bf16.xpose.msra.mxu0 %v2324
  %2339 = vmatprep.subr.bf16.mxu0 0
  %2340 = vmatpush1.bf16.xpose.msra.mxu0 %v2327
  %2341 = vmatprep.subr.bf16.mxu0 0
  %2342 = vmatpush1.bf16.xpose.msra.mxu0 %v2330
  %2343 = vmatprep.subr.bf16.mxu0 0
  %2344 = vmatpush1.bf16.xpose.msra.mxu0 %v2333
  %2345 = vmatprep.subr.bf16.mxu0 0
  %2346 = vmatpush1.bf16.xpose.msra.mxu0 0
  %2347 = vmatprep.subr.bf16.mxu0 0
  %2348 = vmatpush1.bf16.xpose.msra.mxu0 0
  %2349 = vmatprep.subr.bf16.mxu0 0
  %2350 = vmatpush1.bf16.xpose.msra.mxu0 0
  %2351 = vmatprep.subr.bf16.mxu0 0
  %2352 = vmatpush1.bf16.xpose.msra.mxu0 0
  %2353 = vmatprep.subr.bf16.mxu0 0
  %2354 = vmatpush1.bf16.xpose.msra.mxu0 0
  %2355 = vmatprep.subr.bf16.mxu0 0
  %2356 = vmatpush1.bf16.xpose.msra.mxu0 0
  %2357 = vmatprep.subr.bf16.mxu0 0
  %2358 = vmatpush1.bf16.xpose.msra.mxu0 0
  %2359 = vmatprep.subr.bf16.mxu0 0
  %2360 = vmatpush1.bf16.xpose.msra.mxu0 0
  %2361 = vmatprep.subr.bf16.mxu0 0
  %2362 = vmatpush1.bf16.xpose.msra.mxu0 0
  %2363 = vmatprep.subr.bf16.mxu0 0
  %2364 = vmatpush1.bf16.xpose.msra.mxu0 0
  %2365 = vmatprep.subr.bf16.mxu0 0
  %2366 = vmatpush1.bf16.xpose.msra.mxu0 0
  %2367 = vmatprep.mubr.bf16.mxu0 0
  %2368 = vmatmul.mubr.bf16.gmra.mrb[0].mxu0 %v2306
  %v2369 = vpop.f32.mrb[0].mxu0
  %v2370 = vadd.f32 0.0, %v2369
  %v2371 = vpop.f32.mrb[0].mxu0
  %v2372 = vpop.f32.mrb[0].mxu0
  %v2373 = vadd.f32 0.0, %v2372
  %v2374 = vpop.f32.mrb[0].mxu0
  %2375 = vmatprep.mubr.bf16.mxu0 0
  %2376 = vmatmul.mubr.bf16.gmra.mrb[0].mxu0 %v2309
  %v2377 = vpop.f32.mrb[0].mxu0
  %v2378 = vadd.f32 0.0, %v2377
  %v2379 = vpop.f32.mrb[0].mxu0
  %v2380 = vpop.f32.mrb[0].mxu0
  %v2381 = vadd.f32 0.0, %v2380
  %v2382 = vpop.f32.mrb[0].mxu0
  %2383 = vmatprep.mubr.bf16.mxu0 0
  %2384 = vmatmul.mubr.bf16.gmra.mrb[0].mxu0 %v2312
  %v2385 = vpop.f32.mrb[0].mxu0
  %v2386 = vadd.f32 0.0, %v2385
  %v2387 = vpop.f32.mrb[0].mxu0
  %v2388 = vpop.f32.mrb[0].mxu0
  %v2389 = vadd.f32 0.0, %v2388
  %v2390 = vpop.f32.mrb[0].mxu0
  %2391 = vmatprep.mubr.bf16.mxu0 0
  %2392 = vmatmul.mubr.bf16.gmra.mrb[0].mxu0 %v2315
  %v2393 = vpop.f32.mrb[0].mxu0
  %v2394 = vadd.f32 0.0, %v2393
  %v2395 = vpop.f32.mrb[0].mxu0
  %v2396 = vpop.f32.mrb[0].mxu0
  %v2397 = vadd.f32 0.0, %v2396
  %v2398 = vpop.f32.mrb[0].mxu0
  %2399 = vmatprep.mubr.bf16.mxu0 0
  %2400 = vmatmul.mubr.bf16.gmra.mrb[0].mxu0 %v2318
  %v2401 = vpop.f32.mrb[0].mxu0
  %v2402 = vadd.f32 0.0, %v2401
  %v2403 = vpop.f32.mrb[0].mxu0
  %v2404 = vpop.f32.mrb[0].mxu0
  %v2405 = vpop.f32.mrb[0].mxu0
  %2406 = vdwg.mxu0
  %v2407 = vmul.f32 %v2238, 0.125
  %v2408 = vmul.f32 %v2241, 0.125
  %v2409 = vmul.f32 %v2246, 0.125
  %v2410 = vmul.f32 %v2249, 0.125
  %v2411 = vmul.f32 %v2254, 0.125
  %v2412 = vmul.f32 %v2257, 0.125
  %v2413 = vmul.f32 %v2262, 0.125
  %v2414 = vmul.f32 %v2265, 0.125
  %v2415 = vmul.f32 %v2270, 0.125
  %v2416 = vmul.f32 %v2370, 0.125
  %v2417 = vmul.f32 %v2373, 0.125
  %v2418 = vmul.f32 %v2378, 0.125
  %v2419 = vmul.f32 %v2381, 0.125
  %v2420 = vmul.f32 %v2386, 0.125
  %v2421 = vmul.f32 %v2389, 0.125
  %v2422 = vmul.f32 %v2394, 0.125
  %v2423 = vmul.f32 %v2397, 0.125
  %v2424 = vmul.f32 %v2402, 0.125
  %v2425 = vadd.f32 %v2407, %v1464
  %v2426 = vadd.f32 %v2408, %v1464
  %v2427 = vadd.f32 %v2409, %v1464
  %v2428 = vadd.f32 %v2410, %v1464
  %v2429 = vadd.f32 %v2411, %v1464
  %v2430 = vadd.f32 %v2412, %v1464
  %v2431 = vadd.f32 %v2413, %v1464
  %v2432 = vadd.f32 %v2414, %v1464
  %v2433 = vadd.f32 %v2415, %v1464
  %v2434 = vadd.f32 %v2416, %v1464
  %v2435 = vadd.f32 %v2417, %v1464
  %v2436 = vadd.f32 %v2418, %v1464
  %v2437 = vadd.f32 %v2419, %v1464
  %v2438 = vadd.f32 %v2420, %v1464
  %v2439 = vadd.f32 %v2421, %v1464
  %v2440 = vadd.f32 %v2422, %v1464
  %v2441 = vadd.f32 %v2423, %v1464
  %v2442 = vadd.f32 %v2424, %v1464
  %v2443 = vsel %vm1726, %v2425, -inf
  %2444 = vmax.xlane.f32.xlu0 %v2443
  %v2445 = vpop.xlane.xlu0 %2444
  %v2446 = vsel %vm1726, %v2426, -inf
  %2447 = vmax.xlane.f32.xlu0 %v2446
  %v2448 = vpop.xlane.xlu0 %2447
  %v2449 = vsel %vm1726, %v2427, -inf
  %2450 = vmax.xlane.f32.xlu0 %v2449
  %v2451 = vpop.xlane.xlu0 %2450
  %v2452 = vsel %vm1726, %v2428, -inf
  %2453 = vmax.xlane.f32.xlu0 %v2452
  %v2454 = vpop.xlane.xlu0 %2453
  %v2455 = vsel %vm1726, %v2429, -inf
  %2456 = vmax.xlane.f32.xlu0 %v2455
  %v2457 = vpop.xlane.xlu0 %2456
  %v2458 = vsel %vm1726, %v2430, -inf
  %2459 = vmax.xlane.f32.xlu0 %v2458
  %v2460 = vpop.xlane.xlu0 %2459
  %v2461 = vsel %vm1726, %v2431, -inf
  %2462 = vmax.xlane.f32.xlu0 %v2461
  %v2463 = vpop.xlane.xlu0 %2462
  %v2464 = vsel %vm1726, %v2432, -inf
  %2465 = vmax.xlane.f32.xlu0 %v2464
  %v2466 = vpop.xlane.xlu0 %2465
  %v2467 = vsel %vm1726, %v2433, -inf
  %2468 = vmax.xlane.f32.xlu0 %v2467
  %v2469 = vpop.xlane.xlu0 %2468
  %v2470 = vsel %vm1726, %v2434, -inf
  %2471 = vmax.xlane.f32.xlu0 %v2470
  %v2472 = vpop.xlane.xlu0 %2471
  %v2473 = vsel %vm1726, %v2435, -inf
  %2474 = vmax.xlane.f32.xlu0 %v2473
  %v2475 = vpop.xlane.xlu0 %2474
  %v2476 = vsel %vm1726, %v2436, -inf
  %2477 = vmax.xlane.f32.xlu0 %v2476
  %v2478 = vpop.xlane.xlu0 %2477
  %v2479 = vsel %vm1726, %v2437, -inf
  %2480 = vmax.xlane.f32.xlu0 %v2479
  %v2481 = vpop.xlane.xlu0 %2480
  %v2482 = vsel %vm1726, %v2438, -inf
  %2483 = vmax.xlane.f32.xlu0 %v2482
  %v2484 = vpop.xlane.xlu0 %2483
  %v2485 = vsel %vm1726, %v2439, -inf
  %2486 = vmax.xlane.f32.xlu0 %v2485
  %v2487 = vpop.xlane.xlu0 %2486
  %v2488 = vsel %vm1726, %v2440, -inf
  %2489 = vmax.xlane.f32.xlu0 %v2488
  %v2490 = vpop.xlane.xlu0 %2489
  %v2491 = vsel %vm1726, %v2441, -inf
  %2492 = vmax.xlane.f32.xlu0 %v2491
  %v2493 = vpop.xlane.xlu0 %2492
  %v2494 = vsel %vm1726, %v2442, -inf
  %2495 = vmax.xlane.f32.xlu0 %v2494
  %v2496 = vpop.xlane.xlu0 %2495
  %v2497 = vsub.f32 %v2425, %v2445
  %v2498 = vsub.f32 %v2426, %v2448
  %v2499 = vsub.f32 %v2427, %v2451
  %v2500 = vsub.f32 %v2428, %v2454
  %v2501 = vsub.f32 %v2429, %v2457
  %v2502 = vsub.f32 %v2430, %v2460
  %v2503 = vsub.f32 %v2431, %v2463
  %v2504 = vsub.f32 %v2432, %v2466
  %v2505 = vsub.f32 %v2433, %v2469
  %v2506 = vsub.f32 %v2434, %v2472
  %v2507 = vsub.f32 %v2435, %v2475
  %v2508 = vsub.f32 %v2436, %v2478
  %v2509 = vsub.f32 %v2437, %v2481
  %v2510 = vsub.f32 %v2438, %v2484
  %v2511 = vsub.f32 %v2439, %v2487
  %v2512 = vsub.f32 %v2440, %v2490
  %v2513 = vsub.f32 %v2441, %v2493
  %v2514 = vsub.f32 %v2442, %v2496
  %v2515 = vmul.f32 %v2497, 1.442695
  %v2516 = vpow.pop %v2515
  %v2517 = vmul.f32 %v2498, 1.442695
  %v2518 = vpow.pop %v2517
  %v2519 = vmul.f32 %v2499, 1.442695
  %v2520 = vpow.pop %v2519
  %v2521 = vmul.f32 %v2500, 1.442695
  %v2522 = vpow.pop %v2521
  %v2523 = vmul.f32 %v2501, 1.442695
  %v2524 = vpow.pop %v2523
  %v2525 = vmul.f32 %v2502, 1.442695
  %v2526 = vpow.pop %v2525
  %v2527 = vmul.f32 %v2503, 1.442695
  %v2528 = vpow.pop %v2527
  %v2529 = vmul.f32 %v2504, 1.442695
  %v2530 = vpow.pop %v2529
  %v2531 = vmul.f32 %v2505, 1.442695
  %v2532 = vpow.pop %v2531
  %v2533 = vmul.f32 %v2506, 1.442695
  %v2534 = vpow.pop %v2533
  %v2535 = vmul.f32 %v2507, 1.442695
  %v2536 = vpow.pop %v2535
  %v2537 = vmul.f32 %v2508, 1.442695
  %v2538 = vpow.pop %v2537
  %v2539 = vmul.f32 %v2509, 1.442695
  %v2540 = vpow.pop %v2539
  %v2541 = vmul.f32 %v2510, 1.442695
  %v2542 = vpow.pop %v2541
  %v2543 = vmul.f32 %v2511, 1.442695
  %v2544 = vpow.pop %v2543
  %v2545 = vmul.f32 %v2512, 1.442695
  %v2546 = vpow.pop %v2545
  %v2547 = vmul.f32 %v2513, 1.442695
  %v2548 = vpow.pop %v2547
  %v2549 = vmul.f32 %v2514, 1.442695
  %v2550 = vpow.pop %v2549
  %v2551 = vsel %vm1726, %v2516, 0.0
  %2552 = vadd.xlane.f32.xlu0 %v2551
  %v2553 = vpop.xlane.xlu0 %2552
  %v2554 = vsel %vm1726, %v2518, 0.0
  %2555 = vadd.xlane.f32.xlu0 %v2554
  %v2556 = vpop.xlane.xlu0 %2555
  %v2557 = vsel %vm1726, %v2520, 0.0
  %2558 = vadd.xlane.f32.xlu0 %v2557
  %v2559 = vpop.xlane.xlu0 %2558
  %v2560 = vsel %vm1726, %v2522, 0.0
  %2561 = vadd.xlane.f32.xlu0 %v2560
  %v2562 = vpop.xlane.xlu0 %2561
  %v2563 = vsel %vm1726, %v2524, 0.0
  %2564 = vadd.xlane.f32.xlu0 %v2563
  %v2565 = vpop.xlane.xlu0 %2564
  %v2566 = vsel %vm1726, %v2526, 0.0
  %2567 = vadd.xlane.f32.xlu0 %v2566
  %v2568 = vpop.xlane.xlu0 %2567
  %v2569 = vsel %vm1726, %v2528, 0.0
  %2570 = vadd.xlane.f32.xlu0 %v2569
  %v2571 = vpop.xlane.xlu0 %2570
  %v2572 = vsel %vm1726, %v2530, 0.0
  %2573 = vadd.xlane.f32.xlu0 %v2572
  %v2574 = vpop.xlane.xlu0 %2573
  %v2575 = vsel %vm1726, %v2532, 0.0
  %2576 = vadd.xlane.f32.xlu0 %v2575
  %v2577 = vpop.xlane.xlu0 %2576
  %v2578 = vsel %vm1726, %v2534, 0.0
  %2579 = vadd.xlane.f32.xlu0 %v2578
  %v2580 = vpop.xlane.xlu0 %2579
  %v2581 = vsel %vm1726, %v2536, 0.0
  %2582 = vadd.xlane.f32.xlu0 %v2581
  %v2583 = vpop.xlane.xlu0 %2582
  %v2584 = vsel %vm1726, %v2538, 0.0
  %2585 = vadd.xlane.f32.xlu0 %v2584
  %v2586 = vpop.xlane.xlu0 %2585
  %v2587 = vsel %vm1726, %v2540, 0.0
  %2588 = vadd.xlane.f32.xlu0 %v2587
  %v2589 = vpop.xlane.xlu0 %2588
  %v2590 = vsel %vm1726, %v2542, 0.0
  %2591 = vadd.xlane.f32.xlu0 %v2590
  %v2592 = vpop.xlane.xlu0 %2591
  %v2593 = vsel %vm1726, %v2544, 0.0
  %2594 = vadd.xlane.f32.xlu0 %v2593
  %v2595 = vpop.xlane.xlu0 %2594
  %v2596 = vsel %vm1726, %v2546, 0.0
  %2597 = vadd.xlane.f32.xlu0 %v2596
  %v2598 = vpop.xlane.xlu0 %2597
  %v2599 = vsel %vm1726, %v2548, 0.0
  %2600 = vadd.xlane.f32.xlu0 %v2599
  %v2601 = vpop.xlane.xlu0 %2600
  %v2602 = vsel %vm1726, %v2550, 0.0
  %2603 = vadd.xlane.f32.xlu0 %v2602
  %v2604 = vpop.xlane.xlu0 %2603
  %v2605 = vpack.c.bf16 %v2518, %v2516
  %v2606 = vpack.c.bf16 %v2522, %v2520
  %v2607 = vpack.c.bf16 %v2526, %v2524
  %v2608 = vpack.c.bf16 %v2530, %v2528
  %v2609 = vpack.c.bf16 %v2532, %v2532
  %v2610 = vpack.c.bf16 %v2536, %v2534
  %v2611 = vpack.c.bf16 %v2540, %v2538
  %v2612 = vpack.c.bf16 %v2544, %v2542
  %v2613 = vpack.c.bf16 %v2548, %v2546
  %v2614 = vpack.c.bf16 %v2550, %v2550
  %2620 = vrot.lane.b32.xlu0 %v1899, 64
  %v2621 = vpop.permute.xlu0 %2620
  %2622 = vrot.lane.b32.xlu0 %v1900, 64
  %v2623 = vpop.permute.xlu0 %2622
  %2624 = vrot.lane.b32.xlu0 %v1901, 64
  %v2625 = vpop.permute.xlu0 %2624
  %2626 = vrot.lane.b32.xlu0 %v1902, 64
  %v2627 = vpop.permute.xlu0 %2626
  %2628 = vrot.lane.b32.xlu0 %v1903, 64
  %v2629 = vpop.permute.xlu0 %2628
  %v2635 = vsel %vm1726, %v2605, 0
  %v2638 = vsel %vm1726, %v2606, 0
  %v2641 = vsel %vm1726, %v2607, 0
  %v2644 = vsel %vm1726, %v2608, 0
  %v2647 = vsel %vm1726, %v2609, 0
  %v2650 = vsel %vm1924, %v2629, 0
  %2652 = vmatprep.subr.bf16.mxu0 0
  %2653 = vmatpush1.bf16.msra.mxu0 %v2621
  %2654 = vmatprep.subr.bf16.mxu0 0
  %2655 = vmatpush1.bf16.msra.mxu0 %v2623
  %2656 = vmatprep.subr.bf16.mxu0 0
  %2657 = vmatpush1.bf16.msra.mxu0 %v2625
  %2658 = vmatprep.subr.bf16.mxu0 0
  %2659 = vmatpush1.bf16.msra.mxu0 %v2627
  %2660 = vmatprep.subr.bf16.mxu0 0
  %2661 = vmatpush1.bf16.msra.mxu0 %v2650
  %2662 = vmatprep.subr.bf16.mxu0 0
  %2663 = vmatpush1.bf16.msra.mxu0 0
  %2664 = vmatprep.subr.bf16.mxu0 0
  %2665 = vmatpush1.bf16.msra.mxu0 0
  %2666 = vmatprep.subr.bf16.mxu0 0
  %2667 = vmatpush1.bf16.msra.mxu0 0
  %2668 = vmatprep.subr.bf16.mxu0 0
  %2669 = vmatpush1.bf16.msra.mxu0 0
  %2670 = vmatprep.subr.bf16.mxu0 0
  %2671 = vmatpush1.bf16.msra.mxu0 0
  %2672 = vmatprep.subr.bf16.mxu0 0
  %2673 = vmatpush1.bf16.msra.mxu0 0
  %2674 = vmatprep.subr.bf16.mxu0 0
  %2675 = vmatpush1.bf16.msra.mxu0 0
  %2676 = vmatprep.subr.bf16.mxu0 0
  %2677 = vmatpush1.bf16.msra.mxu0 0
  %2678 = vmatprep.subr.bf16.mxu0 0
  %2679 = vmatpush1.bf16.msra.mxu0 0
  %2680 = vmatprep.subr.bf16.mxu0 0
  %2681 = vmatpush1.bf16.msra.mxu0 0
  %2682 = vmatprep.subr.bf16.mxu0 0
  %2683 = vmatpush1.bf16.msra.mxu0 0
  %2684 = vmatprep.mubr.bf16.mxu0 0
  %2685 = vmatmul.mubr.bf16.gmra.mrb[0].mxu0 %v2635
  %v2686 = vpop.f32.mrb[0].mxu0
  %v2687 = vadd.f32 0.0, %v2686
  %v2688 = vpop.f32.mrb[0].mxu0
  %v2689 = vpop.f32.mrb[0].mxu0
  %v2690 = vadd.f32 0.0, %v2689
  %v2691 = vpop.f32.mrb[0].mxu0
  %2692 = vmatprep.mubr.bf16.mxu0 0
  %2693 = vmatmul.mubr.bf16.gmra.mrb[0].mxu0 %v2638
  %v2694 = vpop.f32.mrb[0].mxu0
  %v2695 = vadd.f32 0.0, %v2694
  %v2696 = vpop.f32.mrb[0].mxu0
  %v2697 = vpop.f32.mrb[0].mxu0
  %v2698 = vadd.f32 0.0, %v2697
  %v2699 = vpop.f32.mrb[0].mxu0
  %2700 = vmatprep.mubr.bf16.mxu0 0
  %2701 = vmatmul.mubr.bf16.gmra.mrb[0].mxu0 %v2641
  %v2702 = vpop.f32.mrb[0].mxu0
  %v2703 = vadd.f32 0.0, %v2702
  %v2704 = vpop.f32.mrb[0].mxu0
  %v2705 = vpop.f32.mrb[0].mxu0
  %v2706 = vadd.f32 0.0, %v2705
  %v2707 = vpop.f32.mrb[0].mxu0
  %2708 = vmatprep.mubr.bf16.mxu0 0
  %2709 = vmatmul.mubr.bf16.gmra.mrb[0].mxu0 %v2644
  %v2710 = vpop.f32.mrb[0].mxu0
  %v2711 = vadd.f32 0.0, %v2710
  %v2712 = vpop.f32.mrb[0].mxu0
  %v2713 = vpop.f32.mrb[0].mxu0
  %v2714 = vadd.f32 0.0, %v2713
  %v2715 = vpop.f32.mrb[0].mxu0
  %2716 = vmatprep.mubr.bf16.mxu0 0
  %2717 = vmatmul.mubr.bf16.gmra.mrb[0].mxu0 %v2647
  %v2718 = vpop.f32.mrb[0].mxu0
  %v2719 = vadd.f32 0.0, %v2718
  %v2720 = vpop.f32.mrb[0].mxu0
  %v2721 = vpop.f32.mrb[0].mxu0
  %v2722 = vpop.f32.mrb[0].mxu0
  %2723 = vdwg.mxu0
  %2729 = vrot.lane.b32.xlu0 %v1904, 64
  %v2730 = vpop.permute.xlu0 %2729
  %2731 = vrot.lane.b32.xlu0 %v1905, 64
  %v2732 = vpop.permute.xlu0 %2731
  %2733 = vrot.lane.b32.xlu0 %v1906, 64
  %v2734 = vpop.permute.xlu0 %2733
  %2735 = vrot.lane.b32.xlu0 %v1907, 64
  %v2736 = vpop.permute.xlu0 %2735
  %2737 = vrot.lane.b32.xlu0 %v1908, 64
  %v2738 = vpop.permute.xlu0 %2737
  %v2744 = vsel %vm1726, %v2610, 0
  %v2747 = vsel %vm1726, %v2611, 0
  %v2750 = vsel %vm1726, %v2612, 0
  %v2753 = vsel %vm1726, %v2613, 0
  %v2756 = vsel %vm1726, %v2614, 0
  %v2759 = vsel %vm1924, %v2738, 0
  %2761 = vmatprep.subr.bf16.mxu0 0
  %2762 = vmatpush1.bf16.msra.mxu0 %v2730
  %2763 = vmatprep.subr.bf16.mxu0 0
  %2764 = vmatpush1.bf16.msra.mxu0 %v2732
  %2765 = vmatprep.subr.bf16.mxu0 0
  %2766 = vmatpush1.bf16.msra.mxu0 %v2734
  %2767 = vmatprep.subr.bf16.mxu0 0
  %2768 = vmatpush1.bf16.msra.mxu0 %v2736
  %2769 = vmatprep.subr.bf16.mxu0 0
  %2770 = vmatpush1.bf16.msra.mxu0 %v2759
  %2771 = vmatprep.subr.bf16.mxu0 0
  %2772 = vmatpush1.bf16.msra.mxu0 0
  %2773 = vmatprep.subr.bf16.mxu0 0
  %2774 = vmatpush1.bf16.msra.mxu0 0
  %2775 = vmatprep.subr.bf16.mxu0 0
  %2776 = vmatpush1.bf16.msra.mxu0 0
  %2777 = vmatprep.subr.bf16.mxu0 0
  %2778 = vmatpush1.bf16.msra.mxu0 0
  %2779 = vmatprep.subr.bf16.mxu0 0
  %2780 = vmatpush1.bf16.msra.mxu0 0
  %2781 = vmatprep.subr.bf16.mxu0 0
  %2782 = vmatpush1.bf16.msra.mxu0 0
  %2783 = vmatprep.subr.bf16.mxu0 0
  %2784 = vmatpush1.bf16.msra.mxu0 0
  %2785 = vmatprep.subr.bf16.mxu0 0
  %2786 = vmatpush1.bf16.msra.mxu0 0
  %2787 = vmatprep.subr.bf16.mxu0 0
  %2788 = vmatpush1.bf16.msra.mxu0 0
  %2789 = vmatprep.subr.bf16.mxu0 0
  %2790 = vmatpush1.bf16.msra.mxu0 0
  %2791 = vmatprep.subr.bf16.mxu0 0
  %2792 = vmatpush1.bf16.msra.mxu0 0
  %2793 = vmatprep.mubr.bf16.mxu0 0
  %2794 = vmatmul.mubr.bf16.gmra.mrb[0].mxu0 %v2744
  %v2795 = vpop.f32.mrb[0].mxu0
  %v2796 = vadd.f32 0.0, %v2795
  %v2797 = vpop.f32.mrb[0].mxu0
  %v2798 = vpop.f32.mrb[0].mxu0
  %v2799 = vadd.f32 0.0, %v2798
  %v2800 = vpop.f32.mrb[0].mxu0
  %2801 = vmatprep.mubr.bf16.mxu0 0
  %2802 = vmatmul.mubr.bf16.gmra.mrb[0].mxu0 %v2747
  %v2803 = vpop.f32.mrb[0].mxu0
  %v2804 = vadd.f32 0.0, %v2803
  %v2805 = vpop.f32.mrb[0].mxu0
  %v2806 = vpop.f32.mrb[0].mxu0
  %v2807 = vadd.f32 0.0, %v2806
  %v2808 = vpop.f32.mrb[0].mxu0
  %2809 = vmatprep.mubr.bf16.mxu0 0
  %2810 = vmatmul.mubr.bf16.gmra.mrb[0].mxu0 %v2750
  %v2811 = vpop.f32.mrb[0].mxu0
  %v2812 = vadd.f32 0.0, %v2811
  %v2813 = vpop.f32.mrb[0].mxu0
  %v2814 = vpop.f32.mrb[0].mxu0
  %v2815 = vadd.f32 0.0, %v2814
  %v2816 = vpop.f32.mrb[0].mxu0
  %2817 = vmatprep.mubr.bf16.mxu0 0
  %2818 = vmatmul.mubr.bf16.gmra.mrb[0].mxu0 %v2753
  %v2819 = vpop.f32.mrb[0].mxu0
  %v2820 = vadd.f32 0.0, %v2819
  %v2821 = vpop.f32.mrb[0].mxu0
  %v2822 = vpop.f32.mrb[0].mxu0
  %v2823 = vadd.f32 0.0, %v2822
  %v2824 = vpop.f32.mrb[0].mxu0
  %2825 = vmatprep.mubr.bf16.mxu0 0
  %2826 = vmatmul.mubr.bf16.gmra.mrb[0].mxu0 %v2756
  %v2827 = vpop.f32.mrb[0].mxu0
  %v2828 = vadd.f32 0.0, %v2827
  %v2829 = vpop.f32.mrb[0].mxu0
  %v2830 = vpop.f32.mrb[0].mxu0
  %v2831 = vpop.f32.mrb[0].mxu0
  %2832 = vdwg.mxu0
  %v2833 = vrcp.pop %v2553
  %v2834 = vrcp.pop %v2556
  %v2835 = vrcp.pop %v2559
  %v2836 = vrcp.pop %v2562
  %v2837 = vrcp.pop %v2565
  %v2838 = vrcp.pop %v2568
  %v2839 = vrcp.pop %v2571
  %v2840 = vrcp.pop %v2574
  %v2841 = vrcp.pop %v2577
  %v2842 = vrcp.pop %v2580
  %v2843 = vrcp.pop %v2583
  %v2844 = vrcp.pop %v2586
  %v2845 = vrcp.pop %v2589
  %v2846 = vrcp.pop %v2592
  %v2847 = vrcp.pop %v2595
  %v2848 = vrcp.pop %v2598
  %v2849 = vrcp.pop %v2601
  %v2850 = vrcp.pop %v2604
  %v2851 = vmul.f32 %v2687, %v2833
  %v2852 = vmul.f32 %v2690, %v2834
  %v2853 = vmul.f32 %v2695, %v2835
  %v2854 = vmul.f32 %v2698, %v2836
  %v2855 = vmul.f32 %v2703, %v2837
  %v2856 = vmul.f32 %v2706, %v2838
  %v2857 = vmul.f32 %v2711, %v2839
  %v2858 = vmul.f32 %v2714, %v2840
  %v2859 = vmul.f32 %v2719, %v2841
  %v2860 = vmul.f32 %v2796, %v2842
  %v2861 = vmul.f32 %v2799, %v2843
  %v2862 = vmul.f32 %v2804, %v2844
  %v2863 = vmul.f32 %v2807, %v2845
  %v2864 = vmul.f32 %v2812, %v2846
  %v2865 = vmul.f32 %v2815, %v2847
  %v2866 = vmul.f32 %v2820, %v2848
  %v2867 = vmul.f32 %v2823, %v2849
  %v2868 = vmul.f32 %v2828, %v2850
  %v2869 = vpack.c.bf16 %v2852, %v2851
  %v2870 = vpack.c.bf16 %v2854, %v2853
  %v2871 = vpack.c.bf16 %v2856, %v2855
  %v2872 = vpack.c.bf16 %v2858, %v2857
  %v2873 = vpack.c.bf16 %v2860, %v2859
  %v2874 = vpack.c.bf16 %v2862, %v2861
  %v2875 = vpack.c.bf16 %v2864, %v2863
  %v2876 = vpack.c.bf16 %v2866, %v2865
  %v2877 = vpack.c.bf16 %v2868, %v2867
  %v2878 = vld [vmem:[%s5 + $0x40] sm:$0xff]
  %v2879 = vld [vmem:[%s5 + $0x48] sm:$0xff]
  %v2880 = vld [vmem:[%s5 + $0x50] sm:$0xff]
  %v2881 = vld [vmem:[%s5 + $0x58] sm:$0xff]
  %v2882 = vld [vmem:[%s5 + $0x60] sm:$0xff]
  %v2883 = vld [vmem:[%s5 + $0x68] sm:$0xff]
  %v2884 = vld [vmem:[%s5 + $0x70] sm:$0xff]
  %v2885 = vld [vmem:[%s5 + $0x78] sm:$0xff]
  %v2894 = vunpack.c.l.b16 %v2878
  %v2895 = vunpack.c.h.b16 %v2878
  %v2896 = vunpack.c.l.b16 %v2879
  %v2897 = vunpack.c.h.b16 %v2879
  %v2898 = vunpack.c.l.b16 %v2880
  %v2899 = vunpack.c.h.b16 %v2880
  %v2900 = vunpack.c.l.b16 %v2881
  %v2901 = vunpack.c.h.b16 %v2881
  %v2902 = vunpack.c.l.b16 %v2882
  %v2903 = vunpack.c.h.b16 %v2882
  %v2904 = vunpack.c.l.b16 %v2883
  %v2905 = vunpack.c.h.b16 %v2883
  %v2906 = vunpack.c.l.b16 %v2884
  %v2907 = vunpack.c.h.b16 %v2884
  %v2908 = vunpack.c.l.b16 %v2885
  %v2909 = vunpack.c.h.b16 %v2885
  %v2910 = vpack.c.b16 %v2896, %v2894
  %v2911 = vpack.c.b16 %v2897, %v2895
  %v2912 = vpack.c.b16 %v2900, %v2898
  %v2913 = vpack.c.b16 %v2901, %v2899
  %v2914 = vpack.c.b16 %v2904, %v2902
  %v2915 = vpack.c.b16 %v2905, %v2903
  %v2916 = vpack.c.b16 %v2908, %v2906
  %v2917 = vpack.c.b16 %v2909, %v2907
  %v2927 = vsel %vm1485, %v2869, 0
  %v2930 = vsel %vm1485, %v2870, 0
  %v2933 = vsel %vm1485, %v2871, 0
  %v2936 = vsel %vm1485, %v2872, 0
  %v2939 = vsel %vm1485, %v2873, 0
  %v2942 = vsel %vm1485, %v2874, 0
  %v2945 = vsel %vm1485, %v2875, 0
  %v2948 = vsel %vm1485, %v2876, 0
  %v2951 = vsel %vm1485, %v2877, 0
  %2953 = vmatprep.subr.bf16.mxu0 %v2911
  %2954 = vmatpush1.bf16.msra.mxu0 %v2910
  %2955 = vmatprep.subr.bf16.mxu0 %v2913
  %2956 = vmatpush1.bf16.msra.mxu0 %v2912
  %2957 = vmatprep.subr.bf16.mxu0 %v2915
  %2958 = vmatpush1.bf16.msra.mxu0 %v2914
  %2959 = vmatprep.subr.bf16.mxu0 %v2917
  %2960 = vmatpush1.bf16.msra.mxu0 %v2916
  %2961 = vmatprep.subr.bf16.mxu0 0
  %2962 = vmatpush1.bf16.msra.mxu0 0
  %2963 = vmatprep.subr.bf16.mxu0 0
  %2964 = vmatpush1.bf16.msra.mxu0 0
  %2965 = vmatprep.subr.bf16.mxu0 0
  %2966 = vmatpush1.bf16.msra.mxu0 0
  %2967 = vmatprep.subr.bf16.mxu0 0
  %2968 = vmatpush1.bf16.msra.mxu0 0
  %2969 = vmatprep.subr.bf16.mxu0 0
  %2970 = vmatpush1.bf16.msra.mxu0 0
  %2971 = vmatprep.subr.bf16.mxu0 0
  %2972 = vmatpush1.bf16.msra.mxu0 0
  %2973 = vmatprep.subr.bf16.mxu0 0
  %2974 = vmatpush1.bf16.msra.mxu0 0
  %2975 = vmatprep.subr.bf16.mxu0 0
  %2976 = vmatpush1.bf16.msra.mxu0 0
  %2977 = vmatprep.subr.bf16.mxu0 0
  %2978 = vmatpush1.bf16.msra.mxu0 0
  %2979 = vmatprep.subr.bf16.mxu0 0
  %2980 = vmatpush1.bf16.msra.mxu0 0
  %2981 = vmatprep.subr.bf16.mxu0 0
  %2982 = vmatpush1.bf16.msra.mxu0 0
  %2983 = vmatprep.subr.bf16.mxu0 0
  %2984 = vmatpush1.bf16.msra.mxu0 0
  %2985 = vmatprep.mubr.bf16.mxu0 0
  %2986 = vmatmul.mubr.bf16.gmra.mrb[0].mxu0 %v2927
  %v2987 = vpop.f32.mrb[0].mxu0
  %v2988 = vadd.f32 0.0, %v2987
  %v2989 = vpop.f32.mrb[0].mxu0
  %v2990 = vadd.f32 0.0, %v2989
  %v2991 = vpop.f32.mrb[0].mxu0
  %v2992 = vadd.f32 0.0, %v2991
  %v2993 = vpop.f32.mrb[0].mxu0
  %v2994 = vadd.f32 0.0, %v2993
  %2995 = vmatprep.mubr.bf16.mxu0 0
  %2996 = vmatmul.mubr.bf16.gmra.mrb[0].mxu0 %v2930
  %v2997 = vpop.f32.mrb[0].mxu0
  %v2998 = vadd.f32 0.0, %v2997
  %v2999 = vpop.f32.mrb[0].mxu0
  %v3000 = vadd.f32 0.0, %v2999
  %v3001 = vpop.f32.mrb[0].mxu0
  %v3002 = vadd.f32 0.0, %v3001
  %v3003 = vpop.f32.mrb[0].mxu0
  %v3004 = vadd.f32 0.0, %v3003
  %3005 = vmatprep.mubr.bf16.mxu0 0
  %3006 = vmatmul.mubr.bf16.gmra.mrb[0].mxu0 %v2933
  %v3007 = vpop.f32.mrb[0].mxu0
  %v3008 = vadd.f32 0.0, %v3007
  %v3009 = vpop.f32.mrb[0].mxu0
  %v3010 = vadd.f32 0.0, %v3009
  %v3011 = vpop.f32.mrb[0].mxu0
  %v3012 = vadd.f32 0.0, %v3011
  %v3013 = vpop.f32.mrb[0].mxu0
  %v3014 = vadd.f32 0.0, %v3013
  %3015 = vmatprep.mubr.bf16.mxu0 0
  %3016 = vmatmul.mubr.bf16.gmra.mrb[0].mxu0 %v2936
  %v3017 = vpop.f32.mrb[0].mxu0
  %v3018 = vadd.f32 0.0, %v3017
  %v3019 = vpop.f32.mrb[0].mxu0
  %v3020 = vadd.f32 0.0, %v3019
  %v3021 = vpop.f32.mrb[0].mxu0
  %v3022 = vadd.f32 0.0, %v3021
  %v3023 = vpop.f32.mrb[0].mxu0
  %v3024 = vadd.f32 0.0, %v3023
  %3025 = vmatprep.mubr.bf16.mxu0 0
  %3026 = vmatmul.mubr.bf16.gmra.mrb[0].mxu0 %v2939
  %v3027 = vpop.f32.mrb[0].mxu0
  %v3028 = vadd.f32 0.0, %v3027
  %v3029 = vpop.f32.mrb[0].mxu0
  %v3030 = vadd.f32 0.0, %v3029
  %v3031 = vpop.f32.mrb[0].mxu0
  %v3032 = vadd.f32 0.0, %v3031
  %v3033 = vpop.f32.mrb[0].mxu0
  %v3034 = vadd.f32 0.0, %v3033
  %3035 = vmatprep.mubr.bf16.mxu0 0
  %3036 = vmatmul.mubr.bf16.gmra.mrb[0].mxu0 %v2942
  %v3037 = vpop.f32.mrb[0].mxu0
  %v3038 = vadd.f32 0.0, %v3037
  %v3039 = vpop.f32.mrb[0].mxu0
  %v3040 = vadd.f32 0.0, %v3039
  %v3041 = vpop.f32.mrb[0].mxu0
  %v3042 = vadd.f32 0.0, %v3041
  %v3043 = vpop.f32.mrb[0].mxu0
  %v3044 = vadd.f32 0.0, %v3043
  %3045 = vmatprep.mubr.bf16.mxu0 0
  %3046 = vmatmul.mubr.bf16.gmra.mrb[0].mxu0 %v2945
  %v3047 = vpop.f32.mrb[0].mxu0
  %v3048 = vadd.f32 0.0, %v3047
  %v3049 = vpop.f32.mrb[0].mxu0
  %v3050 = vadd.f32 0.0, %v3049
  %v3051 = vpop.f32.mrb[0].mxu0
  %v3052 = vadd.f32 0.0, %v3051
  %v3053 = vpop.f32.mrb[0].mxu0
  %v3054 = vadd.f32 0.0, %v3053
  %3055 = vmatprep.mubr.bf16.mxu0 0
  %3056 = vmatmul.mubr.bf16.gmra.mrb[0].mxu0 %v2948
  %v3057 = vpop.f32.mrb[0].mxu0
  %v3058 = vadd.f32 0.0, %v3057
  %v3059 = vpop.f32.mrb[0].mxu0
  %v3060 = vadd.f32 0.0, %v3059
  %v3061 = vpop.f32.mrb[0].mxu0
  %v3062 = vadd.f32 0.0, %v3061
  %v3063 = vpop.f32.mrb[0].mxu0
  %v3064 = vadd.f32 0.0, %v3063
  %3065 = vmatprep.mubr.bf16.mxu0 0
  %3066 = vmatmul.mubr.bf16.gmra.mrb[0].mxu0 %v2951
  %v3067 = vpop.f32.mrb[0].mxu0
  %v3068 = vadd.f32 0.0, %v3067
  %v3069 = vpop.f32.mrb[0].mxu0
  %v3070 = vadd.f32 0.0, %v3069
  %v3071 = vpop.f32.mrb[0].mxu0
  %v3072 = vadd.f32 0.0, %v3071
  %v3073 = vpop.f32.mrb[0].mxu0
  %v3074 = vadd.f32 0.0, %v3073
  %3075 = vdwg.mxu0
  %v3084 = vunpack.c.l.b16 %v2135
  %v3085 = vunpack.c.h.b16 %v2135
  %v3086 = vunpack.c.l.b16 %v2136
  %v3087 = vunpack.c.h.b16 %v2136
  %v3088 = vunpack.c.l.b16 %v2137
  %v3089 = vunpack.c.h.b16 %v2137
  %v3090 = vunpack.c.l.b16 %v2138
  %v3091 = vunpack.c.h.b16 %v2138
  %v3092 = vunpack.c.l.b16 %v2139
  %v3093 = vunpack.c.h.b16 %v2139
  %v3094 = vunpack.c.l.b16 %v2140
  %v3095 = vunpack.c.h.b16 %v2140
  %v3096 = vunpack.c.l.b16 %v2141
  %v3097 = vunpack.c.h.b16 %v2141
  %v3098 = vunpack.c.l.b16 %v2142
  %v3099 = vunpack.c.h.b16 %v2142
  %v3100 = vpack.c.b16 %v3086, %v3084
  %v3101 = vpack.c.b16 %v3087, %v3085
  %v3102 = vpack.c.b16 %v3090, %v3088
  %v3103 = vpack.c.b16 %v3091, %v3089
  %v3104 = vpack.c.b16 %v3094, %v3092
  %v3105 = vpack.c.b16 %v3095, %v3093
  %v3106 = vpack.c.b16 %v3098, %v3096
  %v3107 = vpack.c.b16 %v3099, %v3097
  %v3117 = vsel %vm1485, %v2126, 0
  %v3120 = vsel %vm1485, %v2127, 0
  %v3123 = vsel %vm1485, %v2128, 0
  %v3126 = vsel %vm1485, %v2129, 0
  %v3129 = vsel %vm1485, %v2130, 0
  %v3132 = vsel %vm1485, %v2131, 0
  %v3135 = vsel %vm1485, %v2132, 0
  %v3138 = vsel %vm1485, %v2133, 0
  %v3141 = vsel %vm1485, %v2134, 0
  %3143 = vmatprep.subr.bf16.mxu0 %v3101
  %3144 = vmatpush1.bf16.msra.mxu0 %v3100
  %3145 = vmatprep.subr.bf16.mxu0 %v3103
  %3146 = vmatpush1.bf16.msra.mxu0 %v3102
  %3147 = vmatprep.subr.bf16.mxu0 %v3105
  %3148 = vmatpush1.bf16.msra.mxu0 %v3104
  %3149 = vmatprep.subr.bf16.mxu0 %v3107
  %3150 = vmatpush1.bf16.msra.mxu0 %v3106
  %3151 = vmatprep.subr.bf16.mxu0 0
  %3152 = vmatpush1.bf16.msra.mxu0 0
  %3153 = vmatprep.subr.bf16.mxu0 0
  %3154 = vmatpush1.bf16.msra.mxu0 0
  %3155 = vmatprep.subr.bf16.mxu0 0
  %3156 = vmatpush1.bf16.msra.mxu0 0
  %3157 = vmatprep.subr.bf16.mxu0 0
  %3158 = vmatpush1.bf16.msra.mxu0 0
  %3159 = vmatprep.subr.bf16.mxu0 0
  %3160 = vmatpush1.bf16.msra.mxu0 0
  %3161 = vmatprep.subr.bf16.mxu0 0
  %3162 = vmatpush1.bf16.msra.mxu0 0
  %3163 = vmatprep.subr.bf16.mxu0 0
  %3164 = vmatpush1.bf16.msra.mxu0 0
  %3165 = vmatprep.subr.bf16.mxu0 0
  %3166 = vmatpush1.bf16.msra.mxu0 0
  %3167 = vmatprep.subr.bf16.mxu0 0
  %3168 = vmatpush1.bf16.msra.mxu0 0
  %3169 = vmatprep.subr.bf16.mxu0 0
  %3170 = vmatpush1.bf16.msra.mxu0 0
  %3171 = vmatprep.subr.bf16.mxu0 0
  %3172 = vmatpush1.bf16.msra.mxu0 0
  %3173 = vmatprep.subr.bf16.mxu0 0
  %3174 = vmatpush1.bf16.msra.mxu0 0
  %3175 = vmatprep.mubr.bf16.mxu0 0
  %3176 = vmatmul.mubr.bf16.gmra.mrb[0].mxu0 %v3117
  %v3177 = vpop.f32.mrb[0].mxu0
  %v3178 = vadd.f32 %v2988, %v3177
  %v3179 = vpop.f32.mrb[0].mxu0
  %v3180 = vadd.f32 %v2990, %v3179
  %v3181 = vpop.f32.mrb[0].mxu0
  %v3182 = vadd.f32 %v2992, %v3181
  %v3183 = vpop.f32.mrb[0].mxu0
  %v3184 = vadd.f32 %v2994, %v3183
  %3185 = vmatprep.mubr.bf16.mxu0 0
  %3186 = vmatmul.mubr.bf16.gmra.mrb[0].mxu0 %v3120
  %v3187 = vpop.f32.mrb[0].mxu0
  %v3188 = vadd.f32 %v2998, %v3187
  %v3189 = vpop.f32.mrb[0].mxu0
  %v3190 = vadd.f32 %v3000, %v3189
  %v3191 = vpop.f32.mrb[0].mxu0
  %v3192 = vadd.f32 %v3002, %v3191
  %v3193 = vpop.f32.mrb[0].mxu0
  %v3194 = vadd.f32 %v3004, %v3193
  %3195 = vmatprep.mubr.bf16.mxu0 0
  %3196 = vmatmul.mubr.bf16.gmra.mrb[0].mxu0 %v3123
  %v3197 = vpop.f32.mrb[0].mxu0
  %v3198 = vadd.f32 %v3008, %v3197
  %v3199 = vpop.f32.mrb[0].mxu0
  %v3200 = vadd.f32 %v3010, %v3199
  %v3201 = vpop.f32.mrb[0].mxu0
  %v3202 = vadd.f32 %v3012, %v3201
  %v3203 = vpop.f32.mrb[0].mxu0
  %v3204 = vadd.f32 %v3014, %v3203
  %3205 = vmatprep.mubr.bf16.mxu0 0
  %3206 = vmatmul.mubr.bf16.gmra.mrb[0].mxu0 %v3126
  %v3207 = vpop.f32.mrb[0].mxu0
  %v3208 = vadd.f32 %v3018, %v3207
  %v3209 = vpop.f32.mrb[0].mxu0
  %v3210 = vadd.f32 %v3020, %v3209
  %v3211 = vpop.f32.mrb[0].mxu0
  %v3212 = vadd.f32 %v3022, %v3211
  %v3213 = vpop.f32.mrb[0].mxu0
  %v3214 = vadd.f32 %v3024, %v3213
  %3215 = vmatprep.mubr.bf16.mxu0 0
  %3216 = vmatmul.mubr.bf16.gmra.mrb[0].mxu0 %v3129
  %v3217 = vpop.f32.mrb[0].mxu0
  %v3218 = vadd.f32 %v3028, %v3217
  %v3219 = vpop.f32.mrb[0].mxu0
  %v3220 = vadd.f32 %v3030, %v3219
  %v3221 = vpop.f32.mrb[0].mxu0
  %v3222 = vadd.f32 %v3032, %v3221
  %v3223 = vpop.f32.mrb[0].mxu0
  %v3224 = vadd.f32 %v3034, %v3223
  %3225 = vmatprep.mubr.bf16.mxu0 0
  %3226 = vmatmul.mubr.bf16.gmra.mrb[0].mxu0 %v3132
  %v3227 = vpop.f32.mrb[0].mxu0
  %v3228 = vadd.f32 %v3038, %v3227
  %v3229 = vpop.f32.mrb[0].mxu0
  %v3230 = vadd.f32 %v3040, %v3229
  %v3231 = vpop.f32.mrb[0].mxu0
  %v3232 = vadd.f32 %v3042, %v3231
  %v3233 = vpop.f32.mrb[0].mxu0
  %v3234 = vadd.f32 %v3044, %v3233
  %3235 = vmatprep.mubr.bf16.mxu0 0
  %3236 = vmatmul.mubr.bf16.gmra.mrb[0].mxu0 %v3135
  %v3237 = vpop.f32.mrb[0].mxu0
  %v3238 = vadd.f32 %v3048, %v3237
  %v3239 = vpop.f32.mrb[0].mxu0
  %v3240 = vadd.f32 %v3050, %v3239
  %v3241 = vpop.f32.mrb[0].mxu0
  %v3242 = vadd.f32 %v3052, %v3241
  %v3243 = vpop.f32.mrb[0].mxu0
  %v3244 = vadd.f32 %v3054, %v3243
  %3245 = vmatprep.mubr.bf16.mxu0 0
  %3246 = vmatmul.mubr.bf16.gmra.mrb[0].mxu0 %v3138
  %v3247 = vpop.f32.mrb[0].mxu0
  %v3248 = vadd.f32 %v3058, %v3247
  %v3249 = vpop.f32.mrb[0].mxu0
  %v3250 = vadd.f32 %v3060, %v3249
  %v3251 = vpop.f32.mrb[0].mxu0
  %v3252 = vadd.f32 %v3062, %v3251
  %v3253 = vpop.f32.mrb[0].mxu0
  %v3254 = vadd.f32 %v3064, %v3253
  %3255 = vmatprep.mubr.bf16.mxu0 0
  %3256 = vmatmul.mubr.bf16.gmra.mrb[0].mxu0 %v3141
  %v3257 = vpop.f32.mrb[0].mxu0
  %v3258 = vadd.f32 %v3068, %v3257
  %v3259 = vpop.f32.mrb[0].mxu0
  %v3260 = vadd.f32 %v3070, %v3259
  %v3261 = vpop.f32.mrb[0].mxu0
  %v3262 = vadd.f32 %v3072, %v3261
  %v3263 = vpop.f32.mrb[0].mxu0
  %v3264 = vadd.f32 %v3074, %v3263
  %3265 = vdwg.mxu0
  %v3266 = vpack.c.bf16 %v1133, %v1129
  %v3267 = vpack.c.bf16 %v1143, %v1139
  %v3268 = vpack.c.bf16 %v1153, %v1149
  %v3269 = vpack.c.bf16 %v1163, %v1159
  %v3270 = vpack.c.bf16 %v1169, %v1169
  %v3271 = vpack.c.bf16 %v1179, %v1173
  %v3272 = vpack.c.bf16 %v1189, %v1183
  %v3273 = vpack.c.bf16 %v1199, %v1193
  %v3274 = vpack.c.bf16 %v1209, %v1203
  %v3275 = vpack.c.bf16 %v1213, %v1213
  %v3276 = vpack.c.bf16 %v1256, %v1252
  %v3277 = vpack.c.bf16 %v1266, %v1262
  %v3278 = vpack.c.bf16 %v1276, %v1272
  %v3279 = vpack.c.bf16 %v1286, %v1282
  %v3280 = vpack.c.bf16 %v1292, %v1292
  %v3281 = vpack.c.bf16 %v1302, %v1296
  %v3282 = vpack.c.bf16 %v1312, %v1306
  %v3283 = vpack.c.bf16 %v1322, %v1316
  %v3284 = vpack.c.bf16 %v1332, %v1326
  %v3285 = vpack.c.bf16 %v1336, %v1336
  %v3287 = vsel %vm1485, %v3266, 0
  %v3290 = vsel %vm1485, %v3267, 0
  %v3293 = vsel %vm1485, %v3268, 0
  %v3296 = vsel %vm1485, %v3269, 0
  %v3299 = vsel %vm1485, %v3270, 0
  %v3302 = vsel %vm1485, %v3276, 0
  %v3305 = vsel %vm1485, %v3277, 0
  %v3308 = vsel %vm1485, %v3278, 0
  %v3311 = vsel %vm1485, %v3279, 0
  %v3314 = vsel %vm1485, %v3280, 0
  %3316 = vmatprep.subr.bf16.mxu0 0
  %3317 = vmatpush1.bf16.xpose.msra.mxu0 %v3302
  %3318 = vmatprep.subr.bf16.mxu0 0
  %3319 = vmatpush1.bf16.xpose.msra.mxu0 %v3305
  %3320 = vmatprep.subr.bf16.mxu0 0
  %3321 = vmatpush1.bf16.xpose.msra.mxu0 %v3308
  %3322 = vmatprep.subr.bf16.mxu0 0
  %3323 = vmatpush1.bf16.xpose.msra.mxu0 %v3311
  %3324 = vmatprep.subr.bf16.mxu0 0
  %3325 = vmatpush1.bf16.xpose.msra.mxu0 %v3314
  %3326 = vmatprep.subr.bf16.mxu0 0
  %3327 = vmatpush1.bf16.xpose.msra.mxu0 0
  %3328 = vmatprep.subr.bf16.mxu0 0
  %3329 = vmatpush1.bf16.xpose.msra.mxu0 0
  %3330 = vmatprep.subr.bf16.mxu0 0
  %3331 = vmatpush1.bf16.xpose.msra.mxu0 0
  %3332 = vmatprep.subr.bf16.mxu0 0
  %3333 = vmatpush1.bf16.xpose.msra.mxu0 0
  %3334 = vmatprep.subr.bf16.mxu0 0
  %3335 = vmatpush1.bf16.xpose.msra.mxu0 0
  %3336 = vmatprep.subr.bf16.mxu0 0
  %3337 = vmatpush1.bf16.xpose.msra.mxu0 0
  %3338 = vmatprep.subr.bf16.mxu0 0
  %3339 = vmatpush1.bf16.xpose.msra.mxu0 0
  %3340 = vmatprep.subr.bf16.mxu0 0
  %3341 = vmatpush1.bf16.xpose.msra.mxu0 0
  %3342 = vmatprep.subr.bf16.mxu0 0
  %3343 = vmatpush1.bf16.xpose.msra.mxu0 0
  %3344 = vmatprep.subr.bf16.mxu0 0
  %3345 = vmatpush1.bf16.xpose.msra.mxu0 0
  %3346 = vmatprep.subr.bf16.mxu0 0
  %3347 = vmatpush1.bf16.xpose.msra.mxu0 0
  %3348 = vmatprep.mubr.bf16.mxu0 0
  %3349 = vmatmul.mubr.bf16.gmra.mrb[0].mxu0 %v3287
  %v3350 = vpop.f32.mrb[0].mxu0
  %v3351 = vadd.f32 0.0, %v3350
  %v3352 = vpop.f32.mrb[0].mxu0
  %v3353 = vpop.f32.mrb[0].mxu0
  %v3354 = vadd.f32 0.0, %v3353
  %v3355 = vpop.f32.mrb[0].mxu0
  %3356 = vmatprep.mubr.bf16.mxu0 0
  %3357 = vmatmul.mubr.bf16.gmra.mrb[0].mxu0 %v3290
  %v3358 = vpop.f32.mrb[0].mxu0
  %v3359 = vadd.f32 0.0, %v3358
  %v3360 = vpop.f32.mrb[0].mxu0
  %v3361 = vpop.f32.mrb[0].mxu0
  %v3362 = vadd.f32 0.0, %v3361
  %v3363 = vpop.f32.mrb[0].mxu0
  %3364 = vmatprep.mubr.bf16.mxu0 0
  %3365 = vmatmul.mubr.bf16.gmra.mrb[0].mxu0 %v3293
  %v3366 = vpop.f32.mrb[0].mxu0
  %v3367 = vadd.f32 0.0, %v3366
  %v3368 = vpop.f32.mrb[0].mxu0
  %v3369 = vpop.f32.mrb[0].mxu0
  %v3370 = vadd.f32 0.0, %v3369
  %v3371 = vpop.f32.mrb[0].mxu0
  %3372 = vmatprep.mubr.bf16.mxu0 0
  %3373 = vmatmul.mubr.bf16.gmra.mrb[0].mxu0 %v3296
  %v3374 = vpop.f32.mrb[0].mxu0
  %v3375 = vadd.f32 0.0, %v3374
  %v3376 = vpop.f32.mrb[0].mxu0
  %v3377 = vpop.f32.mrb[0].mxu0
  %v3378 = vadd.f32 0.0, %v3377
  %v3379 = vpop.f32.mrb[0].mxu0
  %3380 = vmatprep.mubr.bf16.mxu0 0
  %3381 = vmatmul.mubr.bf16.gmra.mrb[0].mxu0 %v3299
  %v3382 = vpop.f32.mrb[0].mxu0
  %v3383 = vadd.f32 0.0, %v3382
  %v3384 = vpop.f32.mrb[0].mxu0
  %v3385 = vpop.f32.mrb[0].mxu0
  %v3386 = vpop.f32.mrb[0].mxu0
  %3387 = vdwg.mxu0
  %v3389 = vsel %vm1485, %v3271, 0
  %v3392 = vsel %vm1485, %v3272, 0
  %v3395 = vsel %vm1485, %v3273, 0
  %v3398 = vsel %vm1485, %v3274, 0
  %v3401 = vsel %vm1485, %v3275, 0
  %v3404 = vsel %vm1485, %v3281, 0
  %v3407 = vsel %vm1485, %v3282, 0
  %v3410 = vsel %vm1485, %v3283, 0
  %v3413 = vsel %vm1485, %v3284, 0
  %v3416 = vsel %vm1485, %v3285, 0
  %3418 = vmatprep.subr.bf16.mxu0 0
  %3419 = vmatpush1.bf16.xpose.msra.mxu0 %v3404
  %3420 = vmatprep.subr.bf16.mxu0 0
  %3421 = vmatpush1.bf16.xpose.msra.mxu0 %v3407
  %3422 = vmatprep.subr.bf16.mxu0 0
  %3423 = vmatpush1.bf16.xpose.msra.mxu0 %v3410
  %3424 = vmatprep.subr.bf16.mxu0 0
  %3425 = vmatpush1.bf16.xpose.msra.mxu0 %v3413
  %3426 = vmatprep.subr.bf16.mxu0 0
  %3427 = vmatpush1.bf16.xpose.msra.mxu0 %v3416
  %3428 = vmatprep.subr.bf16.mxu0 0
  %3429 = vmatpush1.bf16.xpose.msra.mxu0 0
  %3430 = vmatprep.subr.bf16.mxu0 0
  %3431 = vmatpush1.bf16.xpose.msra.mxu0 0
  %3432 = vmatprep.subr.bf16.mxu0 0
  %3433 = vmatpush1.bf16.xpose.msra.mxu0 0
  %3434 = vmatprep.subr.bf16.mxu0 0
  %3435 = vmatpush1.bf16.xpose.msra.mxu0 0
  %3436 = vmatprep.subr.bf16.mxu0 0
  %3437 = vmatpush1.bf16.xpose.msra.mxu0 0
  %3438 = vmatprep.subr.bf16.mxu0 0
  %3439 = vmatpush1.bf16.xpose.msra.mxu0 0
  %3440 = vmatprep.subr.bf16.mxu0 0
  %3441 = vmatpush1.bf16.xpose.msra.mxu0 0
  %3442 = vmatprep.subr.bf16.mxu0 0
  %3443 = vmatpush1.bf16.xpose.msra.mxu0 0
  %3444 = vmatprep.subr.bf16.mxu0 0
  %3445 = vmatpush1.bf16.xpose.msra.mxu0 0
  %3446 = vmatprep.subr.bf16.mxu0 0
  %3447 = vmatpush1.bf16.xpose.msra.mxu0 0
  %3448 = vmatprep.subr.bf16.mxu0 0
  %3449 = vmatpush1.bf16.xpose.msra.mxu0 0
  %3450 = vmatprep.mubr.bf16.mxu0 0
  %3451 = vmatmul.mubr.bf16.gmra.mrb[0].mxu0 %v3389
  %v3452 = vpop.f32.mrb[0].mxu0
  %v3453 = vadd.f32 0.0, %v3452
  %v3454 = vpop.f32.mrb[0].mxu0
  %v3455 = vpop.f32.mrb[0].mxu0
  %v3456 = vadd.f32 0.0, %v3455
  %v3457 = vpop.f32.mrb[0].mxu0
  %3458 = vmatprep.mubr.bf16.mxu0 0
  %3459 = vmatmul.mubr.bf16.gmra.mrb[0].mxu0 %v3392
  %v3460 = vpop.f32.mrb[0].mxu0
  %v3461 = vadd.f32 0.0, %v3460
  %v3462 = vpop.f32.mrb[0].mxu0
  %v3463 = vpop.f32.mrb[0].mxu0
  %v3464 = vadd.f32 0.0, %v3463
  %v3465 = vpop.f32.mrb[0].mxu0
  %3466 = vmatprep.mubr.bf16.mxu0 0
  %3467 = vmatmul.mubr.bf16.gmra.mrb[0].mxu0 %v3395
  %v3468 = vpop.f32.mrb[0].mxu0
  %v3469 = vadd.f32 0.0, %v3468
  %v3470 = vpop.f32.mrb[0].mxu0
  %v3471 = vpop.f32.mrb[0].mxu0
  %v3472 = vadd.f32 0.0, %v3471
  %v3473 = vpop.f32.mrb[0].mxu0
  %3474 = vmatprep.mubr.bf16.mxu0 0
  %3475 = vmatmul.mubr.bf16.gmra.mrb[0].mxu0 %v3398
  %v3476 = vpop.f32.mrb[0].mxu0
  %v3477 = vadd.f32 0.0, %v3476
  %v3478 = vpop.f32.mrb[0].mxu0
  %v3479 = vpop.f32.mrb[0].mxu0
  %v3480 = vadd.f32 0.0, %v3479
  %v3481 = vpop.f32.mrb[0].mxu0
  %3482 = vmatprep.mubr.bf16.mxu0 0
  %3483 = vmatmul.mubr.bf16.gmra.mrb[0].mxu0 %v3401
  %v3484 = vpop.f32.mrb[0].mxu0
  %v3485 = vadd.f32 0.0, %v3484
  %v3486 = vpop.f32.mrb[0].mxu0
  %v3487 = vpop.f32.mrb[0].mxu0
  %v3488 = vpop.f32.mrb[0].mxu0
  %3489 = vdwg.mxu0
  %v3490 = vmul.f32 %v3351, 0.125
  %v3491 = vmul.f32 %v3354, 0.125
  %v3492 = vmul.f32 %v3359, 0.125
  %v3493 = vmul.f32 %v3362, 0.125
  %v3494 = vmul.f32 %v3367, 0.125
  %v3495 = vmul.f32 %v3370, 0.125
  %v3496 = vmul.f32 %v3375, 0.125
  %v3497 = vmul.f32 %v3378, 0.125
  %v3498 = vmul.f32 %v3383, 0.125
  %v3499 = vmul.f32 %v3453, 0.125
  %v3500 = vmul.f32 %v3456, 0.125
  %v3501 = vmul.f32 %v3461, 0.125
  %v3502 = vmul.f32 %v3464, 0.125
  %v3503 = vmul.f32 %v3469, 0.125
  %v3504 = vmul.f32 %v3472, 0.125
  %v3505 = vmul.f32 %v3477, 0.125
  %v3506 = vmul.f32 %v3480, 0.125
  %v3507 = vmul.f32 %v3485, 0.125
  %v3508 = vadd.f32 %v3490, %v1464
  %v3509 = vadd.f32 %v3491, %v1464
  %v3510 = vadd.f32 %v3492, %v1464
  %v3511 = vadd.f32 %v3493, %v1464
  %v3512 = vadd.f32 %v3494, %v1464
  %v3513 = vadd.f32 %v3495, %v1464
  %v3514 = vadd.f32 %v3496, %v1464
  %v3515 = vadd.f32 %v3497, %v1464
  %v3516 = vadd.f32 %v3498, %v1464
  %v3517 = vadd.f32 %v3499, %v1464
  %v3518 = vadd.f32 %v3500, %v1464
  %v3519 = vadd.f32 %v3501, %v1464
  %v3520 = vadd.f32 %v3502, %v1464
  %v3521 = vadd.f32 %v3503, %v1464
  %v3522 = vadd.f32 %v3504, %v1464
  %v3523 = vadd.f32 %v3505, %v1464
  %v3524 = vadd.f32 %v3506, %v1464
  %v3525 = vadd.f32 %v3507, %v1464
  %v3526 = vsel %vm1726, %v3508, -inf
  %3527 = vmax.xlane.f32.xlu0 %v3526
  %v3528 = vpop.xlane.xlu0 %3527
  %v3529 = vsel %vm1726, %v3509, -inf
  %3530 = vmax.xlane.f32.xlu0 %v3529
  %v3531 = vpop.xlane.xlu0 %3530
  %v3532 = vsel %vm1726, %v3510, -inf
  %3533 = vmax.xlane.f32.xlu0 %v3532
  %v3534 = vpop.xlane.xlu0 %3533
  %v3535 = vsel %vm1726, %v3511, -inf
  %3536 = vmax.xlane.f32.xlu0 %v3535
  %v3537 = vpop.xlane.xlu0 %3536
  %v3538 = vsel %vm1726, %v3512, -inf
  %3539 = vmax.xlane.f32.xlu0 %v3538
  %v3540 = vpop.xlane.xlu0 %3539
  %v3541 = vsel %vm1726, %v3513, -inf
  %3542 = vmax.xlane.f32.xlu0 %v3541
  %v3543 = vpop.xlane.xlu0 %3542
  %v3544 = vsel %vm1726, %v3514, -inf
  %3545 = vmax.xlane.f32.xlu0 %v3544
  %v3546 = vpop.xlane.xlu0 %3545
  %v3547 = vsel %vm1726, %v3515, -inf
  %3548 = vmax.xlane.f32.xlu0 %v3547
  %v3549 = vpop.xlane.xlu0 %3548
  %v3550 = vsel %vm1726, %v3516, -inf
  %3551 = vmax.xlane.f32.xlu0 %v3550
  %v3552 = vpop.xlane.xlu0 %3551
  %v3553 = vsel %vm1726, %v3517, -inf
  %3554 = vmax.xlane.f32.xlu0 %v3553
  %v3555 = vpop.xlane.xlu0 %3554
  %v3556 = vsel %vm1726, %v3518, -inf
  %3557 = vmax.xlane.f32.xlu0 %v3556
  %v3558 = vpop.xlane.xlu0 %3557
  %v3559 = vsel %vm1726, %v3519, -inf
  %3560 = vmax.xlane.f32.xlu0 %v3559
  %v3561 = vpop.xlane.xlu0 %3560
  %v3562 = vsel %vm1726, %v3520, -inf
  %3563 = vmax.xlane.f32.xlu0 %v3562
  %v3564 = vpop.xlane.xlu0 %3563
  %v3565 = vsel %vm1726, %v3521, -inf
  %3566 = vmax.xlane.f32.xlu0 %v3565
  %v3567 = vpop.xlane.xlu0 %3566
  %v3568 = vsel %vm1726, %v3522, -inf
  %3569 = vmax.xlane.f32.xlu0 %v3568
  %v3570 = vpop.xlane.xlu0 %3569
  %v3571 = vsel %vm1726, %v3523, -inf
  %3572 = vmax.xlane.f32.xlu0 %v3571
  %v3573 = vpop.xlane.xlu0 %3572
  %v3574 = vsel %vm1726, %v3524, -inf
  %3575 = vmax.xlane.f32.xlu0 %v3574
  %v3576 = vpop.xlane.xlu0 %3575
  %v3577 = vsel %vm1726, %v3525, -inf
  %3578 = vmax.xlane.f32.xlu0 %v3577
  %v3579 = vpop.xlane.xlu0 %3578
  %v3580 = vsub.f32 %v3508, %v3528
  %v3581 = vsub.f32 %v3509, %v3531
  %v3582 = vsub.f32 %v3510, %v3534
  %v3583 = vsub.f32 %v3511, %v3537
  %v3584 = vsub.f32 %v3512, %v3540
  %v3585 = vsub.f32 %v3513, %v3543
  %v3586 = vsub.f32 %v3514, %v3546
  %v3587 = vsub.f32 %v3515, %v3549
  %v3588 = vsub.f32 %v3516, %v3552
  %v3589 = vsub.f32 %v3517, %v3555
  %v3590 = vsub.f32 %v3518, %v3558
  %v3591 = vsub.f32 %v3519, %v3561
  %v3592 = vsub.f32 %v3520, %v3564
  %v3593 = vsub.f32 %v3521, %v3567
  %v3594 = vsub.f32 %v3522, %v3570
  %v3595 = vsub.f32 %v3523, %v3573
  %v3596 = vsub.f32 %v3524, %v3576
  %v3597 = vsub.f32 %v3525, %v3579
  %v3598 = vmul.f32 %v3580, 1.442695
  %v3599 = vpow.pop %v3598
  %v3600 = vmul.f32 %v3581, 1.442695
  %v3601 = vpow.pop %v3600
  %v3602 = vmul.f32 %v3582, 1.442695
  %v3603 = vpow.pop %v3602
  %v3604 = vmul.f32 %v3583, 1.442695
  %v3605 = vpow.pop %v3604
  %v3606 = vmul.f32 %v3584, 1.442695
  %v3607 = vpow.pop %v3606
  %v3608 = vmul.f32 %v3585, 1.442695
  %v3609 = vpow.pop %v3608
  %v3610 = vmul.f32 %v3586, 1.442695
  %v3611 = vpow.pop %v3610
  %v3612 = vmul.f32 %v3587, 1.442695
  %v3613 = vpow.pop %v3612
  %v3614 = vmul.f32 %v3588, 1.442695
  %v3615 = vpow.pop %v3614
  %v3616 = vmul.f32 %v3589, 1.442695
  %v3617 = vpow.pop %v3616
  %v3618 = vmul.f32 %v3590, 1.442695
  %v3619 = vpow.pop %v3618
  %v3620 = vmul.f32 %v3591, 1.442695
  %v3621 = vpow.pop %v3620
  %v3622 = vmul.f32 %v3592, 1.442695
  %v3623 = vpow.pop %v3622
  %v3624 = vmul.f32 %v3593, 1.442695
  %v3625 = vpow.pop %v3624
  %v3626 = vmul.f32 %v3594, 1.442695
  %v3627 = vpow.pop %v3626
  %v3628 = vmul.f32 %v3595, 1.442695
  %v3629 = vpow.pop %v3628
  %v3630 = vmul.f32 %v3596, 1.442695
  %v3631 = vpow.pop %v3630
  %v3632 = vmul.f32 %v3597, 1.442695
  %v3633 = vpow.pop %v3632
  %v3634 = vsel %vm1726, %v3599, 0.0
  %3635 = vadd.xlane.f32.xlu0 %v3634
  %v3636 = vpop.xlane.xlu0 %3635
  %v3637 = vsel %vm1726, %v3601, 0.0
  %3638 = vadd.xlane.f32.xlu0 %v3637
  %v3639 = vpop.xlane.xlu0 %3638
  %v3640 = vsel %vm1726, %v3603, 0.0
  %3641 = vadd.xlane.f32.xlu0 %v3640
  %v3642 = vpop.xlane.xlu0 %3641
  %v3643 = vsel %vm1726, %v3605, 0.0
  %3644 = vadd.xlane.f32.xlu0 %v3643
  %v3645 = vpop.xlane.xlu0 %3644
  %v3646 = vsel %vm1726, %v3607, 0.0
  %3647 = vadd.xlane.f32.xlu0 %v3646
  %v3648 = vpop.xlane.xlu0 %3647
  %v3649 = vsel %vm1726, %v3609, 0.0
  %3650 = vadd.xlane.f32.xlu0 %v3649
  %v3651 = vpop.xlane.xlu0 %3650
  %v3652 = vsel %vm1726, %v3611, 0.0
  %3653 = vadd.xlane.f32.xlu0 %v3652
  %v3654 = vpop.xlane.xlu0 %3653
  %v3655 = vsel %vm1726, %v3613, 0.0
  %3656 = vadd.xlane.f32.xlu0 %v3655
  %v3657 = vpop.xlane.xlu0 %3656
  %v3658 = vsel %vm1726, %v3615, 0.0
  %3659 = vadd.xlane.f32.xlu0 %v3658
  %v3660 = vpop.xlane.xlu0 %3659
  %v3661 = vsel %vm1726, %v3617, 0.0
  %3662 = vadd.xlane.f32.xlu0 %v3661
  %v3663 = vpop.xlane.xlu0 %3662
  %v3664 = vsel %vm1726, %v3619, 0.0
  %3665 = vadd.xlane.f32.xlu0 %v3664
  %v3666 = vpop.xlane.xlu0 %3665
  %v3667 = vsel %vm1726, %v3621, 0.0
  %3668 = vadd.xlane.f32.xlu0 %v3667
  %v3669 = vpop.xlane.xlu0 %3668
  %v3670 = vsel %vm1726, %v3623, 0.0
  %3671 = vadd.xlane.f32.xlu0 %v3670
  %v3672 = vpop.xlane.xlu0 %3671
  %v3673 = vsel %vm1726, %v3625, 0.0
  %3674 = vadd.xlane.f32.xlu0 %v3673
  %v3675 = vpop.xlane.xlu0 %3674
  %v3676 = vsel %vm1726, %v3627, 0.0
  %3677 = vadd.xlane.f32.xlu0 %v3676
  %v3678 = vpop.xlane.xlu0 %3677
  %v3679 = vsel %vm1726, %v3629, 0.0
  %3680 = vadd.xlane.f32.xlu0 %v3679
  %v3681 = vpop.xlane.xlu0 %3680
  %v3682 = vsel %vm1726, %v3631, 0.0
  %3683 = vadd.xlane.f32.xlu0 %v3682
  %v3684 = vpop.xlane.xlu0 %3683
  %v3685 = vsel %vm1726, %v3633, 0.0
  %3686 = vadd.xlane.f32.xlu0 %v3685
  %v3687 = vpop.xlane.xlu0 %3686
  %v3688 = vpack.c.bf16 %v3601, %v3599
  %v3689 = vpack.c.bf16 %v3605, %v3603
  %v3690 = vpack.c.bf16 %v3609, %v3607
  %v3691 = vpack.c.bf16 %v3613, %v3611
  %v3692 = vpack.c.bf16 %v3615, %v3615
  %v3693 = vpack.c.bf16 %v3619, %v3617
  %v3694 = vpack.c.bf16 %v3623, %v3621
  %v3695 = vpack.c.bf16 %v3627, %v3625
  %v3696 = vpack.c.bf16 %v3631, %v3629
  %v3697 = vpack.c.bf16 %v3633, %v3633
  %v3698 = vpack.c.bf16 %v1379, %v1375
  %v3699 = vpack.c.bf16 %v1389, %v1385
  %v3700 = vpack.c.bf16 %v1399, %v1395
  %v3701 = vpack.c.bf16 %v1409, %v1405
  %v3702 = vpack.c.bf16 %v1415, %v1415
  %v3703 = vpack.c.bf16 %v1425, %v1419
  %v3704 = vpack.c.bf16 %v1435, %v1429
  %v3705 = vpack.c.bf16 %v1445, %v1439
  %v3706 = vpack.c.bf16 %v1455, %v1449
  %v3707 = vpack.c.bf16 %v1459, %v1459
  %v3709 = vsel %vm1726, %v3688, 0
  %v3712 = vsel %vm1726, %v3689, 0
  %v3715 = vsel %vm1726, %v3690, 0
  %v3718 = vsel %vm1726, %v3691, 0
  %v3721 = vsel %vm1726, %v3692, 0
  %v3724 = vsel %vm1924, %v3702, 0
  %3726 = vmatprep.subr.bf16.mxu0 0
  %3727 = vmatpush1.bf16.msra.mxu0 %v3698
  %3728 = vmatprep.subr.bf16.mxu0 0
  %3729 = vmatpush1.bf16.msra.mxu0 %v3699
  %3730 = vmatprep.subr.bf16.mxu0 0
  %3731 = vmatpush1.bf16.msra.mxu0 %v3700
  %3732 = vmatprep.subr.bf16.mxu0 0
  %3733 = vmatpush1.bf16.msra.mxu0 %v3701
  %3734 = vmatprep.subr.bf16.mxu0 0
  %3735 = vmatpush1.bf16.msra.mxu0 %v3724
  %3736 = vmatprep.subr.bf16.mxu0 0
  %3737 = vmatpush1.bf16.msra.mxu0 0
  %3738 = vmatprep.subr.bf16.mxu0 0
  %3739 = vmatpush1.bf16.msra.mxu0 0
  %3740 = vmatprep.subr.bf16.mxu0 0
  %3741 = vmatpush1.bf16.msra.mxu0 0
  %3742 = vmatprep.subr.bf16.mxu0 0
  %3743 = vmatpush1.bf16.msra.mxu0 0
  %3744 = vmatprep.subr.bf16.mxu0 0
  %3745 = vmatpush1.bf16.msra.mxu0 0
  %3746 = vmatprep.subr.bf16.mxu0 0
  %3747 = vmatpush1.bf16.msra.mxu0 0
  %3748 = vmatprep.subr.bf16.mxu0 0
  %3749 = vmatpush1.bf16.msra.mxu0 0
  %3750 = vmatprep.subr.bf16.mxu0 0
  %3751 = vmatpush1.bf16.msra.mxu0 0
  %3752 = vmatprep.subr.bf16.mxu0 0
  %3753 = vmatpush1.bf16.msra.mxu0 0
  %3754 = vmatprep.subr.bf16.mxu0 0
  %3755 = vmatpush1.bf16.msra.mxu0 0
  %3756 = vmatprep.subr.bf16.mxu0 0
  %3757 = vmatpush1.bf16.msra.mxu0 0
  %3758 = vmatprep.mubr.bf16.mxu0 0
  %3759 = vmatmul.mubr.bf16.gmra.mrb[0].mxu0 %v3709
  %v3760 = vpop.f32.mrb[0].mxu0
  %v3761 = vadd.f32 0.0, %v3760
  %v3762 = vpop.f32.mrb[0].mxu0
  %v3763 = vpop.f32.mrb[0].mxu0
  %v3764 = vadd.f32 0.0, %v3763
  %v3765 = vpop.f32.mrb[0].mxu0
  %3766 = vmatprep.mubr.bf16.mxu0 0
  %3767 = vmatmul.mubr.bf16.gmra.mrb[0].mxu0 %v3712
  %v3768 = vpop.f32.mrb[0].mxu0
  %v3769 = vadd.f32 0.0, %v3768
  %v3770 = vpop.f32.mrb[0].mxu0
  %v3771 = vpop.f32.mrb[0].mxu0
  %v3772 = vadd.f32 0.0, %v3771
  %v3773 = vpop.f32.mrb[0].mxu0
  %3774 = vmatprep.mubr.bf16.mxu0 0
  %3775 = vmatmul.mubr.bf16.gmra.mrb[0].mxu0 %v3715
  %v3776 = vpop.f32.mrb[0].mxu0
  %v3777 = vadd.f32 0.0, %v3776
  %v3778 = vpop.f32.mrb[0].mxu0
  %v3779 = vpop.f32.mrb[0].mxu0
  %v3780 = vadd.f32 0.0, %v3779
  %v3781 = vpop.f32.mrb[0].mxu0
  %3782 = vmatprep.mubr.bf16.mxu0 0
  %3783 = vmatmul.mubr.bf16.gmra.mrb[0].mxu0 %v3718
  %v3784 = vpop.f32.mrb[0].mxu0
  %v3785 = vadd.f32 0.0, %v3784
  %v3786 = vpop.f32.mrb[0].mxu0
  %v3787 = vpop.f32.mrb[0].mxu0
  %v3788 = vadd.f32 0.0, %v3787
  %v3789 = vpop.f32.mrb[0].mxu0
  %3790 = vmatprep.mubr.bf16.mxu0 0
  %3791 = vmatmul.mubr.bf16.gmra.mrb[0].mxu0 %v3721
  %v3792 = vpop.f32.mrb[0].mxu0
  %v3793 = vadd.f32 0.0, %v3792
  %v3794 = vpop.f32.mrb[0].mxu0
  %v3795 = vpop.f32.mrb[0].mxu0
  %v3796 = vpop.f32.mrb[0].mxu0
  %3797 = vdwg.mxu0
  %v3799 = vsel %vm1726, %v3693, 0
  %v3802 = vsel %vm1726, %v3694, 0
  %v3805 = vsel %vm1726, %v3695, 0
  %v3808 = vsel %vm1726, %v3696, 0
  %v3811 = vsel %vm1726, %v3697, 0
  %v3814 = vsel %vm1924, %v3707, 0
  %3816 = vmatprep.subr.bf16.mxu0 0
  %3817 = vmatpush1.bf16.msra.mxu0 %v3703
  %3818 = vmatprep.subr.bf16.mxu0 0
  %3819 = vmatpush1.bf16.msra.mxu0 %v3704
  %3820 = vmatprep.subr.bf16.mxu0 0
  %3821 = vmatpush1.bf16.msra.mxu0 %v3705
  %3822 = vmatprep.subr.bf16.mxu0 0
  %3823 = vmatpush1.bf16.msra.mxu0 %v3706
  %3824 = vmatprep.subr.bf16.mxu0 0
  %3825 = vmatpush1.bf16.msra.mxu0 %v3814
  %3826 = vmatprep.subr.bf16.mxu0 0
  %3827 = vmatpush1.bf16.msra.mxu0 0
  %3828 = vmatprep.subr.bf16.mxu0 0
  %3829 = vmatpush1.bf16.msra.mxu0 0
  %3830 = vmatprep.subr.bf16.mxu0 0
  %3831 = vmatpush1.bf16.msra.mxu0 0
  %3832 = vmatprep.subr.bf16.mxu0 0
  %3833 = vmatpush1.bf16.msra.mxu0 0
  %3834 = vmatprep.subr.bf16.mxu0 0
  %3835 = vmatpush1.bf16.msra.mxu0 0
  %3836 = vmatprep.subr.bf16.mxu0 0
  %3837 = vmatpush1.bf16.msra.mxu0 0
  %3838 = vmatprep.subr.bf16.mxu0 0
  %3839 = vmatpush1.bf16.msra.mxu0 0
  %3840 = vmatprep.subr.bf16.mxu0 0
  %3841 = vmatpush1.bf16.msra.mxu0 0
  %3842 = vmatprep.subr.bf16.mxu0 0
  %3843 = vmatpush1.bf16.msra.mxu0 0
  %3844 = vmatprep.subr.bf16.mxu0 0
  %3845 = vmatpush1.bf16.msra.mxu0 0
  %3846 = vmatprep.subr.bf16.mxu0 0
  %3847 = vmatpush1.bf16.msra.mxu0 0
  %3848 = vmatprep.mubr.bf16.mxu0 0
  %3849 = vmatmul.mubr.bf16.gmra.mrb[0].mxu0 %v3799
  %v3850 = vpop.f32.mrb[0].mxu0
  %v3851 = vadd.f32 0.0, %v3850
  %v3852 = vpop.f32.mrb[0].mxu0
  %v3853 = vpop.f32.mrb[0].mxu0
  %v3854 = vadd.f32 0.0, %v3853
  %v3855 = vpop.f32.mrb[0].mxu0
  %3856 = vmatprep.mubr.bf16.mxu0 0
  %3857 = vmatmul.mubr.bf16.gmra.mrb[0].mxu0 %v3802
  %v3858 = vpop.f32.mrb[0].mxu0
  %v3859 = vadd.f32 0.0, %v3858
  %v3860 = vpop.f32.mrb[0].mxu0
  %v3861 = vpop.f32.mrb[0].mxu0
  %v3862 = vadd.f32 0.0, %v3861
  %v3863 = vpop.f32.mrb[0].mxu0
  %3864 = vmatprep.mubr.bf16.mxu0 0
  %3865 = vmatmul.mubr.bf16.gmra.mrb[0].mxu0 %v3805
  %v3866 = vpop.f32.mrb[0].mxu0
  %v3867 = vadd.f32 0.0, %v3866
  %v3868 = vpop.f32.mrb[0].mxu0
  %v3869 = vpop.f32.mrb[0].mxu0
  %v3870 = vadd.f32 0.0, %v3869
  %v3871 = vpop.f32.mrb[0].mxu0
  %3872 = vmatprep.mubr.bf16.mxu0 0
  %3873 = vmatmul.mubr.bf16.gmra.mrb[0].mxu0 %v3808
  %v3874 = vpop.f32.mrb[0].mxu0
  %v3875 = vadd.f32 0.0, %v3874
  %v3876 = vpop.f32.mrb[0].mxu0
  %v3877 = vpop.f32.mrb[0].mxu0
  %v3878 = vadd.f32 0.0, %v3877
  %v3879 = vpop.f32.mrb[0].mxu0
  %3880 = vmatprep.mubr.bf16.mxu0 0
  %3881 = vmatmul.mubr.bf16.gmra.mrb[0].mxu0 %v3811
  %v3882 = vpop.f32.mrb[0].mxu0
  %v3883 = vadd.f32 0.0, %v3882
  %v3884 = vpop.f32.mrb[0].mxu0
  %v3885 = vpop.f32.mrb[0].mxu0
  %v3886 = vpop.f32.mrb[0].mxu0
  %3887 = vdwg.mxu0
  %v3888 = vrcp.pop %v3636
  %v3889 = vrcp.pop %v3639
  %v3890 = vrcp.pop %v3642
  %v3891 = vrcp.pop %v3645
  %v3892 = vrcp.pop %v3648
  %v3893 = vrcp.pop %v3651
  %v3894 = vrcp.pop %v3654
  %v3895 = vrcp.pop %v3657
  %v3896 = vrcp.pop %v3660
  %v3897 = vrcp.pop %v3663
  %v3898 = vrcp.pop %v3666
  %v3899 = vrcp.pop %v3669
  %v3900 = vrcp.pop %v3672
  %v3901 = vrcp.pop %v3675
  %v3902 = vrcp.pop %v3678
  %v3903 = vrcp.pop %v3681
  %v3904 = vrcp.pop %v3684
  %v3905 = vrcp.pop %v3687
  %v3906 = vmul.f32 %v3761, %v3888
  %v3907 = vmul.f32 %v3764, %v3889
  %v3908 = vmul.f32 %v3769, %v3890
  %v3909 = vmul.f32 %v3772, %v3891
  %v3910 = vmul.f32 %v3777, %v3892
  %v3911 = vmul.f32 %v3780, %v3893
  %v3912 = vmul.f32 %v3785, %v3894
  %v3913 = vmul.f32 %v3788, %v3895
  %v3914 = vmul.f32 %v3793, %v3896
  %v3915 = vmul.f32 %v3851, %v3897
  %v3916 = vmul.f32 %v3854, %v3898
  %v3917 = vmul.f32 %v3859, %v3899
  %v3918 = vmul.f32 %v3862, %v3900
  %v3919 = vmul.f32 %v3867, %v3901
  %v3920 = vmul.f32 %v3870, %v3902
  %v3921 = vmul.f32 %v3875, %v3903
  %v3922 = vmul.f32 %v3878, %v3904
  %v3923 = vmul.f32 %v3883, %v3905
  %v3924 = vpack.c.bf16 %v3907, %v3906
  %v3925 = vpack.c.bf16 %v3909, %v3908
  %v3926 = vpack.c.bf16 %v3911, %v3910
  %v3927 = vpack.c.bf16 %v3913, %v3912
  %v3928 = vpack.c.bf16 %v3915, %v3914
  %v3929 = vpack.c.bf16 %v3917, %v3916
  %v3930 = vpack.c.bf16 %v3919, %v3918
  %v3931 = vpack.c.bf16 %v3921, %v3920
  %v3932 = vpack.c.bf16 %v3923, %v3922
  %v3933 = vld [vmem:[%s5 + $0x80] sm:$0xff]
  %v3934 = vld [vmem:[%s5 + $0x88] sm:$0xff]
  %v3935 = vld [vmem:[%s5 + $0x90] sm:$0xff]
  %v3936 = vld [vmem:[%s5 + $0x98] sm:$0xff]
  %v3937 = vld [vmem:[%s5 + $0xa0] sm:$0xff]
  %v3938 = vld [vmem:[%s5 + $0xa8] sm:$0xff]
  %v3939 = vld [vmem:[%s5 + $0xb0] sm:$0xff]
  %v3940 = vld [vmem:[%s5 + $0xb8] sm:$0xff]
  %v3949 = vunpack.c.l.b16 %v3933
  %v3950 = vunpack.c.h.b16 %v3933
  %v3951 = vunpack.c.l.b16 %v3934
  %v3952 = vunpack.c.h.b16 %v3934
  %v3953 = vunpack.c.l.b16 %v3935
  %v3954 = vunpack.c.h.b16 %v3935
  %v3955 = vunpack.c.l.b16 %v3936
  %v3956 = vunpack.c.h.b16 %v3936
  %v3957 = vunpack.c.l.b16 %v3937
  %v3958 = vunpack.c.h.b16 %v3937
  %v3959 = vunpack.c.l.b16 %v3938
  %v3960 = vunpack.c.h.b16 %v3938
  %v3961 = vunpack.c.l.b16 %v3939
  %v3962 = vunpack.c.h.b16 %v3939
  %v3963 = vunpack.c.l.b16 %v3940
  %v3964 = vunpack.c.h.b16 %v3940
  %v3965 = vpack.c.b16 %v3951, %v3949
  %v3966 = vpack.c.b16 %v3952, %v3950
  %v3967 = vpack.c.b16 %v3955, %v3953
  %v3968 = vpack.c.b16 %v3956, %v3954
  %v3969 = vpack.c.b16 %v3959, %v3957
  %v3970 = vpack.c.b16 %v3960, %v3958
  %v3971 = vpack.c.b16 %v3963, %v3961
  %v3972 = vpack.c.b16 %v3964, %v3962
  %v3982 = vsel %vm1485, %v3924, 0
  %v3985 = vsel %vm1485, %v3925, 0
  %v3988 = vsel %vm1485, %v3926, 0
  %v3991 = vsel %vm1485, %v3927, 0
  %v3994 = vsel %vm1485, %v3928, 0
  %v3997 = vsel %vm1485, %v3929, 0
  %v4000 = vsel %vm1485, %v3930, 0
  %v4003 = vsel %vm1485, %v3931, 0
  %v4006 = vsel %vm1485, %v3932, 0
  %4008 = vmatprep.subr.bf16.mxu0 %v3966
  %4009 = vmatpush1.bf16.msra.mxu0 %v3965
  %4010 = vmatprep.subr.bf16.mxu0 %v3968
  %4011 = vmatpush1.bf16.msra.mxu0 %v3967
  %4012 = vmatprep.subr.bf16.mxu0 %v3970
  %4013 = vmatpush1.bf16.msra.mxu0 %v3969
  %4014 = vmatprep.subr.bf16.mxu0 %v3972
  %4015 = vmatpush1.bf16.msra.mxu0 %v3971
  %4016 = vmatprep.subr.bf16.mxu0 0
  %4017 = vmatpush1.bf16.msra.mxu0 0
  %4018 = vmatprep.subr.bf16.mxu0 0
  %4019 = vmatpush1.bf16.msra.mxu0 0
  %4020 = vmatprep.subr.bf16.mxu0 0
  %4021 = vmatpush1.bf16.msra.mxu0 0
  %4022 = vmatprep.subr.bf16.mxu0 0
  %4023 = vmatpush1.bf16.msra.mxu0 0
  %4024 = vmatprep.subr.bf16.mxu0 0
  %4025 = vmatpush1.bf16.msra.mxu0 0
  %4026 = vmatprep.subr.bf16.mxu0 0
  %4027 = vmatpush1.bf16.msra.mxu0 0
  %4028 = vmatprep.subr.bf16.mxu0 0
  %4029 = vmatpush1.bf16.msra.mxu0 0
  %4030 = vmatprep.subr.bf16.mxu0 0
  %4031 = vmatpush1.bf16.msra.mxu0 0
  %4032 = vmatprep.subr.bf16.mxu0 0
  %4033 = vmatpush1.bf16.msra.mxu0 0
  %4034 = vmatprep.subr.bf16.mxu0 0
  %4035 = vmatpush1.bf16.msra.mxu0 0
  %4036 = vmatprep.subr.bf16.mxu0 0
  %4037 = vmatpush1.bf16.msra.mxu0 0
  %4038 = vmatprep.subr.bf16.mxu0 0
  %4039 = vmatpush1.bf16.msra.mxu0 0
  %4040 = vmatprep.mubr.bf16.mxu0 0
  %4041 = vmatmul.mubr.bf16.gmra.mrb[0].mxu0 %v3982
  %v4042 = vpop.f32.mrb[0].mxu0
  %v4043 = vadd.f32 0.0, %v4042
  %v4044 = vpop.f32.mrb[0].mxu0
  %v4045 = vadd.f32 0.0, %v4044
  %v4046 = vpop.f32.mrb[0].mxu0
  %v4047 = vadd.f32 0.0, %v4046
  %v4048 = vpop.f32.mrb[0].mxu0
  %v4049 = vadd.f32 0.0, %v4048
  %4050 = vmatprep.mubr.bf16.mxu0 0
  %4051 = vmatmul.mubr.bf16.gmra.mrb[0].mxu0 %v3985
  %v4052 = vpop.f32.mrb[0].mxu0
  %v4053 = vadd.f32 0.0, %v4052
  %v4054 = vpop.f32.mrb[0].mxu0
  %v4055 = vadd.f32 0.0, %v4054
  %v4056 = vpop.f32.mrb[0].mxu0
  %v4057 = vadd.f32 0.0, %v4056
  %v4058 = vpop.f32.mrb[0].mxu0
  %v4059 = vadd.f32 0.0, %v4058
  %4060 = vmatprep.mubr.bf16.mxu0 0
  %4061 = vmatmul.mubr.bf16.gmra.mrb[0].mxu0 %v3988
  %v4062 = vpop.f32.mrb[0].mxu0
  %v4063 = vadd.f32 0.0, %v4062
  %v4064 = vpop.f32.mrb[0].mxu0
  %v4065 = vadd.f32 0.0, %v4064
  %v4066 = vpop.f32.mrb[0].mxu0
  %v4067 = vadd.f32 0.0, %v4066
  %v4068 = vpop.f32.mrb[0].mxu0
  %v4069 = vadd.f32 0.0, %v4068
  %4070 = vmatprep.mubr.bf16.mxu0 0
  %4071 = vmatmul.mubr.bf16.gmra.mrb[0].mxu0 %v3991
  %v4072 = vpop.f32.mrb[0].mxu0
  %v4073 = vadd.f32 0.0, %v4072
  %v4074 = vpop.f32.mrb[0].mxu0
  %v4075 = vadd.f32 0.0, %v4074
  %v4076 = vpop.f32.mrb[0].mxu0
  %v4077 = vadd.f32 0.0, %v4076
  %v4078 = vpop.f32.mrb[0].mxu0
  %v4079 = vadd.f32 0.0, %v4078
  %4080 = vmatprep.mubr.bf16.mxu0 0
  %4081 = vmatmul.mubr.bf16.gmra.mrb[0].mxu0 %v3994
  %v4082 = vpop.f32.mrb[0].mxu0
  %v4083 = vadd.f32 0.0, %v4082
  %v4084 = vpop.f32.mrb[0].mxu0
  %v4085 = vadd.f32 0.0, %v4084
  %v4086 = vpop.f32.mrb[0].mxu0
  %v4087 = vadd.f32 0.0, %v4086
  %v4088 = vpop.f32.mrb[0].mxu0
  %v4089 = vadd.f32 0.0, %v4088
  %4090 = vmatprep.mubr.bf16.mxu0 0
  %4091 = vmatmul.mubr.bf16.gmra.mrb[0].mxu0 %v3997
  %v4092 = vpop.f32.mrb[0].mxu0
  %v4093 = vadd.f32 0.0, %v4092
  %v4094 = vpop.f32.mrb[0].mxu0
  %v4095 = vadd.f32 0.0, %v4094
  %v4096 = vpop.f32.mrb[0].mxu0
  %v4097 = vadd.f32 0.0, %v4096
  %v4098 = vpop.f32.mrb[0].mxu0
  %v4099 = vadd.f32 0.0, %v4098
  %4100 = vmatprep.mubr.bf16.mxu0 0
  %4101 = vmatmul.mubr.bf16.gmra.mrb[0].mxu0 %v4000
  %v4102 = vpop.f32.mrb[0].mxu0
  %v4103 = vadd.f32 0.0, %v4102
  %v4104 = vpop.f32.mrb[0].mxu0
  %v4105 = vadd.f32 0.0, %v4104
  %v4106 = vpop.f32.mrb[0].mxu0
  %v4107 = vadd.f32 0.0, %v4106
  %v4108 = vpop.f32.mrb[0].mxu0
  %v4109 = vadd.f32 0.0, %v4108
  %4110 = vmatprep.mubr.bf16.mxu0 0
  %4111 = vmatmul.mubr.bf16.gmra.mrb[0].mxu0 %v4003
  %v4112 = vpop.f32.mrb[0].mxu0
  %v4113 = vadd.f32 0.0, %v4112
  %v4114 = vpop.f32.mrb[0].mxu0
  %v4115 = vadd.f32 0.0, %v4114
  %v4116 = vpop.f32.mrb[0].mxu0
  %v4117 = vadd.f32 0.0, %v4116
  %v4118 = vpop.f32.mrb[0].mxu0
  %v4119 = vadd.f32 0.0, %v4118
  %4120 = vmatprep.mubr.bf16.mxu0 0
  %4121 = vmatmul.mubr.bf16.gmra.mrb[0].mxu0 %v4006
  %v4122 = vpop.f32.mrb[0].mxu0
  %v4123 = vadd.f32 0.0, %v4122
  %v4124 = vpop.f32.mrb[0].mxu0
  %v4125 = vadd.f32 0.0, %v4124
  %v4126 = vpop.f32.mrb[0].mxu0
  %v4127 = vadd.f32 0.0, %v4126
  %v4128 = vpop.f32.mrb[0].mxu0
  %v4129 = vadd.f32 0.0, %v4128
  %4130 = vdwg.mxu0
  %v4131 = vadd.f32 %v3178, %v4043
  %v4132 = vadd.f32 %v3180, %v4045
  %v4133 = vadd.f32 %v3182, %v4047
  %v4134 = vadd.f32 %v3184, %v4049
  %v4135 = vadd.f32 %v3188, %v4053
  %v4136 = vadd.f32 %v3190, %v4055
  %v4137 = vadd.f32 %v3192, %v4057
  %v4138 = vadd.f32 %v3194, %v4059
  %v4139 = vadd.f32 %v3198, %v4063
  %v4140 = vadd.f32 %v3200, %v4065
  %v4141 = vadd.f32 %v3202, %v4067
  %v4142 = vadd.f32 %v3204, %v4069
  %v4143 = vadd.f32 %v3208, %v4073
  %v4144 = vadd.f32 %v3210, %v4075
  %v4145 = vadd.f32 %v3212, %v4077
  %v4146 = vadd.f32 %v3214, %v4079
  %v4147 = vadd.f32 %v3218, %v4083
  %v4148 = vadd.f32 %v3220, %v4085
  %v4149 = vadd.f32 %v3222, %v4087
  %v4150 = vadd.f32 %v3224, %v4089
  %v4151 = vadd.f32 %v3228, %v4093
  %v4152 = vadd.f32 %v3230, %v4095
  %v4153 = vadd.f32 %v3232, %v4097
  %v4154 = vadd.f32 %v3234, %v4099
  %v4155 = vadd.f32 %v3238, %v4103
  %v4156 = vadd.f32 %v3240, %v4105
  %v4157 = vadd.f32 %v3242, %v4107
  %v4158 = vadd.f32 %v3244, %v4109
  %v4159 = vadd.f32 %v3248, %v4113
  %v4160 = vadd.f32 %v3250, %v4115
  %v4161 = vadd.f32 %v3252, %v4117
  %v4162 = vadd.f32 %v3254, %v4119
  %v4163 = vadd.f32 %v3258, %v4123
  %v4164 = vadd.f32 %v3260, %v4125
  %v4165 = vadd.f32 %v3262, %v4127
  %v4166 = vadd.f32 %v3264, %v4129
  %4172 = vrot.lane.b32.xlu0 %v3266, 64
  %v4173 = vpop.permute.xlu0 %4172
  %4174 = vrot.lane.b32.xlu0 %v3267, 64
  %v4175 = vpop.permute.xlu0 %4174
  %4176 = vrot.lane.b32.xlu0 %v3268, 64
  %v4177 = vpop.permute.xlu0 %4176
  %4178 = vrot.lane.b32.xlu0 %v3269, 64
  %v4179 = vpop.permute.xlu0 %4178
  %4180 = vrot.lane.b32.xlu0 %v3270, 64
  %v4181 = vpop.permute.xlu0 %4180
  %4187 = vrot.lane.b32.xlu0 %v3276, 64
  %v4188 = vpop.permute.xlu0 %4187
  %4189 = vrot.lane.b32.xlu0 %v3277, 64
  %v4190 = vpop.permute.xlu0 %4189
  %4191 = vrot.lane.b32.xlu0 %v3278, 64
  %v4192 = vpop.permute.xlu0 %4191
  %4193 = vrot.lane.b32.xlu0 %v3279, 64
  %v4194 = vpop.permute.xlu0 %4193
  %4195 = vrot.lane.b32.xlu0 %v3280, 64
  %v4196 = vpop.permute.xlu0 %4195
  %v4198 = vsel %vm1485, %v4173, 0
  %v4201 = vsel %vm1485, %v4175, 0
  %v4204 = vsel %vm1485, %v4177, 0
  %v4207 = vsel %vm1485, %v4179, 0
  %v4210 = vsel %vm1485, %v4181, 0
  %v4213 = vsel %vm1485, %v4188, 0
  %v4216 = vsel %vm1485, %v4190, 0
  %v4219 = vsel %vm1485, %v4192, 0
  %v4222 = vsel %vm1485, %v4194, 0
  %v4225 = vsel %vm1485, %v4196, 0
  %4227 = vmatprep.subr.bf16.mxu0 0
  %4228 = vmatpush1.bf16.xpose.msra.mxu0 %v4213
  %4229 = vmatprep.subr.bf16.mxu0 0
  %4230 = vmatpush1.bf16.xpose.msra.mxu0 %v4216
  %4231 = vmatprep.subr.bf16.mxu0 0
  %4232 = vmatpush1.bf16.xpose.msra.mxu0 %v4219
  %4233 = vmatprep.subr.bf16.mxu0 0
  %4234 = vmatpush1.bf16.xpose.msra.mxu0 %v4222
  %4235 = vmatprep.subr.bf16.mxu0 0
  %4236 = vmatpush1.bf16.xpose.msra.mxu0 %v4225
  %4237 = vmatprep.subr.bf16.mxu0 0
  %4238 = vmatpush1.bf16.xpose.msra.mxu0 0
  %4239 = vmatprep.subr.bf16.mxu0 0
  %4240 = vmatpush1.bf16.xpose.msra.mxu0 0
  %4241 = vmatprep.subr.bf16.mxu0 0
  %4242 = vmatpush1.bf16.xpose.msra.mxu0 0
  %4243 = vmatprep.subr.bf16.mxu0 0
  %4244 = vmatpush1.bf16.xpose.msra.mxu0 0
  %4245 = vmatprep.subr.bf16.mxu0 0
  %4246 = vmatpush1.bf16.xpose.msra.mxu0 0
  %4247 = vmatprep.subr.bf16.mxu0 0
  %4248 = vmatpush1.bf16.xpose.msra.mxu0 0
  %4249 = vmatprep.subr.bf16.mxu0 0
  %4250 = vmatpush1.bf16.xpose.msra.mxu0 0
  %4251 = vmatprep.subr.bf16.mxu0 0
  %4252 = vmatpush1.bf16.xpose.msra.mxu0 0
  %4253 = vmatprep.subr.bf16.mxu0 0
  %4254 = vmatpush1.bf16.xpose.msra.mxu0 0
  %4255 = vmatprep.subr.bf16.mxu0 0
  %4256 = vmatpush1.bf16.xpose.msra.mxu0 0
  %4257 = vmatprep.subr.bf16.mxu0 0
  %4258 = vmatpush1.bf16.xpose.msra.mxu0 0
  %4259 = vmatprep.mubr.bf16.mxu0 0
  %4260 = vmatmul.mubr.bf16.gmra.mrb[0].mxu0 %v4198
  %v4261 = vpop.f32.mrb[0].mxu0
  %v4262 = vadd.f32 0.0, %v4261
  %v4263 = vpop.f32.mrb[0].mxu0
  %v4264 = vpop.f32.mrb[0].mxu0
  %v4265 = vadd.f32 0.0, %v4264
  %v4266 = vpop.f32.mrb[0].mxu0
  %4267 = vmatprep.mubr.bf16.mxu0 0
  %4268 = vmatmul.mubr.bf16.gmra.mrb[0].mxu0 %v4201
  %v4269 = vpop.f32.mrb[0].mxu0
  %v4270 = vadd.f32 0.0, %v4269
  %v4271 = vpop.f32.mrb[0].mxu0
  %v4272 = vpop.f32.mrb[0].mxu0
  %v4273 = vadd.f32 0.0, %v4272
  %v4274 = vpop.f32.mrb[0].mxu0
  %4275 = vmatprep.mubr.bf16.mxu0 0
  %4276 = vmatmul.mubr.bf16.gmra.mrb[0].mxu0 %v4204
  %v4277 = vpop.f32.mrb[0].mxu0
  %v4278 = vadd.f32 0.0, %v4277
  %v4279 = vpop.f32.mrb[0].mxu0
  %v4280 = vpop.f32.mrb[0].mxu0
  %v4281 = vadd.f32 0.0, %v4280
  %v4282 = vpop.f32.mrb[0].mxu0
  %4283 = vmatprep.mubr.bf16.mxu0 0
  %4284 = vmatmul.mubr.bf16.gmra.mrb[0].mxu0 %v4207
  %v4285 = vpop.f32.mrb[0].mxu0
  %v4286 = vadd.f32 0.0, %v4285
  %v4287 = vpop.f32.mrb[0].mxu0
  %v4288 = vpop.f32.mrb[0].mxu0
  %v4289 = vadd.f32 0.0, %v4288
  %v4290 = vpop.f32.mrb[0].mxu0
  %4291 = vmatprep.mubr.bf16.mxu0 0
  %4292 = vmatmul.mubr.bf16.gmra.mrb[0].mxu0 %v4210
  %v4293 = vpop.f32.mrb[0].mxu0
  %v4294 = vadd.f32 0.0, %v4293
  %v4295 = vpop.f32.mrb[0].mxu0
  %v4296 = vpop.f32.mrb[0].mxu0
  %v4297 = vpop.f32.mrb[0].mxu0
  %4298 = vdwg.mxu0
  %4304 = vrot.lane.b32.xlu0 %v3271, 64
  %v4305 = vpop.permute.xlu0 %4304
  %4306 = vrot.lane.b32.xlu0 %v3272, 64
  %v4307 = vpop.permute.xlu0 %4306
  %4308 = vrot.lane.b32.xlu0 %v3273, 64
  %v4309 = vpop.permute.xlu0 %4308
  %4310 = vrot.lane.b32.xlu0 %v3274, 64
  %v4311 = vpop.permute.xlu0 %4310
  %4312 = vrot.lane.b32.xlu0 %v3275, 64
  %v4313 = vpop.permute.xlu0 %4312
  %4319 = vrot.lane.b32.xlu0 %v3281, 64
  %v4320 = vpop.permute.xlu0 %4319
  %4321 = vrot.lane.b32.xlu0 %v3282, 64
  %v4322 = vpop.permute.xlu0 %4321
  %4323 = vrot.lane.b32.xlu0 %v3283, 64
  %v4324 = vpop.permute.xlu0 %4323
  %4325 = vrot.lane.b32.xlu0 %v3284, 64
  %v4326 = vpop.permute.xlu0 %4325
  %4327 = vrot.lane.b32.xlu0 %v3285, 64
  %v4328 = vpop.permute.xlu0 %4327
  %v4330 = vsel %vm1485, %v4305, 0
  %v4333 = vsel %vm1485, %v4307, 0
  %v4336 = vsel %vm1485, %v4309, 0
  %v4339 = vsel %vm1485, %v4311, 0
  %v4342 = vsel %vm1485, %v4313, 0
  %v4345 = vsel %vm1485, %v4320, 0
  %v4348 = vsel %vm1485, %v4322, 0
  %v4351 = vsel %vm1485, %v4324, 0
  %v4354 = vsel %vm1485, %v4326, 0
  %v4357 = vsel %vm1485, %v4328, 0
  %4359 = vmatprep.subr.bf16.mxu0 0
  %4360 = vmatpush1.bf16.xpose.msra.mxu0 %v4345
  %4361 = vmatprep.subr.bf16.mxu0 0
  %4362 = vmatpush1.bf16.xpose.msra.mxu0 %v4348
  %4363 = vmatprep.subr.bf16.mxu0 0
  %4364 = vmatpush1.bf16.xpose.msra.mxu0 %v4351
  %4365 = vmatprep.subr.bf16.mxu0 0
  %4366 = vmatpush1.bf16.xpose.msra.mxu0 %v4354
  %4367 = vmatprep.subr.bf16.mxu0 0
  %4368 = vmatpush1.bf16.xpose.msra.mxu0 %v4357
  %4369 = vmatprep.subr.bf16.mxu0 0
  %4370 = vmatpush1.bf16.xpose.msra.mxu0 0
  %4371 = vmatprep.subr.bf16.mxu0 0
  %4372 = vmatpush1.bf16.xpose.msra.mxu0 0
  %4373 = vmatprep.subr.bf16.mxu0 0
  %4374 = vmatpush1.bf16.xpose.msra.mxu0 0
  %4375 = vmatprep.subr.bf16.mxu0 0
  %4376 = vmatpush1.bf16.xpose.msra.mxu0 0
  %4377 = vmatprep.subr.bf16.mxu0 0
  %4378 = vmatpush1.bf16.xpose.msra.mxu0 0
  %4379 = vmatprep.subr.bf16.mxu0 0
  %4380 = vmatpush1.bf16.xpose.msra.mxu0 0
  %4381 = vmatprep.subr.bf16.mxu0 0
  %4382 = vmatpush1.bf16.xpose.msra.mxu0 0
  %4383 = vmatprep.subr.bf16.mxu0 0
  %4384 = vmatpush1.bf16.xpose.msra.mxu0 0
  %4385 = vmatprep.subr.bf16.mxu0 0
  %4386 = vmatpush1.bf16.xpose.msra.mxu0 0
  %4387 = vmatprep.subr.bf16.mxu0 0
  %4388 = vmatpush1.bf16.xpose.msra.mxu0 0
  %4389 = vmatprep.subr.bf16.mxu0 0
  %4390 = vmatpush1.bf16.xpose.msra.mxu0 0
  %4391 = vmatprep.mubr.bf16.mxu0 0
  %4392 = vmatmul.mubr.bf16.gmra.mrb[0].mxu0 %v4330
  %v4393 = vpop.f32.mrb[0].mxu0
  %v4394 = vadd.f32 0.0, %v4393
  %v4395 = vpop.f32.mrb[0].mxu0
  %v4396 = vpop.f32.mrb[0].mxu0
  %v4397 = vadd.f32 0.0, %v4396
  %v4398 = vpop.f32.mrb[0].mxu0
  %4399 = vmatprep.mubr.bf16.mxu0 0
  %4400 = vmatmul.mubr.bf16.gmra.mrb[0].mxu0 %v4333
  %v4401 = vpop.f32.mrb[0].mxu0
  %v4402 = vadd.f32 0.0, %v4401
  %v4403 = vpop.f32.mrb[0].mxu0
  %v4404 = vpop.f32.mrb[0].mxu0
  %v4405 = vadd.f32 0.0, %v4404
  %v4406 = vpop.f32.mrb[0].mxu0
  %4407 = vmatprep.mubr.bf16.mxu0 0
  %4408 = vmatmul.mubr.bf16.gmra.mrb[0].mxu0 %v4336
  %v4409 = vpop.f32.mrb[0].mxu0
  %v4410 = vadd.f32 0.0, %v4409
  %v4411 = vpop.f32.mrb[0].mxu0
  %v4412 = vpop.f32.mrb[0].mxu0
  %v4413 = vadd.f32 0.0, %v4412
  %v4414 = vpop.f32.mrb[0].mxu0
  %4415 = vmatprep.mubr.bf16.mxu0 0
  %4416 = vmatmul.mubr.bf16.gmra.mrb[0].mxu0 %v4339
  %v4417 = vpop.f32.mrb[0].mxu0
  %v4418 = vadd.f32 0.0, %v4417
  %v4419 = vpop.f32.mrb[0].mxu0
  %v4420 = vpop.f32.mrb[0].mxu0
  %v4421 = vadd.f32 0.0, %v4420
  %v4422 = vpop.f32.mrb[0].mxu0
  %4423 = vmatprep.mubr.bf16.mxu0 0
  %4424 = vmatmul.mubr.bf16.gmra.mrb[0].mxu0 %v4342
  %v4425 = vpop.f32.mrb[0].mxu0
  %v4426 = vadd.f32 0.0, %v4425
  %v4427 = vpop.f32.mrb[0].mxu0
  %v4428 = vpop.f32.mrb[0].mxu0
  %v4429 = vpop.f32.mrb[0].mxu0
  %4430 = vdwg.mxu0
  %v4431 = vmul.f32 %v4262, 0.125
  %v4432 = vmul.f32 %v4265, 0.125
  %v4433 = vmul.f32 %v4270, 0.125
  %v4434 = vmul.f32 %v4273, 0.125
  %v4435 = vmul.f32 %v4278, 0.125
  %v4436 = vmul.f32 %v4281, 0.125
  %v4437 = vmul.f32 %v4286, 0.125
  %v4438 = vmul.f32 %v4289, 0.125
  %v4439 = vmul.f32 %v4294, 0.125
  %v4440 = vmul.f32 %v4394, 0.125
  %v4441 = vmul.f32 %v4397, 0.125
  %v4442 = vmul.f32 %v4402, 0.125
  %v4443 = vmul.f32 %v4405, 0.125
  %v4444 = vmul.f32 %v4410, 0.125
  %v4445 = vmul.f32 %v4413, 0.125
  %v4446 = vmul.f32 %v4418, 0.125
  %v4447 = vmul.f32 %v4421, 0.125
  %v4448 = vmul.f32 %v4426, 0.125
  %v4449 = vadd.f32 %v4431, %v1464
  %v4450 = vadd.f32 %v4432, %v1464
  %v4451 = vadd.f32 %v4433, %v1464
  %v4452 = vadd.f32 %v4434, %v1464
  %v4453 = vadd.f32 %v4435, %v1464
  %v4454 = vadd.f32 %v4436, %v1464
  %v4455 = vadd.f32 %v4437, %v1464
  %v4456 = vadd.f32 %v4438, %v1464
  %v4457 = vadd.f32 %v4439, %v1464
  %v4458 = vadd.f32 %v4440, %v1464
  %v4459 = vadd.f32 %v4441, %v1464
  %v4460 = vadd.f32 %v4442, %v1464
  %v4461 = vadd.f32 %v4443, %v1464
  %v4462 = vadd.f32 %v4444, %v1464
  %v4463 = vadd.f32 %v4445, %v1464
  %v4464 = vadd.f32 %v4446, %v1464
  %v4465 = vadd.f32 %v4447, %v1464
  %v4466 = vadd.f32 %v4448, %v1464
  %v4467 = vsel %vm1726, %v4449, -inf
  %4468 = vmax.xlane.f32.xlu0 %v4467
  %v4469 = vpop.xlane.xlu0 %4468
  %v4470 = vsel %vm1726, %v4450, -inf
  %4471 = vmax.xlane.f32.xlu0 %v4470
  %v4472 = vpop.xlane.xlu0 %4471
  %v4473 = vsel %vm1726, %v4451, -inf
  %4474 = vmax.xlane.f32.xlu0 %v4473
  %v4475 = vpop.xlane.xlu0 %4474
  %v4476 = vsel %vm1726, %v4452, -inf
  %4477 = vmax.xlane.f32.xlu0 %v4476
  %v4478 = vpop.xlane.xlu0 %4477
  %v4479 = vsel %vm1726, %v4453, -inf
  %4480 = vmax.xlane.f32.xlu0 %v4479
  %v4481 = vpop.xlane.xlu0 %4480
  %v4482 = vsel %vm1726, %v4454, -inf
  %4483 = vmax.xlane.f32.xlu0 %v4482
  %v4484 = vpop.xlane.xlu0 %4483
  %v4485 = vsel %vm1726, %v4455, -inf
  %4486 = vmax.xlane.f32.xlu0 %v4485
  %v4487 = vpop.xlane.xlu0 %4486
  %v4488 = vsel %vm1726, %v4456, -inf
  %4489 = vmax.xlane.f32.xlu0 %v4488
  %v4490 = vpop.xlane.xlu0 %4489
  %v4491 = vsel %vm1726, %v4457, -inf
  %4492 = vmax.xlane.f32.xlu0 %v4491
  %v4493 = vpop.xlane.xlu0 %4492
  %v4494 = vsel %vm1726, %v4458, -inf
  %4495 = vmax.xlane.f32.xlu0 %v4494
  %v4496 = vpop.xlane.xlu0 %4495
  %v4497 = vsel %vm1726, %v4459, -inf
  %4498 = vmax.xlane.f32.xlu0 %v4497
  %v4499 = vpop.xlane.xlu0 %4498
  %v4500 = vsel %vm1726, %v4460, -inf
  %4501 = vmax.xlane.f32.xlu0 %v4500
  %v4502 = vpop.xlane.xlu0 %4501
  %v4503 = vsel %vm1726, %v4461, -inf
  %4504 = vmax.xlane.f32.xlu0 %v4503
  %v4505 = vpop.xlane.xlu0 %4504
  %v4506 = vsel %vm1726, %v4462, -inf
  %4507 = vmax.xlane.f32.xlu0 %v4506
  %v4508 = vpop.xlane.xlu0 %4507
  %v4509 = vsel %vm1726, %v4463, -inf
  %4510 = vmax.xlane.f32.xlu0 %v4509
  %v4511 = vpop.xlane.xlu0 %4510
  %v4512 = vsel %vm1726, %v4464, -inf
  %4513 = vmax.xlane.f32.xlu0 %v4512
  %v4514 = vpop.xlane.xlu0 %4513
  %v4515 = vsel %vm1726, %v4465, -inf
  %4516 = vmax.xlane.f32.xlu0 %v4515
  %v4517 = vpop.xlane.xlu0 %4516
  %v4518 = vsel %vm1726, %v4466, -inf
  %4519 = vmax.xlane.f32.xlu0 %v4518
  %v4520 = vpop.xlane.xlu0 %4519
  %v4521 = vsub.f32 %v4449, %v4469
  %v4522 = vsub.f32 %v4450, %v4472
  %v4523 = vsub.f32 %v4451, %v4475
  %v4524 = vsub.f32 %v4452, %v4478
  %v4525 = vsub.f32 %v4453, %v4481
  %v4526 = vsub.f32 %v4454, %v4484
  %v4527 = vsub.f32 %v4455, %v4487
  %v4528 = vsub.f32 %v4456, %v4490
  %v4529 = vsub.f32 %v4457, %v4493
  %v4530 = vsub.f32 %v4458, %v4496
  %v4531 = vsub.f32 %v4459, %v4499
  %v4532 = vsub.f32 %v4460, %v4502
  %v4533 = vsub.f32 %v4461, %v4505
  %v4534 = vsub.f32 %v4462, %v4508
  %v4535 = vsub.f32 %v4463, %v4511
  %v4536 = vsub.f32 %v4464, %v4514
  %v4537 = vsub.f32 %v4465, %v4517
  %v4538 = vsub.f32 %v4466, %v4520
  %v4539 = vmul.f32 %v4521, 1.442695
  %v4540 = vpow.pop %v4539
  %v4541 = vmul.f32 %v4522, 1.442695
  %v4542 = vpow.pop %v4541
  %v4543 = vmul.f32 %v4523, 1.442695
  %v4544 = vpow.pop %v4543
  %v4545 = vmul.f32 %v4524, 1.442695
  %v4546 = vpow.pop %v4545
  %v4547 = vmul.f32 %v4525, 1.442695
  %v4548 = vpow.pop %v4547
  %v4549 = vmul.f32 %v4526, 1.442695
  %v4550 = vpow.pop %v4549
  %v4551 = vmul.f32 %v4527, 1.442695
  %v4552 = vpow.pop %v4551
  %v4553 = vmul.f32 %v4528, 1.442695
  %v4554 = vpow.pop %v4553
  %v4555 = vmul.f32 %v4529, 1.442695
  %v4556 = vpow.pop %v4555
  %v4557 = vmul.f32 %v4530, 1.442695
  %v4558 = vpow.pop %v4557
  %v4559 = vmul.f32 %v4531, 1.442695
  %v4560 = vpow.pop %v4559
  %v4561 = vmul.f32 %v4532, 1.442695
  %v4562 = vpow.pop %v4561
  %v4563 = vmul.f32 %v4533, 1.442695
  %v4564 = vpow.pop %v4563
  %v4565 = vmul.f32 %v4534, 1.442695
  %v4566 = vpow.pop %v4565
  %v4567 = vmul.f32 %v4535, 1.442695
  %v4568 = vpow.pop %v4567
  %v4569 = vmul.f32 %v4536, 1.442695
  %v4570 = vpow.pop %v4569
  %v4571 = vmul.f32 %v4537, 1.442695
  %v4572 = vpow.pop %v4571
  %v4573 = vmul.f32 %v4538, 1.442695
  %v4574 = vpow.pop %v4573
  %v4575 = vsel %vm1726, %v4540, 0.0
  %4576 = vadd.xlane.f32.xlu0 %v4575
  %v4577 = vpop.xlane.xlu0 %4576
  %v4578 = vsel %vm1726, %v4542, 0.0
  %4579 = vadd.xlane.f32.xlu0 %v4578
  %v4580 = vpop.xlane.xlu0 %4579
  %v4581 = vsel %vm1726, %v4544, 0.0
  %4582 = vadd.xlane.f32.xlu0 %v4581
  %v4583 = vpop.xlane.xlu0 %4582
  %v4584 = vsel %vm1726, %v4546, 0.0
  %4585 = vadd.xlane.f32.xlu0 %v4584
  %v4586 = vpop.xlane.xlu0 %4585
  %v4587 = vsel %vm1726, %v4548, 0.0
  %4588 = vadd.xlane.f32.xlu0 %v4587
  %v4589 = vpop.xlane.xlu0 %4588
  %v4590 = vsel %vm1726, %v4550, 0.0
  %4591 = vadd.xlane.f32.xlu0 %v4590
  %v4592 = vpop.xlane.xlu0 %4591
  %v4593 = vsel %vm1726, %v4552, 0.0
  %4594 = vadd.xlane.f32.xlu0 %v4593
  %v4595 = vpop.xlane.xlu0 %4594
  %v4596 = vsel %vm1726, %v4554, 0.0
  %4597 = vadd.xlane.f32.xlu0 %v4596
  %v4598 = vpop.xlane.xlu0 %4597
  %v4599 = vsel %vm1726, %v4556, 0.0
  %4600 = vadd.xlane.f32.xlu0 %v4599
  %v4601 = vpop.xlane.xlu0 %4600
  %v4602 = vsel %vm1726, %v4558, 0.0
  %4603 = vadd.xlane.f32.xlu0 %v4602
  %v4604 = vpop.xlane.xlu0 %4603
  %v4605 = vsel %vm1726, %v4560, 0.0
  %4606 = vadd.xlane.f32.xlu0 %v4605
  %v4607 = vpop.xlane.xlu0 %4606
  %v4608 = vsel %vm1726, %v4562, 0.0
  %4609 = vadd.xlane.f32.xlu0 %v4608
  %v4610 = vpop.xlane.xlu0 %4609
  %v4611 = vsel %vm1726, %v4564, 0.0
  %4612 = vadd.xlane.f32.xlu0 %v4611
  %v4613 = vpop.xlane.xlu0 %4612
  %v4614 = vsel %vm1726, %v4566, 0.0
  %4615 = vadd.xlane.f32.xlu0 %v4614
  %v4616 = vpop.xlane.xlu0 %4615
  %v4617 = vsel %vm1726, %v4568, 0.0
  %4618 = vadd.xlane.f32.xlu0 %v4617
  %v4619 = vpop.xlane.xlu0 %4618
  %v4620 = vsel %vm1726, %v4570, 0.0
  %4621 = vadd.xlane.f32.xlu0 %v4620
  %v4622 = vpop.xlane.xlu0 %4621
  %v4623 = vsel %vm1726, %v4572, 0.0
  %4624 = vadd.xlane.f32.xlu0 %v4623
  %v4625 = vpop.xlane.xlu0 %4624
  %v4626 = vsel %vm1726, %v4574, 0.0
  %4627 = vadd.xlane.f32.xlu0 %v4626
  %v4628 = vpop.xlane.xlu0 %4627
  %v4629 = vpack.c.bf16 %v4542, %v4540
  %v4630 = vpack.c.bf16 %v4546, %v4544
  %v4631 = vpack.c.bf16 %v4550, %v4548
  %v4632 = vpack.c.bf16 %v4554, %v4552
  %v4633 = vpack.c.bf16 %v4556, %v4556
  %v4634 = vpack.c.bf16 %v4560, %v4558
  %v4635 = vpack.c.bf16 %v4564, %v4562
  %v4636 = vpack.c.bf16 %v4568, %v4566
  %v4637 = vpack.c.bf16 %v4572, %v4570
  %v4638 = vpack.c.bf16 %v4574, %v4574
  %4644 = vrot.lane.b32.xlu0 %v3698, 64
  %v4645 = vpop.permute.xlu0 %4644
  %4646 = vrot.lane.b32.xlu0 %v3699, 64
  %v4647 = vpop.permute.xlu0 %4646
  %4648 = vrot.lane.b32.xlu0 %v3700, 64
  %v4649 = vpop.permute.xlu0 %4648
  %4650 = vrot.lane.b32.xlu0 %v3701, 64
  %v4651 = vpop.permute.xlu0 %4650
  %4652 = vrot.lane.b32.xlu0 %v3702, 64
  %v4653 = vpop.permute.xlu0 %4652
  %v4659 = vsel %vm1726, %v4629, 0
  %v4662 = vsel %vm1726, %v4630, 0
  %v4665 = vsel %vm1726, %v4631, 0
  %v4668 = vsel %vm1726, %v4632, 0
  %v4671 = vsel %vm1726, %v4633, 0
  %v4674 = vsel %vm1924, %v4653, 0
  %4676 = vmatprep.subr.bf16.mxu0 0
  %4677 = vmatpush1.bf16.msra.mxu0 %v4645
  %4678 = vmatprep.subr.bf16.mxu0 0
  %4679 = vmatpush1.bf16.msra.mxu0 %v4647
  %4680 = vmatprep.subr.bf16.mxu0 0
  %4681 = vmatpush1.bf16.msra.mxu0 %v4649
  %4682 = vmatprep.subr.bf16.mxu0 0
  %4683 = vmatpush1.bf16.msra.mxu0 %v4651
  %4684 = vmatprep.subr.bf16.mxu0 0
  %4685 = vmatpush1.bf16.msra.mxu0 %v4674
  %4686 = vmatprep.subr.bf16.mxu0 0
  %4687 = vmatpush1.bf16.msra.mxu0 0
  %4688 = vmatprep.subr.bf16.mxu0 0
  %4689 = vmatpush1.bf16.msra.mxu0 0
  %4690 = vmatprep.subr.bf16.mxu0 0
  %4691 = vmatpush1.bf16.msra.mxu0 0
  %4692 = vmatprep.subr.bf16.mxu0 0
  %4693 = vmatpush1.bf16.msra.mxu0 0
  %4694 = vmatprep.subr.bf16.mxu0 0
  %4695 = vmatpush1.bf16.msra.mxu0 0
  %4696 = vmatprep.subr.bf16.mxu0 0
  %4697 = vmatpush1.bf16.msra.mxu0 0
  %4698 = vmatprep.subr.bf16.mxu0 0
  %4699 = vmatpush1.bf16.msra.mxu0 0
  %4700 = vmatprep.subr.bf16.mxu0 0
  %4701 = vmatpush1.bf16.msra.mxu0 0
  %4702 = vmatprep.subr.bf16.mxu0 0
  %4703 = vmatpush1.bf16.msra.mxu0 0
  %4704 = vmatprep.subr.bf16.mxu0 0
  %4705 = vmatpush1.bf16.msra.mxu0 0
  %4706 = vmatprep.subr.bf16.mxu0 0
  %4707 = vmatpush1.bf16.msra.mxu0 0
  %4708 = vmatprep.mubr.bf16.mxu0 0
  %4709 = vmatmul.mubr.bf16.gmra.mrb[0].mxu0 %v4659
  %v4710 = vpop.f32.mrb[0].mxu0
  %v4711 = vadd.f32 0.0, %v4710
  %v4712 = vpop.f32.mrb[0].mxu0
  %v4713 = vpop.f32.mrb[0].mxu0
  %v4714 = vadd.f32 0.0, %v4713
  %v4715 = vpop.f32.mrb[0].mxu0
  %4716 = vmatprep.mubr.bf16.mxu0 0
  %4717 = vmatmul.mubr.bf16.gmra.mrb[0].mxu0 %v4662
  %v4718 = vpop.f32.mrb[0].mxu0
  %v4719 = vadd.f32 0.0, %v4718
  %v4720 = vpop.f32.mrb[0].mxu0
  %v4721 = vpop.f32.mrb[0].mxu0
  %v4722 = vadd.f32 0.0, %v4721
  %v4723 = vpop.f32.mrb[0].mxu0
  %4724 = vmatprep.mubr.bf16.mxu0 0
  %4725 = vmatmul.mubr.bf16.gmra.mrb[0].mxu0 %v4665
  %v4726 = vpop.f32.mrb[0].mxu0
  %v4727 = vadd.f32 0.0, %v4726
  %v4728 = vpop.f32.mrb[0].mxu0
  %v4729 = vpop.f32.mrb[0].mxu0
  %v4730 = vadd.f32 0.0, %v4729
  %v4731 = vpop.f32.mrb[0].mxu0
  %4732 = vmatprep.mubr.bf16.mxu0 0
  %4733 = vmatmul.mubr.bf16.gmra.mrb[0].mxu0 %v4668
  %v4734 = vpop.f32.mrb[0].mxu0
  %v4735 = vadd.f32 0.0, %v4734
  %v4736 = vpop.f32.mrb[0].mxu0
  %v4737 = vpop.f32.mrb[0].mxu0
  %v4738 = vadd.f32 0.0, %v4737
  %v4739 = vpop.f32.mrb[0].mxu0
  %4740 = vmatprep.mubr.bf16.mxu0 0
  %4741 = vmatmul.mubr.bf16.gmra.mrb[0].mxu0 %v4671
  %v4742 = vpop.f32.mrb[0].mxu0
  %v4743 = vadd.f32 0.0, %v4742
  %v4744 = vpop.f32.mrb[0].mxu0
  %v4745 = vpop.f32.mrb[0].mxu0
  %v4746 = vpop.f32.mrb[0].mxu0
  %4747 = vdwg.mxu0
  %4753 = vrot.lane.b32.xlu0 %v3703, 64
  %v4754 = vpop.permute.xlu0 %4753
  %4755 = vrot.lane.b32.xlu0 %v3704, 64
  %v4756 = vpop.permute.xlu0 %4755
  %4757 = vrot.lane.b32.xlu0 %v3705, 64
  %v4758 = vpop.permute.xlu0 %4757
  %4759 = vrot.lane.b32.xlu0 %v3706, 64
  %v4760 = vpop.permute.xlu0 %4759
  %4761 = vrot.lane.b32.xlu0 %v3707, 64
  %v4762 = vpop.permute.xlu0 %4761
  %v4768 = vsel %vm1726, %v4634, 0
  %v4771 = vsel %vm1726, %v4635, 0
  %v4774 = vsel %vm1726, %v4636, 0
  %v4777 = vsel %vm1726, %v4637, 0
  %v4780 = vsel %vm1726, %v4638, 0
  %v4783 = vsel %vm1924, %v4762, 0
  %4785 = vmatprep.subr.bf16.mxu0 0
  %4786 = vmatpush1.bf16.msra.mxu0 %v4754
  %4787 = vmatprep.subr.bf16.mxu0 0
  %4788 = vmatpush1.bf16.msra.mxu0 %v4756
  %4789 = vmatprep.subr.bf16.mxu0 0
  %4790 = vmatpush1.bf16.msra.mxu0 %v4758
  %4791 = vmatprep.subr.bf16.mxu0 0
  %4792 = vmatpush1.bf16.msra.mxu0 %v4760
  %4793 = vmatprep.subr.bf16.mxu0 0
  %4794 = vmatpush1.bf16.msra.mxu0 %v4783
  %4795 = vmatprep.subr.bf16.mxu0 0
  %4796 = vmatpush1.bf16.msra.mxu0 0
  %4797 = vmatprep.subr.bf16.mxu0 0
  %4798 = vmatpush1.bf16.msra.mxu0 0
  %4799 = vmatprep.subr.bf16.mxu0 0
  %4800 = vmatpush1.bf16.msra.mxu0 0
  %4801 = vmatprep.subr.bf16.mxu0 0
  %4802 = vmatpush1.bf16.msra.mxu0 0
  %4803 = vmatprep.subr.bf16.mxu0 0
  %4804 = vmatpush1.bf16.msra.mxu0 0
  %4805 = vmatprep.subr.bf16.mxu0 0
  %4806 = vmatpush1.bf16.msra.mxu0 0
  %4807 = vmatprep.subr.bf16.mxu0 0
  %4808 = vmatpush1.bf16.msra.mxu0 0
  %4809 = vmatprep.subr.bf16.mxu0 0
  %4810 = vmatpush1.bf16.msra.mxu0 0
  %4811 = vmatprep.subr.bf16.mxu0 0
  %4812 = vmatpush1.bf16.msra.mxu0 0
  %4813 = vmatprep.subr.bf16.mxu0 0
  %4814 = vmatpush1.bf16.msra.mxu0 0
  %4815 = vmatprep.subr.bf16.mxu0 0
  %4816 = vmatpush1.bf16.msra.mxu0 0
  %4817 = vmatprep.mubr.bf16.mxu0 0
  %4818 = vmatmul.mubr.bf16.gmra.mrb[0].mxu0 %v4768
  %v4819 = vpop.f32.mrb[0].mxu0
  %v4820 = vadd.f32 0.0, %v4819
  %v4821 = vpop.f32.mrb[0].mxu0
  %v4822 = vpop.f32.mrb[0].mxu0
  %v4823 = vadd.f32 0.0, %v4822
  %v4824 = vpop.f32.mrb[0].mxu0
  %4825 = vmatprep.mubr.bf16.mxu0 0
  %4826 = vmatmul.mubr.bf16.gmra.mrb[0].mxu0 %v4771
  %v4827 = vpop.f32.mrb[0].mxu0
  %v4828 = vadd.f32 0.0, %v4827
  %v4829 = vpop.f32.mrb[0].mxu0
  %v4830 = vpop.f32.mrb[0].mxu0
  %v4831 = vadd.f32 0.0, %v4830
  %v4832 = vpop.f32.mrb[0].mxu0
  %4833 = vmatprep.mubr.bf16.mxu0 0
  %4834 = vmatmul.mubr.bf16.gmra.mrb[0].mxu0 %v4774
  %v4835 = vpop.f32.mrb[0].mxu0
  %v4836 = vadd.f32 0.0, %v4835
  %v4837 = vpop.f32.mrb[0].mxu0
  %v4838 = vpop.f32.mrb[0].mxu0
  %v4839 = vadd.f32 0.0, %v4838
  %v4840 = vpop.f32.mrb[0].mxu0
  %4841 = vmatprep.mubr.bf16.mxu0 0
  %4842 = vmatmul.mubr.bf16.gmra.mrb[0].mxu0 %v4777
  %v4843 = vpop.f32.mrb[0].mxu0
  %v4844 = vadd.f32 0.0, %v4843
  %v4845 = vpop.f32.mrb[0].mxu0
  %v4846 = vpop.f32.mrb[0].mxu0
  %v4847 = vadd.f32 0.0, %v4846
  %v4848 = vpop.f32.mrb[0].mxu0
  %4849 = vmatprep.mubr.bf16.mxu0 0
  %4850 = vmatmul.mubr.bf16.gmra.mrb[0].mxu0 %v4780
  %v4851 = vpop.f32.mrb[0].mxu0
  %v4852 = vadd.f32 0.0, %v4851
  %v4853 = vpop.f32.mrb[0].mxu0
  %v4854 = vpop.f32.mrb[0].mxu0
  %v4855 = vpop.f32.mrb[0].mxu0
  %4856 = vdwg.mxu0
  %v4857 = vrcp.pop %v4577
  %v4858 = vrcp.pop %v4580
  %v4859 = vrcp.pop %v4583
  %v4860 = vrcp.pop %v4586
  %v4861 = vrcp.pop %v4589
  %v4862 = vrcp.pop %v4592
  %v4863 = vrcp.pop %v4595
  %v4864 = vrcp.pop %v4598
  %v4865 = vrcp.pop %v4601
  %v4866 = vrcp.pop %v4604
  %v4867 = vrcp.pop %v4607
  %v4868 = vrcp.pop %v4610
  %v4869 = vrcp.pop %v4613
  %v4870 = vrcp.pop %v4616
  %v4871 = vrcp.pop %v4619
  %v4872 = vrcp.pop %v4622
  %v4873 = vrcp.pop %v4625
  %v4874 = vrcp.pop %v4628
  %v4875 = vmul.f32 %v4711, %v4857
  %v4876 = vmul.f32 %v4714, %v4858
  %v4877 = vmul.f32 %v4719, %v4859
  %v4878 = vmul.f32 %v4722, %v4860
  %v4879 = vmul.f32 %v4727, %v4861
  %v4880 = vmul.f32 %v4730, %v4862
  %v4881 = vmul.f32 %v4735, %v4863
  %v4882 = vmul.f32 %v4738, %v4864
  %v4883 = vmul.f32 %v4743, %v4865
  %v4884 = vmul.f32 %v4820, %v4866
  %v4885 = vmul.f32 %v4823, %v4867
  %v4886 = vmul.f32 %v4828, %v4868
  %v4887 = vmul.f32 %v4831, %v4869
  %v4888 = vmul.f32 %v4836, %v4870
  %v4889 = vmul.f32 %v4839, %v4871
  %v4890 = vmul.f32 %v4844, %v4872
  %v4891 = vmul.f32 %v4847, %v4873
  %v4892 = vmul.f32 %v4852, %v4874
  %v4893 = vpack.c.bf16 %v4876, %v4875
  %v4894 = vpack.c.bf16 %v4878, %v4877
  %v4895 = vpack.c.bf16 %v4880, %v4879
  %v4896 = vpack.c.bf16 %v4882, %v4881
  %v4897 = vpack.c.bf16 %v4884, %v4883
  %v4898 = vpack.c.bf16 %v4886, %v4885
  %v4899 = vpack.c.bf16 %v4888, %v4887
  %v4900 = vpack.c.bf16 %v4890, %v4889
  %v4901 = vpack.c.bf16 %v4892, %v4891
  %v4902 = vld [vmem:[%s5 + $0xc0] sm:$0xff]
  %v4903 = vld [vmem:[%s5 + $0xc8] sm:$0xff]
  %v4904 = vld [vmem:[%s5 + $0xd0] sm:$0xff]
  %v4905 = vld [vmem:[%s5 + $0xd8] sm:$0xff]
  %v4906 = vld [vmem:[%s5 + $0xe0] sm:$0xff]
  %v4907 = vld [vmem:[%s5 + $0xe8] sm:$0xff]
  %v4908 = vld [vmem:[%s5 + $0xf0] sm:$0xff]
  %v4909 = vld [vmem:[%s5 + $0xf8] sm:$0xff]
  %v4918 = vunpack.c.l.b16 %v4902
  %v4919 = vunpack.c.h.b16 %v4902
  %v4920 = vunpack.c.l.b16 %v4903
  %v4921 = vunpack.c.h.b16 %v4903
  %v4922 = vunpack.c.l.b16 %v4904
  %v4923 = vunpack.c.h.b16 %v4904
  %v4924 = vunpack.c.l.b16 %v4905
  %v4925 = vunpack.c.h.b16 %v4905
  %v4926 = vunpack.c.l.b16 %v4906
  %v4927 = vunpack.c.h.b16 %v4906
  %v4928 = vunpack.c.l.b16 %v4907
  %v4929 = vunpack.c.h.b16 %v4907
  %v4930 = vunpack.c.l.b16 %v4908
  %v4931 = vunpack.c.h.b16 %v4908
  %v4932 = vunpack.c.l.b16 %v4909
  %v4933 = vunpack.c.h.b16 %v4909
  %v4934 = vpack.c.b16 %v4920, %v4918
  %v4935 = vpack.c.b16 %v4921, %v4919
  %v4936 = vpack.c.b16 %v4924, %v4922
  %v4937 = vpack.c.b16 %v4925, %v4923
  %v4938 = vpack.c.b16 %v4928, %v4926
  %v4939 = vpack.c.b16 %v4929, %v4927
  %v4940 = vpack.c.b16 %v4932, %v4930
  %v4941 = vpack.c.b16 %v4933, %v4931
  %v4951 = vsel %vm1485, %v4893, 0
  %v4954 = vsel %vm1485, %v4894, 0
  %v4957 = vsel %vm1485, %v4895, 0
  %v4960 = vsel %vm1485, %v4896, 0
  %v4963 = vsel %vm1485, %v4897, 0
  %v4966 = vsel %vm1485, %v4898, 0
  %v4969 = vsel %vm1485, %v4899, 0
  %v4972 = vsel %vm1485, %v4900, 0
  %v4975 = vsel %vm1485, %v4901, 0
  %4977 = vmatprep.subr.bf16.mxu0 %v4935
  %4978 = vmatpush1.bf16.msra.mxu0 %v4934
  %4979 = vmatprep.subr.bf16.mxu0 %v4937
  %4980 = vmatpush1.bf16.msra.mxu0 %v4936
  %4981 = vmatprep.subr.bf16.mxu0 %v4939
  %4982 = vmatpush1.bf16.msra.mxu0 %v4938
  %4983 = vmatprep.subr.bf16.mxu0 %v4941
  %4984 = vmatpush1.bf16.msra.mxu0 %v4940
  %4985 = vmatprep.subr.bf16.mxu0 0
  %4986 = vmatpush1.bf16.msra.mxu0 0
  %4987 = vmatprep.subr.bf16.mxu0 0
  %4988 = vmatpush1.bf16.msra.mxu0 0
  %4989 = vmatprep.subr.bf16.mxu0 0
  %4990 = vmatpush1.bf16.msra.mxu0 0
  %4991 = vmatprep.subr.bf16.mxu0 0
  %4992 = vmatpush1.bf16.msra.mxu0 0
  %4993 = vmatprep.subr.bf16.mxu0 0
  %4994 = vmatpush1.bf16.msra.mxu0 0
  %4995 = vmatprep.subr.bf16.mxu0 0
  %4996 = vmatpush1.bf16.msra.mxu0 0
  %4997 = vmatprep.subr.bf16.mxu0 0
  %4998 = vmatpush1.bf16.msra.mxu0 0
  %4999 = vmatprep.subr.bf16.mxu0 0
  %5000 = vmatpush1.bf16.msra.mxu0 0
  %5001 = vmatprep.subr.bf16.mxu0 0
  %5002 = vmatpush1.bf16.msra.mxu0 0
  %5003 = vmatprep.subr.bf16.mxu0 0
  %5004 = vmatpush1.bf16.msra.mxu0 0
  %5005 = vmatprep.subr.bf16.mxu0 0
  %5006 = vmatpush1.bf16.msra.mxu0 0
  %5007 = vmatprep.subr.bf16.mxu0 0
  %5008 = vmatpush1.bf16.msra.mxu0 0
  %5009 = vmatprep.mubr.bf16.mxu0 0
  %5010 = vmatmul.mubr.bf16.gmra.mrb[0].mxu0 %v4951
  %v5011 = vpop.f32.mrb[0].mxu0
  %v5012 = vadd.f32 0.0, %v5011
  %v5013 = vpop.f32.mrb[0].mxu0
  %v5014 = vadd.f32 0.0, %v5013
  %v5015 = vpop.f32.mrb[0].mxu0
  %v5016 = vadd.f32 0.0, %v5015
  %v5017 = vpop.f32.mrb[0].mxu0
  %v5018 = vadd.f32 0.0, %v5017
  %5019 = vmatprep.mubr.bf16.mxu0 0
  %5020 = vmatmul.mubr.bf16.gmra.mrb[0].mxu0 %v4954
  %v5021 = vpop.f32.mrb[0].mxu0
  %v5022 = vadd.f32 0.0, %v5021
  %v5023 = vpop.f32.mrb[0].mxu0
  %v5024 = vadd.f32 0.0, %v5023
  %v5025 = vpop.f32.mrb[0].mxu0
  %v5026 = vadd.f32 0.0, %v5025
  %v5027 = vpop.f32.mrb[0].mxu0
  %v5028 = vadd.f32 0.0, %v5027
  %5029 = vmatprep.mubr.bf16.mxu0 0
  %5030 = vmatmul.mubr.bf16.gmra.mrb[0].mxu0 %v4957
  %v5031 = vpop.f32.mrb[0].mxu0
  %v5032 = vadd.f32 0.0, %v5031
  %v5033 = vpop.f32.mrb[0].mxu0
  %v5034 = vadd.f32 0.0, %v5033
  %v5035 = vpop.f32.mrb[0].mxu0
  %v5036 = vadd.f32 0.0, %v5035
  %v5037 = vpop.f32.mrb[0].mxu0
  %v5038 = vadd.f32 0.0, %v5037
  %5039 = vmatprep.mubr.bf16.mxu0 0
  %5040 = vmatmul.mubr.bf16.gmra.mrb[0].mxu0 %v4960
  %v5041 = vpop.f32.mrb[0].mxu0
  %v5042 = vadd.f32 0.0, %v5041
  %v5043 = vpop.f32.mrb[0].mxu0
  %v5044 = vadd.f32 0.0, %v5043
  %v5045 = vpop.f32.mrb[0].mxu0
  %v5046 = vadd.f32 0.0, %v5045
  %v5047 = vpop.f32.mrb[0].mxu0
  %v5048 = vadd.f32 0.0, %v5047
  %5049 = vmatprep.mubr.bf16.mxu0 0
  %5050 = vmatmul.mubr.bf16.gmra.mrb[0].mxu0 %v4963
  %v5051 = vpop.f32.mrb[0].mxu0
  %v5052 = vadd.f32 0.0, %v5051
  %v5053 = vpop.f32.mrb[0].mxu0
  %v5054 = vadd.f32 0.0, %v5053
  %v5055 = vpop.f32.mrb[0].mxu0
  %v5056 = vadd.f32 0.0, %v5055
  %v5057 = vpop.f32.mrb[0].mxu0
  %v5058 = vadd.f32 0.0, %v5057
  %5059 = vmatprep.mubr.bf16.mxu0 0
  %5060 = vmatmul.mubr.bf16.gmra.mrb[0].mxu0 %v4966
  %v5061 = vpop.f32.mrb[0].mxu0
  %v5062 = vadd.f32 0.0, %v5061
  %v5063 = vpop.f32.mrb[0].mxu0
  %v5064 = vadd.f32 0.0, %v5063
  %v5065 = vpop.f32.mrb[0].mxu0
  %v5066 = vadd.f32 0.0, %v5065
  %v5067 = vpop.f32.mrb[0].mxu0
  %v5068 = vadd.f32 0.0, %v5067
  %5069 = vmatprep.mubr.bf16.mxu0 0
  %5070 = vmatmul.mubr.bf16.gmra.mrb[0].mxu0 %v4969
  %v5071 = vpop.f32.mrb[0].mxu0
  %v5072 = vadd.f32 0.0, %v5071
  %v5073 = vpop.f32.mrb[0].mxu0
  %v5074 = vadd.f32 0.0, %v5073
  %v5075 = vpop.f32.mrb[0].mxu0
  %v5076 = vadd.f32 0.0, %v5075
  %v5077 = vpop.f32.mrb[0].mxu0
  %v5078 = vadd.f32 0.0, %v5077
  %5079 = vmatprep.mubr.bf16.mxu0 0
  %5080 = vmatmul.mubr.bf16.gmra.mrb[0].mxu0 %v4972
  %v5081 = vpop.f32.mrb[0].mxu0
  %v5082 = vadd.f32 0.0, %v5081
  %v5083 = vpop.f32.mrb[0].mxu0
  %v5084 = vadd.f32 0.0, %v5083
  %v5085 = vpop.f32.mrb[0].mxu0
  %v5086 = vadd.f32 0.0, %v5085
  %v5087 = vpop.f32.mrb[0].mxu0
  %v5088 = vadd.f32 0.0, %v5087
  %5089 = vmatprep.mubr.bf16.mxu0 0
  %5090 = vmatmul.mubr.bf16.gmra.mrb[0].mxu0 %v4975
  %v5091 = vpop.f32.mrb[0].mxu0
  %v5092 = vadd.f32 0.0, %v5091
  %v5093 = vpop.f32.mrb[0].mxu0
  %v5094 = vadd.f32 0.0, %v5093
  %v5095 = vpop.f32.mrb[0].mxu0
  %v5096 = vadd.f32 0.0, %v5095
  %v5097 = vpop.f32.mrb[0].mxu0
  %v5098 = vadd.f32 0.0, %v5097
  %5099 = vdwg.mxu0
  %v5100 = vadd.f32 %v4131, %v5012
  %v5101 = vadd.f32 %v4132, %v5014
  %v5102 = vadd.f32 %v4133, %v5016
  %v5103 = vadd.f32 %v4134, %v5018
  %v5104 = vadd.f32 %v4135, %v5022
  %v5105 = vadd.f32 %v4136, %v5024
  %v5106 = vadd.f32 %v4137, %v5026
  %v5107 = vadd.f32 %v4138, %v5028
  %v5108 = vadd.f32 %v4139, %v5032
  %v5109 = vadd.f32 %v4140, %v5034
  %v5110 = vadd.f32 %v4141, %v5036
  %v5111 = vadd.f32 %v4142, %v5038
  %v5112 = vadd.f32 %v4143, %v5042
  %v5113 = vadd.f32 %v4144, %v5044
  %v5114 = vadd.f32 %v4145, %v5046
  %v5115 = vadd.f32 %v4146, %v5048
  %v5116 = vadd.f32 %v4147, %v5052
  %v5117 = vadd.f32 %v4148, %v5054
  %v5118 = vadd.f32 %v4149, %v5056
  %v5119 = vadd.f32 %v4150, %v5058
  %v5120 = vadd.f32 %v4151, %v5062
  %v5121 = vadd.f32 %v4152, %v5064
  %v5122 = vadd.f32 %v4153, %v5066
  %v5123 = vadd.f32 %v4154, %v5068
  %v5124 = vadd.f32 %v4155, %v5072
  %v5125 = vadd.f32 %v4156, %v5074
  %v5126 = vadd.f32 %v4157, %v5076
  %v5127 = vadd.f32 %v4158, %v5078
  %v5128 = vadd.f32 %v4159, %v5082
  %v5129 = vadd.f32 %v4160, %v5084
  %v5130 = vadd.f32 %v4161, %v5086
  %v5131 = vadd.f32 %v4162, %v5088
  %v5132 = vadd.f32 %v4163, %v5092
  %v5133 = vadd.f32 %v4164, %v5094
  %v5134 = vadd.f32 %v4165, %v5096
  %v5135 = vadd.f32 %v4166, %v5098
  %v5136 = vadd.f32 %v45, %v5100
  %v5137 = vadd.f32 %v46, %v5101
  %v5138 = vadd.f32 %v47, %v5102
  %v5139 = vadd.f32 %v48, %v5103
  %v5140 = vadd.f32 %v49, %v5104
  %v5141 = vadd.f32 %v50, %v5105
  %v5142 = vadd.f32 %v51, %v5106
  %v5143 = vadd.f32 %v52, %v5107
  %v5144 = vadd.f32 %v53, %v5108
  %v5145 = vadd.f32 %v54, %v5109
  %v5146 = vadd.f32 %v55, %v5110
  %v5147 = vadd.f32 %v56, %v5111
  %v5148 = vadd.f32 %v57, %v5112
  %v5149 = vadd.f32 %v58, %v5113
  %v5150 = vadd.f32 %v59, %v5114
  %v5151 = vadd.f32 %v60, %v5115
  %v5152 = vadd.f32 %v61, %v5116
  %v5153 = vadd.f32 %v62, %v5117
  %v5154 = vadd.f32 %v63, %v5118
  %v5155 = vadd.f32 %v64, %v5119
  %v5156 = vadd.f32 %v65, %v5120
  %v5157 = vadd.f32 %v66, %v5121
  %v5158 = vadd.f32 %v67, %v5122
  %v5159 = vadd.f32 %v68, %v5123
  %v5160 = vadd.f32 %v69, %v5124
  %v5161 = vadd.f32 %v70, %v5125
  %v5162 = vadd.f32 %v71, %v5126
  %v5163 = vadd.f32 %v72, %v5127
  %v5164 = vadd.f32 %v73, %v5128
  %v5165 = vadd.f32 %v74, %v5129
  %v5166 = vadd.f32 %v75, %v5130
  %v5167 = vadd.f32 %v76, %v5131
  %v5168 = vadd.f32 %v77, %v5132
  %v5169 = vadd.f32 %v78, %v5133
  %v5170 = vadd.f32 %v79, %v5134
  %v5171 = vadd.f32 %v80, %v5135
  %v5172 = vld [vmem:[%s6] sm:$0x3]
  %v5174 = vlaneseq
  %v5175 = vshrl.u32 %v5174, 7
  %v5176 = vsub.s32 0, %v5175
  %v5177 = vrot.slane %v5172, %v5176
  %v5178 = vlaneseq
  %v5179 = vshrl.u32 %v5178, 7
  %v5180 = vsub.s32 1, %v5179
  %v5181 = vrot.slane %v5172, %v5180
  %v5184 = vadd.f32 %v5136, %v5177
  %v5185 = vadd.f32 %v5137, %v5181
  %v5186 = vadd.f32 %v5138, %v5177
  %v5187 = vadd.f32 %v5139, %v5181
  %v5188 = vadd.f32 %v5140, %v5177
  %v5189 = vadd.f32 %v5141, %v5181
  %v5190 = vadd.f32 %v5142, %v5177
  %v5191 = vadd.f32 %v5143, %v5181
  %v5192 = vadd.f32 %v5144, %v5177
  %v5193 = vadd.f32 %v5145, %v5181
  %v5194 = vadd.f32 %v5146, %v5177
  %v5195 = vadd.f32 %v5147, %v5181
  %v5196 = vadd.f32 %v5148, %v5177
  %v5197 = vadd.f32 %v5149, %v5181
  %v5198 = vadd.f32 %v5150, %v5177
  %v5199 = vadd.f32 %v5151, %v5181
  %v5200 = vadd.f32 %v5152, %v5177
  %v5201 = vadd.f32 %v5153, %v5181
  %v5202 = vadd.f32 %v5154, %v5177
  %v5203 = vadd.f32 %v5155, %v5181
  %v5204 = vadd.f32 %v5156, %v5177
  %v5205 = vadd.f32 %v5157, %v5181
  %v5206 = vadd.f32 %v5158, %v5177
  %v5207 = vadd.f32 %v5159, %v5181
  %v5208 = vadd.f32 %v5160, %v5177
  %v5209 = vadd.f32 %v5161, %v5181
  %v5210 = vadd.f32 %v5162, %v5177
  %v5211 = vadd.f32 %v5163, %v5181
  %v5212 = vadd.f32 %v5164, %v5177
  %v5213 = vadd.f32 %v5165, %v5181
  %v5214 = vadd.f32 %v5166, %v5177
  %v5215 = vadd.f32 %v5167, %v5181
  %v5216 = vadd.f32 %v5168, %v5177
  %v5217 = vadd.f32 %v5169, %v5181
  %v5218 = vadd.f32 %v5170, %v5177
  %v5219 = vadd.f32 %v5171, %v5181
  %v5220 = vadd.f32 %v5184, %v5185
  %5221 = vadd.xlane.f32.xlu0 %v5220
  %v5222 = vpop.xlane.xlu0 %5221
  %v5223 = vadd.f32 %v5186, %v5187
  %5224 = vadd.xlane.f32.xlu0 %v5223
  %v5225 = vpop.xlane.xlu0 %5224
  %v5226 = vadd.f32 %v5188, %v5189
  %5227 = vadd.xlane.f32.xlu0 %v5226
  %v5228 = vpop.xlane.xlu0 %5227
  %v5229 = vadd.f32 %v5190, %v5191
  %5230 = vadd.xlane.f32.xlu0 %v5229
  %v5231 = vpop.xlane.xlu0 %5230
  %v5232 = vadd.f32 %v5192, %v5193
  %5233 = vadd.xlane.f32.xlu0 %v5232
  %v5234 = vpop.xlane.xlu0 %5233
  %v5235 = vadd.f32 %v5194, %v5195
  %5236 = vadd.xlane.f32.xlu0 %v5235
  %v5237 = vpop.xlane.xlu0 %5236
  %v5238 = vadd.f32 %v5196, %v5197
  %5239 = vadd.xlane.f32.xlu0 %v5238
  %v5240 = vpop.xlane.xlu0 %5239
  %v5241 = vadd.f32 %v5198, %v5199
  %5242 = vadd.xlane.f32.xlu0 %v5241
  %v5243 = vpop.xlane.xlu0 %5242
  %v5244 = vadd.f32 %v5200, %v5201
  %5245 = vadd.xlane.f32.xlu0 %v5244
  %v5246 = vpop.xlane.xlu0 %5245
  %v5247 = vadd.f32 %v5202, %v5203
  %5248 = vadd.xlane.f32.xlu0 %v5247
  %v5249 = vpop.xlane.xlu0 %5248
  %v5250 = vadd.f32 %v5204, %v5205
  %5251 = vadd.xlane.f32.xlu0 %v5250
  %v5252 = vpop.xlane.xlu0 %5251
  %v5253 = vadd.f32 %v5206, %v5207
  %5254 = vadd.xlane.f32.xlu0 %v5253
  %v5255 = vpop.xlane.xlu0 %5254
  %v5256 = vadd.f32 %v5208, %v5209
  %5257 = vadd.xlane.f32.xlu0 %v5256
  %v5258 = vpop.xlane.xlu0 %5257
  %v5259 = vadd.f32 %v5210, %v5211
  %5260 = vadd.xlane.f32.xlu0 %v5259
  %v5261 = vpop.xlane.xlu0 %5260
  %v5262 = vadd.f32 %v5212, %v5213
  %5263 = vadd.xlane.f32.xlu0 %v5262
  %v5264 = vpop.xlane.xlu0 %5263
  %v5265 = vadd.f32 %v5214, %v5215
  %5266 = vadd.xlane.f32.xlu0 %v5265
  %v5267 = vpop.xlane.xlu0 %5266
  %v5268 = vadd.f32 %v5216, %v5217
  %5269 = vadd.xlane.f32.xlu0 %v5268
  %v5270 = vpop.xlane.xlu0 %5269
  %v5271 = vadd.f32 %v5218, %v5219
  %5272 = vadd.xlane.f32.xlu0 %v5271
  %v5273 = vpop.xlane.xlu0 %5272
  %v5274 = vmul.f32 %v5222, %v135
  %v5275 = vmul.f32 %v5225, %v135
  %v5276 = vmul.f32 %v5228, %v135
  %v5277 = vmul.f32 %v5231, %v135
  %v5278 = vmul.f32 %v5234, %v135
  %v5279 = vmul.f32 %v5237, %v135
  %v5280 = vmul.f32 %v5240, %v135
  %v5281 = vmul.f32 %v5243, %v135
  %v5282 = vmul.f32 %v5246, %v135
  %v5283 = vmul.f32 %v5249, %v135
  %v5284 = vmul.f32 %v5252, %v135
  %v5285 = vmul.f32 %v5255, %v135
  %v5286 = vmul.f32 %v5258, %v135
  %v5287 = vmul.f32 %v5261, %v135
  %v5288 = vmul.f32 %v5264, %v135
  %v5289 = vmul.f32 %v5267, %v135
  %v5290 = vmul.f32 %v5270, %v135
  %v5291 = vmul.f32 %v5273, %v135
  %v5292 = vsub.f32 %v5184, %v5274
  %v5293 = vsub.f32 %v5185, %v5274
  %v5294 = vsub.f32 %v5186, %v5275
  %v5295 = vsub.f32 %v5187, %v5275
  %v5296 = vsub.f32 %v5188, %v5276
  %v5297 = vsub.f32 %v5189, %v5276
  %v5298 = vsub.f32 %v5190, %v5277
  %v5299 = vsub.f32 %v5191, %v5277
  %v5300 = vsub.f32 %v5192, %v5278
  %v5301 = vsub.f32 %v5193, %v5278
  %v5302 = vsub.f32 %v5194, %v5279
  %v5303 = vsub.f32 %v5195, %v5279
  %v5304 = vsub.f32 %v5196, %v5280
  %v5305 = vsub.f32 %v5197, %v5280
  %v5306 = vsub.f32 %v5198, %v5281
  %v5307 = vsub.f32 %v5199, %v5281
  %v5308 = vsub.f32 %v5200, %v5282
  %v5309 = vsub.f32 %v5201, %v5282
  %v5310 = vsub.f32 %v5202, %v5283
  %v5311 = vsub.f32 %v5203, %v5283
  %v5312 = vsub.f32 %v5204, %v5284
  %v5313 = vsub.f32 %v5205, %v5284
  %v5314 = vsub.f32 %v5206, %v5285
  %v5315 = vsub.f32 %v5207, %v5285
  %v5316 = vsub.f32 %v5208, %v5286
  %v5317 = vsub.f32 %v5209, %v5286
  %v5318 = vsub.f32 %v5210, %v5287
  %v5319 = vsub.f32 %v5211, %v5287
  %v5320 = vsub.f32 %v5212, %v5288
  %v5321 = vsub.f32 %v5213, %v5288
  %v5322 = vsub.f32 %v5214, %v5289
  %v5323 = vsub.f32 %v5215, %v5289
  %v5324 = vsub.f32 %v5216, %v5290
  %v5325 = vsub.f32 %v5217, %v5290
  %v5326 = vsub.f32 %v5218, %v5291
  %v5327 = vsub.f32 %v5219, %v5291
  %v5328 = vmul.f32 %v5292, %v5292
  %v5329 = vmul.f32 %v5293, %v5293
  %v5330 = vmul.f32 %v5294, %v5294
  %v5331 = vmul.f32 %v5295, %v5295
  %v5332 = vmul.f32 %v5296, %v5296
  %v5333 = vmul.f32 %v5297, %v5297
  %v5334 = vmul.f32 %v5298, %v5298
  %v5335 = vmul.f32 %v5299, %v5299
  %v5336 = vmul.f32 %v5300, %v5300
  %v5337 = vmul.f32 %v5301, %v5301
  %v5338 = vmul.f32 %v5302, %v5302
  %v5339 = vmul.f32 %v5303, %v5303
  %v5340 = vmul.f32 %v5304, %v5304
  %v5341 = vmul.f32 %v5305, %v5305
  %v5342 = vmul.f32 %v5306, %v5306
  %v5343 = vmul.f32 %v5307, %v5307
  %v5344 = vmul.f32 %v5308, %v5308
  %v5345 = vmul.f32 %v5309, %v5309
  %v5346 = vmul.f32 %v5310, %v5310
  %v5347 = vmul.f32 %v5311, %v5311
  %v5348 = vmul.f32 %v5312, %v5312
  %v5349 = vmul.f32 %v5313, %v5313
  %v5350 = vmul.f32 %v5314, %v5314
  %v5351 = vmul.f32 %v5315, %v5315
  %v5352 = vmul.f32 %v5316, %v5316
  %v5353 = vmul.f32 %v5317, %v5317
  %v5354 = vmul.f32 %v5318, %v5318
  %v5355 = vmul.f32 %v5319, %v5319
  %v5356 = vmul.f32 %v5320, %v5320
  %v5357 = vmul.f32 %v5321, %v5321
  %v5358 = vmul.f32 %v5322, %v5322
  %v5359 = vmul.f32 %v5323, %v5323
  %v5360 = vmul.f32 %v5324, %v5324
  %v5361 = vmul.f32 %v5325, %v5325
  %v5362 = vmul.f32 %v5326, %v5326
  %v5363 = vmul.f32 %v5327, %v5327
  %v5364 = vadd.f32 %v5328, %v5329
  %5365 = vadd.xlane.f32.xlu0 %v5364
  %v5366 = vpop.xlane.xlu0 %5365
  %v5367 = vadd.f32 %v5330, %v5331
  %5368 = vadd.xlane.f32.xlu0 %v5367
  %v5369 = vpop.xlane.xlu0 %5368
  %v5370 = vadd.f32 %v5332, %v5333
  %5371 = vadd.xlane.f32.xlu0 %v5370
  %v5372 = vpop.xlane.xlu0 %5371
  %v5373 = vadd.f32 %v5334, %v5335
  %5374 = vadd.xlane.f32.xlu0 %v5373
  %v5375 = vpop.xlane.xlu0 %5374
  %v5376 = vadd.f32 %v5336, %v5337
  %5377 = vadd.xlane.f32.xlu0 %v5376
  %v5378 = vpop.xlane.xlu0 %5377
  %v5379 = vadd.f32 %v5338, %v5339
  %5380 = vadd.xlane.f32.xlu0 %v5379
  %v5381 = vpop.xlane.xlu0 %5380
  %v5382 = vadd.f32 %v5340, %v5341
  %5383 = vadd.xlane.f32.xlu0 %v5382
  %v5384 = vpop.xlane.xlu0 %5383
  %v5385 = vadd.f32 %v5342, %v5343
  %5386 = vadd.xlane.f32.xlu0 %v5385
  %v5387 = vpop.xlane.xlu0 %5386
  %v5388 = vadd.f32 %v5344, %v5345
  %5389 = vadd.xlane.f32.xlu0 %v5388
  %v5390 = vpop.xlane.xlu0 %5389
  %v5391 = vadd.f32 %v5346, %v5347
  %5392 = vadd.xlane.f32.xlu0 %v5391
  %v5393 = vpop.xlane.xlu0 %5392
  %v5394 = vadd.f32 %v5348, %v5349
  %5395 = vadd.xlane.f32.xlu0 %v5394
  %v5396 = vpop.xlane.xlu0 %5395
  %v5397 = vadd.f32 %v5350, %v5351
  %5398 = vadd.xlane.f32.xlu0 %v5397
  %v5399 = vpop.xlane.xlu0 %5398
  %v5400 = vadd.f32 %v5352, %v5353
  %5401 = vadd.xlane.f32.xlu0 %v5400
  %v5402 = vpop.xlane.xlu0 %5401
  %v5403 = vadd.f32 %v5354, %v5355
  %5404 = vadd.xlane.f32.xlu0 %v5403
  %v5405 = vpop.xlane.xlu0 %5404
  %v5406 = vadd.f32 %v5356, %v5357
  %5407 = vadd.xlane.f32.xlu0 %v5406
  %v5408 = vpop.xlane.xlu0 %5407
  %v5409 = vadd.f32 %v5358, %v5359
  %5410 = vadd.xlane.f32.xlu0 %v5409
  %v5411 = vpop.xlane.xlu0 %5410
  %v5412 = vadd.f32 %v5360, %v5361
  %5413 = vadd.xlane.f32.xlu0 %v5412
  %v5414 = vpop.xlane.xlu0 %5413
  %v5415 = vadd.f32 %v5362, %v5363
  %5416 = vadd.xlane.f32.xlu0 %v5415
  %v5417 = vpop.xlane.xlu0 %5416
  %v5418 = vmul.f32 %v5366, %v135
  %v5419 = vmul.f32 %v5369, %v135
  %v5420 = vmul.f32 %v5372, %v135
  %v5421 = vmul.f32 %v5375, %v135
  %v5422 = vmul.f32 %v5378, %v135
  %v5423 = vmul.f32 %v5381, %v135
  %v5424 = vmul.f32 %v5384, %v135
  %v5425 = vmul.f32 %v5387, %v135
  %v5426 = vmul.f32 %v5390, %v135
  %v5427 = vmul.f32 %v5393, %v135
  %v5428 = vmul.f32 %v5396, %v135
  %v5429 = vmul.f32 %v5399, %v135
  %v5430 = vmul.f32 %v5402, %v135
  %v5431 = vmul.f32 %v5405, %v135
  %v5432 = vmul.f32 %v5408, %v135
  %v5433 = vmul.f32 %v5411, %v135
  %v5434 = vmul.f32 %v5414, %v135
  %v5435 = vmul.f32 %v5417, %v135
  %v5436 = vadd.f32 %v5418, 1e-05
  %v5437 = vadd.f32 %v5419, 1e-05
  %v5438 = vadd.f32 %v5420, 1e-05
  %v5439 = vadd.f32 %v5421, 1e-05
  %v5440 = vadd.f32 %v5422, 1e-05
  %v5441 = vadd.f32 %v5423, 1e-05
  %v5442 = vadd.f32 %v5424, 1e-05
  %v5443 = vadd.f32 %v5425, 1e-05
  %v5444 = vadd.f32 %v5426, 1e-05
  %v5445 = vadd.f32 %v5427, 1e-05
  %v5446 = vadd.f32 %v5428, 1e-05
  %v5447 = vadd.f32 %v5429, 1e-05
  %v5448 = vadd.f32 %v5430, 1e-05
  %v5449 = vadd.f32 %v5431, 1e-05
  %v5450 = vadd.f32 %v5432, 1e-05
  %v5451 = vadd.f32 %v5433, 1e-05
  %v5452 = vadd.f32 %v5434, 1e-05
  %v5453 = vadd.f32 %v5435, 1e-05
  %v5454 = vrsqrt.pop %v5436
  %v5455 = vrsqrt.pop %v5437
  %v5456 = vrsqrt.pop %v5438
  %v5457 = vrsqrt.pop %v5439
  %v5458 = vrsqrt.pop %v5440
  %v5459 = vrsqrt.pop %v5441
  %v5460 = vrsqrt.pop %v5442
  %v5461 = vrsqrt.pop %v5443
  %v5462 = vrsqrt.pop %v5444
  %v5463 = vrsqrt.pop %v5445
  %v5464 = vrsqrt.pop %v5446
  %v5465 = vrsqrt.pop %v5447
  %v5466 = vrsqrt.pop %v5448
  %v5467 = vrsqrt.pop %v5449
  %v5468 = vrsqrt.pop %v5450
  %v5469 = vrsqrt.pop %v5451
  %v5470 = vrsqrt.pop %v5452
  %v5471 = vrsqrt.pop %v5453
  %v5472 = vmul.f32 %v5292, %v5454
  %v5473 = vmul.f32 %v5293, %v5454
  %v5474 = vmul.f32 %v5294, %v5455
  %v5475 = vmul.f32 %v5295, %v5455
  %v5476 = vmul.f32 %v5296, %v5456
  %v5477 = vmul.f32 %v5297, %v5456
  %v5478 = vmul.f32 %v5298, %v5457
  %v5479 = vmul.f32 %v5299, %v5457
  %v5480 = vmul.f32 %v5300, %v5458
  %v5481 = vmul.f32 %v5301, %v5458
  %v5482 = vmul.f32 %v5302, %v5459
  %v5483 = vmul.f32 %v5303, %v5459
  %v5484 = vmul.f32 %v5304, %v5460
  %v5485 = vmul.f32 %v5305, %v5460
  %v5486 = vmul.f32 %v5306, %v5461
  %v5487 = vmul.f32 %v5307, %v5461
  %v5488 = vmul.f32 %v5308, %v5462
  %v5489 = vmul.f32 %v5309, %v5462
  %v5490 = vmul.f32 %v5310, %v5463
  %v5491 = vmul.f32 %v5311, %v5463
  %v5492 = vmul.f32 %v5312, %v5464
  %v5493 = vmul.f32 %v5313, %v5464
  %v5494 = vmul.f32 %v5314, %v5465
  %v5495 = vmul.f32 %v5315, %v5465
  %v5496 = vmul.f32 %v5316, %v5466
  %v5497 = vmul.f32 %v5317, %v5466
  %v5498 = vmul.f32 %v5318, %v5467
  %v5499 = vmul.f32 %v5319, %v5467
  %v5500 = vmul.f32 %v5320, %v5468
  %v5501 = vmul.f32 %v5321, %v5468
  %v5502 = vmul.f32 %v5322, %v5469
  %v5503 = vmul.f32 %v5323, %v5469
  %v5504 = vmul.f32 %v5324, %v5470
  %v5505 = vmul.f32 %v5325, %v5470
  %v5506 = vmul.f32 %v5326, %v5471
  %v5507 = vmul.f32 %v5327, %v5471
  %v5508 = vld [vmem:[%s7] sm:$0x3]
  %v5510 = vlaneseq
  %v5511 = vshrl.u32 %v5510, 7
  %v5512 = vsub.s32 0, %v5511
  %v5513 = vrot.slane %v5508, %v5512
  %v5514 = vlaneseq
  %v5515 = vshrl.u32 %v5514, 7
  %v5516 = vsub.s32 1, %v5515
  %v5517 = vrot.slane %v5508, %v5516
  %v5520 = vmul.f32 %v5472, %v5513
  %v5521 = vmul.f32 %v5473, %v5517
  %v5522 = vmul.f32 %v5474, %v5513
  %v5523 = vmul.f32 %v5475, %v5517
  %v5524 = vmul.f32 %v5476, %v5513
  %v5525 = vmul.f32 %v5477, %v5517
  %v5526 = vmul.f32 %v5478, %v5513
  %v5527 = vmul.f32 %v5479, %v5517
  %v5528 = vmul.f32 %v5480, %v5513
  %v5529 = vmul.f32 %v5481, %v5517
  %v5530 = vmul.f32 %v5482, %v5513
  %v5531 = vmul.f32 %v5483, %v5517
  %v5532 = vmul.f32 %v5484, %v5513
  %v5533 = vmul.f32 %v5485, %v5517
  %v5534 = vmul.f32 %v5486, %v5513
  %v5535 = vmul.f32 %v5487, %v5517
  %v5536 = vmul.f32 %v5488, %v5513
  %v5537 = vmul.f32 %v5489, %v5517
  %v5538 = vmul.f32 %v5490, %v5513
  %v5539 = vmul.f32 %v5491, %v5517
  %v5540 = vmul.f32 %v5492, %v5513
  %v5541 = vmul.f32 %v5493, %v5517
  %v5542 = vmul.f32 %v5494, %v5513
  %v5543 = vmul.f32 %v5495, %v5517
  %v5544 = vmul.f32 %v5496, %v5513
  %v5545 = vmul.f32 %v5497, %v5517
  %v5546 = vmul.f32 %v5498, %v5513
  %v5547 = vmul.f32 %v5499, %v5517
  %v5548 = vmul.f32 %v5500, %v5513
  %v5549 = vmul.f32 %v5501, %v5517
  %v5550 = vmul.f32 %v5502, %v5513
  %v5551 = vmul.f32 %v5503, %v5517
  %v5552 = vmul.f32 %v5504, %v5513
  %v5553 = vmul.f32 %v5505, %v5517
  %v5554 = vmul.f32 %v5506, %v5513
  %v5555 = vmul.f32 %v5507, %v5517
  %v5556 = vld [vmem:[%s8] sm:$0x3]
  %v5558 = vlaneseq
  %v5559 = vshrl.u32 %v5558, 7
  %v5560 = vsub.s32 0, %v5559
  %v5561 = vrot.slane %v5556, %v5560
  %v5562 = vlaneseq
  %v5563 = vshrl.u32 %v5562, 7
  %v5564 = vsub.s32 1, %v5563
  %v5565 = vrot.slane %v5556, %v5564
  %v5568 = vadd.f32 %v5520, %v5561
  %v5569 = vadd.f32 %v5521, %v5565
  %v5570 = vadd.f32 %v5522, %v5561
  %v5571 = vadd.f32 %v5523, %v5565
  %v5572 = vadd.f32 %v5524, %v5561
  %v5573 = vadd.f32 %v5525, %v5565
  %v5574 = vadd.f32 %v5526, %v5561
  %v5575 = vadd.f32 %v5527, %v5565
  %v5576 = vadd.f32 %v5528, %v5561
  %v5577 = vadd.f32 %v5529, %v5565
  %v5578 = vadd.f32 %v5530, %v5561
  %v5579 = vadd.f32 %v5531, %v5565
  %v5580 = vadd.f32 %v5532, %v5561
  %v5581 = vadd.f32 %v5533, %v5565
  %v5582 = vadd.f32 %v5534, %v5561
  %v5583 = vadd.f32 %v5535, %v5565
  %v5584 = vadd.f32 %v5536, %v5561
  %v5585 = vadd.f32 %v5537, %v5565
  %v5586 = vadd.f32 %v5538, %v5561
  %v5587 = vadd.f32 %v5539, %v5565
  %v5588 = vadd.f32 %v5540, %v5561
  %v5589 = vadd.f32 %v5541, %v5565
  %v5590 = vadd.f32 %v5542, %v5561
  %v5591 = vadd.f32 %v5543, %v5565
  %v5592 = vadd.f32 %v5544, %v5561
  %v5593 = vadd.f32 %v5545, %v5565
  %v5594 = vadd.f32 %v5546, %v5561
  %v5595 = vadd.f32 %v5547, %v5565
  %v5596 = vadd.f32 %v5548, %v5561
  %v5597 = vadd.f32 %v5549, %v5565
  %v5598 = vadd.f32 %v5550, %v5561
  %v5599 = vadd.f32 %v5551, %v5565
  %v5600 = vadd.f32 %v5552, %v5561
  %v5601 = vadd.f32 %v5553, %v5565
  %v5602 = vadd.f32 %v5554, %v5561
  %v5603 = vadd.f32 %v5555, %v5565
  %v5604 = vpack.c.bf16 %v5570, %v5568
  %v5605 = vpack.c.bf16 %v5571, %v5569
  %v5606 = vpack.c.bf16 %v5574, %v5572
  %v5607 = vpack.c.bf16 %v5575, %v5573
  %v5608 = vpack.c.bf16 %v5578, %v5576
  %v5609 = vpack.c.bf16 %v5579, %v5577
  %v5610 = vpack.c.bf16 %v5582, %v5580
  %v5611 = vpack.c.bf16 %v5583, %v5581
  %v5612 = vpack.c.bf16 %v5586, %v5584
  %v5613 = vpack.c.bf16 %v5587, %v5585
  %v5614 = vpack.c.bf16 %v5590, %v5588
  %v5615 = vpack.c.bf16 %v5591, %v5589
  %v5616 = vpack.c.bf16 %v5594, %v5592
  %v5617 = vpack.c.bf16 %v5595, %v5593
  %v5618 = vpack.c.bf16 %v5598, %v5596
  %v5619 = vpack.c.bf16 %v5599, %v5597
  %v5620 = vpack.c.bf16 %v5602, %v5600
  %v5621 = vpack.c.bf16 %v5603, %v5601
  %v5622 = vld [vmem:[%s9] sm:$0xff]
  %v5623 = vld [vmem:[%s9 + $0x8] sm:$0xff]
  %v5624 = vld [vmem:[%s9 + $0x10] sm:$0xff]
  %v5625 = vld [vmem:[%s9 + $0x18] sm:$0xff]
  %v5626 = vld [vmem:[%s9 + $0x20] sm:$0xff]
  %v5627 = vld [vmem:[%s9 + $0x28] sm:$0xff]
  %v5628 = vld [vmem:[%s9 + $0x30] sm:$0xff]
  %v5629 = vld [vmem:[%s9 + $0x38] sm:$0xff]
  %v5630 = vld [vmem:[%s9 + $0x40] sm:$0xff]
  %v5631 = vld [vmem:[%s9 + $0x48] sm:$0xff]
  %v5632 = vld [vmem:[%s9 + $0x50] sm:$0xff]
  %v5633 = vld [vmem:[%s9 + $0x58] sm:$0xff]
  %v5634 = vld [vmem:[%s9 + $0x60] sm:$0xff]
  %v5635 = vld [vmem:[%s9 + $0x68] sm:$0xff]
  %v5636 = vld [vmem:[%s9 + $0x70] sm:$0xff]
  %v5637 = vld [vmem:[%s9 + $0x78] sm:$0xff]
  %v5638 = vld [vmem:[%s9 + $0x80] sm:$0xff]
  %v5639 = vld [vmem:[%s9 + $0x88] sm:$0xff]
  %v5640 = vld [vmem:[%s9 + $0x90] sm:$0xff]
  %v5641 = vld [vmem:[%s9 + $0x98] sm:$0xff]
  %v5642 = vld [vmem:[%s9 + $0xa0] sm:$0xff]
  %v5643 = vld [vmem:[%s9 + $0xa8] sm:$0xff]
  %v5644 = vld [vmem:[%s9 + $0xb0] sm:$0xff]
  %v5645 = vld [vmem:[%s9 + $0xb8] sm:$0xff]
  %v5646 = vld [vmem:[%s9 + $0xc0] sm:$0xff]
  %v5647 = vld [vmem:[%s9 + $0xc8] sm:$0xff]
  %v5648 = vld [vmem:[%s9 + $0xd0] sm:$0xff]
  %v5649 = vld [vmem:[%s9 + $0xd8] sm:$0xff]
  %v5650 = vld [vmem:[%s9 + $0xe0] sm:$0xff]
  %v5651 = vld [vmem:[%s9 + $0xe8] sm:$0xff]
  %v5652 = vld [vmem:[%s9 + $0xf0] sm:$0xff]
  %v5653 = vld [vmem:[%s9 + $0xf8] sm:$0xff]
  %v5654 = vld [vmem:[%s9 + $0x100] sm:$0xff]
  %v5655 = vld [vmem:[%s9 + $0x108] sm:$0xff]
  %v5656 = vld [vmem:[%s9 + $0x110] sm:$0xff]
  %v5657 = vld [vmem:[%s9 + $0x118] sm:$0xff]
  %v5658 = vld [vmem:[%s9 + $0x120] sm:$0xff]
  %v5659 = vld [vmem:[%s9 + $0x128] sm:$0xff]
  %v5660 = vld [vmem:[%s9 + $0x130] sm:$0xff]
  %v5661 = vld [vmem:[%s9 + $0x138] sm:$0xff]
  %v5662 = vld [vmem:[%s9 + $0x140] sm:$0xff]
  %v5663 = vld [vmem:[%s9 + $0x148] sm:$0xff]
  %v5664 = vld [vmem:[%s9 + $0x150] sm:$0xff]
  %v5665 = vld [vmem:[%s9 + $0x158] sm:$0xff]
  %v5666 = vld [vmem:[%s9 + $0x160] sm:$0xff]
  %v5667 = vld [vmem:[%s9 + $0x168] sm:$0xff]
  %v5668 = vld [vmem:[%s9 + $0x170] sm:$0xff]
  %v5669 = vld [vmem:[%s9 + $0x178] sm:$0xff]
  %v5670 = vld [vmem:[%s9 + $0x180] sm:$0xff]
  %v5671 = vld [vmem:[%s9 + $0x188] sm:$0xff]
  %v5672 = vld [vmem:[%s9 + $0x190] sm:$0xff]
  %v5673 = vld [vmem:[%s9 + $0x198] sm:$0xff]
  %v5674 = vld [vmem:[%s9 + $0x1a0] sm:$0xff]
  %v5675 = vld [vmem:[%s9 + $0x1a8] sm:$0xff]
  %v5676 = vld [vmem:[%s9 + $0x1b0] sm:$0xff]
  %v5677 = vld [vmem:[%s9 + $0x1b8] sm:$0xff]
  %v5678 = vld [vmem:[%s9 + $0x1c0] sm:$0xff]
  %v5679 = vld [vmem:[%s9 + $0x1c8] sm:$0xff]
  %v5680 = vld [vmem:[%s9 + $0x1d0] sm:$0xff]
  %v5681 = vld [vmem:[%s9 + $0x1d8] sm:$0xff]
  %v5682 = vld [vmem:[%s9 + $0x1e0] sm:$0xff]
  %v5683 = vld [vmem:[%s9 + $0x1e8] sm:$0xff]
  %v5684 = vld [vmem:[%s9 + $0x1f0] sm:$0xff]
  %v5685 = vld [vmem:[%s9 + $0x1f8] sm:$0xff]
  %v5686 = vld [vmem:[%s9 + $0x200] sm:$0xff]
  %v5687 = vld [vmem:[%s9 + $0x208] sm:$0xff]
  %v5688 = vld [vmem:[%s9 + $0x210] sm:$0xff]
  %v5689 = vld [vmem:[%s9 + $0x218] sm:$0xff]
  %v5690 = vld [vmem:[%s9 + $0x220] sm:$0xff]
  %v5691 = vld [vmem:[%s9 + $0x228] sm:$0xff]
  %v5692 = vld [vmem:[%s9 + $0x230] sm:$0xff]
  %v5693 = vld [vmem:[%s9 + $0x238] sm:$0xff]
  %v5694 = vld [vmem:[%s9 + $0x240] sm:$0xff]
  %v5695 = vld [vmem:[%s9 + $0x248] sm:$0xff]
  %v5696 = vld [vmem:[%s9 + $0x250] sm:$0xff]
  %v5697 = vld [vmem:[%s9 + $0x258] sm:$0xff]
  %v5698 = vld [vmem:[%s9 + $0x260] sm:$0xff]
  %v5699 = vld [vmem:[%s9 + $0x268] sm:$0xff]
  %v5700 = vld [vmem:[%s9 + $0x270] sm:$0xff]
  %v5701 = vld [vmem:[%s9 + $0x278] sm:$0xff]
  %v5702 = vld [vmem:[%s9 + $0x280] sm:$0xff]
  %v5703 = vld [vmem:[%s9 + $0x288] sm:$0xff]
  %v5704 = vld [vmem:[%s9 + $0x290] sm:$0xff]
  %v5705 = vld [vmem:[%s9 + $0x298] sm:$0xff]
  %v5706 = vld [vmem:[%s9 + $0x2a0] sm:$0xff]
  %v5707 = vld [vmem:[%s9 + $0x2a8] sm:$0xff]
  %v5708 = vld [vmem:[%s9 + $0x2b0] sm:$0xff]
  %v5709 = vld [vmem:[%s9 + $0x2b8] sm:$0xff]
  %v5710 = vld [vmem:[%s9 + $0x2c0] sm:$0xff]
  %v5711 = vld [vmem:[%s9 + $0x2c8] sm:$0xff]
  %v5712 = vld [vmem:[%s9 + $0x2d0] sm:$0xff]
  %v5713 = vld [vmem:[%s9 + $0x2d8] sm:$0xff]
  %v5714 = vld [vmem:[%s9 + $0x2e0] sm:$0xff]
  %v5715 = vld [vmem:[%s9 + $0x2e8] sm:$0xff]
  %v5716 = vld [vmem:[%s9 + $0x2f0] sm:$0xff]
  %v5717 = vld [vmem:[%s9 + $0x2f8] sm:$0xff]
  %v5718 = vld [vmem:[%s9 + $0x300] sm:$0xff]
  %v5719 = vld [vmem:[%s9 + $0x308] sm:$0xff]
  %v5720 = vld [vmem:[%s9 + $0x310] sm:$0xff]
  %v5721 = vld [vmem:[%s9 + $0x318] sm:$0xff]
  %v5722 = vld [vmem:[%s9 + $0x320] sm:$0xff]
  %v5723 = vld [vmem:[%s9 + $0x328] sm:$0xff]
  %v5724 = vld [vmem:[%s9 + $0x330] sm:$0xff]
  %v5725 = vld [vmem:[%s9 + $0x338] sm:$0xff]
  %v5726 = vld [vmem:[%s9 + $0x340] sm:$0xff]
  %v5727 = vld [vmem:[%s9 + $0x348] sm:$0xff]
  %v5728 = vld [vmem:[%s9 + $0x350] sm:$0xff]
  %v5729 = vld [vmem:[%s9 + $0x358] sm:$0xff]
  %v5730 = vld [vmem:[%s9 + $0x360] sm:$0xff]
  %v5731 = vld [vmem:[%s9 + $0x368] sm:$0xff]
  %v5732 = vld [vmem:[%s9 + $0x370] sm:$0xff]
  %v5733 = vld [vmem:[%s9 + $0x378] sm:$0xff]
  %v5734 = vld [vmem:[%s9 + $0x380] sm:$0xff]
  %v5735 = vld [vmem:[%s9 + $0x388] sm:$0xff]
  %v5736 = vld [vmem:[%s9 + $0x390] sm:$0xff]
  %v5737 = vld [vmem:[%s9 + $0x398] sm:$0xff]
  %v5738 = vld [vmem:[%s9 + $0x3a0] sm:$0xff]
  %v5739 = vld [vmem:[%s9 + $0x3a8] sm:$0xff]
  %v5740 = vld [vmem:[%s9 + $0x3b0] sm:$0xff]
  %v5741 = vld [vmem:[%s9 + $0x3b8] sm:$0xff]
  %v5742 = vld [vmem:[%s9 + $0x3c0] sm:$0xff]
  %v5743 = vld [vmem:[%s9 + $0x3c8] sm:$0xff]
  %v5744 = vld [vmem:[%s9 + $0x3d0] sm:$0xff]
  %v5745 = vld [vmem:[%s9 + $0x3d8] sm:$0xff]
  %v5746 = vld [vmem:[%s9 + $0x3e0] sm:$0xff]
  %v5747 = vld [vmem:[%s9 + $0x3e8] sm:$0xff]
  %v5748 = vld [vmem:[%s9 + $0x3f0] sm:$0xff]
  %v5749 = vld [vmem:[%s9 + $0x3f8] sm:$0xff]
  %v5750 = vld [vmem:[%s10] sm:$0xff]
  %v5752 = vlaneseq
  %v5753 = vshrl.u32 %v5752, 7
  %v5754 = vsub.s32 0, %v5753
  %v5755 = vrot.slane %v5750, %v5754
  %v5756 = vlaneseq
  %v5757 = vshrl.u32 %v5756, 7
  %v5758 = vsub.s32 1, %v5757
  %v5759 = vrot.slane %v5750, %v5758
  %v5760 = vlaneseq
  %v5761 = vshrl.u32 %v5760, 7
  %v5762 = vsub.s32 2, %v5761
  %v5763 = vrot.slane %v5750, %v5762
  %v5764 = vlaneseq
  %v5765 = vshrl.u32 %v5764, 7
  %v5766 = vsub.s32 3, %v5765
  %v5767 = vrot.slane %v5750, %v5766
  %v5768 = vlaneseq
  %v5769 = vshrl.u32 %v5768, 7
  %v5770 = vsub.s32 4, %v5769
  %v5771 = vrot.slane %v5750, %v5770
  %v5772 = vlaneseq
  %v5773 = vshrl.u32 %v5772, 7
  %v5774 = vsub.s32 5, %v5773
  %v5775 = vrot.slane %v5750, %v5774
  %v5776 = vlaneseq
  %v5777 = vshrl.u32 %v5776, 7
  %v5778 = vsub.s32 6, %v5777
  %v5779 = vrot.slane %v5750, %v5778
  %v5780 = vlaneseq
  %v5781 = vshrl.u32 %v5780, 7
  %v5782 = vsub.s32 7, %v5781
  %v5783 = vrot.slane %v5750, %v5782
  %v5920 = vunpack.c.l.b16 %v5622
  %v5921 = vunpack.c.h.b16 %v5622
  %v5922 = vunpack.c.l.b16 %v5623
  %v5923 = vunpack.c.h.b16 %v5623
  %v5924 = vunpack.c.l.b16 %v5624
  %v5925 = vunpack.c.h.b16 %v5624
  %v5926 = vunpack.c.l.b16 %v5625
  %v5927 = vunpack.c.h.b16 %v5625
  %v5928 = vunpack.c.l.b16 %v5626
  %v5929 = vunpack.c.h.b16 %v5626
  %v5930 = vunpack.c.l.b16 %v5627
  %v5931 = vunpack.c.h.b16 %v5627
  %v5932 = vunpack.c.l.b16 %v5628
  %v5933 = vunpack.c.h.b16 %v5628
  %v5934 = vunpack.c.l.b16 %v5629
  %v5935 = vunpack.c.h.b16 %v5629
  %v5936 = vunpack.c.l.b16 %v5630
  %v5937 = vunpack.c.h.b16 %v5630
  %v5938 = vunpack.c.l.b16 %v5631
  %v5939 = vunpack.c.h.b16 %v5631
  %v5940 = vunpack.c.l.b16 %v5632
  %v5941 = vunpack.c.h.b16 %v5632
  %v5942 = vunpack.c.l.b16 %v5633
  %v5943 = vunpack.c.h.b16 %v5633
  %v5944 = vunpack.c.l.b16 %v5634
  %v5945 = vunpack.c.h.b16 %v5634
  %v5946 = vunpack.c.l.b16 %v5635
  %v5947 = vunpack.c.h.b16 %v5635
  %v5948 = vunpack.c.l.b16 %v5636
  %v5949 = vunpack.c.h.b16 %v5636
  %v5950 = vunpack.c.l.b16 %v5637
  %v5951 = vunpack.c.h.b16 %v5637
  %v5952 = vunpack.c.l.b16 %v5638
  %v5953 = vunpack.c.h.b16 %v5638
  %v5954 = vunpack.c.l.b16 %v5639
  %v5955 = vunpack.c.h.b16 %v5639
  %v5956 = vunpack.c.l.b16 %v5640
  %v5957 = vunpack.c.h.b16 %v5640
  %v5958 = vunpack.c.l.b16 %v5641
  %v5959 = vunpack.c.h.b16 %v5641
  %v5960 = vunpack.c.l.b16 %v5642
  %v5961 = vunpack.c.h.b16 %v5642
  %v5962 = vunpack.c.l.b16 %v5643
  %v5963 = vunpack.c.h.b16 %v5643
  %v5964 = vunpack.c.l.b16 %v5644
  %v5965 = vunpack.c.h.b16 %v5644
  %v5966 = vunpack.c.l.b16 %v5645
  %v5967 = vunpack.c.h.b16 %v5645
  %v5968 = vunpack.c.l.b16 %v5646
  %v5969 = vunpack.c.h.b16 %v5646
  %v5970 = vunpack.c.l.b16 %v5647
  %v5971 = vunpack.c.h.b16 %v5647
  %v5972 = vunpack.c.l.b16 %v5648
  %v5973 = vunpack.c.h.b16 %v5648
  %v5974 = vunpack.c.l.b16 %v5649
  %v5975 = vunpack.c.h.b16 %v5649
  %v5976 = vunpack.c.l.b16 %v5650
  %v5977 = vunpack.c.h.b16 %v5650
  %v5978 = vunpack.c.l.b16 %v5651
  %v5979 = vunpack.c.h.b16 %v5651
  %v5980 = vunpack.c.l.b16 %v5652
  %v5981 = vunpack.c.h.b16 %v5652
  %v5982 = vunpack.c.l.b16 %v5653
  %v5983 = vunpack.c.h.b16 %v5653
  %v5984 = vunpack.c.l.b16 %v5654
  %v5985 = vunpack.c.h.b16 %v5654
  %v5986 = vunpack.c.l.b16 %v5655
  %v5987 = vunpack.c.h.b16 %v5655
  %v5988 = vunpack.c.l.b16 %v5656
  %v5989 = vunpack.c.h.b16 %v5656
  %v5990 = vunpack.c.l.b16 %v5657
  %v5991 = vunpack.c.h.b16 %v5657
  %v5992 = vunpack.c.l.b16 %v5658
  %v5993 = vunpack.c.h.b16 %v5658
  %v5994 = vunpack.c.l.b16 %v5659
  %v5995 = vunpack.c.h.b16 %v5659
  %v5996 = vunpack.c.l.b16 %v5660
  %v5997 = vunpack.c.h.b16 %v5660
  %v5998 = vunpack.c.l.b16 %v5661
  %v5999 = vunpack.c.h.b16 %v5661
  %v6000 = vunpack.c.l.b16 %v5662
  %v6001 = vunpack.c.h.b16 %v5662
  %v6002 = vunpack.c.l.b16 %v5663
  %v6003 = vunpack.c.h.b16 %v5663
  %v6004 = vunpack.c.l.b16 %v5664
  %v6005 = vunpack.c.h.b16 %v5664
  %v6006 = vunpack.c.l.b16 %v5665
  %v6007 = vunpack.c.h.b16 %v5665
  %v6008 = vunpack.c.l.b16 %v5666
  %v6009 = vunpack.c.h.b16 %v5666
  %v6010 = vunpack.c.l.b16 %v5667
  %v6011 = vunpack.c.h.b16 %v5667
  %v6012 = vunpack.c.l.b16 %v5668
  %v6013 = vunpack.c.h.b16 %v5668
  %v6014 = vunpack.c.l.b16 %v5669
  %v6015 = vunpack.c.h.b16 %v5669
  %v6016 = vunpack.c.l.b16 %v5670
  %v6017 = vunpack.c.h.b16 %v5670
  %v6018 = vunpack.c.l.b16 %v5671
  %v6019 = vunpack.c.h.b16 %v5671
  %v6020 = vunpack.c.l.b16 %v5672
  %v6021 = vunpack.c.h.b16 %v5672
  %v6022 = vunpack.c.l.b16 %v5673
  %v6023 = vunpack.c.h.b16 %v5673
  %v6024 = vunpack.c.l.b16 %v5674
  %v6025 = vunpack.c.h.b16 %v5674
  %v6026 = vunpack.c.l.b16 %v5675
  %v6027 = vunpack.c.h.b16 %v5675
  %v6028 = vunpack.c.l.b16 %v5676
  %v6029 = vunpack.c.h.b16 %v5676
  %v6030 = vunpack.c.l.b16 %v5677
  %v6031 = vunpack.c.h.b16 %v5677
  %v6032 = vunpack.c.l.b16 %v5678
  %v6033 = vunpack.c.h.b16 %v5678
  %v6034 = vunpack.c.l.b16 %v5679
  %v6035 = vunpack.c.h.b16 %v5679
  %v6036 = vunpack.c.l.b16 %v5680
  %v6037 = vunpack.c.h.b16 %v5680
  %v6038 = vunpack.c.l.b16 %v5681
  %v6039 = vunpack.c.h.b16 %v5681
  %v6040 = vunpack.c.l.b16 %v5682
  %v6041 = vunpack.c.h.b16 %v5682
  %v6042 = vunpack.c.l.b16 %v5683
  %v6043 = vunpack.c.h.b16 %v5683
  %v6044 = vunpack.c.l.b16 %v5684
  %v6045 = vunpack.c.h.b16 %v5684
  %v6046 = vunpack.c.l.b16 %v5685
  %v6047 = vunpack.c.h.b16 %v5685
  %v6048 = vunpack.c.l.b16 %v5686
  %v6049 = vunpack.c.h.b16 %v5686
  %v6050 = vunpack.c.l.b16 %v5687
  %v6051 = vunpack.c.h.b16 %v5687
  %v6052 = vunpack.c.l.b16 %v5688
  %v6053 = vunpack.c.h.b16 %v5688
  %v6054 = vunpack.c.l.b16 %v5689
  %v6055 = vunpack.c.h.b16 %v5689
  %v6056 = vunpack.c.l.b16 %v5690
  %v6057 = vunpack.c.h.b16 %v5690
  %v6058 = vunpack.c.l.b16 %v5691
  %v6059 = vunpack.c.h.b16 %v5691
  %v6060 = vunpack.c.l.b16 %v5692
  %v6061 = vunpack.c.h.b16 %v5692
  %v6062 = vunpack.c.l.b16 %v5693
  %v6063 = vunpack.c.h.b16 %v5693
  %v6064 = vunpack.c.l.b16 %v5694
  %v6065 = vunpack.c.h.b16 %v5694
  %v6066 = vunpack.c.l.b16 %v5695
  %v6067 = vunpack.c.h.b16 %v5695
  %v6068 = vunpack.c.l.b16 %v5696
  %v6069 = vunpack.c.h.b16 %v5696
  %v6070 = vunpack.c.l.b16 %v5697
  %v6071 = vunpack.c.h.b16 %v5697
  %v6072 = vunpack.c.l.b16 %v5698
  %v6073 = vunpack.c.h.b16 %v5698
  %v6074 = vunpack.c.l.b16 %v5699
  %v6075 = vunpack.c.h.b16 %v5699
  %v6076 = vunpack.c.l.b16 %v5700
  %v6077 = vunpack.c.h.b16 %v5700
  %v6078 = vunpack.c.l.b16 %v5701
  %v6079 = vunpack.c.h.b16 %v5701
  %v6080 = vunpack.c.l.b16 %v5702
  %v6081 = vunpack.c.h.b16 %v5702
  %v6082 = vunpack.c.l.b16 %v5703
  %v6083 = vunpack.c.h.b16 %v5703
  %v6084 = vunpack.c.l.b16 %v5704
  %v6085 = vunpack.c.h.b16 %v5704
  %v6086 = vunpack.c.l.b16 %v5705
  %v6087 = vunpack.c.h.b16 %v5705
  %v6088 = vunpack.c.l.b16 %v5706
  %v6089 = vunpack.c.h.b16 %v5706
  %v6090 = vunpack.c.l.b16 %v5707
  %v6091 = vunpack.c.h.b16 %v5707
  %v6092 = vunpack.c.l.b16 %v5708
  %v6093 = vunpack.c.h.b16 %v5708
  %v6094 = vunpack.c.l.b16 %v5709
  %v6095 = vunpack.c.h.b16 %v5709
  %v6096 = vunpack.c.l.b16 %v5710
  %v6097 = vunpack.c.h.b16 %v5710
  %v6098 = vunpack.c.l.b16 %v5711
  %v6099 = vunpack.c.h.b16 %v5711
  %v6100 = vunpack.c.l.b16 %v5712
  %v6101 = vunpack.c.h.b16 %v5712
  %v6102 = vunpack.c.l.b16 %v5713
  %v6103 = vunpack.c.h.b16 %v5713
  %v6104 = vunpack.c.l.b16 %v5714
  %v6105 = vunpack.c.h.b16 %v5714
  %v6106 = vunpack.c.l.b16 %v5715
  %v6107 = vunpack.c.h.b16 %v5715
  %v6108 = vunpack.c.l.b16 %v5716
  %v6109 = vunpack.c.h.b16 %v5716
  %v6110 = vunpack.c.l.b16 %v5717
  %v6111 = vunpack.c.h.b16 %v5717
  %v6112 = vunpack.c.l.b16 %v5718
  %v6113 = vunpack.c.h.b16 %v5718
  %v6114 = vunpack.c.l.b16 %v5719
  %v6115 = vunpack.c.h.b16 %v5719
  %v6116 = vunpack.c.l.b16 %v5720
  %v6117 = vunpack.c.h.b16 %v5720
  %v6118 = vunpack.c.l.b16 %v5721
  %v6119 = vunpack.c.h.b16 %v5721
  %v6120 = vunpack.c.l.b16 %v5722
  %v6121 = vunpack.c.h.b16 %v5722
  %v6122 = vunpack.c.l.b16 %v5723
  %v6123 = vunpack.c.h.b16 %v5723
  %v6124 = vunpack.c.l.b16 %v5724
  %v6125 = vunpack.c.h.b16 %v5724
  %v6126 = vunpack.c.l.b16 %v5725
  %v6127 = vunpack.c.h.b16 %v5725
  %v6128 = vunpack.c.l.b16 %v5726
  %v6129 = vunpack.c.h.b16 %v5726
  %v6130 = vunpack.c.l.b16 %v5727
  %v6131 = vunpack.c.h.b16 %v5727
  %v6132 = vunpack.c.l.b16 %v5728
  %v6133 = vunpack.c.h.b16 %v5728
  %v6134 = vunpack.c.l.b16 %v5729
  %v6135 = vunpack.c.h.b16 %v5729
  %v6136 = vunpack.c.l.b16 %v5730
  %v6137 = vunpack.c.h.b16 %v5730
  %v6138 = vunpack.c.l.b16 %v5731
  %v6139 = vunpack.c.h.b16 %v5731
  %v6140 = vunpack.c.l.b16 %v5732
  %v6141 = vunpack.c.h.b16 %v5732
  %v6142 = vunpack.c.l.b16 %v5733
  %v6143 = vunpack.c.h.b16 %v5733
  %v6144 = vunpack.c.l.b16 %v5734
  %v6145 = vunpack.c.h.b16 %v5734
  %v6146 = vunpack.c.l.b16 %v5735
  %v6147 = vunpack.c.h.b16 %v5735
  %v6148 = vunpack.c.l.b16 %v5736
  %v6149 = vunpack.c.h.b16 %v5736
  %v6150 = vunpack.c.l.b16 %v5737
  %v6151 = vunpack.c.h.b16 %v5737
  %v6152 = vunpack.c.l.b16 %v5738
  %v6153 = vunpack.c.h.b16 %v5738
  %v6154 = vunpack.c.l.b16 %v5739
  %v6155 = vunpack.c.h.b16 %v5739
  %v6156 = vunpack.c.l.b16 %v5740
  %v6157 = vunpack.c.h.b16 %v5740
  %v6158 = vunpack.c.l.b16 %v5741
  %v6159 = vunpack.c.h.b16 %v5741
  %v6160 = vunpack.c.l.b16 %v5742
  %v6161 = vunpack.c.h.b16 %v5742
  %v6162 = vunpack.c.l.b16 %v5743
  %v6163 = vunpack.c.h.b16 %v5743
  %v6164 = vunpack.c.l.b16 %v5744
  %v6165 = vunpack.c.h.b16 %v5744
  %v6166 = vunpack.c.l.b16 %v5745
  %v6167 = vunpack.c.h.b16 %v5745
  %v6168 = vunpack.c.l.b16 %v5746
  %v6169 = vunpack.c.h.b16 %v5746
  %v6170 = vunpack.c.l.b16 %v5747
  %v6171 = vunpack.c.h.b16 %v5747
  %v6172 = vunpack.c.l.b16 %v5748
  %v6173 = vunpack.c.h.b16 %v5748
  %v6174 = vunpack.c.l.b16 %v5749
  %v6175 = vunpack.c.h.b16 %v5749
  %v6176 = vpack.c.b16 %v5928, %v5920
  %v6177 = vpack.c.b16 %v5929, %v5921
  %v6178 = vpack.c.b16 %v5930, %v5922
  %v6179 = vpack.c.b16 %v5931, %v5923
  %v6180 = vpack.c.b16 %v5932, %v5924
  %v6181 = vpack.c.b16 %v5933, %v5925
  %v6182 = vpack.c.b16 %v5934, %v5926
  %v6183 = vpack.c.b16 %v5935, %v5927
  %v6184 = vpack.c.b16 %v5944, %v5936
  %v6185 = vpack.c.b16 %v5945, %v5937
  %v6186 = vpack.c.b16 %v5946, %v5938
  %v6187 = vpack.c.b16 %v5947, %v5939
  %v6188 = vpack.c.b16 %v5948, %v5940
  %v6189 = vpack.c.b16 %v5949, %v5941
  %v6190 = vpack.c.b16 %v5950, %v5942
  %v6191 = vpack.c.b16 %v5951, %v5943
  %v6192 = vpack.c.b16 %v5960, %v5952
  %v6193 = vpack.c.b16 %v5961, %v5953
  %v6194 = vpack.c.b16 %v5962, %v5954
  %v6195 = vpack.c.b16 %v5963, %v5955
  %v6196 = vpack.c.b16 %v5964, %v5956
  %v6197 = vpack.c.b16 %v5965, %v5957
  %v6198 = vpack.c.b16 %v5966, %v5958
  %v6199 = vpack.c.b16 %v5967, %v5959
  %v6200 = vpack.c.b16 %v5976, %v5968
  %v6201 = vpack.c.b16 %v5977, %v5969
  %v6202 = vpack.c.b16 %v5978, %v5970
  %v6203 = vpack.c.b16 %v5979, %v5971
  %v6204 = vpack.c.b16 %v5980, %v5972
  %v6205 = vpack.c.b16 %v5981, %v5973
  %v6206 = vpack.c.b16 %v5982, %v5974
  %v6207 = vpack.c.b16 %v5983, %v5975
  %v6208 = vpack.c.b16 %v5992, %v5984
  %v6209 = vpack.c.b16 %v5993, %v5985
  %v6210 = vpack.c.b16 %v5994, %v5986
  %v6211 = vpack.c.b16 %v5995, %v5987
  %v6212 = vpack.c.b16 %v5996, %v5988
  %v6213 = vpack.c.b16 %v5997, %v5989
  %v6214 = vpack.c.b16 %v5998, %v5990
  %v6215 = vpack.c.b16 %v5999, %v5991
  %v6216 = vpack.c.b16 %v6008, %v6000
  %v6217 = vpack.c.b16 %v6009, %v6001
  %v6218 = vpack.c.b16 %v6010, %v6002
  %v6219 = vpack.c.b16 %v6011, %v6003
  %v6220 = vpack.c.b16 %v6012, %v6004
  %v6221 = vpack.c.b16 %v6013, %v6005
  %v6222 = vpack.c.b16 %v6014, %v6006
  %v6223 = vpack.c.b16 %v6015, %v6007
  %v6224 = vpack.c.b16 %v6024, %v6016
  %v6225 = vpack.c.b16 %v6025, %v6017
  %v6226 = vpack.c.b16 %v6026, %v6018
  %v6227 = vpack.c.b16 %v6027, %v6019
  %v6228 = vpack.c.b16 %v6028, %v6020
  %v6229 = vpack.c.b16 %v6029, %v6021
  %v6230 = vpack.c.b16 %v6030, %v6022
  %v6231 = vpack.c.b16 %v6031, %v6023
  %v6232 = vpack.c.b16 %v6040, %v6032
  %v6233 = vpack.c.b16 %v6041, %v6033
  %v6234 = vpack.c.b16 %v6042, %v6034
  %v6235 = vpack.c.b16 %v6043, %v6035
  %v6236 = vpack.c.b16 %v6044, %v6036
  %v6237 = vpack.c.b16 %v6045, %v6037
  %v6238 = vpack.c.b16 %v6046, %v6038
  %v6239 = vpack.c.b16 %v6047, %v6039
  %v6240 = vpack.c.b16 %v6056, %v6048
  %v6241 = vpack.c.b16 %v6057, %v6049
  %v6242 = vpack.c.b16 %v6058, %v6050
  %v6243 = vpack.c.b16 %v6059, %v6051
  %v6244 = vpack.c.b16 %v6060, %v6052
  %v6245 = vpack.c.b16 %v6061, %v6053
  %v6246 = vpack.c.b16 %v6062, %v6054
  %v6247 = vpack.c.b16 %v6063, %v6055
  %v6248 = vpack.c.b16 %v6072, %v6064
  %v6249 = vpack.c.b16 %v6073, %v6065
  %v6250 = vpack.c.b16 %v6074, %v6066
  %v6251 = vpack.c.b16 %v6075, %v6067
  %v6252 = vpack.c.b16 %v6076, %v6068
  %v6253 = vpack.c.b16 %v6077, %v6069
  %v6254 = vpack.c.b16 %v6078, %v6070
  %v6255 = vpack.c.b16 %v6079, %v6071
  %v6256 = vpack.c.b16 %v6088, %v6080
  %v6257 = vpack.c.b16 %v6089, %v6081
  %v6258 = vpack.c.b16 %v6090, %v6082
  %v6259 = vpack.c.b16 %v6091, %v6083
  %v6260 = vpack.c.b16 %v6092, %v6084
  %v6261 = vpack.c.b16 %v6093, %v6085
  %v6262 = vpack.c.b16 %v6094, %v6086
  %v6263 = vpack.c.b16 %v6095, %v6087
  %v6264 = vpack.c.b16 %v6104, %v6096
  %v6265 = vpack.c.b16 %v6105, %v6097
  %v6266 = vpack.c.b16 %v6106, %v6098
  %v6267 = vpack.c.b16 %v6107, %v6099
  %v6268 = vpack.c.b16 %v6108, %v6100
  %v6269 = vpack.c.b16 %v6109, %v6101
  %v6270 = vpack.c.b16 %v6110, %v6102
  %v6271 = vpack.c.b16 %v6111, %v6103
  %v6272 = vpack.c.b16 %v6120, %v6112
  %v6273 = vpack.c.b16 %v6121, %v6113
  %v6274 = vpack.c.b16 %v6122, %v6114
  %v6275 = vpack.c.b16 %v6123, %v6115
  %v6276 = vpack.c.b16 %v6124, %v6116
  %v6277 = vpack.c.b16 %v6125, %v6117
  %v6278 = vpack.c.b16 %v6126, %v6118
  %v6279 = vpack.c.b16 %v6127, %v6119
  %v6280 = vpack.c.b16 %v6136, %v6128
  %v6281 = vpack.c.b16 %v6137, %v6129
  %v6282 = vpack.c.b16 %v6138, %v6130
  %v6283 = vpack.c.b16 %v6139, %v6131
  %v6284 = vpack.c.b16 %v6140, %v6132
  %v6285 = vpack.c.b16 %v6141, %v6133
  %v6286 = vpack.c.b16 %v6142, %v6134
  %v6287 = vpack.c.b16 %v6143, %v6135
  %v6288 = vpack.c.b16 %v6152, %v6144
  %v6289 = vpack.c.b16 %v6153, %v6145
  %v6290 = vpack.c.b16 %v6154, %v6146
  %v6291 = vpack.c.b16 %v6155, %v6147
  %v6292 = vpack.c.b16 %v6156, %v6148
  %v6293 = vpack.c.b16 %v6157, %v6149
  %v6294 = vpack.c.b16 %v6158, %v6150
  %v6295 = vpack.c.b16 %v6159, %v6151
  %v6296 = vpack.c.b16 %v6168, %v6160
  %v6297 = vpack.c.b16 %v6169, %v6161
  %v6298 = vpack.c.b16 %v6170, %v6162
  %v6299 = vpack.c.b16 %v6171, %v6163
  %v6300 = vpack.c.b16 %v6172, %v6164
  %v6301 = vpack.c.b16 %v6173, %v6165
  %v6302 = vpack.c.b16 %v6174, %v6166
  %v6303 = vpack.c.b16 %v6175, %v6167
  %6432 = vmatprep.subr.bf16.mxu0 %v6177
  %6433 = vmatpush1.bf16.msra.mxu0 %v6176
  %6434 = vmatprep.subr.bf16.mxu0 %v6185
  %6435 = vmatpush1.bf16.msra.mxu0 %v6184
  %6436 = vmatprep.subr.bf16.mxu0 %v6193
  %6437 = vmatpush1.bf16.msra.mxu0 %v6192
  %6438 = vmatprep.subr.bf16.mxu0 %v6201
  %6439 = vmatpush1.bf16.msra.mxu0 %v6200
  %6440 = vmatprep.subr.bf16.mxu0 %v6209
  %6441 = vmatpush1.bf16.msra.mxu0 %v6208
  %6442 = vmatprep.subr.bf16.mxu0 %v6217
  %6443 = vmatpush1.bf16.msra.mxu0 %v6216
  %6444 = vmatprep.subr.bf16.mxu0 %v6225
  %6445 = vmatpush1.bf16.msra.mxu0 %v6224
  %6446 = vmatprep.subr.bf16.mxu0 %v6233
  %6447 = vmatpush1.bf16.msra.mxu0 %v6232
  %6448 = vmatprep.subr.bf16.mxu0 %v6241
  %6449 = vmatpush1.bf16.msra.mxu0 %v6240
  %6450 = vmatprep.subr.bf16.mxu0 %v6249
  %6451 = vmatpush1.bf16.msra.mxu0 %v6248
  %6452 = vmatprep.subr.bf16.mxu0 %v6257
  %6453 = vmatpush1.bf16.msra.mxu0 %v6256
  %6454 = vmatprep.subr.bf16.mxu0 %v6265
  %6455 = vmatpush1.bf16.msra.mxu0 %v6264
  %6456 = vmatprep.subr.bf16.mxu0 %v6273
  %6457 = vmatpush1.bf16.msra.mxu0 %v6272
  %6458 = vmatprep.subr.bf16.mxu0 %v6281
  %6459 = vmatpush1.bf16.msra.mxu0 %v6280
  %6460 = vmatprep.subr.bf16.mxu0 %v6289
  %6461 = vmatpush1.bf16.msra.mxu0 %v6288
  %6462 = vmatprep.subr.bf16.mxu0 %v6297
  %6463 = vmatpush1.bf16.msra.mxu0 %v6296
  %6464 = vmatprep.mubr.bf16.mxu0 %v5605
  %6465 = vmatmul.mubr.bf16.gmra.mrb[0].mxu0 %v5604
  %v6466 = vpop.f32.mrb[0].mxu0
  %v6467 = vadd.f32 %v5755, %v6466
  %v6468 = vpop.f32.mrb[0].mxu0
  %v6469 = vadd.f32 %v5759, %v6468
  %v6470 = vpop.f32.mrb[0].mxu0
  %v6471 = vadd.f32 %v5755, %v6470
  %v6472 = vpop.f32.mrb[0].mxu0
  %v6473 = vadd.f32 %v5759, %v6472
  %6474 = vmatprep.mubr.bf16.mxu0 %v5607
  %6475 = vmatmul.mubr.bf16.gmra.mrb[0].mxu0 %v5606
  %v6476 = vpop.f32.mrb[0].mxu0
  %v6477 = vadd.f32 %v5755, %v6476
  %v6478 = vpop.f32.mrb[0].mxu0
  %v6479 = vadd.f32 %v5759, %v6478
  %v6480 = vpop.f32.mrb[0].mxu0
  %v6481 = vadd.f32 %v5755, %v6480
  %v6482 = vpop.f32.mrb[0].mxu0
  %v6483 = vadd.f32 %v5759, %v6482
  %6484 = vmatprep.mubr.bf16.mxu0 %v5609
  %6485 = vmatmul.mubr.bf16.gmra.mrb[0].mxu0 %v5608
  %v6486 = vpop.f32.mrb[0].mxu0
  %v6487 = vadd.f32 %v5755, %v6486
  %v6488 = vpop.f32.mrb[0].mxu0
  %v6489 = vadd.f32 %v5759, %v6488
  %v6490 = vpop.f32.mrb[0].mxu0
  %v6491 = vadd.f32 %v5755, %v6490
  %v6492 = vpop.f32.mrb[0].mxu0
  %v6493 = vadd.f32 %v5759, %v6492
  %6494 = vmatprep.mubr.bf16.mxu0 %v5611
  %6495 = vmatmul.mubr.bf16.gmra.mrb[0].mxu0 %v5610
  %v6496 = vpop.f32.mrb[0].mxu0
  %v6497 = vadd.f32 %v5755, %v6496
  %v6498 = vpop.f32.mrb[0].mxu0
  %v6499 = vadd.f32 %v5759, %v6498
  %v6500 = vpop.f32.mrb[0].mxu0
  %v6501 = vadd.f32 %v5755, %v6500
  %v6502 = vpop.f32.mrb[0].mxu0
  %v6503 = vadd.f32 %v5759, %v6502
  %6504 = vmatprep.mubr.bf16.mxu0 %v5613
  %6505 = vmatmul.mubr.bf16.gmra.mrb[0].mxu0 %v5612
  %v6506 = vpop.f32.mrb[0].mxu0
  %v6507 = vadd.f32 %v5755, %v6506
  %v6508 = vpop.f32.mrb[0].mxu0
  %v6509 = vadd.f32 %v5759, %v6508
  %v6510 = vpop.f32.mrb[0].mxu0
  %v6511 = vadd.f32 %v5755, %v6510
  %v6512 = vpop.f32.mrb[0].mxu0
  %v6513 = vadd.f32 %v5759, %v6512
  %6514 = vmatprep.mubr.bf16.mxu0 %v5615
  %6515 = vmatmul.mubr.bf16.gmra.mrb[0].mxu0 %v5614
  %v6516 = vpop.f32.mrb[0].mxu0
  %v6517 = vadd.f32 %v5755, %v6516
  %v6518 = vpop.f32.mrb[0].mxu0
  %v6519 = vadd.f32 %v5759, %v6518
  %v6520 = vpop.f32.mrb[0].mxu0
  %v6521 = vadd.f32 %v5755, %v6520
  %v6522 = vpop.f32.mrb[0].mxu0
  %v6523 = vadd.f32 %v5759, %v6522
  %6524 = vmatprep.mubr.bf16.mxu0 %v5617
  %6525 = vmatmul.mubr.bf16.gmra.mrb[0].mxu0 %v5616
  %v6526 = vpop.f32.mrb[0].mxu0
  %v6527 = vadd.f32 %v5755, %v6526
  %v6528 = vpop.f32.mrb[0].mxu0
  %v6529 = vadd.f32 %v5759, %v6528
  %v6530 = vpop.f32.mrb[0].mxu0
  %v6531 = vadd.f32 %v5755, %v6530
  %v6532 = vpop.f32.mrb[0].mxu0
  %v6533 = vadd.f32 %v5759, %v6532
  %6534 = vmatprep.mubr.bf16.mxu0 %v5619
  %6535 = vmatmul.mubr.bf16.gmra.mrb[0].mxu0 %v5618
  %v6536 = vpop.f32.mrb[0].mxu0
  %v6537 = vadd.f32 %v5755, %v6536
  %v6538 = vpop.f32.mrb[0].mxu0
  %v6539 = vadd.f32 %v5759, %v6538
  %v6540 = vpop.f32.mrb[0].mxu0
  %v6541 = vadd.f32 %v5755, %v6540
  %v6542 = vpop.f32.mrb[0].mxu0
  %v6543 = vadd.f32 %v5759, %v6542
  %6544 = vmatprep.mubr.bf16.mxu0 %v5621
  %6545 = vmatmul.mubr.bf16.gmra.mrb[0].mxu0 %v5620
  %v6546 = vpop.f32.mrb[0].mxu0
  %v6547 = vadd.f32 %v5755, %v6546
  %v6548 = vpop.f32.mrb[0].mxu0
  %v6549 = vadd.f32 %v5759, %v6548
  %v6550 = vpop.f32.mrb[0].mxu0
  %v6551 = vadd.f32 %v5755, %v6550
  %v6552 = vpop.f32.mrb[0].mxu0
  %v6553 = vadd.f32 %v5759, %v6552
  %6554 = vdwg.mxu0
  %6555 = vmatprep.subr.bf16.mxu0 %v6179
  %6556 = vmatpush1.bf16.msra.mxu0 %v6178
  %6557 = vmatprep.subr.bf16.mxu0 %v6187
  %6558 = vmatpush1.bf16.msra.mxu0 %v6186
  %6559 = vmatprep.subr.bf16.mxu0 %v6195
  %6560 = vmatpush1.bf16.msra.mxu0 %v6194
  %6561 = vmatprep.subr.bf16.mxu0 %v6203
  %6562 = vmatpush1.bf16.msra.mxu0 %v6202
  %6563 = vmatprep.subr.bf16.mxu0 %v6211
  %6564 = vmatpush1.bf16.msra.mxu0 %v6210
  %6565 = vmatprep.subr.bf16.mxu0 %v6219
  %6566 = vmatpush1.bf16.msra.mxu0 %v6218
  %6567 = vmatprep.subr.bf16.mxu0 %v6227
  %6568 = vmatpush1.bf16.msra.mxu0 %v6226
  %6569 = vmatprep.subr.bf16.mxu0 %v6235
  %6570 = vmatpush1.bf16.msra.mxu0 %v6234
  %6571 = vmatprep.subr.bf16.mxu0 %v6243
  %6572 = vmatpush1.bf16.msra.mxu0 %v6242
  %6573 = vmatprep.subr.bf16.mxu0 %v6251
  %6574 = vmatpush1.bf16.msra.mxu0 %v6250
  %6575 = vmatprep.subr.bf16.mxu0 %v6259
  %6576 = vmatpush1.bf16.msra.mxu0 %v6258
  %6577 = vmatprep.subr.bf16.mxu0 %v6267
  %6578 = vmatpush1.bf16.msra.mxu0 %v6266
  %6579 = vmatprep.subr.bf16.mxu0 %v6275
  %6580 = vmatpush1.bf16.msra.mxu0 %v6274
  %6581 = vmatprep.subr.bf16.mxu0 %v6283
  %6582 = vmatpush1.bf16.msra.mxu0 %v6282
  %6583 = vmatprep.subr.bf16.mxu0 %v6291
  %6584 = vmatpush1.bf16.msra.mxu0 %v6290
  %6585 = vmatprep.subr.bf16.mxu0 %v6299
  %6586 = vmatpush1.bf16.msra.mxu0 %v6298
  %6587 = vmatprep.mubr.bf16.mxu0 %v5605
  %6588 = vmatmul.mubr.bf16.gmra.mrb[0].mxu0 %v5604
  %v6589 = vpop.f32.mrb[0].mxu0
  %v6590 = vadd.f32 %v5763, %v6589
  %v6591 = vpop.f32.mrb[0].mxu0
  %v6592 = vadd.f32 %v5767, %v6591
  %v6593 = vpop.f32.mrb[0].mxu0
  %v6594 = vadd.f32 %v5763, %v6593
  %v6595 = vpop.f32.mrb[0].mxu0
  %v6596 = vadd.f32 %v5767, %v6595
  %6597 = vmatprep.mubr.bf16.mxu0 %v5607
  %6598 = vmatmul.mubr.bf16.gmra.mrb[0].mxu0 %v5606
  %v6599 = vpop.f32.mrb[0].mxu0
  %v6600 = vadd.f32 %v5763, %v6599
  %v6601 = vpop.f32.mrb[0].mxu0
  %v6602 = vadd.f32 %v5767, %v6601
  %v6603 = vpop.f32.mrb[0].mxu0
  %v6604 = vadd.f32 %v5763, %v6603
  %v6605 = vpop.f32.mrb[0].mxu0
  %v6606 = vadd.f32 %v5767, %v6605
  %6607 = vmatprep.mubr.bf16.mxu0 %v5609
  %6608 = vmatmul.mubr.bf16.gmra.mrb[0].mxu0 %v5608
  %v6609 = vpop.f32.mrb[0].mxu0
  %v6610 = vadd.f32 %v5763, %v6609
  %v6611 = vpop.f32.mrb[0].mxu0
  %v6612 = vadd.f32 %v5767, %v6611
  %v6613 = vpop.f32.mrb[0].mxu0
  %v6614 = vadd.f32 %v5763, %v6613
  %v6615 = vpop.f32.mrb[0].mxu0
  %v6616 = vadd.f32 %v5767, %v6615
  %6617 = vmatprep.mubr.bf16.mxu0 %v5611
  %6618 = vmatmul.mubr.bf16.gmra.mrb[0].mxu0 %v5610
  %v6619 = vpop.f32.mrb[0].mxu0
  %v6620 = vadd.f32 %v5763, %v6619
  %v6621 = vpop.f32.mrb[0].mxu0
  %v6622 = vadd.f32 %v5767, %v6621
  %v6623 = vpop.f32.mrb[0].mxu0
  %v6624 = vadd.f32 %v5763, %v6623
  %v6625 = vpop.f32.mrb[0].mxu0
  %v6626 = vadd.f32 %v5767, %v6625
  %6627 = vmatprep.mubr.bf16.mxu0 %v5613
  %6628 = vmatmul.mubr.bf16.gmra.mrb[0].mxu0 %v5612
  %v6629 = vpop.f32.mrb[0].mxu0
  %v6630 = vadd.f32 %v5763, %v6629
  %v6631 = vpop.f32.mrb[0].mxu0
  %v6632 = vadd.f32 %v5767, %v6631
  %v6633 = vpop.f32.mrb[0].mxu0
  %v6634 = vadd.f32 %v5763, %v6633
  %v6635 = vpop.f32.mrb[0].mxu0
  %v6636 = vadd.f32 %v5767, %v6635
  %6637 = vmatprep.mubr.bf16.mxu0 %v5615
  %6638 = vmatmul.mubr.bf16.gmra.mrb[0].mxu0 %v5614
  %v6639 = vpop.f32.mrb[0].mxu0
  %v6640 = vadd.f32 %v5763, %v6639
  %v6641 = vpop.f32.mrb[0].mxu0
  %v6642 = vadd.f32 %v5767, %v6641
  %v6643 = vpop.f32.mrb[0].mxu0
  %v6644 = vadd.f32 %v5763, %v6643
  %v6645 = vpop.f32.mrb[0].mxu0
  %v6646 = vadd.f32 %v5767, %v6645
  %6647 = vmatprep.mubr.bf16.mxu0 %v5617
  %6648 = vmatmul.mubr.bf16.gmra.mrb[0].mxu0 %v5616
  %v6649 = vpop.f32.mrb[0].mxu0
  %v6650 = vadd.f32 %v5763, %v6649
  %v6651 = vpop.f32.mrb[0].mxu0
  %v6652 = vadd.f32 %v5767, %v6651
  %v6653 = vpop.f32.mrb[0].mxu0
  %v6654 = vadd.f32 %v5763, %v6653
  %v6655 = vpop.f32.mrb[0].mxu0
  %v6656 = vadd.f32 %v5767, %v6655
  %6657 = vmatprep.mubr.bf16.mxu0 %v5619
  %6658 = vmatmul.mubr.bf16.gmra.mrb[0].mxu0 %v5618
  %v6659 = vpop.f32.mrb[0].mxu0
  %v6660 = vadd.f32 %v5763, %v6659
  %v6661 = vpop.f32.mrb[0].mxu0
  %v6662 = vadd.f32 %v5767, %v6661
  %v6663 = vpop.f32.mrb[0].mxu0
  %v6664 = vadd.f32 %v5763, %v6663
  %v6665 = vpop.f32.mrb[0].mxu0
  %v6666 = vadd.f32 %v5767, %v6665
  %6667 = vmatprep.mubr.bf16.mxu0 %v5621
  %6668 = vmatmul.mubr.bf16.gmra.mrb[0].mxu0 %v5620
  %v6669 = vpop.f32.mrb[0].mxu0
  %v6670 = vadd.f32 %v5763, %v6669
  %v6671 = vpop.f32.mrb[0].mxu0
  %v6672 = vadd.f32 %v5767, %v6671
  %v6673 = vpop.f32.mrb[0].mxu0
  %v6674 = vadd.f32 %v5763, %v6673
  %v6675 = vpop.f32.mrb[0].mxu0
  %v6676 = vadd.f32 %v5767, %v6675
  %6677 = vdwg.mxu0
  %6678 = vmatprep.subr.bf16.mxu0 %v6181
  %6679 = vmatpush1.bf16.msra.mxu0 %v6180
  %6680 = vmatprep.subr.bf16.mxu0 %v6189
  %6681 = vmatpush1.bf16.msra.mxu0 %v6188
  %6682 = vmatprep.subr.bf16.mxu0 %v6197
  %6683 = vmatpush1.bf16.msra.mxu0 %v6196
  %6684 = vmatprep.subr.bf16.mxu0 %v6205
  %6685 = vmatpush1.bf16.msra.mxu0 %v6204
  %6686 = vmatprep.subr.bf16.mxu0 %v6213
  %6687 = vmatpush1.bf16.msra.mxu0 %v6212
  %6688 = vmatprep.subr.bf16.mxu0 %v6221
  %6689 = vmatpush1.bf16.msra.mxu0 %v6220
  %6690 = vmatprep.subr.bf16.mxu0 %v6229
  %6691 = vmatpush1.bf16.msra.mxu0 %v6228
  %6692 = vmatprep.subr.bf16.mxu0 %v6237
  %6693 = vmatpush1.bf16.msra.mxu0 %v6236
  %6694 = vmatprep.subr.bf16.mxu0 %v6245
  %6695 = vmatpush1.bf16.msra.mxu0 %v6244
  %6696 = vmatprep.subr.bf16.mxu0 %v6253
  %6697 = vmatpush1.bf16.msra.mxu0 %v6252
  %6698 = vmatprep.subr.bf16.mxu0 %v6261
  %6699 = vmatpush1.bf16.msra.mxu0 %v6260
  %6700 = vmatprep.subr.bf16.mxu0 %v6269
  %6701 = vmatpush1.bf16.msra.mxu0 %v6268
  %6702 = vmatprep.subr.bf16.mxu0 %v6277
  %6703 = vmatpush1.bf16.msra.mxu0 %v6276
  %6704 = vmatprep.subr.bf16.mxu0 %v6285
  %6705 = vmatpush1.bf16.msra.mxu0 %v6284
  %6706 = vmatprep.subr.bf16.mxu0 %v6293
  %6707 = vmatpush1.bf16.msra.mxu0 %v6292
  %6708 = vmatprep.subr.bf16.mxu0 %v6301
  %6709 = vmatpush1.bf16.msra.mxu0 %v6300
  %6710 = vmatprep.mubr.bf16.mxu0 %v5605
  %6711 = vmatmul.mubr.bf16.gmra.mrb[0].mxu0 %v5604
  %v6712 = vpop.f32.mrb[0].mxu0
  %v6713 = vadd.f32 %v5771, %v6712
  %v6714 = vpop.f32.mrb[0].mxu0
  %v6715 = vadd.f32 %v5775, %v6714
  %v6716 = vpop.f32.mrb[0].mxu0
  %v6717 = vadd.f32 %v5771, %v6716
  %v6718 = vpop.f32.mrb[0].mxu0
  %v6719 = vadd.f32 %v5775, %v6718
  %6720 = vmatprep.mubr.bf16.mxu0 %v5607
  %6721 = vmatmul.mubr.bf16.gmra.mrb[0].mxu0 %v5606
  %v6722 = vpop.f32.mrb[0].mxu0
  %v6723 = vadd.f32 %v5771, %v6722
  %v6724 = vpop.f32.mrb[0].mxu0
  %v6725 = vadd.f32 %v5775, %v6724
  %v6726 = vpop.f32.mrb[0].mxu0
  %v6727 = vadd.f32 %v5771, %v6726
  %v6728 = vpop.f32.mrb[0].mxu0
  %v6729 = vadd.f32 %v5775, %v6728
  %6730 = vmatprep.mubr.bf16.mxu0 %v5609
  %6731 = vmatmul.mubr.bf16.gmra.mrb[0].mxu0 %v5608
  %v6732 = vpop.f32.mrb[0].mxu0
  %v6733 = vadd.f32 %v5771, %v6732
  %v6734 = vpop.f32.mrb[0].mxu0
  %v6735 = vadd.f32 %v5775, %v6734
  %v6736 = vpop.f32.mrb[0].mxu0
  %v6737 = vadd.f32 %v5771, %v6736
  %v6738 = vpop.f32.mrb[0].mxu0
  %v6739 = vadd.f32 %v5775, %v6738
  %6740 = vmatprep.mubr.bf16.mxu0 %v5611
  %6741 = vmatmul.mubr.bf16.gmra.mrb[0].mxu0 %v5610
  %v6742 = vpop.f32.mrb[0].mxu0
  %v6743 = vadd.f32 %v5771, %v6742
  %v6744 = vpop.f32.mrb[0].mxu0
  %v6745 = vadd.f32 %v5775, %v6744
  %v6746 = vpop.f32.mrb[0].mxu0
  %v6747 = vadd.f32 %v5771, %v6746
  %v6748 = vpop.f32.mrb[0].mxu0
  %v6749 = vadd.f32 %v5775, %v6748
  %6750 = vmatprep.mubr.bf16.mxu0 %v5613
  %6751 = vmatmul.mubr.bf16.gmra.mrb[0].mxu0 %v5612
  %v6752 = vpop.f32.mrb[0].mxu0
  %v6753 = vadd.f32 %v5771, %v6752
  %v6754 = vpop.f32.mrb[0].mxu0
  %v6755 = vadd.f32 %v5775, %v6754
  %v6756 = vpop.f32.mrb[0].mxu0
  %v6757 = vadd.f32 %v5771, %v6756
  %v6758 = vpop.f32.mrb[0].mxu0
  %v6759 = vadd.f32 %v5775, %v6758
  %6760 = vmatprep.mubr.bf16.mxu0 %v5615
  %6761 = vmatmul.mubr.bf16.gmra.mrb[0].mxu0 %v5614
  %v6762 = vpop.f32.mrb[0].mxu0
  %v6763 = vadd.f32 %v5771, %v6762
  %v6764 = vpop.f32.mrb[0].mxu0
  %v6765 = vadd.f32 %v5775, %v6764
  %v6766 = vpop.f32.mrb[0].mxu0
  %v6767 = vadd.f32 %v5771, %v6766
  %v6768 = vpop.f32.mrb[0].mxu0
  %v6769 = vadd.f32 %v5775, %v6768
  %6770 = vmatprep.mubr.bf16.mxu0 %v5617
  %6771 = vmatmul.mubr.bf16.gmra.mrb[0].mxu0 %v5616
  %v6772 = vpop.f32.mrb[0].mxu0
  %v6773 = vadd.f32 %v5771, %v6772
  %v6774 = vpop.f32.mrb[0].mxu0
  %v6775 = vadd.f32 %v5775, %v6774
  %v6776 = vpop.f32.mrb[0].mxu0
  %v6777 = vadd.f32 %v5771, %v6776
  %v6778 = vpop.f32.mrb[0].mxu0
  %v6779 = vadd.f32 %v5775, %v6778
  %6780 = vmatprep.mubr.bf16.mxu0 %v5619
  %6781 = vmatmul.mubr.bf16.gmra.mrb[0].mxu0 %v5618
  %v6782 = vpop.f32.mrb[0].mxu0
  %v6783 = vadd.f32 %v5771, %v6782
  %v6784 = vpop.f32.mrb[0].mxu0
  %v6785 = vadd.f32 %v5775, %v6784
  %v6786 = vpop.f32.mrb[0].mxu0
  %v6787 = vadd.f32 %v5771, %v6786
  %v6788 = vpop.f32.mrb[0].mxu0
  %v6789 = vadd.f32 %v5775, %v6788
  %6790 = vmatprep.mubr.bf16.mxu0 %v5621
  %6791 = vmatmul.mubr.bf16.gmra.mrb[0].mxu0 %v5620
  %v6792 = vpop.f32.mrb[0].mxu0
  %v6793 = vadd.f32 %v5771, %v6792
  %v6794 = vpop.f32.mrb[0].mxu0
  %v6795 = vadd.f32 %v5775, %v6794
  %v6796 = vpop.f32.mrb[0].mxu0
  %v6797 = vadd.f32 %v5771, %v6796
  %v6798 = vpop.f32.mrb[0].mxu0
  %v6799 = vadd.f32 %v5775, %v6798
  %6800 = vdwg.mxu0
  %6801 = vmatprep.subr.bf16.mxu0 %v6183
  %6802 = vmatpush1.bf16.msra.mxu0 %v6182
  %6803 = vmatprep.subr.bf16.mxu0 %v6191
  %6804 = vmatpush1.bf16.msra.mxu0 %v6190
  %6805 = vmatprep.subr.bf16.mxu0 %v6199
  %6806 = vmatpush1.bf16.msra.mxu0 %v6198
  %6807 = vmatprep.subr.bf16.mxu0 %v6207
  %6808 = vmatpush1.bf16.msra.mxu0 %v6206
  %6809 = vmatprep.subr.bf16.mxu0 %v6215
  %6810 = vmatpush1.bf16.msra.mxu0 %v6214
  %6811 = vmatprep.subr.bf16.mxu0 %v6223
  %6812 = vmatpush1.bf16.msra.mxu0 %v6222
  %6813 = vmatprep.subr.bf16.mxu0 %v6231
  %6814 = vmatpush1.bf16.msra.mxu0 %v6230
  %6815 = vmatprep.subr.bf16.mxu0 %v6239
  %6816 = vmatpush1.bf16.msra.mxu0 %v6238
  %6817 = vmatprep.subr.bf16.mxu0 %v6247
  %6818 = vmatpush1.bf16.msra.mxu0 %v6246
  %6819 = vmatprep.subr.bf16.mxu0 %v6255
  %6820 = vmatpush1.bf16.msra.mxu0 %v6254
  %6821 = vmatprep.subr.bf16.mxu0 %v6263
  %6822 = vmatpush1.bf16.msra.mxu0 %v6262
  %6823 = vmatprep.subr.bf16.mxu0 %v6271
  %6824 = vmatpush1.bf16.msra.mxu0 %v6270
  %6825 = vmatprep.subr.bf16.mxu0 %v6279
  %6826 = vmatpush1.bf16.msra.mxu0 %v6278
  %6827 = vmatprep.subr.bf16.mxu0 %v6287
  %6828 = vmatpush1.bf16.msra.mxu0 %v6286
  %6829 = vmatprep.subr.bf16.mxu0 %v6295
  %6830 = vmatpush1.bf16.msra.mxu0 %v6294
  %6831 = vmatprep.subr.bf16.mxu0 %v6303
  %6832 = vmatpush1.bf16.msra.mxu0 %v6302
  %6833 = vmatprep.mubr.bf16.mxu0 %v5605
  %6834 = vmatmul.mubr.bf16.gmra.mrb[0].mxu0 %v5604
  %v6835 = vpop.f32.mrb[0].mxu0
  %v6836 = vadd.f32 %v5779, %v6835
  %v6837 = vpop.f32.mrb[0].mxu0
  %v6838 = vadd.f32 %v5783, %v6837
  %v6839 = vpop.f32.mrb[0].mxu0
  %v6840 = vadd.f32 %v5779, %v6839
  %v6841 = vpop.f32.mrb[0].mxu0
  %v6842 = vadd.f32 %v5783, %v6841
  %6843 = vmatprep.mubr.bf16.mxu0 %v5607
  %6844 = vmatmul.mubr.bf16.gmra.mrb[0].mxu0 %v5606
  %v6845 = vpop.f32.mrb[0].mxu0
  %v6846 = vadd.f32 %v5779, %v6845
  %v6847 = vpop.f32.mrb[0].mxu0
  %v6848 = vadd.f32 %v5783, %v6847
  %v6849 = vpop.f32.mrb[0].mxu0
  %v6850 = vadd.f32 %v5779, %v6849
  %v6851 = vpop.f32.mrb[0].mxu0
  %v6852 = vadd.f32 %v5783, %v6851
  %6853 = vmatprep.mubr.bf16.mxu0 %v5609
  %6854 = vmatmul.mubr.bf16.gmra.mrb[0].mxu0 %v5608
  %v6855 = vpop.f32.mrb[0].mxu0
  %v6856 = vadd.f32 %v5779, %v6855
  %v6857 = vpop.f32.mrb[0].mxu0
  %v6858 = vadd.f32 %v5783, %v6857
  %v6859 = vpop.f32.mrb[0].mxu0
  %v6860 = vadd.f32 %v5779, %v6859
  %v6861 = vpop.f32.mrb[0].mxu0
  %v6862 = vadd.f32 %v5783, %v6861
  %6863 = vmatprep.mubr.bf16.mxu0 %v5611
  %6864 = vmatmul.mubr.bf16.gmra.mrb[0].mxu0 %v5610
  %v6865 = vpop.f32.mrb[0].mxu0
  %v6866 = vadd.f32 %v5779, %v6865
  %v6867 = vpop.f32.mrb[0].mxu0
  %v6868 = vadd.f32 %v5783, %v6867
  %v6869 = vpop.f32.mrb[0].mxu0
  %v6870 = vadd.f32 %v5779, %v6869
  %v6871 = vpop.f32.mrb[0].mxu0
  %v6872 = vadd.f32 %v5783, %v6871
  %6873 = vmatprep.mubr.bf16.mxu0 %v5613
  %6874 = vmatmul.mubr.bf16.gmra.mrb[0].mxu0 %v5612
  %v6875 = vpop.f32.mrb[0].mxu0
  %v6876 = vadd.f32 %v5779, %v6875
  %v6877 = vpop.f32.mrb[0].mxu0
  %v6878 = vadd.f32 %v5783, %v6877
  %v6879 = vpop.f32.mrb[0].mxu0
  %v6880 = vadd.f32 %v5779, %v6879
  %v6881 = vpop.f32.mrb[0].mxu0
  %v6882 = vadd.f32 %v5783, %v6881
  %6883 = vmatprep.mubr.bf16.mxu0 %v5615
  %6884 = vmatmul.mubr.bf16.gmra.mrb[0].mxu0 %v5614
  %v6885 = vpop.f32.mrb[0].mxu0
  %v6886 = vadd.f32 %v5779, %v6885
  %v6887 = vpop.f32.mrb[0].mxu0
  %v6888 = vadd.f32 %v5783, %v6887
  %v6889 = vpop.f32.mrb[0].mxu0
  %v6890 = vadd.f32 %v5779, %v6889
  %v6891 = vpop.f32.mrb[0].mxu0
  %v6892 = vadd.f32 %v5783, %v6891
  %6893 = vmatprep.mubr.bf16.mxu0 %v5617
  %6894 = vmatmul.mubr.bf16.gmra.mrb[0].mxu0 %v5616
  %v6895 = vpop.f32.mrb[0].mxu0
  %v6896 = vadd.f32 %v5779, %v6895
  %v6897 = vpop.f32.mrb[0].mxu0
  %v6898 = vadd.f32 %v5783, %v6897
  %v6899 = vpop.f32.mrb[0].mxu0
  %v6900 = vadd.f32 %v5779, %v6899
  %v6901 = vpop.f32.mrb[0].mxu0
  %v6902 = vadd.f32 %v5783, %v6901
  %6903 = vmatprep.mubr.bf16.mxu0 %v5619
  %6904 = vmatmul.mubr.bf16.gmra.mrb[0].mxu0 %v5618
  %v6905 = vpop.f32.mrb[0].mxu0
  %v6906 = vadd.f32 %v5779, %v6905
  %v6907 = vpop.f32.mrb[0].mxu0
  %v6908 = vadd.f32 %v5783, %v6907
  %v6909 = vpop.f32.mrb[0].mxu0
  %v6910 = vadd.f32 %v5779, %v6909
  %v6911 = vpop.f32.mrb[0].mxu0
  %v6912 = vadd.f32 %v5783, %v6911
  %6913 = vmatprep.mubr.bf16.mxu0 %v5621
  %6914 = vmatmul.mubr.bf16.gmra.mrb[0].mxu0 %v5620
  %v6915 = vpop.f32.mrb[0].mxu0
  %v6916 = vadd.f32 %v5779, %v6915
  %v6917 = vpop.f32.mrb[0].mxu0
  %v6918 = vadd.f32 %v5783, %v6917
  %v6919 = vpop.f32.mrb[0].mxu0
  %v6920 = vadd.f32 %v5779, %v6919
  %v6921 = vpop.f32.mrb[0].mxu0
  %v6922 = vadd.f32 %v5783, %v6921
  %6923 = vdwg.mxu0
  %v6924 = vmul.f32 %v6467, 1.702
  %v6925 = vmul.f32 %v6469, 1.702
  %v6926 = vmul.f32 %v6590, 1.702
  %v6927 = vmul.f32 %v6592, 1.702
  %v6928 = vmul.f32 %v6713, 1.702
  %v6929 = vmul.f32 %v6715, 1.702
  %v6930 = vmul.f32 %v6836, 1.702
  %v6931 = vmul.f32 %v6838, 1.702
  %v6932 = vmul.f32 %v6471, 1.702
  %v6933 = vmul.f32 %v6473, 1.702
  %v6934 = vmul.f32 %v6594, 1.702
  %v6935 = vmul.f32 %v6596, 1.702
  %v6936 = vmul.f32 %v6717, 1.702
  %v6937 = vmul.f32 %v6719, 1.702
  %v6938 = vmul.f32 %v6840, 1.702
  %v6939 = vmul.f32 %v6842, 1.702
  %v6940 = vmul.f32 %v6477, 1.702
  %v6941 = vmul.f32 %v6479, 1.702
  %v6942 = vmul.f32 %v6600, 1.702
  %v6943 = vmul.f32 %v6602, 1.702
  %v6944 = vmul.f32 %v6723, 1.702
  %v6945 = vmul.f32 %v6725, 1.702
  %v6946 = vmul.f32 %v6846, 1.702
  %v6947 = vmul.f32 %v6848, 1.702
  %v6948 = vmul.f32 %v6481, 1.702
  %v6949 = vmul.f32 %v6483, 1.702
  %v6950 = vmul.f32 %v6604, 1.702
  %v6951 = vmul.f32 %v6606, 1.702
  %v6952 = vmul.f32 %v6727, 1.702
  %v6953 = vmul.f32 %v6729, 1.702
  %v6954 = vmul.f32 %v6850, 1.702
  %v6955 = vmul.f32 %v6852, 1.702
  %v6956 = vmul.f32 %v6487, 1.702
  %v6957 = vmul.f32 %v6489, 1.702
  %v6958 = vmul.f32 %v6610, 1.702
  %v6959 = vmul.f32 %v6612, 1.702
  %v6960 = vmul.f32 %v6733, 1.702
  %v6961 = vmul.f32 %v6735, 1.702
  %v6962 = vmul.f32 %v6856, 1.702
  %v6963 = vmul.f32 %v6858, 1.702
  %v6964 = vmul.f32 %v6491, 1.702
  %v6965 = vmul.f32 %v6493, 1.702
  %v6966 = vmul.f32 %v6614, 1.702
  %v6967 = vmul.f32 %v6616, 1.702
  %v6968 = vmul.f32 %v6737, 1.702
  %v6969 = vmul.f32 %v6739, 1.702
  %v6970 = vmul.f32 %v6860, 1.702
  %v6971 = vmul.f32 %v6862, 1.702
  %v6972 = vmul.f32 %v6497, 1.702
  %v6973 = vmul.f32 %v6499, 1.702
  %v6974 = vmul.f32 %v6620, 1.702
  %v6975 = vmul.f32 %v6622, 1.702
  %v6976 = vmul.f32 %v6743, 1.702
  %v6977 = vmul.f32 %v6745, 1.702
  %v6978 = vmul.f32 %v6866, 1.702
  %v6979 = vmul.f32 %v6868, 1.702
  %v6980 = vmul.f32 %v6501, 1.702
  %v6981 = vmul.f32 %v6503, 1.702
  %v6982 = vmul.f32 %v6624, 1.702
  %v6983 = vmul.f32 %v6626, 1.702
  %v6984 = vmul.f32 %v6747, 1.702
  %v6985 = vmul.f32 %v6749, 1.702
  %v6986 = vmul.f32 %v6870, 1.702
  %v6987 = vmul.f32 %v6872, 1.702
  %v6988 = vmul.f32 %v6507, 1.702
  %v6989 = vmul.f32 %v6509, 1.702
  %v6990 = vmul.f32 %v6630, 1.702
  %v6991 = vmul.f32 %v6632, 1.702
  %v6992 = vmul.f32 %v6753, 1.702
  %v6993 = vmul.f32 %v6755, 1.702
  %v6994 = vmul.f32 %v6876, 1.702
  %v6995 = vmul.f32 %v6878, 1.702
  %v6996 = vmul.f32 %v6511, 1.702
  %v6997 = vmul.f32 %v6513, 1.702
  %v6998 = vmul.f32 %v6634, 1.702
  %v6999 = vmul.f32 %v6636, 1.702
  %v7000 = vmul.f32 %v6757, 1.702
  %v7001 = vmul.f32 %v6759, 1.702
  %v7002 = vmul.f32 %v6880, 1.702
  %v7003 = vmul.f32 %v6882, 1.702
  %v7004 = vmul.f32 %v6517, 1.702
  %v7005 = vmul.f32 %v6519, 1.702
  %v7006 = vmul.f32 %v6640, 1.702
  %v7007 = vmul.f32 %v6642, 1.702
  %v7008 = vmul.f32 %v6763, 1.702
  %v7009 = vmul.f32 %v6765, 1.702
  %v7010 = vmul.f32 %v6886, 1.702
  %v7011 = vmul.f32 %v6888, 1.702
  %v7012 = vmul.f32 %v6521, 1.702
  %v7013 = vmul.f32 %v6523, 1.702
  %v7014 = vmul.f32 %v6644, 1.702
  %v7015 = vmul.f32 %v6646, 1.702
  %v7016 = vmul.f32 %v6767, 1.702
  %v7017 = vmul.f32 %v6769, 1.702
  %v7018 = vmul.f32 %v6890, 1.702
  %v7019 = vmul.f32 %v6892, 1.702
  %v7020 = vmul.f32 %v6527, 1.702
  %v7021 = vmul.f32 %v6529, 1.702
  %v7022 = vmul.f32 %v6650, 1.702
  %v7023 = vmul.f32 %v6652, 1.702
  %v7024 = vmul.f32 %v6773, 1.702
  %v7025 = vmul.f32 %v6775, 1.702
  %v7026 = vmul.f32 %v6896, 1.702
  %v7027 = vmul.f32 %v6898, 1.702
  %v7028 = vmul.f32 %v6531, 1.702
  %v7029 = vmul.f32 %v6533, 1.702
  %v7030 = vmul.f32 %v6654, 1.702
  %v7031 = vmul.f32 %v6656, 1.702
  %v7032 = vmul.f32 %v6777, 1.702
  %v7033 = vmul.f32 %v6779, 1.702
  %v7034 = vmul.f32 %v6900, 1.702
  %v7035 = vmul.f32 %v6902, 1.702
  %v7036 = vmul.f32 %v6537, 1.702
  %v7037 = vmul.f32 %v6539, 1.702
  %v7038 = vmul.f32 %v6660, 1.702
  %v7039 = vmul.f32 %v6662, 1.702
  %v7040 = vmul.f32 %v6783, 1.702
  %v7041 = vmul.f32 %v6785, 1.702
  %v7042 = vmul.f32 %v6906, 1.702
  %v7043 = vmul.f32 %v6908, 1.702
  %v7044 = vmul.f32 %v6541, 1.702
  %v7045 = vmul.f32 %v6543, 1.702
  %v7046 = vmul.f32 %v6664, 1.702
  %v7047 = vmul.f32 %v6666, 1.702
  %v7048 = vmul.f32 %v6787, 1.702
  %v7049 = vmul.f32 %v6789, 1.702
  %v7050 = vmul.f32 %v6910, 1.702
  %v7051 = vmul.f32 %v6912, 1.702
  %v7052 = vmul.f32 %v6547, 1.702
  %v7053 = vmul.f32 %v6549, 1.702
  %v7054 = vmul.f32 %v6670, 1.702
  %v7055 = vmul.f32 %v6672, 1.702
  %v7056 = vmul.f32 %v6793, 1.702
  %v7057 = vmul.f32 %v6795, 1.702
  %v7058 = vmul.f32 %v6916, 1.702
  %v7059 = vmul.f32 %v6918, 1.702
  %v7060 = vmul.f32 %v6551, 1.702
  %v7061 = vmul.f32 %v6553, 1.702
  %v7062 = vmul.f32 %v6674, 1.702
  %v7063 = vmul.f32 %v6676, 1.702
  %v7064 = vmul.f32 %v6797, 1.702
  %v7065 = vmul.f32 %v6799, 1.702
  %v7066 = vmul.f32 %v6920, 1.702
  %v7067 = vmul.f32 %v6922, 1.702
  %v7068 = vxor.u32 %v6924, 2147483648
  %v7069 = vxor.u32 %v6925, 2147483648
  %v7070 = vxor.u32 %v6926, 2147483648
  %v7071 = vxor.u32 %v6927, 2147483648
  %v7072 = vxor.u32 %v6928, 2147483648
  %v7073 = vxor.u32 %v6929, 2147483648
  %v7074 = vxor.u32 %v6930, 2147483648
  %v7075 = vxor.u32 %v6931, 2147483648
  %v7076 = vxor.u32 %v6932, 2147483648
  %v7077 = vxor.u32 %v6933, 2147483648
  %v7078 = vxor.u32 %v6934, 2147483648
  %v7079 = vxor.u32 %v6935, 2147483648
  %v7080 = vxor.u32 %v6936, 2147483648
  %v7081 = vxor.u32 %v6937, 2147483648
  %v7082 = vxor.u32 %v6938, 2147483648
  %v7083 = vxor.u32 %v6939, 2147483648
  %v7084 = vxor.u32 %v6940, 2147483648
  %v7085 = vxor.u32 %v6941, 2147483648
  %v7086 = vxor.u32 %v6942, 2147483648
  %v7087 = vxor.u32 %v6943, 2147483648
  %v7088 = vxor.u32 %v6944, 2147483648
  %v7089 = vxor.u32 %v6945, 2147483648
  %v7090 = vxor.u32 %v6946, 2147483648
  %v7091 = vxor.u32 %v6947, 2147483648
  %v7092 = vxor.u32 %v6948, 2147483648
  %v7093 = vxor.u32 %v6949, 2147483648
  %v7094 = vxor.u32 %v6950, 2147483648
  %v7095 = vxor.u32 %v6951, 2147483648
  %v7096 = vxor.u32 %v6952, 2147483648
  %v7097 = vxor.u32 %v6953, 2147483648
  %v7098 = vxor.u32 %v6954, 2147483648
  %v7099 = vxor.u32 %v6955, 2147483648
  %v7100 = vxor.u32 %v6956, 2147483648
  %v7101 = vxor.u32 %v6957, 2147483648
  %v7102 = vxor.u32 %v6958, 2147483648
  %v7103 = vxor.u32 %v6959, 2147483648
  %v7104 = vxor.u32 %v6960, 2147483648
  %v7105 = vxor.u32 %v6961, 2147483648
  %v7106 = vxor.u32 %v6962, 2147483648
  %v7107 = vxor.u32 %v6963, 2147483648
  %v7108 = vxor.u32 %v6964, 2147483648
  %v7109 = vxor.u32 %v6965, 2147483648
  %v7110 = vxor.u32 %v6966, 2147483648
  %v7111 = vxor.u32 %v6967, 2147483648
  %v7112 = vxor.u32 %v6968, 2147483648
  %v7113 = vxor.u32 %v6969, 2147483648
  %v7114 = vxor.u32 %v6970, 2147483648
  %v7115 = vxor.u32 %v6971, 2147483648
  %v7116 = vxor.u32 %v6972, 2147483648
  %v7117 = vxor.u32 %v6973, 2147483648
  %v7118 = vxor.u32 %v6974, 2147483648
  %v7119 = vxor.u32 %v6975, 2147483648
  %v7120 = vxor.u32 %v6976, 2147483648
  %v7121 = vxor.u32 %v6977, 2147483648
  %v7122 = vxor.u32 %v6978, 2147483648
  %v7123 = vxor.u32 %v6979, 2147483648
  %v7124 = vxor.u32 %v6980, 2147483648
  %v7125 = vxor.u32 %v6981, 2147483648
  %v7126 = vxor.u32 %v6982, 2147483648
  %v7127 = vxor.u32 %v6983, 2147483648
  %v7128 = vxor.u32 %v6984, 2147483648
  %v7129 = vxor.u32 %v6985, 2147483648
  %v7130 = vxor.u32 %v6986, 2147483648
  %v7131 = vxor.u32 %v6987, 2147483648
  %v7132 = vxor.u32 %v6988, 2147483648
  %v7133 = vxor.u32 %v6989, 2147483648
  %v7134 = vxor.u32 %v6990, 2147483648
  %v7135 = vxor.u32 %v6991, 2147483648
  %v7136 = vxor.u32 %v6992, 2147483648
  %v7137 = vxor.u32 %v6993, 2147483648
  %v7138 = vxor.u32 %v6994, 2147483648
  %v7139 = vxor.u32 %v6995, 2147483648
  %v7140 = vxor.u32 %v6996, 2147483648
  %v7141 = vxor.u32 %v6997, 2147483648
  %v7142 = vxor.u32 %v6998, 2147483648
  %v7143 = vxor.u32 %v6999, 2147483648
  %v7144 = vxor.u32 %v7000, 2147483648
  %v7145 = vxor.u32 %v7001, 2147483648
  %v7146 = vxor.u32 %v7002, 2147483648
  %v7147 = vxor.u32 %v7003, 2147483648
  %v7148 = vxor.u32 %v7004, 2147483648
  %v7149 = vxor.u32 %v7005, 2147483648
  %v7150 = vxor.u32 %v7006, 2147483648
  %v7151 = vxor.u32 %v7007, 2147483648
  %v7152 = vxor.u32 %v7008, 2147483648
  %v7153 = vxor.u32 %v7009, 2147483648
  %v7154 = vxor.u32 %v7010, 2147483648
  %v7155 = vxor.u32 %v7011, 2147483648
  %v7156 = vxor.u32 %v7012, 2147483648
  %v7157 = vxor.u32 %v7013, 2147483648
  %v7158 = vxor.u32 %v7014, 2147483648
  %v7159 = vxor.u32 %v7015, 2147483648
  %v7160 = vxor.u32 %v7016, 2147483648
  %v7161 = vxor.u32 %v7017, 2147483648
  %v7162 = vxor.u32 %v7018, 2147483648
  %v7163 = vxor.u32 %v7019, 2147483648
  %v7164 = vxor.u32 %v7020, 2147483648
  %v7165 = vxor.u32 %v7021, 2147483648
  %v7166 = vxor.u32 %v7022, 2147483648
  %v7167 = vxor.u32 %v7023, 2147483648
  %v7168 = vxor.u32 %v7024, 2147483648
  %v7169 = vxor.u32 %v7025, 2147483648
  %v7170 = vxor.u32 %v7026, 2147483648
  %v7171 = vxor.u32 %v7027, 2147483648
  %v7172 = vxor.u32 %v7028, 2147483648
  %v7173 = vxor.u32 %v7029, 2147483648
  %v7174 = vxor.u32 %v7030, 2147483648
  %v7175 = vxor.u32 %v7031, 2147483648
  %v7176 = vxor.u32 %v7032, 2147483648
  %v7177 = vxor.u32 %v7033, 2147483648
  %v7178 = vxor.u32 %v7034, 2147483648
  %v7179 = vxor.u32 %v7035, 2147483648
  %v7180 = vxor.u32 %v7036, 2147483648
  %v7181 = vxor.u32 %v7037, 2147483648
  %v7182 = vxor.u32 %v7038, 2147483648
  %v7183 = vxor.u32 %v7039, 2147483648
  %v7184 = vxor.u32 %v7040, 2147483648
  %v7185 = vxor.u32 %v7041, 2147483648
  %v7186 = vxor.u32 %v7042, 2147483648
  %v7187 = vxor.u32 %v7043, 2147483648
  %v7188 = vxor.u32 %v7044, 2147483648
  %v7189 = vxor.u32 %v7045, 2147483648
  %v7190 = vxor.u32 %v7046, 2147483648
  %v7191 = vxor.u32 %v7047, 2147483648
  %v7192 = vxor.u32 %v7048, 2147483648
  %v7193 = vxor.u32 %v7049, 2147483648
  %v7194 = vxor.u32 %v7050, 2147483648
  %v7195 = vxor.u32 %v7051, 2147483648
  %v7196 = vxor.u32 %v7052, 2147483648
  %v7197 = vxor.u32 %v7053, 2147483648
  %v7198 = vxor.u32 %v7054, 2147483648
  %v7199 = vxor.u32 %v7055, 2147483648
  %v7200 = vxor.u32 %v7056, 2147483648
  %v7201 = vxor.u32 %v7057, 2147483648
  %v7202 = vxor.u32 %v7058, 2147483648
  %v7203 = vxor.u32 %v7059, 2147483648
  %v7204 = vxor.u32 %v7060, 2147483648
  %v7205 = vxor.u32 %v7061, 2147483648
  %v7206 = vxor.u32 %v7062, 2147483648
  %v7207 = vxor.u32 %v7063, 2147483648
  %v7208 = vxor.u32 %v7064, 2147483648
  %v7209 = vxor.u32 %v7065, 2147483648
  %v7210 = vxor.u32 %v7066, 2147483648
  %v7211 = vxor.u32 %v7067, 2147483648
  %v7212 = vmul.f32 %v7068, 1.442695
  %v7213 = vpow.pop %v7212
  %v7214 = vmul.f32 %v7069, 1.442695
  %v7215 = vpow.pop %v7214
  %v7216 = vmul.f32 %v7070, 1.442695
  %v7217 = vpow.pop %v7216
  %v7218 = vmul.f32 %v7071, 1.442695
  %v7219 = vpow.pop %v7218
  %v7220 = vmul.f32 %v7072, 1.442695
  %v7221 = vpow.pop %v7220
  %v7222 = vmul.f32 %v7073, 1.442695
  %v7223 = vpow.pop %v7222
  %v7224 = vmul.f32 %v7074, 1.442695
  %v7225 = vpow.pop %v7224
  %v7226 = vmul.f32 %v7075, 1.442695
  %v7227 = vpow.pop %v7226
  %v7228 = vmul.f32 %v7076, 1.442695
  %v7229 = vpow.pop %v7228
  %v7230 = vmul.f32 %v7077, 1.442695
  %v7231 = vpow.pop %v7230
  %v7232 = vmul.f32 %v7078, 1.442695
  %v7233 = vpow.pop %v7232
  %v7234 = vmul.f32 %v7079, 1.442695
  %v7235 = vpow.pop %v7234
  %v7236 = vmul.f32 %v7080, 1.442695
  %v7237 = vpow.pop %v7236
  %v7238 = vmul.f32 %v7081, 1.442695
  %v7239 = vpow.pop %v7238
  %v7240 = vmul.f32 %v7082, 1.442695
  %v7241 = vpow.pop %v7240
  %v7242 = vmul.f32 %v7083, 1.442695
  %v7243 = vpow.pop %v7242
  %v7244 = vmul.f32 %v7084, 1.442695
  %v7245 = vpow.pop %v7244
  %v7246 = vmul.f32 %v7085, 1.442695
  %v7247 = vpow.pop %v7246
  %v7248 = vmul.f32 %v7086, 1.442695
  %v7249 = vpow.pop %v7248
  %v7250 = vmul.f32 %v7087, 1.442695
  %v7251 = vpow.pop %v7250
  %v7252 = vmul.f32 %v7088, 1.442695
  %v7253 = vpow.pop %v7252
  %v7254 = vmul.f32 %v7089, 1.442695
  %v7255 = vpow.pop %v7254
  %v7256 = vmul.f32 %v7090, 1.442695
  %v7257 = vpow.pop %v7256
  %v7258 = vmul.f32 %v7091, 1.442695
  %v7259 = vpow.pop %v7258
  %v7260 = vmul.f32 %v7092, 1.442695
  %v7261 = vpow.pop %v7260
  %v7262 = vmul.f32 %v7093, 1.442695
  %v7263 = vpow.pop %v7262
  %v7264 = vmul.f32 %v7094, 1.442695
  %v7265 = vpow.pop %v7264
  %v7266 = vmul.f32 %v7095, 1.442695
  %v7267 = vpow.pop %v7266
  %v7268 = vmul.f32 %v7096, 1.442695
  %v7269 = vpow.pop %v7268
  %v7270 = vmul.f32 %v7097, 1.442695
  %v7271 = vpow.pop %v7270
  %v7272 = vmul.f32 %v7098, 1.442695
  %v7273 = vpow.pop %v7272
  %v7274 = vmul.f32 %v7099, 1.442695
  %v7275 = vpow.pop %v7274
  %v7276 = vmul.f32 %v7100, 1.442695
  %v7277 = vpow.pop %v7276
  %v7278 = vmul.f32 %v7101, 1.442695
  %v7279 = vpow.pop %v7278
  %v7280 = vmul.f32 %v7102, 1.442695
  %v7281 = vpow.pop %v7280
  %v7282 = vmul.f32 %v7103, 1.442695
  %v7283 = vpow.pop %v7282
  %v7284 = vmul.f32 %v7104, 1.442695
  %v7285 = vpow.pop %v7284
  %v7286 = vmul.f32 %v7105, 1.442695
  %v7287 = vpow.pop %v7286
  %v7288 = vmul.f32 %v7106, 1.442695
  %v7289 = vpow.pop %v7288
  %v7290 = vmul.f32 %v7107, 1.442695
  %v7291 = vpow.pop %v7290
  %v7292 = vmul.f32 %v7108, 1.442695
  %v7293 = vpow.pop %v7292
  %v7294 = vmul.f32 %v7109, 1.442695
  %v7295 = vpow.pop %v7294
  %v7296 = vmul.f32 %v7110, 1.442695
  %v7297 = vpow.pop %v7296
  %v7298 = vmul.f32 %v7111, 1.442695
  %v7299 = vpow.pop %v7298
  %v7300 = vmul.f32 %v7112, 1.442695
  %v7301 = vpow.pop %v7300
  %v7302 = vmul.f32 %v7113, 1.442695
  %v7303 = vpow.pop %v7302
  %v7304 = vmul.f32 %v7114, 1.442695
  %v7305 = vpow.pop %v7304
  %v7306 = vmul.f32 %v7115, 1.442695
  %v7307 = vpow.pop %v7306
  %v7308 = vmul.f32 %v7116, 1.442695
  %v7309 = vpow.pop %v7308
  %v7310 = vmul.f32 %v7117, 1.442695
  %v7311 = vpow.pop %v7310
  %v7312 = vmul.f32 %v7118, 1.442695
  %v7313 = vpow.pop %v7312
  %v7314 = vmul.f32 %v7119, 1.442695
  %v7315 = vpow.pop %v7314
  %v7316 = vmul.f32 %v7120, 1.442695
  %v7317 = vpow.pop %v7316
  %v7318 = vmul.f32 %v7121, 1.442695
  %v7319 = vpow.pop %v7318
  %v7320 = vmul.f32 %v7122, 1.442695
  %v7321 = vpow.pop %v7320
  %v7322 = vmul.f32 %v7123, 1.442695
  %v7323 = vpow.pop %v7322
  %v7324 = vmul.f32 %v7124, 1.442695
  %v7325 = vpow.pop %v7324
  %v7326 = vmul.f32 %v7125, 1.442695
  %v7327 = vpow.pop %v7326
  %v7328 = vmul.f32 %v7126, 1.442695
  %v7329 = vpow.pop %v7328
  %v7330 = vmul.f32 %v7127, 1.442695
  %v7331 = vpow.pop %v7330
  %v7332 = vmul.f32 %v7128, 1.442695
  %v7333 = vpow.pop %v7332
  %v7334 = vmul.f32 %v7129, 1.442695
  %v7335 = vpow.pop %v7334
  %v7336 = vmul.f32 %v7130, 1.442695
  %v7337 = vpow.pop %v7336
  %v7338 = vmul.f32 %v7131, 1.442695
  %v7339 = vpow.pop %v7338
  %v7340 = vmul.f32 %v7132, 1.442695
  %v7341 = vpow.pop %v7340
  %v7342 = vmul.f32 %v7133, 1.442695
  %v7343 = vpow.pop %v7342
  %v7344 = vmul.f32 %v7134, 1.442695
  %v7345 = vpow.pop %v7344
  %v7346 = vmul.f32 %v7135, 1.442695
  %v7347 = vpow.pop %v7346
  %v7348 = vmul.f32 %v7136, 1.442695
  %v7349 = vpow.pop %v7348
  %v7350 = vmul.f32 %v7137, 1.442695
  %v7351 = vpow.pop %v7350
  %v7352 = vmul.f32 %v7138, 1.442695
  %v7353 = vpow.pop %v7352
  %v7354 = vmul.f32 %v7139, 1.442695
  %v7355 = vpow.pop %v7354
  %v7356 = vmul.f32 %v7140, 1.442695
  %v7357 = vpow.pop %v7356
  %v7358 = vmul.f32 %v7141, 1.442695
  %v7359 = vpow.pop %v7358
  %v7360 = vmul.f32 %v7142, 1.442695
  %v7361 = vpow.pop %v7360
  %v7362 = vmul.f32 %v7143, 1.442695
  %v7363 = vpow.pop %v7362
  %v7364 = vmul.f32 %v7144, 1.442695
  %v7365 = vpow.pop %v7364
  %v7366 = vmul.f32 %v7145, 1.442695
  %v7367 = vpow.pop %v7366
  %v7368 = vmul.f32 %v7146, 1.442695
  %v7369 = vpow.pop %v7368
  %v7370 = vmul.f32 %v7147, 1.442695
  %v7371 = vpow.pop %v7370
  %v7372 = vmul.f32 %v7148, 1.442695
  %v7373 = vpow.pop %v7372
  %v7374 = vmul.f32 %v7149, 1.442695
  %v7375 = vpow.pop %v7374
  %v7376 = vmul.f32 %v7150, 1.442695
  %v7377 = vpow.pop %v7376
  %v7378 = vmul.f32 %v7151, 1.442695
  %v7379 = vpow.pop %v7378
  %v7380 = vmul.f32 %v7152, 1.442695
  %v7381 = vpow.pop %v7380
  %v7382 = vmul.f32 %v7153, 1.442695
  %v7383 = vpow.pop %v7382
  %v7384 = vmul.f32 %v7154, 1.442695
  %v7385 = vpow.pop %v7384
  %v7386 = vmul.f32 %v7155, 1.442695
  %v7387 = vpow.pop %v7386
  %v7388 = vmul.f32 %v7156, 1.442695
  %v7389 = vpow.pop %v7388
  %v7390 = vmul.f32 %v7157, 1.442695
  %v7391 = vpow.pop %v7390
  %v7392 = vmul.f32 %v7158, 1.442695
  %v7393 = vpow.pop %v7392
  %v7394 = vmul.f32 %v7159, 1.442695
  %v7395 = vpow.pop %v7394
  %v7396 = vmul.f32 %v7160, 1.442695
  %v7397 = vpow.pop %v7396
  %v7398 = vmul.f32 %v7161, 1.442695
  %v7399 = vpow.pop %v7398
  %v7400 = vmul.f32 %v7162, 1.442695
  %v7401 = vpow.pop %v7400
  %v7402 = vmul.f32 %v7163, 1.442695
  %v7403 = vpow.pop %v7402
  %v7404 = vmul.f32 %v7164, 1.442695
  %v7405 = vpow.pop %v7404
  %v7406 = vmul.f32 %v7165, 1.442695
  %v7407 = vpow.pop %v7406
  %v7408 = vmul.f32 %v7166, 1.442695
  %v7409 = vpow.pop %v7408
  %v7410 = vmul.f32 %v7167, 1.442695
  %v7411 = vpow.pop %v7410
  %v7412 = vmul.f32 %v7168, 1.442695
  %v7413 = vpow.pop %v7412
  %v7414 = vmul.f32 %v7169, 1.442695
  %v7415 = vpow.pop %v7414
  %v7416 = vmul.f32 %v7170, 1.442695
  %v7417 = vpow.pop %v7416
  %v7418 = vmul.f32 %v7171, 1.442695
  %v7419 = vpow.pop %v7418
  %v7420 = vmul.f32 %v7172, 1.442695
  %v7421 = vpow.pop %v7420
  %v7422 = vmul.f32 %v7173, 1.442695
  %v7423 = vpow.pop %v7422
  %v7424 = vmul.f32 %v7174, 1.442695
  %v7425 = vpow.pop %v7424
  %v7426 = vmul.f32 %v7175, 1.442695
  %v7427 = vpow.pop %v7426
  %v7428 = vmul.f32 %v7176, 1.442695
  %v7429 = vpow.pop %v7428
  %v7430 = vmul.f32 %v7177, 1.442695
  %v7431 = vpow.pop %v7430
  %v7432 = vmul.f32 %v7178, 1.442695
  %v7433 = vpow.pop %v7432
  %v7434 = vmul.f32 %v7179, 1.442695
  %v7435 = vpow.pop %v7434
  %v7436 = vmul.f32 %v7180, 1.442695
  %v7437 = vpow.pop %v7436
  %v7438 = vmul.f32 %v7181, 1.442695
  %v7439 = vpow.pop %v7438
  %v7440 = vmul.f32 %v7182, 1.442695
  %v7441 = vpow.pop %v7440
  %v7442 = vmul.f32 %v7183, 1.442695
  %v7443 = vpow.pop %v7442
  %v7444 = vmul.f32 %v7184, 1.442695
  %v7445 = vpow.pop %v7444
  %v7446 = vmul.f32 %v7185, 1.442695
  %v7447 = vpow.pop %v7446
  %v7448 = vmul.f32 %v7186, 1.442695
  %v7449 = vpow.pop %v7448
  %v7450 = vmul.f32 %v7187, 1.442695
  %v7451 = vpow.pop %v7450
  %v7452 = vmul.f32 %v7188, 1.442695
  %v7453 = vpow.pop %v7452
  %v7454 = vmul.f32 %v7189, 1.442695
  %v7455 = vpow.pop %v7454
  %v7456 = vmul.f32 %v7190, 1.442695
  %v7457 = vpow.pop %v7456
  %v7458 = vmul.f32 %v7191, 1.442695
  %v7459 = vpow.pop %v7458
  %v7460 = vmul.f32 %v7192, 1.442695
  %v7461 = vpow.pop %v7460
  %v7462 = vmul.f32 %v7193, 1.442695
  %v7463 = vpow.pop %v7462
  %v7464 = vmul.f32 %v7194, 1.442695
  %v7465 = vpow.pop %v7464
  %v7466 = vmul.f32 %v7195, 1.442695
  %v7467 = vpow.pop %v7466
  %v7468 = vmul.f32 %v7196, 1.442695
  %v7469 = vpow.pop %v7468
  %v7470 = vmul.f32 %v7197, 1.442695
  %v7471 = vpow.pop %v7470
  %v7472 = vmul.f32 %v7198, 1.442695
  %v7473 = vpow.pop %v7472
  %v7474 = vmul.f32 %v7199, 1.442695
  %v7475 = vpow.pop %v7474
  %v7476 = vmul.f32 %v7200, 1.442695
  %v7477 = vpow.pop %v7476
  %v7478 = vmul.f32 %v7201, 1.442695
  %v7479 = vpow.pop %v7478
  %v7480 = vmul.f32 %v7202, 1.442695
  %v7481 = vpow.pop %v7480
  %v7482 = vmul.f32 %v7203, 1.442695
  %v7483 = vpow.pop %v7482
  %v7484 = vmul.f32 %v7204, 1.442695
  %v7485 = vpow.pop %v7484
  %v7486 = vmul.f32 %v7205, 1.442695
  %v7487 = vpow.pop %v7486
  %v7488 = vmul.f32 %v7206, 1.442695
  %v7489 = vpow.pop %v7488
  %v7490 = vmul.f32 %v7207, 1.442695
  %v7491 = vpow.pop %v7490
  %v7492 = vmul.f32 %v7208, 1.442695
  %v7493 = vpow.pop %v7492
  %v7494 = vmul.f32 %v7209, 1.442695
  %v7495 = vpow.pop %v7494
  %v7496 = vmul.f32 %v7210, 1.442695
  %v7497 = vpow.pop %v7496
  %v7498 = vmul.f32 %v7211, 1.442695
  %v7499 = vpow.pop %v7498
  %v7500 = vadd.f32 %v7213, 1.0
  %v7501 = vadd.f32 %v7215, 1.0
  %v7502 = vadd.f32 %v7217, 1.0
  %v7503 = vadd.f32 %v7219, 1.0
  %v7504 = vadd.f32 %v7221, 1.0
  %v7505 = vadd.f32 %v7223, 1.0
  %v7506 = vadd.f32 %v7225, 1.0
  %v7507 = vadd.f32 %v7227, 1.0
  %v7508 = vadd.f32 %v7229, 1.0
  %v7509 = vadd.f32 %v7231, 1.0
  %v7510 = vadd.f32 %v7233, 1.0
  %v7511 = vadd.f32 %v7235, 1.0
  %v7512 = vadd.f32 %v7237, 1.0
  %v7513 = vadd.f32 %v7239, 1.0
  %v7514 = vadd.f32 %v7241, 1.0
  %v7515 = vadd.f32 %v7243, 1.0
  %v7516 = vadd.f32 %v7245, 1.0
  %v7517 = vadd.f32 %v7247, 1.0
  %v7518 = vadd.f32 %v7249, 1.0
  %v7519 = vadd.f32 %v7251, 1.0
  %v7520 = vadd.f32 %v7253, 1.0
  %v7521 = vadd.f32 %v7255, 1.0
  %v7522 = vadd.f32 %v7257, 1.0
  %v7523 = vadd.f32 %v7259, 1.0
  %v7524 = vadd.f32 %v7261, 1.0
  %v7525 = vadd.f32 %v7263, 1.0
  %v7526 = vadd.f32 %v7265, 1.0
  %v7527 = vadd.f32 %v7267, 1.0
  %v7528 = vadd.f32 %v7269, 1.0
  %v7529 = vadd.f32 %v7271, 1.0
  %v7530 = vadd.f32 %v7273, 1.0
  %v7531 = vadd.f32 %v7275, 1.0
  %v7532 = vadd.f32 %v7277, 1.0
  %v7533 = vadd.f32 %v7279, 1.0
  %v7534 = vadd.f32 %v7281, 1.0
  %v7535 = vadd.f32 %v7283, 1.0
  %v7536 = vadd.f32 %v7285, 1.0
  %v7537 = vadd.f32 %v7287, 1.0
  %v7538 = vadd.f32 %v7289, 1.0
  %v7539 = vadd.f32 %v7291, 1.0
  %v7540 = vadd.f32 %v7293, 1.0
  %v7541 = vadd.f32 %v7295, 1.0
  %v7542 = vadd.f32 %v7297, 1.0
  %v7543 = vadd.f32 %v7299, 1.0
  %v7544 = vadd.f32 %v7301, 1.0
  %v7545 = vadd.f32 %v7303, 1.0
  %v7546 = vadd.f32 %v7305, 1.0
  %v7547 = vadd.f32 %v7307, 1.0
  %v7548 = vadd.f32 %v7309, 1.0
  %v7549 = vadd.f32 %v7311, 1.0
  %v7550 = vadd.f32 %v7313, 1.0
  %v7551 = vadd.f32 %v7315, 1.0
  %v7552 = vadd.f32 %v7317, 1.0
  %v7553 = vadd.f32 %v7319, 1.0
  %v7554 = vadd.f32 %v7321, 1.0
  %v7555 = vadd.f32 %v7323, 1.0
  %v7556 = vadd.f32 %v7325, 1.0
  %v7557 = vadd.f32 %v7327, 1.0
  %v7558 = vadd.f32 %v7329, 1.0
  %v7559 = vadd.f32 %v7331, 1.0
  %v7560 = vadd.f32 %v7333, 1.0
  %v7561 = vadd.f32 %v7335, 1.0
  %v7562 = vadd.f32 %v7337, 1.0
  %v7563 = vadd.f32 %v7339, 1.0
  %v7564 = vadd.f32 %v7341, 1.0
  %v7565 = vadd.f32 %v7343, 1.0
  %v7566 = vadd.f32 %v7345, 1.0
  %v7567 = vadd.f32 %v7347, 1.0
  %v7568 = vadd.f32 %v7349, 1.0
  %v7569 = vadd.f32 %v7351, 1.0
  %v7570 = vadd.f32 %v7353, 1.0
  %v7571 = vadd.f32 %v7355, 1.0
  %v7572 = vadd.f32 %v7357, 1.0
  %v7573 = vadd.f32 %v7359, 1.0
  %v7574 = vadd.f32 %v7361, 1.0
  %v7575 = vadd.f32 %v7363, 1.0
  %v7576 = vadd.f32 %v7365, 1.0
  %v7577 = vadd.f32 %v7367, 1.0
  %v7578 = vadd.f32 %v7369, 1.0
  %v7579 = vadd.f32 %v7371, 1.0
  %v7580 = vadd.f32 %v7373, 1.0
  %v7581 = vadd.f32 %v7375, 1.0
  %v7582 = vadd.f32 %v7377, 1.0
  %v7583 = vadd.f32 %v7379, 1.0
  %v7584 = vadd.f32 %v7381, 1.0
  %v7585 = vadd.f32 %v7383, 1.0
  %v7586 = vadd.f32 %v7385, 1.0
  %v7587 = vadd.f32 %v7387, 1.0
  %v7588 = vadd.f32 %v7389, 1.0
  %v7589 = vadd.f32 %v7391, 1.0
  %v7590 = vadd.f32 %v7393, 1.0
  %v7591 = vadd.f32 %v7395, 1.0
  %v7592 = vadd.f32 %v7397, 1.0
  %v7593 = vadd.f32 %v7399, 1.0
  %v7594 = vadd.f32 %v7401, 1.0
  %v7595 = vadd.f32 %v7403, 1.0
  %v7596 = vadd.f32 %v7405, 1.0
  %v7597 = vadd.f32 %v7407, 1.0
  %v7598 = vadd.f32 %v7409, 1.0
  %v7599 = vadd.f32 %v7411, 1.0
  %v7600 = vadd.f32 %v7413, 1.0
  %v7601 = vadd.f32 %v7415, 1.0
  %v7602 = vadd.f32 %v7417, 1.0
  %v7603 = vadd.f32 %v7419, 1.0
  %v7604 = vadd.f32 %v7421, 1.0
  %v7605 = vadd.f32 %v7423, 1.0
  %v7606 = vadd.f32 %v7425, 1.0
  %v7607 = vadd.f32 %v7427, 1.0
  %v7608 = vadd.f32 %v7429, 1.0
  %v7609 = vadd.f32 %v7431, 1.0
  %v7610 = vadd.f32 %v7433, 1.0
  %v7611 = vadd.f32 %v7435, 1.0
  %v7612 = vadd.f32 %v7437, 1.0
  %v7613 = vadd.f32 %v7439, 1.0
  %v7614 = vadd.f32 %v7441, 1.0
  %v7615 = vadd.f32 %v7443, 1.0
  %v7616 = vadd.f32 %v7445, 1.0
  %v7617 = vadd.f32 %v7447, 1.0
  %v7618 = vadd.f32 %v7449, 1.0
  %v7619 = vadd.f32 %v7451, 1.0
  %v7620 = vadd.f32 %v7453, 1.0
  %v7621 = vadd.f32 %v7455, 1.0
  %v7622 = vadd.f32 %v7457, 1.0
  %v7623 = vadd.f32 %v7459, 1.0
  %v7624 = vadd.f32 %v7461, 1.0
  %v7625 = vadd.f32 %v7463, 1.0
  %v7626 = vadd.f32 %v7465, 1.0
  %v7627 = vadd.f32 %v7467, 1.0
  %v7628 = vadd.f32 %v7469, 1.0
  %v7629 = vadd.f32 %v7471, 1.0
  %v7630 = vadd.f32 %v7473, 1.0
  %v7631 = vadd.f32 %v7475, 1.0
  %v7632 = vadd.f32 %v7477, 1.0
  %v7633 = vadd.f32 %v7479, 1.0
  %v7634 = vadd.f32 %v7481, 1.0
  %v7635 = vadd.f32 %v7483, 1.0
  %v7636 = vadd.f32 %v7485, 1.0
  %v7637 = vadd.f32 %v7487, 1.0
  %v7638 = vadd.f32 %v7489, 1.0
  %v7639 = vadd.f32 %v7491, 1.0
  %v7640 = vadd.f32 %v7493, 1.0
  %v7641 = vadd.f32 %v7495, 1.0
  %v7642 = vadd.f32 %v7497, 1.0
  %v7643 = vadd.f32 %v7499, 1.0
  %v7644 = vrcp.pop %v7500
  %v7645 = vmul.f32 1.0, %v7644
  %v7646 = vrcp.pop %v7501
  %v7647 = vmul.f32 1.0, %v7646
  %v7648 = vrcp.pop %v7502
  %v7649 = vmul.f32 1.0, %v7648
  %v7650 = vrcp.pop %v7503
  %v7651 = vmul.f32 1.0, %v7650
  %v7652 = vrcp.pop %v7504
  %v7653 = vmul.f32 1.0, %v7652
  %v7654 = vrcp.pop %v7505
  %v7655 = vmul.f32 1.0, %v7654
  %v7656 = vrcp.pop %v7506
  %v7657 = vmul.f32 1.0, %v7656
  %v7658 = vrcp.pop %v7507
  %v7659 = vmul.f32 1.0, %v7658
  %v7660 = vrcp.pop %v7508
  %v7661 = vmul.f32 1.0, %v7660
  %v7662 = vrcp.pop %v7509
  %v7663 = vmul.f32 1.0, %v7662
  %v7664 = vrcp.pop %v7510
  %v7665 = vmul.f32 1.0, %v7664
  %v7666 = vrcp.pop %v7511
  %v7667 = vmul.f32 1.0, %v7666
  %v7668 = vrcp.pop %v7512
  %v7669 = vmul.f32 1.0, %v7668
  %v7670 = vrcp.pop %v7513
  %v7671 = vmul.f32 1.0, %v7670
  %v7672 = vrcp.pop %v7514
  %v7673 = vmul.f32 1.0, %v7672
  %v7674 = vrcp.pop %v7515
  %v7675 = vmul.f32 1.0, %v7674
  %v7676 = vrcp.pop %v7516
  %v7677 = vmul.f32 1.0, %v7676
  %v7678 = vrcp.pop %v7517
  %v7679 = vmul.f32 1.0, %v7678
  %v7680 = vrcp.pop %v7518
  %v7681 = vmul.f32 1.0, %v7680
  %v7682 = vrcp.pop %v7519
  %v7683 = vmul.f32 1.0, %v7682
  %v7684 = vrcp.pop %v7520
  %v7685 = vmul.f32 1.0, %v7684
  %v7686 = vrcp.pop %v7521
  %v7687 = vmul.f32 1.0, %v7686
  %v7688 = vrcp.pop %v7522
  %v7689 = vmul.f32 1.0, %v7688
  %v7690 = vrcp.pop %v7523
  %v7691 = vmul.f32 1.0, %v7690
  %v7692 = vrcp.pop %v7524
  %v7693 = vmul.f32 1.0, %v7692
  %v7694 = vrcp.pop %v7525
  %v7695 = vmul.f32 1.0, %v7694
  %v7696 = vrcp.pop %v7526
  %v7697 = vmul.f32 1.0, %v7696
  %v7698 = vrcp.pop %v7527
  %v7699 = vmul.f32 1.0, %v7698
  %v7700 = vrcp.pop %v7528
  %v7701 = vmul.f32 1.0, %v7700
  %v7702 = vrcp.pop %v7529
  %v7703 = vmul.f32 1.0, %v7702
  %v7704 = vrcp.pop %v7530
  %v7705 = vmul.f32 1.0, %v7704
  %v7706 = vrcp.pop %v7531
  %v7707 = vmul.f32 1.0, %v7706
  %v7708 = vrcp.pop %v7532
  %v7709 = vmul.f32 1.0, %v7708
  %v7710 = vrcp.pop %v7533
  %v7711 = vmul.f32 1.0, %v7710
  %v7712 = vrcp.pop %v7534
  %v7713 = vmul.f32 1.0, %v7712
  %v7714 = vrcp.pop %v7535
  %v7715 = vmul.f32 1.0, %v7714
  %v7716 = vrcp.pop %v7536
  %v7717 = vmul.f32 1.0, %v7716
  %v7718 = vrcp.pop %v7537
  %v7719 = vmul.f32 1.0, %v7718
  %v7720 = vrcp.pop %v7538
  %v7721 = vmul.f32 1.0, %v7720
  %v7722 = vrcp.pop %v7539
  %v7723 = vmul.f32 1.0, %v7722
  %v7724 = vrcp.pop %v7540
  %v7725 = vmul.f32 1.0, %v7724
  %v7726 = vrcp.pop %v7541
  %v7727 = vmul.f32 1.0, %v7726
  %v7728 = vrcp.pop %v7542
  %v7729 = vmul.f32 1.0, %v7728
  %v7730 = vrcp.pop %v7543
  %v7731 = vmul.f32 1.0, %v7730
  %v7732 = vrcp.pop %v7544
  %v7733 = vmul.f32 1.0, %v7732
  %v7734 = vrcp.pop %v7545
  %v7735 = vmul.f32 1.0, %v7734
  %v7736 = vrcp.pop %v7546
  %v7737 = vmul.f32 1.0, %v7736
  %v7738 = vrcp.pop %v7547
  %v7739 = vmul.f32 1.0, %v7738
  %v7740 = vrcp.pop %v7548
  %v7741 = vmul.f32 1.0, %v7740
  %v7742 = vrcp.pop %v7549
  %v7743 = vmul.f32 1.0, %v7742
  %v7744 = vrcp.pop %v7550
  %v7745 = vmul.f32 1.0, %v7744
  %v7746 = vrcp.pop %v7551
  %v7747 = vmul.f32 1.0, %v7746
  %v7748 = vrcp.pop %v7552
  %v7749 = vmul.f32 1.0, %v7748
  %v7750 = vrcp.pop %v7553
  %v7751 = vmul.f32 1.0, %v7750
  %v7752 = vrcp.pop %v7554
  %v7753 = vmul.f32 1.0, %v7752
  %v7754 = vrcp.pop %v7555
  %v7755 = vmul.f32 1.0, %v7754
  %v7756 = vrcp.pop %v7556
  %v7757 = vmul.f32 1.0, %v7756
  %v7758 = vrcp.pop %v7557
  %v7759 = vmul.f32 1.0, %v7758
  %v7760 = vrcp.pop %v7558
  %v7761 = vmul.f32 1.0, %v7760
  %v7762 = vrcp.pop %v7559
  %v7763 = vmul.f32 1.0, %v7762
  %v7764 = vrcp.pop %v7560
  %v7765 = vmul.f32 1.0, %v7764
  %v7766 = vrcp.pop %v7561
  %v7767 = vmul.f32 1.0, %v7766
  %v7768 = vrcp.pop %v7562
  %v7769 = vmul.f32 1.0, %v7768
  %v7770 = vrcp.pop %v7563
  %v7771 = vmul.f32 1.0, %v7770
  %v7772 = vrcp.pop %v7564
  %v7773 = vmul.f32 1.0, %v7772
  %v7774 = vrcp.pop %v7565
  %v7775 = vmul.f32 1.0, %v7774
  %v7776 = vrcp.pop %v7566
  %v7777 = vmul.f32 1.0, %v7776
  %v7778 = vrcp.pop %v7567
  %v7779 = vmul.f32 1.0, %v7778
  %v7780 = vrcp.pop %v7568
  %v7781 = vmul.f32 1.0, %v7780
  %v7782 = vrcp.pop %v7569
  %v7783 = vmul.f32 1.0, %v7782
  %v7784 = vrcp.pop %v7570
  %v7785 = vmul.f32 1.0, %v7784
  %v7786 = vrcp.pop %v7571
  %v7787 = vmul.f32 1.0, %v7786
  %v7788 = vrcp.pop %v7572
  %v7789 = vmul.f32 1.0, %v7788
  %v7790 = vrcp.pop %v7573
  %v7791 = vmul.f32 1.0, %v7790
  %v7792 = vrcp.pop %v7574
  %v7793 = vmul.f32 1.0, %v7792
  %v7794 = vrcp.pop %v7575
  %v7795 = vmul.f32 1.0, %v7794
  %v7796 = vrcp.pop %v7576
  %v7797 = vmul.f32 1.0, %v7796
  %v7798 = vrcp.pop %v7577
  %v7799 = vmul.f32 1.0, %v7798
  %v7800 = vrcp.pop %v7578
  %v7801 = vmul.f32 1.0, %v7800
  %v7802 = vrcp.pop %v7579
  %v7803 = vmul.f32 1.0, %v7802
  %v7804 = vrcp.pop %v7580
  %v7805 = vmul.f32 1.0, %v7804
  %v7806 = vrcp.pop %v7581
  %v7807 = vmul.f32 1.0, %v7806
  %v7808 = vrcp.pop %v7582
  %v7809 = vmul.f32 1.0, %v7808
  %v7810 = vrcp.pop %v7583
  %v7811 = vmul.f32 1.0, %v7810
  %v7812 = vrcp.pop %v7584
  %v7813 = vmul.f32 1.0, %v7812
  %v7814 = vrcp.pop %v7585
  %v7815 = vmul.f32 1.0, %v7814
  %v7816 = vrcp.pop %v7586
  %v7817 = vmul.f32 1.0, %v7816
  %v7818 = vrcp.pop %v7587
  %v7819 = vmul.f32 1.0, %v7818
  %v7820 = vrcp.pop %v7588
  %v7821 = vmul.f32 1.0, %v7820
  %v7822 = vrcp.pop %v7589
  %v7823 = vmul.f32 1.0, %v7822
  %v7824 = vrcp.pop %v7590
  %v7825 = vmul.f32 1.0, %v7824
  %v7826 = vrcp.pop %v7591
  %v7827 = vmul.f32 1.0, %v7826
  %v7828 = vrcp.pop %v7592
  %v7829 = vmul.f32 1.0, %v7828
  %v7830 = vrcp.pop %v7593
  %v7831 = vmul.f32 1.0, %v7830
  %v7832 = vrcp.pop %v7594
  %v7833 = vmul.f32 1.0, %v7832
  %v7834 = vrcp.pop %v7595
  %v7835 = vmul.f32 1.0, %v7834
  %v7836 = vrcp.pop %v7596
  %v7837 = vmul.f32 1.0, %v7836
  %v7838 = vrcp.pop %v7597
  %v7839 = vmul.f32 1.0, %v7838
  %v7840 = vrcp.pop %v7598
  %v7841 = vmul.f32 1.0, %v7840
  %v7842 = vrcp.pop %v7599
  %v7843 = vmul.f32 1.0, %v7842
  %v7844 = vrcp.pop %v7600
  %v7845 = vmul.f32 1.0, %v7844
  %v7846 = vrcp.pop %v7601
  %v7847 = vmul.f32 1.0, %v7846
  %v7848 = vrcp.pop %v7602
  %v7849 = vmul.f32 1.0, %v7848
  %v7850 = vrcp.pop %v7603
  %v7851 = vmul.f32 1.0, %v7850
  %v7852 = vrcp.pop %v7604
  %v7853 = vmul.f32 1.0, %v7852
  %v7854 = vrcp.pop %v7605
  %v7855 = vmul.f32 1.0, %v7854
  %v7856 = vrcp.pop %v7606
  %v7857 = vmul.f32 1.0, %v7856
  %v7858 = vrcp.pop %v7607
  %v7859 = vmul.f32 1.0, %v7858
  %v7860 = vrcp.pop %v7608
  %v7861 = vmul.f32 1.0, %v7860
  %v7862 = vrcp.pop %v7609
  %v7863 = vmul.f32 1.0, %v7862
  %v7864 = vrcp.pop %v7610
  %v7865 = vmul.f32 1.0, %v7864
  %v7866 = vrcp.pop %v7611
  %v7867 = vmul.f32 1.0, %v7866
  %v7868 = vrcp.pop %v7612
  %v7869 = vmul.f32 1.0, %v7868
  %v7870 = vrcp.pop %v7613
  %v7871 = vmul.f32 1.0, %v7870
  %v7872 = vrcp.pop %v7614
  %v7873 = vmul.f32 1.0, %v7872
  %v7874 = vrcp.pop %v7615
  %v7875 = vmul.f32 1.0, %v7874
  %v7876 = vrcp.pop %v7616
  %v7877 = vmul.f32 1.0, %v7876
  %v7878 = vrcp.pop %v7617
  %v7879 = vmul.f32 1.0, %v7878
  %v7880 = vrcp.pop %v7618
  %v7881 = vmul.f32 1.0, %v7880
  %v7882 = vrcp.pop %v7619
  %v7883 = vmul.f32 1.0, %v7882
  %v7884 = vrcp.pop %v7620
  %v7885 = vmul.f32 1.0, %v7884
  %v7886 = vrcp.pop %v7621
  %v7887 = vmul.f32 1.0, %v7886
  %v7888 = vrcp.pop %v7622
  %v7889 = vmul.f32 1.0, %v7888
  %v7890 = vrcp.pop %v7623
  %v7891 = vmul.f32 1.0, %v7890
  %v7892 = vrcp.pop %v7624
  %v7893 = vmul.f32 1.0, %v7892
  %v7894 = vrcp.pop %v7625
  %v7895 = vmul.f32 1.0, %v7894
  %v7896 = vrcp.pop %v7626
  %v7897 = vmul.f32 1.0, %v7896
  %v7898 = vrcp.pop %v7627
  %v7899 = vmul.f32 1.0, %v7898
  %v7900 = vrcp.pop %v7628
  %v7901 = vmul.f32 1.0, %v7900
  %v7902 = vrcp.pop %v7629
  %v7903 = vmul.f32 1.0, %v7902
  %v7904 = vrcp.pop %v7630
  %v7905 = vmul.f32 1.0, %v7904
  %v7906 = vrcp.pop %v7631
  %v7907 = vmul.f32 1.0, %v7906
  %v7908 = vrcp.pop %v7632
  %v7909 = vmul.f32 1.0, %v7908
  %v7910 = vrcp.pop %v7633
  %v7911 = vmul.f32 1.0, %v7910
  %v7912 = vrcp.pop %v7634
  %v7913 = vmul.f32 1.0, %v7912
  %v7914 = vrcp.pop %v7635
  %v7915 = vmul.f32 1.0, %v7914
  %v7916 = vrcp.pop %v7636
  %v7917 = vmul.f32 1.0, %v7916
  %v7918 = vrcp.pop %v7637
  %v7919 = vmul.f32 1.0, %v7918
  %v7920 = vrcp.pop %v7638
  %v7921 = vmul.f32 1.0, %v7920
  %v7922 = vrcp.pop %v7639
  %v7923 = vmul.f32 1.0, %v7922
  %v7924 = vrcp.pop %v7640
  %v7925 = vmul.f32 1.0, %v7924
  %v7926 = vrcp.pop %v7641
  %v7927 = vmul.f32 1.0, %v7926
  %v7928 = vrcp.pop %v7642
  %v7929 = vmul.f32 1.0, %v7928
  %v7930 = vrcp.pop %v7643
  %v7931 = vmul.f32 1.0, %v7930
  %v7932 = vmul.f32 %v6467, %v7645
  %v7933 = vmul.f32 %v6469, %v7647
  %v7934 = vmul.f32 %v6590, %v7649
  %v7935 = vmul.f32 %v6592, %v7651
  %v7936 = vmul.f32 %v6713, %v7653
  %v7937 = vmul.f32 %v6715, %v7655
  %v7938 = vmul.f32 %v6836, %v7657
  %v7939 = vmul.f32 %v6838, %v7659
  %v7940 = vmul.f32 %v6471, %v7661
  %v7941 = vmul.f32 %v6473, %v7663
  %v7942 = vmul.f32 %v6594, %v7665
  %v7943 = vmul.f32 %v6596, %v7667
  %v7944 = vmul.f32 %v6717, %v7669
  %v7945 = vmul.f32 %v6719, %v7671
  %v7946 = vmul.f32 %v6840, %v7673
  %v7947 = vmul.f32 %v6842, %v7675
  %v7948 = vmul.f32 %v6477, %v7677
  %v7949 = vmul.f32 %v6479, %v7679
  %v7950 = vmul.f32 %v6600, %v7681
  %v7951 = vmul.f32 %v6602, %v7683
  %v7952 = vmul.f32 %v6723, %v7685
  %v7953 = vmul.f32 %v6725, %v7687
  %v7954 = vmul.f32 %v6846, %v7689
  %v7955 = vmul.f32 %v6848, %v7691
  %v7956 = vmul.f32 %v6481, %v7693
  %v7957 = vmul.f32 %v6483, %v7695
  %v7958 = vmul.f32 %v6604, %v7697
  %v7959 = vmul.f32 %v6606, %v7699
  %v7960 = vmul.f32 %v6727, %v7701
  %v7961 = vmul.f32 %v6729, %v7703
  %v7962 = vmul.f32 %v6850, %v7705
  %v7963 = vmul.f32 %v6852, %v7707
  %v7964 = vmul.f32 %v6487, %v7709
  %v7965 = vmul.f32 %v6489, %v7711
  %v7966 = vmul.f32 %v6610, %v7713
  %v7967 = vmul.f32 %v6612, %v7715
  %v7968 = vmul.f32 %v6733, %v7717
  %v7969 = vmul.f32 %v6735, %v7719
  %v7970 = vmul.f32 %v6856, %v7721
  %v7971 = vmul.f32 %v6858, %v7723
  %v7972 = vmul.f32 %v6491, %v7725
  %v7973 = vmul.f32 %v6493, %v7727
  %v7974 = vmul.f32 %v6614, %v7729
  %v7975 = vmul.f32 %v6616, %v7731
  %v7976 = vmul.f32 %v6737, %v7733
  %v7977 = vmul.f32 %v6739, %v7735
  %v7978 = vmul.f32 %v6860, %v7737
  %v7979 = vmul.f32 %v6862, %v7739
  %v7980 = vmul.f32 %v6497, %v7741
  %v7981 = vmul.f32 %v6499, %v7743
  %v7982 = vmul.f32 %v6620, %v7745
  %v7983 = vmul.f32 %v6622, %v7747
  %v7984 = vmul.f32 %v6743, %v7749
  %v7985 = vmul.f32 %v6745, %v7751
  %v7986 = vmul.f32 %v6866, %v7753
  %v7987 = vmul.f32 %v6868, %v7755
  %v7988 = vmul.f32 %v6501, %v7757
  %v7989 = vmul.f32 %v6503, %v7759
  %v7990 = vmul.f32 %v6624, %v7761
  %v7991 = vmul.f32 %v6626, %v7763
  %v7992 = vmul.f32 %v6747, %v7765
  %v7993 = vmul.f32 %v6749, %v7767
  %v7994 = vmul.f32 %v6870, %v7769
  %v7995 = vmul.f32 %v6872, %v7771
  %v7996 = vmul.f32 %v6507, %v7773
  %v7997 = vmul.f32 %v6509, %v7775
  %v7998 = vmul.f32 %v6630, %v7777
  %v7999 = vmul.f32 %v6632, %v7779
  %v8000 = vmul.f32 %v6753, %v7781
  %v8001 = vmul.f32 %v6755, %v7783
  %v8002 = vmul.f32 %v6876, %v7785
  %v8003 = vmul.f32 %v6878, %v7787
  %v8004 = vmul.f32 %v6511, %v7789
  %v8005 = vmul.f32 %v6513, %v7791
  %v8006 = vmul.f32 %v6634, %v7793
  %v8007 = vmul.f32 %v6636, %v7795
  %v8008 = vmul.f32 %v6757, %v7797
  %v8009 = vmul.f32 %v6759, %v7799
  %v8010 = vmul.f32 %v6880, %v7801
  %v8011 = vmul.f32 %v6882, %v7803
  %v8012 = vmul.f32 %v6517, %v7805
  %v8013 = vmul.f32 %v6519, %v7807
  %v8014 = vmul.f32 %v6640, %v7809
  %v8015 = vmul.f32 %v6642, %v7811
  %v8016 = vmul.f32 %v6763, %v7813
  %v8017 = vmul.f32 %v6765, %v7815
  %v8018 = vmul.f32 %v6886, %v7817
  %v8019 = vmul.f32 %v6888, %v7819
  %v8020 = vmul.f32 %v6521, %v7821
  %v8021 = vmul.f32 %v6523, %v7823
  %v8022 = vmul.f32 %v6644, %v7825
  %v8023 = vmul.f32 %v6646, %v7827
  %v8024 = vmul.f32 %v6767, %v7829
  %v8025 = vmul.f32 %v6769, %v7831
  %v8026 = vmul.f32 %v6890, %v7833
  %v8027 = vmul.f32 %v6892, %v7835
  %v8028 = vmul.f32 %v6527, %v7837
  %v8029 = vmul.f32 %v6529, %v7839
  %v8030 = vmul.f32 %v6650, %v7841
  %v8031 = vmul.f32 %v6652, %v7843
  %v8032 = vmul.f32 %v6773, %v7845
  %v8033 = vmul.f32 %v6775, %v7847
  %v8034 = vmul.f32 %v6896, %v7849
  %v8035 = vmul.f32 %v6898, %v7851
  %v8036 = vmul.f32 %v6531, %v7853
  %v8037 = vmul.f32 %v6533, %v7855
  %v8038 = vmul.f32 %v6654, %v7857
  %v8039 = vmul.f32 %v6656, %v7859
  %v8040 = vmul.f32 %v6777, %v7861
  %v8041 = vmul.f32 %v6779, %v7863
  %v8042 = vmul.f32 %v6900, %v7865
  %v8043 = vmul.f32 %v6902, %v7867
  %v8044 = vmul.f32 %v6537, %v7869
  %v8045 = vmul.f32 %v6539, %v7871
  %v8046 = vmul.f32 %v6660, %v7873
  %v8047 = vmul.f32 %v6662, %v7875
  %v8048 = vmul.f32 %v6783, %v7877
  %v8049 = vmul.f32 %v6785, %v7879
  %v8050 = vmul.f32 %v6906, %v7881
  %v8051 = vmul.f32 %v6908, %v7883
  %v8052 = vmul.f32 %v6541, %v7885
  %v8053 = vmul.f32 %v6543, %v7887
  %v8054 = vmul.f32 %v6664, %v7889
  %v8055 = vmul.f32 %v6666, %v7891
  %v8056 = vmul.f32 %v6787, %v7893
  %v8057 = vmul.f32 %v6789, %v7895
  %v8058 = vmul.f32 %v6910, %v7897
  %v8059 = vmul.f32 %v6912, %v7899
  %v8060 = vmul.f32 %v6547, %v7901
  %v8061 = vmul.f32 %v6549, %v7903
  %v8062 = vmul.f32 %v6670, %v7905
  %v8063 = vmul.f32 %v6672, %v7907
  %v8064 = vmul.f32 %v6793, %v7909
  %v8065 = vmul.f32 %v6795, %v7911
  %v8066 = vmul.f32 %v6916, %v7913
  %v8067 = vmul.f32 %v6918, %v7915
  %v8068 = vmul.f32 %v6551, %v7917
  %v8069 = vmul.f32 %v6553, %v7919
  %v8070 = vmul.f32 %v6674, %v7921
  %v8071 = vmul.f32 %v6676, %v7923
  %v8072 = vmul.f32 %v6797, %v7925
  %v8073 = vmul.f32 %v6799, %v7927
  %v8074 = vmul.f32 %v6920, %v7929
  %v8075 = vmul.f32 %v6922, %v7931
  %v8076 = vpack.c.bf16 %v7940, %v7932
  %v8077 = vpack.c.bf16 %v7941, %v7933
  %v8078 = vpack.c.bf16 %v7942, %v7934
  %v8079 = vpack.c.bf16 %v7943, %v7935
  %v8080 = vpack.c.bf16 %v7944, %v7936
  %v8081 = vpack.c.bf16 %v7945, %v7937
  %v8082 = vpack.c.bf16 %v7946, %v7938
  %v8083 = vpack.c.bf16 %v7947, %v7939
  %v8084 = vpack.c.bf16 %v7956, %v7948
  %v8085 = vpack.c.bf16 %v7957, %v7949
  %v8086 = vpack.c.bf16 %v7958, %v7950
  %v8087 = vpack.c.bf16 %v7959, %v7951
  %v8088 = vpack.c.bf16 %v7960, %v7952
  %v8089 = vpack.c.bf16 %v7961, %v7953
  %v8090 = vpack.c.bf16 %v7962, %v7954
  %v8091 = vpack.c.bf16 %v7963, %v7955
  %v8092 = vpack.c.bf16 %v7972, %v7964
  %v8093 = vpack.c.bf16 %v7973, %v7965
  %v8094 = vpack.c.bf16 %v7974, %v7966
  %v8095 = vpack.c.bf16 %v7975, %v7967
  %v8096 = vpack.c.bf16 %v7976, %v7968
  %v8097 = vpack.c.bf16 %v7977, %v7969
  %v8098 = vpack.c.bf16 %v7978, %v7970
  %v8099 = vpack.c.bf16 %v7979, %v7971
  %v8100 = vpack.c.bf16 %v7988, %v7980
  %v8101 = vpack.c.bf16 %v7989, %v7981
  %v8102 = vpack.c.bf16 %v7990, %v7982
  %v8103 = vpack.c.bf16 %v7991, %v7983
  %v8104 = vpack.c.bf16 %v7992, %v7984
  %v8105 = vpack.c.bf16 %v7993, %v7985
  %v8106 = vpack.c.bf16 %v7994, %v7986
  %v8107 = vpack.c.bf16 %v7995, %v7987
  %v8108 = vpack.c.bf16 %v8004, %v7996
  %v8109 = vpack.c.bf16 %v8005, %v7997
  %v8110 = vpack.c.bf16 %v8006, %v7998
  %v8111 = vpack.c.bf16 %v8007, %v7999
  %v8112 = vpack.c.bf16 %v8008, %v8000
  %v8113 = vpack.c.bf16 %v8009, %v8001
  %v8114 = vpack.c.bf16 %v8010, %v8002
  %v8115 = vpack.c.bf16 %v8011, %v8003
  %v8116 = vpack.c.bf16 %v8020, %v8012
  %v8117 = vpack.c.bf16 %v8021, %v8013
  %v8118 = vpack.c.bf16 %v8022, %v8014
  %v8119 = vpack.c.bf16 %v8023, %v8015
  %v8120 = vpack.c.bf16 %v8024, %v8016
  %v8121 = vpack.c.bf16 %v8025, %v8017
  %v8122 = vpack.c.bf16 %v8026, %v8018
  %v8123 = vpack.c.bf16 %v8027, %v8019
  %v8124 = vpack.c.bf16 %v8036, %v8028
  %v8125 = vpack.c.bf16 %v8037, %v8029
  %v8126 = vpack.c.bf16 %v8038, %v8030
  %v8127 = vpack.c.bf16 %v8039, %v8031
  %v8128 = vpack.c.bf16 %v8040, %v8032
  %v8129 = vpack.c.bf16 %v8041, %v8033
  %v8130 = vpack.c.bf16 %v8042, %v8034
  %v8131 = vpack.c.bf16 %v8043, %v8035
  %v8132 = vpack.c.bf16 %v8052, %v8044
  %v8133 = vpack.c.bf16 %v8053, %v8045
  %v8134 = vpack.c.bf16 %v8054, %v8046
  %v8135 = vpack.c.bf16 %v8055, %v8047
  %v8136 = vpack.c.bf16 %v8056, %v8048
  %v8137 = vpack.c.bf16 %v8057, %v8049
  %v8138 = vpack.c.bf16 %v8058, %v8050
  %v8139 = vpack.c.bf16 %v8059, %v8051
  %v8140 = vpack.c.bf16 %v8068, %v8060
  %v8141 = vpack.c.bf16 %v8069, %v8061
  %v8142 = vpack.c.bf16 %v8070, %v8062
  %v8143 = vpack.c.bf16 %v8071, %v8063
  %v8144 = vpack.c.bf16 %v8072, %v8064
  %v8145 = vpack.c.bf16 %v8073, %v8065
  %v8146 = vpack.c.bf16 %v8074, %v8066
  %v8147 = vpack.c.bf16 %v8075, %v8067
  %v8148 = vld [vmem:[%s11] sm:$0xff]
  %v8149 = vld [vmem:[%s11 + $0x8] sm:$0xff]
  %v8150 = vld [vmem:[%s11 + $0x10] sm:$0xff]
  %v8151 = vld [vmem:[%s11 + $0x18] sm:$0xff]
  %v8152 = vld [vmem:[%s11 + $0x20] sm:$0xff]
  %v8153 = vld [vmem:[%s11 + $0x28] sm:$0xff]
  %v8154 = vld [vmem:[%s11 + $0x30] sm:$0xff]
  %v8155 = vld [vmem:[%s11 + $0x38] sm:$0xff]
  %v8156 = vld [vmem:[%s11 + $0x40] sm:$0xff]
  %v8157 = vld [vmem:[%s11 + $0x48] sm:$0xff]
  %v8158 = vld [vmem:[%s11 + $0x50] sm:$0xff]
  %v8159 = vld [vmem:[%s11 + $0x58] sm:$0xff]
  %v8160 = vld [vmem:[%s11 + $0x60] sm:$0xff]
  %v8161 = vld [vmem:[%s11 + $0x68] sm:$0xff]
  %v8162 = vld [vmem:[%s11 + $0x70] sm:$0xff]
  %v8163 = vld [vmem:[%s11 + $0x78] sm:$0xff]
  %v8164 = vld [vmem:[%s11 + $0x80] sm:$0xff]
  %v8165 = vld [vmem:[%s11 + $0x88] sm:$0xff]
  %v8166 = vld [vmem:[%s11 + $0x90] sm:$0xff]
  %v8167 = vld [vmem:[%s11 + $0x98] sm:$0xff]
  %v8168 = vld [vmem:[%s11 + $0xa0] sm:$0xff]
  %v8169 = vld [vmem:[%s11 + $0xa8] sm:$0xff]
  %v8170 = vld [vmem:[%s11 + $0xb0] sm:$0xff]
  %v8171 = vld [vmem:[%s11 + $0xb8] sm:$0xff]
  %v8172 = vld [vmem:[%s11 + $0xc0] sm:$0xff]
  %v8173 = vld [vmem:[%s11 + $0xc8] sm:$0xff]
  %v8174 = vld [vmem:[%s11 + $0xd0] sm:$0xff]
  %v8175 = vld [vmem:[%s11 + $0xd8] sm:$0xff]
  %v8176 = vld [vmem:[%s11 + $0xe0] sm:$0xff]
  %v8177 = vld [vmem:[%s11 + $0xe8] sm:$0xff]
  %v8178 = vld [vmem:[%s11 + $0xf0] sm:$0xff]
  %v8179 = vld [vmem:[%s11 + $0xf8] sm:$0xff]
  %v8180 = vld [vmem:[%s11 + $0x100] sm:$0xff]
  %v8181 = vld [vmem:[%s11 + $0x108] sm:$0xff]
  %v8182 = vld [vmem:[%s11 + $0x110] sm:$0xff]
  %v8183 = vld [vmem:[%s11 + $0x118] sm:$0xff]
  %v8184 = vld [vmem:[%s11 + $0x120] sm:$0xff]
  %v8185 = vld [vmem:[%s11 + $0x128] sm:$0xff]
  %v8186 = vld [vmem:[%s11 + $0x130] sm:$0xff]
  %v8187 = vld [vmem:[%s11 + $0x138] sm:$0xff]
  %v8188 = vld [vmem:[%s11 + $0x140] sm:$0xff]
  %v8189 = vld [vmem:[%s11 + $0x148] sm:$0xff]
  %v8190 = vld [vmem:[%s11 + $0x150] sm:$0xff]
  %v8191 = vld [vmem:[%s11 + $0x158] sm:$0xff]
  %v8192 = vld [vmem:[%s11 + $0x160] sm:$0xff]
  %v8193 = vld [vmem:[%s11 + $0x168] sm:$0xff]
  %v8194 = vld [vmem:[%s11 + $0x170] sm:$0xff]
  %v8195 = vld [vmem:[%s11 + $0x178] sm:$0xff]
  %v8196 = vld [vmem:[%s11 + $0x180] sm:$0xff]
  %v8197 = vld [vmem:[%s11 + $0x188] sm:$0xff]
  %v8198 = vld [vmem:[%s11 + $0x190] sm:$0xff]
  %v8199 = vld [vmem:[%s11 + $0x198] sm:$0xff]
  %v8200 = vld [vmem:[%s11 + $0x1a0] sm:$0xff]
  %v8201 = vld [vmem:[%s11 + $0x1a8] sm:$0xff]
  %v8202 = vld [vmem:[%s11 + $0x1b0] sm:$0xff]
  %v8203 = vld [vmem:[%s11 + $0x1b8] sm:$0xff]
  %v8204 = vld [vmem:[%s11 + $0x1c0] sm:$0xff]
  %v8205 = vld [vmem:[%s11 + $0x1c8] sm:$0xff]
  %v8206 = vld [vmem:[%s11 + $0x1d0] sm:$0xff]
  %v8207 = vld [vmem:[%s11 + $0x1d8] sm:$0xff]
  %v8208 = vld [vmem:[%s11 + $0x1e0] sm:$0xff]
  %v8209 = vld [vmem:[%s11 + $0x1e8] sm:$0xff]
  %v8210 = vld [vmem:[%s11 + $0x1f0] sm:$0xff]
  %v8211 = vld [vmem:[%s11 + $0x1f8] sm:$0xff]
  %v8212 = vld [vmem:[%s11 + $0x200] sm:$0xff]
  %v8213 = vld [vmem:[%s11 + $0x208] sm:$0xff]
  %v8214 = vld [vmem:[%s11 + $0x210] sm:$0xff]
  %v8215 = vld [vmem:[%s11 + $0x218] sm:$0xff]
  %v8216 = vld [vmem:[%s11 + $0x220] sm:$0xff]
  %v8217 = vld [vmem:[%s11 + $0x228] sm:$0xff]
  %v8218 = vld [vmem:[%s11 + $0x230] sm:$0xff]
  %v8219 = vld [vmem:[%s11 + $0x238] sm:$0xff]
  %v8220 = vld [vmem:[%s11 + $0x240] sm:$0xff]
  %v8221 = vld [vmem:[%s11 + $0x248] sm:$0xff]
  %v8222 = vld [vmem:[%s11 + $0x250] sm:$0xff]
  %v8223 = vld [vmem:[%s11 + $0x258] sm:$0xff]
  %v8224 = vld [vmem:[%s11 + $0x260] sm:$0xff]
  %v8225 = vld [vmem:[%s11 + $0x268] sm:$0xff]
  %v8226 = vld [vmem:[%s11 + $0x270] sm:$0xff]
  %v8227 = vld [vmem:[%s11 + $0x278] sm:$0xff]
  %v8228 = vld [vmem:[%s11 + $0x280] sm:$0xff]
  %v8229 = vld [vmem:[%s11 + $0x288] sm:$0xff]
  %v8230 = vld [vmem:[%s11 + $0x290] sm:$0xff]
  %v8231 = vld [vmem:[%s11 + $0x298] sm:$0xff]
  %v8232 = vld [vmem:[%s11 + $0x2a0] sm:$0xff]
  %v8233 = vld [vmem:[%s11 + $0x2a8] sm:$0xff]
  %v8234 = vld [vmem:[%s11 + $0x2b0] sm:$0xff]
  %v8235 = vld [vmem:[%s11 + $0x2b8] sm:$0xff]
  %v8236 = vld [vmem:[%s11 + $0x2c0] sm:$0xff]
  %v8237 = vld [vmem:[%s11 + $0x2c8] sm:$0xff]
  %v8238 = vld [vmem:[%s11 + $0x2d0] sm:$0xff]
  %v8239 = vld [vmem:[%s11 + $0x2d8] sm:$0xff]
  %v8240 = vld [vmem:[%s11 + $0x2e0] sm:$0xff]
  %v8241 = vld [vmem:[%s11 + $0x2e8] sm:$0xff]
  %v8242 = vld [vmem:[%s11 + $0x2f0] sm:$0xff]
  %v8243 = vld [vmem:[%s11 + $0x2f8] sm:$0xff]
  %v8244 = vld [vmem:[%s11 + $0x300] sm:$0xff]
  %v8245 = vld [vmem:[%s11 + $0x308] sm:$0xff]
  %v8246 = vld [vmem:[%s11 + $0x310] sm:$0xff]
  %v8247 = vld [vmem:[%s11 + $0x318] sm:$0xff]
  %v8248 = vld [vmem:[%s11 + $0x320] sm:$0xff]
  %v8249 = vld [vmem:[%s11 + $0x328] sm:$0xff]
  %v8250 = vld [vmem:[%s11 + $0x330] sm:$0xff]
  %v8251 = vld [vmem:[%s11 + $0x338] sm:$0xff]
  %v8252 = vld [vmem:[%s11 + $0x340] sm:$0xff]
  %v8253 = vld [vmem:[%s11 + $0x348] sm:$0xff]
  %v8254 = vld [vmem:[%s11 + $0x350] sm:$0xff]
  %v8255 = vld [vmem:[%s11 + $0x358] sm:$0xff]
  %v8256 = vld [vmem:[%s11 + $0x360] sm:$0xff]
  %v8257 = vld [vmem:[%s11 + $0x368] sm:$0xff]
  %v8258 = vld [vmem:[%s11 + $0x370] sm:$0xff]
  %v8259 = vld [vmem:[%s11 + $0x378] sm:$0xff]
  %v8260 = vld [vmem:[%s11 + $0x380] sm:$0xff]
  %v8261 = vld [vmem:[%s11 + $0x388] sm:$0xff]
  %v8262 = vld [vmem:[%s11 + $0x390] sm:$0xff]
  %v8263 = vld [vmem:[%s11 + $0x398] sm:$0xff]
  %v8264 = vld [vmem:[%s11 + $0x3a0] sm:$0xff]
  %v8265 = vld [vmem:[%s11 + $0x3a8] sm:$0xff]
  %v8266 = vld [vmem:[%s11 + $0x3b0] sm:$0xff]
  %v8267 = vld [vmem:[%s11 + $0x3b8] sm:$0xff]
  %v8268 = vld [vmem:[%s11 + $0x3c0] sm:$0xff]
  %v8269 = vld [vmem:[%s11 + $0x3c8] sm:$0xff]
  %v8270 = vld [vmem:[%s11 + $0x3d0] sm:$0xff]
  %v8271 = vld [vmem:[%s11 + $0x3d8] sm:$0xff]
  %v8272 = vld [vmem:[%s11 + $0x3e0] sm:$0xff]
  %v8273 = vld [vmem:[%s11 + $0x3e8] sm:$0xff]
  %v8274 = vld [vmem:[%s11 + $0x3f0] sm:$0xff]
  %v8275 = vld [vmem:[%s11 + $0x3f8] sm:$0xff]
  %v8276 = vld [vmem:[%s12] sm:$0x3]
  %v8278 = vlaneseq
  %v8279 = vshrl.u32 %v8278, 7
  %v8280 = vsub.s32 0, %v8279
  %v8281 = vrot.slane %v8276, %v8280
  %v8282 = vlaneseq
  %v8283 = vshrl.u32 %v8282, 7
  %v8284 = vsub.s32 1, %v8283
  %v8285 = vrot.slane %v8276, %v8284
  %v8416 = vunpack.c.l.b16 %v8148
  %v8417 = vunpack.c.h.b16 %v8148
  %v8418 = vunpack.c.l.b16 %v8149
  %v8419 = vunpack.c.h.b16 %v8149
  %v8420 = vunpack.c.l.b16 %v8150
  %v8421 = vunpack.c.h.b16 %v8150
  %v8422 = vunpack.c.l.b16 %v8151
  %v8423 = vunpack.c.h.b16 %v8151
  %v8424 = vunpack.c.l.b16 %v8152
  %v8425 = vunpack.c.h.b16 %v8152
  %v8426 = vunpack.c.l.b16 %v8153
  %v8427 = vunpack.c.h.b16 %v8153
  %v8428 = vunpack.c.l.b16 %v8154
  %v8429 = vunpack.c.h.b16 %v8154
  %v8430 = vunpack.c.l.b16 %v8155
  %v8431 = vunpack.c.h.b16 %v8155
  %v8432 = vunpack.c.l.b16 %v8156
  %v8433 = vunpack.c.h.b16 %v8156
  %v8434 = vunpack.c.l.b16 %v8157
  %v8435 = vunpack.c.h.b16 %v8157
  %v8436 = vunpack.c.l.b16 %v8158
  %v8437 = vunpack.c.h.b16 %v8158
  %v8438 = vunpack.c.l.b16 %v8159
  %v8439 = vunpack.c.h.b16 %v8159
  %v8440 = vunpack.c.l.b16 %v8160
  %v8441 = vunpack.c.h.b16 %v8160
  %v8442 = vunpack.c.l.b16 %v8161
  %v8443 = vunpack.c.h.b16 %v8161
  %v8444 = vunpack.c.l.b16 %v8162
  %v8445 = vunpack.c.h.b16 %v8162
  %v8446 = vunpack.c.l.b16 %v8163
  %v8447 = vunpack.c.h.b16 %v8163
  %v8448 = vunpack.c.l.b16 %v8164
  %v8449 = vunpack.c.h.b16 %v8164
  %v8450 = vunpack.c.l.b16 %v8165
  %v8451 = vunpack.c.h.b16 %v8165
  %v8452 = vunpack.c.l.b16 %v8166
  %v8453 = vunpack.c.h.b16 %v8166
  %v8454 = vunpack.c.l.b16 %v8167
  %v8455 = vunpack.c.h.b16 %v8167
  %v8456 = vunpack.c.l.b16 %v8168
  %v8457 = vunpack.c.h.b16 %v8168
  %v8458 = vunpack.c.l.b16 %v8169
  %v8459 = vunpack.c.h.b16 %v8169
  %v8460 = vunpack.c.l.b16 %v8170
  %v8461 = vunpack.c.h.b16 %v8170
  %v8462 = vunpack.c.l.b16 %v8171
  %v8463 = vunpack.c.h.b16 %v8171
  %v8464 = vunpack.c.l.b16 %v8172
  %v8465 = vunpack.c.h.b16 %v8172
  %v8466 = vunpack.c.l.b16 %v8173
  %v8467 = vunpack.c.h.b16 %v8173
  %v8468 = vunpack.c.l.b16 %v8174
  %v8469 = vunpack.c.h.b16 %v8174
  %v8470 = vunpack.c.l.b16 %v8175
  %v8471 = vunpack.c.h.b16 %v8175
  %v8472 = vunpack.c.l.b16 %v8176
  %v8473 = vunpack.c.h.b16 %v8176
  %v8474 = vunpack.c.l.b16 %v8177
  %v8475 = vunpack.c.h.b16 %v8177
  %v8476 = vunpack.c.l.b16 %v8178
  %v8477 = vunpack.c.h.b16 %v8178
  %v8478 = vunpack.c.l.b16 %v8179
  %v8479 = vunpack.c.h.b16 %v8179
  %v8480 = vunpack.c.l.b16 %v8180
  %v8481 = vunpack.c.h.b16 %v8180
  %v8482 = vunpack.c.l.b16 %v8181
  %v8483 = vunpack.c.h.b16 %v8181
  %v8484 = vunpack.c.l.b16 %v8182
  %v8485 = vunpack.c.h.b16 %v8182
  %v8486 = vunpack.c.l.b16 %v8183
  %v8487 = vunpack.c.h.b16 %v8183
  %v8488 = vunpack.c.l.b16 %v8184
  %v8489 = vunpack.c.h.b16 %v8184
  %v8490 = vunpack.c.l.b16 %v8185
  %v8491 = vunpack.c.h.b16 %v8185
  %v8492 = vunpack.c.l.b16 %v8186
  %v8493 = vunpack.c.h.b16 %v8186
  %v8494 = vunpack.c.l.b16 %v8187
  %v8495 = vunpack.c.h.b16 %v8187
  %v8496 = vunpack.c.l.b16 %v8188
  %v8497 = vunpack.c.h.b16 %v8188
  %v8498 = vunpack.c.l.b16 %v8189
  %v8499 = vunpack.c.h.b16 %v8189
  %v8500 = vunpack.c.l.b16 %v8190
  %v8501 = vunpack.c.h.b16 %v8190
  %v8502 = vunpack.c.l.b16 %v8191
  %v8503 = vunpack.c.h.b16 %v8191
  %v8504 = vunpack.c.l.b16 %v8192
  %v8505 = vunpack.c.h.b16 %v8192
  %v8506 = vunpack.c.l.b16 %v8193
  %v8507 = vunpack.c.h.b16 %v8193
  %v8508 = vunpack.c.l.b16 %v8194
  %v8509 = vunpack.c.h.b16 %v8194
  %v8510 = vunpack.c.l.b16 %v8195
  %v8511 = vunpack.c.h.b16 %v8195
  %v8512 = vunpack.c.l.b16 %v8196
  %v8513 = vunpack.c.h.b16 %v8196
  %v8514 = vunpack.c.l.b16 %v8197
  %v8515 = vunpack.c.h.b16 %v8197
  %v8516 = vunpack.c.l.b16 %v8198
  %v8517 = vunpack.c.h.b16 %v8198
  %v8518 = vunpack.c.l.b16 %v8199
  %v8519 = vunpack.c.h.b16 %v8199
  %v8520 = vunpack.c.l.b16 %v8200
  %v8521 = vunpack.c.h.b16 %v8200
  %v8522 = vunpack.c.l.b16 %v8201
  %v8523 = vunpack.c.h.b16 %v8201
  %v8524 = vunpack.c.l.b16 %v8202
  %v8525 = vunpack.c.h.b16 %v8202
  %v8526 = vunpack.c.l.b16 %v8203
  %v8527 = vunpack.c.h.b16 %v8203
  %v8528 = vunpack.c.l.b16 %v8204
  %v8529 = vunpack.c.h.b16 %v8204
  %v8530 = vunpack.c.l.b16 %v8205
  %v8531 = vunpack.c.h.b16 %v8205
  %v8532 = vunpack.c.l.b16 %v8206
  %v8533 = vunpack.c.h.b16 %v8206
  %v8534 = vunpack.c.l.b16 %v8207
  %v8535 = vunpack.c.h.b16 %v8207
  %v8536 = vunpack.c.l.b16 %v8208
  %v8537 = vunpack.c.h.b16 %v8208
  %v8538 = vunpack.c.l.b16 %v8209
  %v8539 = vunpack.c.h.b16 %v8209
  %v8540 = vunpack.c.l.b16 %v8210
  %v8541 = vunpack.c.h.b16 %v8210
  %v8542 = vunpack.c.l.b16 %v8211
  %v8543 = vunpack.c.h.b16 %v8211
  %v8544 = vunpack.c.l.b16 %v8212
  %v8545 = vunpack.c.h.b16 %v8212
  %v8546 = vunpack.c.l.b16 %v8213
  %v8547 = vunpack.c.h.b16 %v8213
  %v8548 = vunpack.c.l.b16 %v8214
  %v8549 = vunpack.c.h.b16 %v8214
  %v8550 = vunpack.c.l.b16 %v8215
  %v8551 = vunpack.c.h.b16 %v8215
  %v8552 = vunpack.c.l.b16 %v8216
  %v8553 = vunpack.c.h.b16 %v8216
  %v8554 = vunpack.c.l.b16 %v8217
  %v8555 = vunpack.c.h.b16 %v8217
  %v8556 = vunpack.c.l.b16 %v8218
  %v8557 = vunpack.c.h.b16 %v8218
  %v8558 = vunpack.c.l.b16 %v8219
  %v8559 = vunpack.c.h.b16 %v8219
  %v8560 = vunpack.c.l.b16 %v8220
  %v8561 = vunpack.c.h.b16 %v8220
  %v8562 = vunpack.c.l.b16 %v8221
  %v8563 = vunpack.c.h.b16 %v8221
  %v8564 = vunpack.c.l.b16 %v8222
  %v8565 = vunpack.c.h.b16 %v8222
  %v8566 = vunpack.c.l.b16 %v8223
  %v8567 = vunpack.c.h.b16 %v8223
  %v8568 = vunpack.c.l.b16 %v8224
  %v8569 = vunpack.c.h.b16 %v8224
  %v8570 = vunpack.c.l.b16 %v8225
  %v8571 = vunpack.c.h.b16 %v8225
  %v8572 = vunpack.c.l.b16 %v8226
  %v8573 = vunpack.c.h.b16 %v8226
  %v8574 = vunpack.c.l.b16 %v8227
  %v8575 = vunpack.c.h.b16 %v8227
  %v8576 = vunpack.c.l.b16 %v8228
  %v8577 = vunpack.c.h.b16 %v8228
  %v8578 = vunpack.c.l.b16 %v8229
  %v8579 = vunpack.c.h.b16 %v8229
  %v8580 = vunpack.c.l.b16 %v8230
  %v8581 = vunpack.c.h.b16 %v8230
  %v8582 = vunpack.c.l.b16 %v8231
  %v8583 = vunpack.c.h.b16 %v8231
  %v8584 = vunpack.c.l.b16 %v8232
  %v8585 = vunpack.c.h.b16 %v8232
  %v8586 = vunpack.c.l.b16 %v8233
  %v8587 = vunpack.c.h.b16 %v8233
  %v8588 = vunpack.c.l.b16 %v8234
  %v8589 = vunpack.c.h.b16 %v8234
  %v8590 = vunpack.c.l.b16 %v8235
  %v8591 = vunpack.c.h.b16 %v8235
  %v8592 = vunpack.c.l.b16 %v8236
  %v8593 = vunpack.c.h.b16 %v8236
  %v8594 = vunpack.c.l.b16 %v8237
  %v8595 = vunpack.c.h.b16 %v8237
  %v8596 = vunpack.c.l.b16 %v8238
  %v8597 = vunpack.c.h.b16 %v8238
  %v8598 = vunpack.c.l.b16 %v8239
  %v8599 = vunpack.c.h.b16 %v8239
  %v8600 = vunpack.c.l.b16 %v8240
  %v8601 = vunpack.c.h.b16 %v8240
  %v8602 = vunpack.c.l.b16 %v8241
  %v8603 = vunpack.c.h.b16 %v8241
  %v8604 = vunpack.c.l.b16 %v8242
  %v8605 = vunpack.c.h.b16 %v8242
  %v8606 = vunpack.c.l.b16 %v8243
  %v8607 = vunpack.c.h.b16 %v8243
  %v8608 = vunpack.c.l.b16 %v8244
  %v8609 = vunpack.c.h.b16 %v8244
  %v8610 = vunpack.c.l.b16 %v8245
  %v8611 = vunpack.c.h.b16 %v8245
  %v8612 = vunpack.c.l.b16 %v8246
  %v8613 = vunpack.c.h.b16 %v8246
  %v8614 = vunpack.c.l.b16 %v8247
  %v8615 = vunpack.c.h.b16 %v8247
  %v8616 = vunpack.c.l.b16 %v8248
  %v8617 = vunpack.c.h.b16 %v8248
  %v8618 = vunpack.c.l.b16 %v8249
  %v8619 = vunpack.c.h.b16 %v8249
  %v8620 = vunpack.c.l.b16 %v8250
  %v8621 = vunpack.c.h.b16 %v8250
  %v8622 = vunpack.c.l.b16 %v8251
  %v8623 = vunpack.c.h.b16 %v8251
  %v8624 = vunpack.c.l.b16 %v8252
  %v8625 = vunpack.c.h.b16 %v8252
  %v8626 = vunpack.c.l.b16 %v8253
  %v8627 = vunpack.c.h.b16 %v8253
  %v8628 = vunpack.c.l.b16 %v8254
  %v8629 = vunpack.c.h.b16 %v8254
  %v8630 = vunpack.c.l.b16 %v8255
  %v8631 = vunpack.c.h.b16 %v8255
  %v8632 = vunpack.c.l.b16 %v8256
  %v8633 = vunpack.c.h.b16 %v8256
  %v8634 = vunpack.c.l.b16 %v8257
  %v8635 = vunpack.c.h.b16 %v8257
  %v8636 = vunpack.c.l.b16 %v8258
  %v8637 = vunpack.c.h.b16 %v8258
  %v8638 = vunpack.c.l.b16 %v8259
  %v8639 = vunpack.c.h.b16 %v8259
  %v8640 = vunpack.c.l.b16 %v8260
  %v8641 = vunpack.c.h.b16 %v8260
  %v8642 = vunpack.c.l.b16 %v8261
  %v8643 = vunpack.c.h.b16 %v8261
  %v8644 = vunpack.c.l.b16 %v8262
  %v8645 = vunpack.c.h.b16 %v8262
  %v8646 = vunpack.c.l.b16 %v8263
  %v8647 = vunpack.c.h.b16 %v8263
  %v8648 = vunpack.c.l.b16 %v8264
  %v8649 = vunpack.c.h.b16 %v8264
  %v8650 = vunpack.c.l.b16 %v8265
  %v8651 = vunpack.c.h.b16 %v8265
  %v8652 = vunpack.c.l.b16 %v8266
  %v8653 = vunpack.c.h.b16 %v8266
  %v8654 = vunpack.c.l.b16 %v8267
  %v8655 = vunpack.c.h.b16 %v8267
  %v8656 = vunpack.c.l.b16 %v8268
  %v8657 = vunpack.c.h.b16 %v8268
  %v8658 = vunpack.c.l.b16 %v8269
  %v8659 = vunpack.c.h.b16 %v8269
  %v8660 = vunpack.c.l.b16 %v8270
  %v8661 = vunpack.c.h.b16 %v8270
  %v8662 = vunpack.c.l.b16 %v8271
  %v8663 = vunpack.c.h.b16 %v8271
  %v8664 = vunpack.c.l.b16 %v8272
  %v8665 = vunpack.c.h.b16 %v8272
  %v8666 = vunpack.c.l.b16 %v8273
  %v8667 = vunpack.c.h.b16 %v8273
  %v8668 = vunpack.c.l.b16 %v8274
  %v8669 = vunpack.c.h.b16 %v8274
  %v8670 = vunpack.c.l.b16 %v8275
  %v8671 = vunpack.c.h.b16 %v8275
  %v8672 = vpack.c.b16 %v8418, %v8416
  %v8673 = vpack.c.b16 %v8419, %v8417
  %v8674 = vpack.c.b16 %v8422, %v8420
  %v8675 = vpack.c.b16 %v8423, %v8421
  %v8676 = vpack.c.b16 %v8426, %v8424
  %v8677 = vpack.c.b16 %v8427, %v8425
  %v8678 = vpack.c.b16 %v8430, %v8428
  %v8679 = vpack.c.b16 %v8431, %v8429
  %v8680 = vpack.c.b16 %v8434, %v8432
  %v8681 = vpack.c.b16 %v8435, %v8433
  %v8682 = vpack.c.b16 %v8438, %v8436
  %v8683 = vpack.c.b16 %v8439, %v8437
  %v8684 = vpack.c.b16 %v8442, %v8440
  %v8685 = vpack.c.b16 %v8443, %v8441
  %v8686 = vpack.c.b16 %v8446, %v8444
  %v8687 = vpack.c.b16 %v8447, %v8445
  %v8688 = vpack.c.b16 %v8450, %v8448
  %v8689 = vpack.c.b16 %v8451, %v8449
  %v8690 = vpack.c.b16 %v8454, %v8452
  %v8691 = vpack.c.b16 %v8455, %v8453
  %v8692 = vpack.c.b16 %v8458, %v8456
  %v8693 = vpack.c.b16 %v8459, %v8457
  %v8694 = vpack.c.b16 %v8462, %v8460
  %v8695 = vpack.c.b16 %v8463, %v8461
  %v8696 = vpack.c.b16 %v8466, %v8464
  %v8697 = vpack.c.b16 %v8467, %v8465
  %v8698 = vpack.c.b16 %v8470, %v8468
  %v8699 = vpack.c.b16 %v8471, %v8469
  %v8700 = vpack.c.b16 %v8474, %v8472
  %v8701 = vpack.c.b16 %v8475, %v8473
  %v8702 = vpack.c.b16 %v8478, %v8476
  %v8703 = vpack.c.b16 %v8479, %v8477
  %v8704 = vpack.c.b16 %v8482, %v8480
  %v8705 = vpack.c.b16 %v8483, %v8481
  %v8706 = vpack.c.b16 %v8486, %v8484
  %v8707 = vpack.c.b16 %v8487, %v8485
  %v8708 = vpack.c.b16 %v8490, %v8488
  %v8709 = vpack.c.b16 %v8491, %v8489
  %v8710 = vpack.c.b16 %v8494, %v8492
  %v8711 = vpack.c.b16 %v8495, %v8493
  %v8712 = vpack.c.b16 %v8498, %v8496
  %v8713 = vpack.c.b16 %v8499, %v8497
  %v8714 = vpack.c.b16 %v8502, %v8500
  %v8715 = vpack.c.b16 %v8503, %v8501
  %v8716 = vpack.c.b16 %v8506, %v8504
  %v8717 = vpack.c.b16 %v8507, %v8505
  %v8718 = vpack.c.b16 %v8510, %v8508
  %v8719 = vpack.c.b16 %v8511, %v8509
  %v8720 = vpack.c.b16 %v8514, %v8512
  %v8721 = vpack.c.b16 %v8515, %v8513
  %v8722 = vpack.c.b16 %v8518, %v8516
  %v8723 = vpack.c.b16 %v8519, %v8517
  %v8724 = vpack.c.b16 %v8522, %v8520
  %v8725 = vpack.c.b16 %v8523, %v8521
  %v8726 = vpack.c.b16 %v8526, %v8524
  %v8727 = vpack.c.b16 %v8527, %v8525
  %v8728 = vpack.c.b16 %v8530, %v8528
  %v8729 = vpack.c.b16 %v8531, %v8529
  %v8730 = vpack.c.b16 %v8534, %v8532
  %v8731 = vpack.c.b16 %v8535, %v8533
  %v8732 = vpack.c.b16 %v8538, %v8536
  %v8733 = vpack.c.b16 %v8539, %v8537
  %v8734 = vpack.c.b16 %v8542, %v8540
  %v8735 = vpack.c.b16 %v8543, %v8541
  %v8736 = vpack.c.b16 %v8546, %v8544
  %v8737 = vpack.c.b16 %v8547, %v8545
  %v8738 = vpack.c.b16 %v8550, %v8548
  %v8739 = vpack.c.b16 %v8551, %v8549
  %v8740 = vpack.c.b16 %v8554, %v8552
  %v8741 = vpack.c.b16 %v8555, %v8553
  %v8742 = vpack.c.b16 %v8558, %v8556
  %v8743 = vpack.c.b16 %v8559, %v8557
  %v8744 = vpack.c.b16 %v8562, %v8560
  %v8745 = vpack.c.b16 %v8563, %v8561
  %v8746 = vpack.c.b16 %v8566, %v8564
  %v8747 = vpack.c.b16 %v8567, %v8565
  %v8748 = vpack.c.b16 %v8570, %v8568
  %v8749 = vpack.c.b16 %v8571, %v8569
  %v8750 = vpack.c.b16 %v8574, %v8572
  %v8751 = vpack.c.b16 %v8575, %v8573
  %v8752 = vpack.c.b16 %v8578, %v8576
  %v8753 = vpack.c.b16 %v8579, %v8577
  %v8754 = vpack.c.b16 %v8582, %v8580
  %v8755 = vpack.c.b16 %v8583, %v8581
  %v8756 = vpack.c.b16 %v8586, %v8584
  %v8757 = vpack.c.b16 %v8587, %v8585
  %v8758 = vpack.c.b16 %v8590, %v8588
  %v8759 = vpack.c.b16 %v8591, %v8589
  %v8760 = vpack.c.b16 %v8594, %v8592
  %v8761 = vpack.c.b16 %v8595, %v8593
  %v8762 = vpack.c.b16 %v8598, %v8596
  %v8763 = vpack.c.b16 %v8599, %v8597
  %v8764 = vpack.c.b16 %v8602, %v8600
  %v8765 = vpack.c.b16 %v8603, %v8601
  %v8766 = vpack.c.b16 %v8606, %v8604
  %v8767 = vpack.c.b16 %v8607, %v8605
  %v8768 = vpack.c.b16 %v8610, %v8608
  %v8769 = vpack.c.b16 %v8611, %v8609
  %v8770 = vpack.c.b16 %v8614, %v8612
  %v8771 = vpack.c.b16 %v8615, %v8613
  %v8772 = vpack.c.b16 %v8618, %v8616
  %v8773 = vpack.c.b16 %v8619, %v8617
  %v8774 = vpack.c.b16 %v8622, %v8620
  %v8775 = vpack.c.b16 %v8623, %v8621
  %v8776 = vpack.c.b16 %v8626, %v8624
  %v8777 = vpack.c.b16 %v8627, %v8625
  %v8778 = vpack.c.b16 %v8630, %v8628
  %v8779 = vpack.c.b16 %v8631, %v8629
  %v8780 = vpack.c.b16 %v8634, %v8632
  %v8781 = vpack.c.b16 %v8635, %v8633
  %v8782 = vpack.c.b16 %v8638, %v8636
  %v8783 = vpack.c.b16 %v8639, %v8637
  %v8784 = vpack.c.b16 %v8642, %v8640
  %v8785 = vpack.c.b16 %v8643, %v8641
  %v8786 = vpack.c.b16 %v8646, %v8644
  %v8787 = vpack.c.b16 %v8647, %v8645
  %v8788 = vpack.c.b16 %v8650, %v8648
  %v8789 = vpack.c.b16 %v8651, %v8649
  %v8790 = vpack.c.b16 %v8654, %v8652
  %v8791 = vpack.c.b16 %v8655, %v8653
  %v8792 = vpack.c.b16 %v8658, %v8656
  %v8793 = vpack.c.b16 %v8659, %v8657
  %v8794 = vpack.c.b16 %v8662, %v8660
  %v8795 = vpack.c.b16 %v8663, %v8661
  %v8796 = vpack.c.b16 %v8666, %v8664
  %v8797 = vpack.c.b16 %v8667, %v8665
  %v8798 = vpack.c.b16 %v8670, %v8668
  %v8799 = vpack.c.b16 %v8671, %v8669
  %8928 = vmatprep.subr.bf16.mxu0 %v8673
  %8929 = vmatpush1.bf16.msra.mxu0 %v8672
  %8930 = vmatprep.subr.bf16.mxu0 %v8675
  %8931 = vmatpush1.bf16.msra.mxu0 %v8674
  %8932 = vmatprep.subr.bf16.mxu0 %v8677
  %8933 = vmatpush1.bf16.msra.mxu0 %v8676
  %8934 = vmatprep.subr.bf16.mxu0 %v8679
  %8935 = vmatpush1.bf16.msra.mxu0 %v8678
  %8936 = vmatprep.subr.bf16.mxu0 %v8681
  %8937 = vmatpush1.bf16.msra.mxu0 %v8680
  %8938 = vmatprep.subr.bf16.mxu0 %v8683
  %8939 = vmatpush1.bf16.msra.mxu0 %v8682
  %8940 = vmatprep.subr.bf16.mxu0 %v8685
  %8941 = vmatpush1.bf16.msra.mxu0 %v8684
  %8942 = vmatprep.subr.bf16.mxu0 %v8687
  %8943 = vmatpush1.bf16.msra.mxu0 %v8686
  %8944 = vmatprep.subr.bf16.mxu0 %v8689
  %8945 = vmatpush1.bf16.msra.mxu0 %v8688
  %8946 = vmatprep.subr.bf16.mxu0 %v8691
  %8947 = vmatpush1.bf16.msra.mxu0 %v8690
  %8948 = vmatprep.subr.bf16.mxu0 %v8693
  %8949 = vmatpush1.bf16.msra.mxu0 %v8692
  %8950 = vmatprep.subr.bf16.mxu0 %v8695
  %8951 = vmatpush1.bf16.msra.mxu0 %v8694
  %8952 = vmatprep.subr.bf16.mxu0 %v8697
  %8953 = vmatpush1.bf16.msra.mxu0 %v8696
  %8954 = vmatprep.subr.bf16.mxu0 %v8699
  %8955 = vmatpush1.bf16.msra.mxu0 %v8698
  %8956 = vmatprep.subr.bf16.mxu0 %v8701
  %8957 = vmatpush1.bf16.msra.mxu0 %v8700
  %8958 = vmatprep.subr.bf16.mxu0 %v8703
  %8959 = vmatpush1.bf16.msra.mxu0 %v8702
  %8960 = vmatprep.mubr.bf16.mxu0 %v8077
  %8961 = vmatmul.mubr.bf16.gmra.mrb[0].mxu0 %v8076
  %v8962 = vpop.f32.mrb[0].mxu0
  %v8963 = vadd.f32 %v8281, %v8962
  %v8964 = vpop.f32.mrb[0].mxu0
  %v8965 = vadd.f32 %v8285, %v8964
  %v8966 = vpop.f32.mrb[0].mxu0
  %v8967 = vadd.f32 %v8281, %v8966
  %v8968 = vpop.f32.mrb[0].mxu0
  %v8969 = vadd.f32 %v8285, %v8968
  %8970 = vmatprep.mubr.bf16.mxu0 %v8085
  %8971 = vmatmul.mubr.bf16.gmra.mrb[0].mxu0 %v8084
  %v8972 = vpop.f32.mrb[0].mxu0
  %v8973 = vadd.f32 %v8281, %v8972
  %v8974 = vpop.f32.mrb[0].mxu0
  %v8975 = vadd.f32 %v8285, %v8974
  %v8976 = vpop.f32.mrb[0].mxu0
  %v8977 = vadd.f32 %v8281, %v8976
  %v8978 = vpop.f32.mrb[0].mxu0
  %v8979 = vadd.f32 %v8285, %v8978
  %8980 = vmatprep.mubr.bf16.mxu0 %v8093
  %8981 = vmatmul.mubr.bf16.gmra.mrb[0].mxu0 %v8092
  %v8982 = vpop.f32.mrb[0].mxu0
  %v8983 = vadd.f32 %v8281, %v8982
  %v8984 = vpop.f32.mrb[0].mxu0
  %v8985 = vadd.f32 %v8285, %v8984
  %v8986 = vpop.f32.mrb[0].mxu0
  %v8987 = vadd.f32 %v8281, %v8986
  %v8988 = vpop.f32.mrb[0].mxu0
  %v8989 = vadd.f32 %v8285, %v8988
  %8990 = vmatprep.mubr.bf16.mxu0 %v8101
  %8991 = vmatmul.mubr.bf16.gmra.mrb[0].mxu0 %v8100
  %v8992 = vpop.f32.mrb[0].mxu0
  %v8993 = vadd.f32 %v8281, %v8992
  %v8994 = vpop.f32.mrb[0].mxu0
  %v8995 = vadd.f32 %v8285, %v8994
  %v8996 = vpop.f32.mrb[0].mxu0
  %v8997 = vadd.f32 %v8281, %v8996
  %v8998 = vpop.f32.mrb[0].mxu0
  %v8999 = vadd.f32 %v8285, %v8998
  %9000 = vmatprep.mubr.bf16.mxu0 %v8109
  %9001 = vmatmul.mubr.bf16.gmra.mrb[0].mxu0 %v8108
  %v9002 = vpop.f32.mrb[0].mxu0
  %v9003 = vadd.f32 %v8281, %v9002
  %v9004 = vpop.f32.mrb[0].mxu0
  %v9005 = vadd.f32 %v8285, %v9004
  %v9006 = vpop.f32.mrb[0].mxu0
  %v9007 = vadd.f32 %v8281, %v9006
  %v9008 = vpop.f32.mrb[0].mxu0
  %v9009 = vadd.f32 %v8285, %v9008
  %9010 = vmatprep.mubr.bf16.mxu0 %v8117
  %9011 = vmatmul.mubr.bf16.gmra.mrb[0].mxu0 %v8116
  %v9012 = vpop.f32.mrb[0].mxu0
  %v9013 = vadd.f32 %v8281, %v9012
  %v9014 = vpop.f32.mrb[0].mxu0
  %v9015 = vadd.f32 %v8285, %v9014
  %v9016 = vpop.f32.mrb[0].mxu0
  %v9017 = vadd.f32 %v8281, %v9016
  %v9018 = vpop.f32.mrb[0].mxu0
  %v9019 = vadd.f32 %v8285, %v9018
  %9020 = vmatprep.mubr.bf16.mxu0 %v8125
  %9021 = vmatmul.mubr.bf16.gmra.mrb[0].mxu0 %v8124
  %v9022 = vpop.f32.mrb[0].mxu0
  %v9023 = vadd.f32 %v8281, %v9022
  %v9024 = vpop.f32.mrb[0].mxu0
  %v9025 = vadd.f32 %v8285, %v9024
  %v9026 = vpop.f32.mrb[0].mxu0
  %v9027 = vadd.f32 %v8281, %v9026
  %v9028 = vpop.f32.mrb[0].mxu0
  %v9029 = vadd.f32 %v8285, %v9028
  %9030 = vmatprep.mubr.bf16.mxu0 %v8133
  %9031 = vmatmul.mubr.bf16.gmra.mrb[0].mxu0 %v8132
  %v9032 = vpop.f32.mrb[0].mxu0
  %v9033 = vadd.f32 %v8281, %v9032
  %v9034 = vpop.f32.mrb[0].mxu0
  %v9035 = vadd.f32 %v8285, %v9034
  %v9036 = vpop.f32.mrb[0].mxu0
  %v9037 = vadd.f32 %v8281, %v9036
  %v9038 = vpop.f32.mrb[0].mxu0
  %v9039 = vadd.f32 %v8285, %v9038
  %9040 = vmatprep.mubr.bf16.mxu0 %v8141
  %9041 = vmatmul.mubr.bf16.gmra.mrb[0].mxu0 %v8140
  %v9042 = vpop.f32.mrb[0].mxu0
  %v9043 = vadd.f32 %v8281, %v9042
  %v9044 = vpop.f32.mrb[0].mxu0
  %v9045 = vadd.f32 %v8285, %v9044
  %v9046 = vpop.f32.mrb[0].mxu0
  %v9047 = vadd.f32 %v8281, %v9046
  %v9048 = vpop.f32.mrb[0].mxu0
  %v9049 = vadd.f32 %v8285, %v9048
  %9050 = vdwg.mxu0
  %9051 = vmatprep.subr.bf16.mxu0 %v8705
  %9052 = vmatpush1.bf16.msra.mxu0 %v8704
  %9053 = vmatprep.subr.bf16.mxu0 %v8707
  %9054 = vmatpush1.bf16.msra.mxu0 %v8706
  %9055 = vmatprep.subr.bf16.mxu0 %v8709
  %9056 = vmatpush1.bf16.msra.mxu0 %v8708
  %9057 = vmatprep.subr.bf16.mxu0 %v8711
  %9058 = vmatpush1.bf16.msra.mxu0 %v8710
  %9059 = vmatprep.subr.bf16.mxu0 %v8713
  %9060 = vmatpush1.bf16.msra.mxu0 %v8712
  %9061 = vmatprep.subr.bf16.mxu0 %v8715
  %9062 = vmatpush1.bf16.msra.mxu0 %v8714
  %9063 = vmatprep.subr.bf16.mxu0 %v8717
  %9064 = vmatpush1.bf16.msra.mxu0 %v8716
  %9065 = vmatprep.subr.bf16.mxu0 %v8719
  %9066 = vmatpush1.bf16.msra.mxu0 %v8718
  %9067 = vmatprep.subr.bf16.mxu0 %v8721
  %9068 = vmatpush1.bf16.msra.mxu0 %v8720
  %9069 = vmatprep.subr.bf16.mxu0 %v8723
  %9070 = vmatpush1.bf16.msra.mxu0 %v8722
  %9071 = vmatprep.subr.bf16.mxu0 %v8725
  %9072 = vmatpush1.bf16.msra.mxu0 %v8724
  %9073 = vmatprep.subr.bf16.mxu0 %v8727
  %9074 = vmatpush1.bf16.msra.mxu0 %v8726
  %9075 = vmatprep.subr.bf16.mxu0 %v8729
  %9076 = vmatpush1.bf16.msra.mxu0 %v8728
  %9077 = vmatprep.subr.bf16.mxu0 %v8731
  %9078 = vmatpush1.bf16.msra.mxu0 %v8730
  %9079 = vmatprep.subr.bf16.mxu0 %v8733
  %9080 = vmatpush1.bf16.msra.mxu0 %v8732
  %9081 = vmatprep.subr.bf16.mxu0 %v8735
  %9082 = vmatpush1.bf16.msra.mxu0 %v8734
  %9083 = vmatprep.mubr.bf16.mxu0 %v8079
  %9084 = vmatmul.mubr.bf16.gmra.mrb[0].mxu0 %v8078
  %v9085 = vpop.f32.mrb[0].mxu0
  %v9086 = vadd.f32 %v8963, %v9085
  %v9087 = vpop.f32.mrb[0].mxu0
  %v9088 = vadd.f32 %v8965, %v9087
  %v9089 = vpop.f32.mrb[0].mxu0
  %v9090 = vadd.f32 %v8967, %v9089
  %v9091 = vpop.f32.mrb[0].mxu0
  %v9092 = vadd.f32 %v8969, %v9091
  %9093 = vmatprep.mubr.bf16.mxu0 %v8087
  %9094 = vmatmul.mubr.bf16.gmra.mrb[0].mxu0 %v8086
  %v9095 = vpop.f32.mrb[0].mxu0
  %v9096 = vadd.f32 %v8973, %v9095
  %v9097 = vpop.f32.mrb[0].mxu0
  %v9098 = vadd.f32 %v8975, %v9097
  %v9099 = vpop.f32.mrb[0].mxu0
  %v9100 = vadd.f32 %v8977, %v9099
  %v9101 = vpop.f32.mrb[0].mxu0
  %v9102 = vadd.f32 %v8979, %v9101
  %9103 = vmatprep.mubr.bf16.mxu0 %v8095
  %9104 = vmatmul.mubr.bf16.gmra.mrb[0].mxu0 %v8094
  %v9105 = vpop.f32.mrb[0].mxu0
  %v9106 = vadd.f32 %v8983, %v9105
  %v9107 = vpop.f32.mrb[0].mxu0
  %v9108 = vadd.f32 %v8985, %v9107
  %v9109 = vpop.f32.mrb[0].mxu0
  %v9110 = vadd.f32 %v8987, %v9109
  %v9111 = vpop.f32.mrb[0].mxu0
  %v9112 = vadd.f32 %v8989, %v9111
  %9113 = vmatprep.mubr.bf16.mxu0 %v8103
  %9114 = vmatmul.mubr.bf16.gmra.mrb[0].mxu0 %v8102
  %v9115 = vpop.f32.mrb[0].mxu0
  %v9116 = vadd.f32 %v8993, %v9115
  %v9117 = vpop.f32.mrb[0].mxu0
  %v9118 = vadd.f32 %v8995, %v9117
  %v9119 = vpop.f32.mrb[0].mxu0
  %v9120 = vadd.f32 %v8997, %v9119
  %v9121 = vpop.f32.mrb[0].mxu0
  %v9122 = vadd.f32 %v8999, %v9121
  %9123 = vmatprep.mubr.bf16.mxu0 %v8111
  %9124 = vmatmul.mubr.bf16.gmra.mrb[0].mxu0 %v8110
  %v9125 = vpop.f32.mrb[0].mxu0
  %v9126 = vadd.f32 %v9003, %v9125
  %v9127 = vpop.f32.mrb[0].mxu0
  %v9128 = vadd.f32 %v9005, %v9127
  %v9129 = vpop.f32.mrb[0].mxu0
  %v9130 = vadd.f32 %v9007, %v9129
  %v9131 = vpop.f32.mrb[0].mxu0
  %v9132 = vadd.f32 %v9009, %v9131
  %9133 = vmatprep.mubr.bf16.mxu0 %v8119
  %9134 = vmatmul.mubr.bf16.gmra.mrb[0].mxu0 %v8118
  %v9135 = vpop.f32.mrb[0].mxu0
  %v9136 = vadd.f32 %v9013, %v9135
  %v9137 = vpop.f32.mrb[0].mxu0
  %v9138 = vadd.f32 %v9015, %v9137
  %v9139 = vpop.f32.mrb[0].mxu0
  %v9140 = vadd.f32 %v9017, %v9139
  %v9141 = vpop.f32.mrb[0].mxu0
  %v9142 = vadd.f32 %v9019, %v9141
  %9143 = vmatprep.mubr.bf16.mxu0 %v8127
  %9144 = vmatmul.mubr.bf16.gmra.mrb[0].mxu0 %v8126
  %v9145 = vpop.f32.mrb[0].mxu0
  %v9146 = vadd.f32 %v9023, %v9145
  %v9147 = vpop.f32.mrb[0].mxu0
  %v9148 = vadd.f32 %v9025, %v9147
  %v9149 = vpop.f32.mrb[0].mxu0
  %v9150 = vadd.f32 %v9027, %v9149
  %v9151 = vpop.f32.mrb[0].mxu0
  %v9152 = vadd.f32 %v9029, %v9151
  %9153 = vmatprep.mubr.bf16.mxu0 %v8135
  %9154 = vmatmul.mubr.bf16.gmra.mrb[0].mxu0 %v8134
  %v9155 = vpop.f32.mrb[0].mxu0
  %v9156 = vadd.f32 %v9033, %v9155
  %v9157 = vpop.f32.mrb[0].mxu0
  %v9158 = vadd.f32 %v9035, %v9157
  %v9159 = vpop.f32.mrb[0].mxu0
  %v9160 = vadd.f32 %v9037, %v9159
  %v9161 = vpop.f32.mrb[0].mxu0
  %v9162 = vadd.f32 %v9039, %v9161
  %9163 = vmatprep.mubr.bf16.mxu0 %v8143
  %9164 = vmatmul.mubr.bf16.gmra.mrb[0].mxu0 %v8142
  %v9165 = vpop.f32.mrb[0].mxu0
  %v9166 = vadd.f32 %v9043, %v9165
  %v9167 = vpop.f32.mrb[0].mxu0
  %v9168 = vadd.f32 %v9045, %v9167
  %v9169 = vpop.f32.mrb[0].mxu0
  %v9170 = vadd.f32 %v9047, %v9169
  %v9171 = vpop.f32.mrb[0].mxu0
  %v9172 = vadd.f32 %v9049, %v9171
  %9173 = vdwg.mxu0
  %9174 = vmatprep.subr.bf16.mxu0 %v8737
  %9175 = vmatpush1.bf16.msra.mxu0 %v8736
  %9176 = vmatprep.subr.bf16.mxu0 %v8739
  %9177 = vmatpush1.bf16.msra.mxu0 %v8738
  %9178 = vmatprep.subr.bf16.mxu0 %v8741
  %9179 = vmatpush1.bf16.msra.mxu0 %v8740
  %9180 = vmatprep.subr.bf16.mxu0 %v8743
  %9181 = vmatpush1.bf16.msra.mxu0 %v8742
  %9182 = vmatprep.subr.bf16.mxu0 %v8745
  %9183 = vmatpush1.bf16.msra.mxu0 %v8744
  %9184 = vmatprep.subr.bf16.mxu0 %v8747
  %9185 = vmatpush1.bf16.msra.mxu0 %v8746
  %9186 = vmatprep.subr.bf16.mxu0 %v8749
  %9187 = vmatpush1.bf16.msra.mxu0 %v8748
  %9188 = vmatprep.subr.bf16.mxu0 %v8751
  %9189 = vmatpush1.bf16.msra.mxu0 %v8750
  %9190 = vmatprep.subr.bf16.mxu0 %v8753
  %9191 = vmatpush1.bf16.msra.mxu0 %v8752
  %9192 = vmatprep.subr.bf16.mxu0 %v8755
  %9193 = vmatpush1.bf16.msra.mxu0 %v8754
  %9194 = vmatprep.subr.bf16.mxu0 %v8757
  %9195 = vmatpush1.bf16.msra.mxu0 %v8756
  %9196 = vmatprep.subr.bf16.mxu0 %v8759
  %9197 = vmatpush1.bf16.msra.mxu0 %v8758
  %9198 = vmatprep.subr.bf16.mxu0 %v8761
  %9199 = vmatpush1.bf16.msra.mxu0 %v8760
  %9200 = vmatprep.subr.bf16.mxu0 %v8763
  %9201 = vmatpush1.bf16.msra.mxu0 %v8762
  %9202 = vmatprep.subr.bf16.mxu0 %v8765
  %9203 = vmatpush1.bf16.msra.mxu0 %v8764
  %9204 = vmatprep.subr.bf16.mxu0 %v8767
  %9205 = vmatpush1.bf16.msra.mxu0 %v8766
  %9206 = vmatprep.mubr.bf16.mxu0 %v8081
  %9207 = vmatmul.mubr.bf16.gmra.mrb[0].mxu0 %v8080
  %v9208 = vpop.f32.mrb[0].mxu0
  %v9209 = vadd.f32 %v9086, %v9208
  %v9210 = vpop.f32.mrb[0].mxu0
  %v9211 = vadd.f32 %v9088, %v9210
  %v9212 = vpop.f32.mrb[0].mxu0
  %v9213 = vadd.f32 %v9090, %v9212
  %v9214 = vpop.f32.mrb[0].mxu0
  %v9215 = vadd.f32 %v9092, %v9214
  %9216 = vmatprep.mubr.bf16.mxu0 %v8089
  %9217 = vmatmul.mubr.bf16.gmra.mrb[0].mxu0 %v8088
  %v9218 = vpop.f32.mrb[0].mxu0
  %v9219 = vadd.f32 %v9096, %v9218
  %v9220 = vpop.f32.mrb[0].mxu0
  %v9221 = vadd.f32 %v9098, %v9220
  %v9222 = vpop.f32.mrb[0].mxu0
  %v9223 = vadd.f32 %v9100, %v9222
  %v9224 = vpop.f32.mrb[0].mxu0
  %v9225 = vadd.f32 %v9102, %v9224
  %9226 = vmatprep.mubr.bf16.mxu0 %v8097
  %9227 = vmatmul.mubr.bf16.gmra.mrb[0].mxu0 %v8096
  %v9228 = vpop.f32.mrb[0].mxu0
  %v9229 = vadd.f32 %v9106, %v9228
  %v9230 = vpop.f32.mrb[0].mxu0
  %v9231 = vadd.f32 %v9108, %v9230
  %v9232 = vpop.f32.mrb[0].mxu0
  %v9233 = vadd.f32 %v9110, %v9232
  %v9234 = vpop.f32.mrb[0].mxu0
  %v9235 = vadd.f32 %v9112, %v9234
  %9236 = vmatprep.mubr.bf16.mxu0 %v8105
  %9237 = vmatmul.mubr.bf16.gmra.mrb[0].mxu0 %v8104
  %v9238 = vpop.f32.mrb[0].mxu0
  %v9239 = vadd.f32 %v9116, %v9238
  %v9240 = vpop.f32.mrb[0].mxu0
  %v9241 = vadd.f32 %v9118, %v9240
  %v9242 = vpop.f32.mrb[0].mxu0
  %v9243 = vadd.f32 %v9120, %v9242
  %v9244 = vpop.f32.mrb[0].mxu0
  %v9245 = vadd.f32 %v9122, %v9244
  %9246 = vmatprep.mubr.bf16.mxu0 %v8113
  %9247 = vmatmul.mubr.bf16.gmra.mrb[0].mxu0 %v8112
  %v9248 = vpop.f32.mrb[0].mxu0
  %v9249 = vadd.f32 %v9126, %v9248
  %v9250 = vpop.f32.mrb[0].mxu0
  %v9251 = vadd.f32 %v9128, %v9250
  %v9252 = vpop.f32.mrb[0].mxu0
  %v9253 = vadd.f32 %v9130, %v9252
  %v9254 = vpop.f32.mrb[0].mxu0
  %v9255 = vadd.f32 %v9132, %v9254
  %9256 = vmatprep.mubr.bf16.mxu0 %v8121
  %9257 = vmatmul.mubr.bf16.gmra.mrb[0].mxu0 %v8120
  %v9258 = vpop.f32.mrb[0].mxu0
  %v9259 = vadd.f32 %v9136, %v9258
  %v9260 = vpop.f32.mrb[0].mxu0
  %v9261 = vadd.f32 %v9138, %v9260
  %v9262 = vpop.f32.mrb[0].mxu0
  %v9263 = vadd.f32 %v9140, %v9262
  %v9264 = vpop.f32.mrb[0].mxu0
  %v9265 = vadd.f32 %v9142, %v9264
  %9266 = vmatprep.mubr.bf16.mxu0 %v8129
  %9267 = vmatmul.mubr.bf16.gmra.mrb[0].mxu0 %v8128
  %v9268 = vpop.f32.mrb[0].mxu0
  %v9269 = vadd.f32 %v9146, %v9268
  %v9270 = vpop.f32.mrb[0].mxu0
  %v9271 = vadd.f32 %v9148, %v9270
  %v9272 = vpop.f32.mrb[0].mxu0
  %v9273 = vadd.f32 %v9150, %v9272
  %v9274 = vpop.f32.mrb[0].mxu0
  %v9275 = vadd.f32 %v9152, %v9274
  %9276 = vmatprep.mubr.bf16.mxu0 %v8137
  %9277 = vmatmul.mubr.bf16.gmra.mrb[0].mxu0 %v8136
  %v9278 = vpop.f32.mrb[0].mxu0
  %v9279 = vadd.f32 %v9156, %v9278
  %v9280 = vpop.f32.mrb[0].mxu0
  %v9281 = vadd.f32 %v9158, %v9280
  %v9282 = vpop.f32.mrb[0].mxu0
  %v9283 = vadd.f32 %v9160, %v9282
  %v9284 = vpop.f32.mrb[0].mxu0
  %v9285 = vadd.f32 %v9162, %v9284
  %9286 = vmatprep.mubr.bf16.mxu0 %v8145
  %9287 = vmatmul.mubr.bf16.gmra.mrb[0].mxu0 %v8144
  %v9288 = vpop.f32.mrb[0].mxu0
  %v9289 = vadd.f32 %v9166, %v9288
  %v9290 = vpop.f32.mrb[0].mxu0
  %v9291 = vadd.f32 %v9168, %v9290
  %v9292 = vpop.f32.mrb[0].mxu0
  %v9293 = vadd.f32 %v9170, %v9292
  %v9294 = vpop.f32.mrb[0].mxu0
  %v9295 = vadd.f32 %v9172, %v9294
  %9296 = vdwg.mxu0
  %9297 = vmatprep.subr.bf16.mxu0 %v8769
  %9298 = vmatpush1.bf16.msra.mxu0 %v8768
  %9299 = vmatprep.subr.bf16.mxu0 %v8771
  %9300 = vmatpush1.bf16.msra.mxu0 %v8770
  %9301 = vmatprep.subr.bf16.mxu0 %v8773
  %9302 = vmatpush1.bf16.msra.mxu0 %v8772
  %9303 = vmatprep.subr.bf16.mxu0 %v8775
  %9304 = vmatpush1.bf16.msra.mxu0 %v8774
  %9305 = vmatprep.subr.bf16.mxu0 %v8777
  %9306 = vmatpush1.bf16.msra.mxu0 %v8776
  %9307 = vmatprep.subr.bf16.mxu0 %v8779
  %9308 = vmatpush1.bf16.msra.mxu0 %v8778
  %9309 = vmatprep.subr.bf16.mxu0 %v8781
  %9310 = vmatpush1.bf16.msra.mxu0 %v8780
  %9311 = vmatprep.subr.bf16.mxu0 %v8783
  %9312 = vmatpush1.bf16.msra.mxu0 %v8782
  %9313 = vmatprep.subr.bf16.mxu0 %v8785
  %9314 = vmatpush1.bf16.msra.mxu0 %v8784
  %9315 = vmatprep.subr.bf16.mxu0 %v8787
  %9316 = vmatpush1.bf16.msra.mxu0 %v8786
  %9317 = vmatprep.subr.bf16.mxu0 %v8789
  %9318 = vmatpush1.bf16.msra.mxu0 %v8788
  %9319 = vmatprep.subr.bf16.mxu0 %v8791
  %9320 = vmatpush1.bf16.msra.mxu0 %v8790
  %9321 = vmatprep.subr.bf16.mxu0 %v8793
  %9322 = vmatpush1.bf16.msra.mxu0 %v8792
  %9323 = vmatprep.subr.bf16.mxu0 %v8795
  %9324 = vmatpush1.bf16.msra.mxu0 %v8794
  %9325 = vmatprep.subr.bf16.mxu0 %v8797
  %9326 = vmatpush1.bf16.msra.mxu0 %v8796
  %9327 = vmatprep.subr.bf16.mxu0 %v8799
  %9328 = vmatpush1.bf16.msra.mxu0 %v8798
  %9329 = vmatprep.mubr.bf16.mxu0 %v8083
  %9330 = vmatmul.mubr.bf16.gmra.mrb[0].mxu0 %v8082
  %v9331 = vpop.f32.mrb[0].mxu0
  %v9332 = vadd.f32 %v9209, %v9331
  %v9333 = vpop.f32.mrb[0].mxu0
  %v9334 = vadd.f32 %v9211, %v9333
  %v9335 = vpop.f32.mrb[0].mxu0
  %v9336 = vadd.f32 %v9213, %v9335
  %v9337 = vpop.f32.mrb[0].mxu0
  %v9338 = vadd.f32 %v9215, %v9337
  %9339 = vmatprep.mubr.bf16.mxu0 %v8091
  %9340 = vmatmul.mubr.bf16.gmra.mrb[0].mxu0 %v8090
  %v9341 = vpop.f32.mrb[0].mxu0
  %v9342 = vadd.f32 %v9219, %v9341
  %v9343 = vpop.f32.mrb[0].mxu0
  %v9344 = vadd.f32 %v9221, %v9343
  %v9345 = vpop.f32.mrb[0].mxu0
  %v9346 = vadd.f32 %v9223, %v9345
  %v9347 = vpop.f32.mrb[0].mxu0
  %v9348 = vadd.f32 %v9225, %v9347
  %9349 = vmatprep.mubr.bf16.mxu0 %v8099
  %9350 = vmatmul.mubr.bf16.gmra.mrb[0].mxu0 %v8098
  %v9351 = vpop.f32.mrb[0].mxu0
  %v9352 = vadd.f32 %v9229, %v9351
  %v9353 = vpop.f32.mrb[0].mxu0
  %v9354 = vadd.f32 %v9231, %v9353
  %v9355 = vpop.f32.mrb[0].mxu0
  %v9356 = vadd.f32 %v9233, %v9355
  %v9357 = vpop.f32.mrb[0].mxu0
  %v9358 = vadd.f32 %v9235, %v9357
  %9359 = vmatprep.mubr.bf16.mxu0 %v8107
  %9360 = vmatmul.mubr.bf16.gmra.mrb[0].mxu0 %v8106
  %v9361 = vpop.f32.mrb[0].mxu0
  %v9362 = vadd.f32 %v9239, %v9361
  %v9363 = vpop.f32.mrb[0].mxu0
  %v9364 = vadd.f32 %v9241, %v9363
  %v9365 = vpop.f32.mrb[0].mxu0
  %v9366 = vadd.f32 %v9243, %v9365
  %v9367 = vpop.f32.mrb[0].mxu0
  %v9368 = vadd.f32 %v9245, %v9367
  %9369 = vmatprep.mubr.bf16.mxu0 %v8115
  %9370 = vmatmul.mubr.bf16.gmra.mrb[0].mxu0 %v8114
  %v9371 = vpop.f32.mrb[0].mxu0
  %v9372 = vadd.f32 %v9249, %v9371
  %v9373 = vpop.f32.mrb[0].mxu0
  %v9374 = vadd.f32 %v9251, %v9373
  %v9375 = vpop.f32.mrb[0].mxu0
  %v9376 = vadd.f32 %v9253, %v9375
  %v9377 = vpop.f32.mrb[0].mxu0
  %v9378 = vadd.f32 %v9255, %v9377
  %9379 = vmatprep.mubr.bf16.mxu0 %v8123
  %9380 = vmatmul.mubr.bf16.gmra.mrb[0].mxu0 %v8122
  %v9381 = vpop.f32.mrb[0].mxu0
  %v9382 = vadd.f32 %v9259, %v9381
  %v9383 = vpop.f32.mrb[0].mxu0
  %v9384 = vadd.f32 %v9261, %v9383
  %v9385 = vpop.f32.mrb[0].mxu0
  %v9386 = vadd.f32 %v9263, %v9385
  %v9387 = vpop.f32.mrb[0].mxu0
  %v9388 = vadd.f32 %v9265, %v9387
  %9389 = vmatprep.mubr.bf16.mxu0 %v8131
  %9390 = vmatmul.mubr.bf16.gmra.mrb[0].mxu0 %v8130
  %v9391 = vpop.f32.mrb[0].mxu0
  %v9392 = vadd.f32 %v9269, %v9391
  %v9393 = vpop.f32.mrb[0].mxu0
  %v9394 = vadd.f32 %v9271, %v9393
  %v9395 = vpop.f32.mrb[0].mxu0
  %v9396 = vadd.f32 %v9273, %v9395
  %v9397 = vpop.f32.mrb[0].mxu0
  %v9398 = vadd.f32 %v9275, %v9397
  %9399 = vmatprep.mubr.bf16.mxu0 %v8139
  %9400 = vmatmul.mubr.bf16.gmra.mrb[0].mxu0 %v8138
  %v9401 = vpop.f32.mrb[0].mxu0
  %v9402 = vadd.f32 %v9279, %v9401
  %v9403 = vpop.f32.mrb[0].mxu0
  %v9404 = vadd.f32 %v9281, %v9403
  %v9405 = vpop.f32.mrb[0].mxu0
  %v9406 = vadd.f32 %v9283, %v9405
  %v9407 = vpop.f32.mrb[0].mxu0
  %v9408 = vadd.f32 %v9285, %v9407
  %9409 = vmatprep.mubr.bf16.mxu0 %v8147
  %9410 = vmatmul.mubr.bf16.gmra.mrb[0].mxu0 %v8146
  %v9411 = vpop.f32.mrb[0].mxu0
  %v9412 = vadd.f32 %v9289, %v9411
  %v9413 = vpop.f32.mrb[0].mxu0
  %v9414 = vadd.f32 %v9291, %v9413
  %v9415 = vpop.f32.mrb[0].mxu0
  %v9416 = vadd.f32 %v9293, %v9415
  %v9417 = vpop.f32.mrb[0].mxu0
  %v9418 = vadd.f32 %v9295, %v9417
  %9419 = vdwg.mxu0
  %v9420 = vadd.f32 %v5184, %v9332
  %v9421 = vadd.f32 %v5185, %v9334
  %v9422 = vadd.f32 %v5186, %v9336
  %v9423 = vadd.f32 %v5187, %v9338
  %v9424 = vadd.f32 %v5188, %v9342
  %v9425 = vadd.f32 %v5189, %v9344
  %v9426 = vadd.f32 %v5190, %v9346
  %v9427 = vadd.f32 %v5191, %v9348
  %v9428 = vadd.f32 %v5192, %v9352
  %v9429 = vadd.f32 %v5193, %v9354
  %v9430 = vadd.f32 %v5194, %v9356
  %v9431 = vadd.f32 %v5195, %v9358
  %v9432 = vadd.f32 %v5196, %v9362
  %v9433 = vadd.f32 %v5197, %v9364
  %v9434 = vadd.f32 %v5198, %v9366
  %v9435 = vadd.f32 %v5199, %v9368
  %v9436 = vadd.f32 %v5200, %v9372
  %v9437 = vadd.f32 %v5201, %v9374
  %v9438 = vadd.f32 %v5202, %v9376
  %v9439 = vadd.f32 %v5203, %v9378
  %v9440 = vadd.f32 %v5204, %v9382
  %v9441 = vadd.f32 %v5205, %v9384
  %v9442 = vadd.f32 %v5206, %v9386
  %v9443 = vadd.f32 %v5207, %v9388
  %v9444 = vadd.f32 %v5208, %v9392
  %v9445 = vadd.f32 %v5209, %v9394
  %v9446 = vadd.f32 %v5210, %v9396
  %v9447 = vadd.f32 %v5211, %v9398
  %v9448 = vadd.f32 %v5212, %v9402
  %v9449 = vadd.f32 %v5213, %v9404
  %v9450 = vadd.f32 %v5214, %v9406
  %v9451 = vadd.f32 %v5215, %v9408
  %v9452 = vadd.f32 %v5216, %v9412
  %v9453 = vadd.f32 %v5217, %v9414
  %v9454 = vadd.f32 %v5218, %v9416
  %v9455 = vadd.f32 %v5219, %v9418
  %9456 = vst [vmem:[%s13] sm:$0xff] %v9420
  %9457 = vst [vmem:[%s13 + $0x8] sm:$0xff] %v9421
  %9458 = vst [vmem:[%s13 + $0x10] sm:$0xff] %v9422
  %9459 = vst [vmem:[%s13 + $0x18] sm:$0xff] %v9423
  %9460 = vst [vmem:[%s13 + $0x20] sm:$0xff] %v9424
  %9461 = vst [vmem:[%s13 + $0x28] sm:$0xff] %v9425
  %9462 = vst [vmem:[%s13 + $0x30] sm:$0xff] %v9426
  %9463 = vst [vmem:[%s13 + $0x38] sm:$0xff] %v9427
  %9464 = vst [vmem:[%s13 + $0x40] sm:$0xff] %v9428
  %9465 = vst [vmem:[%s13 + $0x48] sm:$0xff] %v9429
  %9466 = vst [vmem:[%s13 + $0x50] sm:$0xff] %v9430
  %9467 = vst [vmem:[%s13 + $0x58] sm:$0xff] %v9431
  %9468 = vst [vmem:[%s13 + $0x60] sm:$0xff] %v9432
  %9469 = vst [vmem:[%s13 + $0x68] sm:$0xff] %v9433
  %9470 = vst [vmem:[%s13 + $0x70] sm:$0xff] %v9434
  %9471 = vst [vmem:[%s13 + $0x78] sm:$0xff] %v9435
  %9472 = vst [vmem:[%s13 + $0x80] sm:$0xff] %v9436
  %9473 = vst [vmem:[%s13 + $0x88] sm:$0xff] %v9437
  %9474 = vst [vmem:[%s13 + $0x90] sm:$0xff] %v9438
  %9475 = vst [vmem:[%s13 + $0x98] sm:$0xff] %v9439
  %9476 = vst [vmem:[%s13 + $0xa0] sm:$0xff] %v9440
  %9477 = vst [vmem:[%s13 + $0xa8] sm:$0xff] %v9441
  %9478 = vst [vmem:[%s13 + $0xb0] sm:$0xff] %v9442
  %9479 = vst [vmem:[%s13 + $0xb8] sm:$0xff] %v9443
  %9480 = vst [vmem:[%s13 + $0xc0] sm:$0xff] %v9444
  %9481 = vst [vmem:[%s13 + $0xc8] sm:$0xff] %v9445
  %9482 = vst [vmem:[%s13 + $0xd0] sm:$0xff] %v9446
  %9483 = vst [vmem:[%s13 + $0xd8] sm:$0xff] %v9447
  %9484 = vst [vmem:[%s13 + $0xe0] sm:$0xff] %v9448
  %9485 = vst [vmem:[%s13 + $0xe8] sm:$0xff] %v9449
  %9486 = vst [vmem:[%s13 + $0xf0] sm:$0xff] %v9450
  %9487 = vst [vmem:[%s13 + $0xf8] sm:$0xff] %v9451
  %9488 = vst [vmem:[%s13 + $0x100] sm:$0xff] %v9452
  %9489 = vst [vmem:[%s13 + $0x108] sm:$0xff] %v9453
  %9490 = vst [vmem:[%s13 + $0x110] sm:$0xff] %v9454
  %9491 = vst [vmem:[%s13 + $0x118] sm:$0xff] %v9455
  // Predicated region
  $region54: #{vit_forward.5} parent=0 // pred_check
    _
  $region55: #{vit_forward.5} parent=0 // pred_check_branch
    %9493 = sbr.rel (0) target = $region57
  $region56: #{vit_forward.5} parent=0 // pred_region
    _
  $region57: #{vit_forward.5} parent=0 // pred_fallthru
    _
  // Predicated region
  $region58: #{vit_forward.5} parent=0 // pred_check
    _
  $region59: #{vit_forward.5} parent=0 // pred_check_branch
    %9495 = sbr.rel (0) target = $region61
  $region60: #{vit_forward.5} parent=0 // pred_region
    _
  $region61: #{vit_forward.5} parent=0 // pred_fallthru
    _

</llo_original>
